<compile_context>
chip_gen: v7x
topology: tpu7x:2x2x1
jax: 0.10.0
libtpu: 0.0.40
codegen_flags: <defaults>
</compile_context>

<pallas_src>
import functools
import math

import jax
import jax.numpy as jnp
from jax import lax
from jax.experimental import pallas as pl
from jax.experimental.pallas import tpu as pltpu

EMBED_DIM = 64
HEADS = 8
HEAD_DIM = EMBED_DIM // HEADS // 2      # DIFF-Transformer: d = D / (2h) = 4
RMS_EPS = 1e-5


def _diff_attn_kernel(xT_ref, wqkvT_ref, woT_ref, outT_ref, *,
                      lam, heads, head_dim):
    f32 = jnp.float32
    bf16 = jnp.bfloat16

    D = xT_ref.shape[0]            # 64  (channel axis, sublanes)
    L = xT_ref.shape[1]            # 128 (sequence axis, lanes)
    G = 2 * heads                  # 16 score groups: [q1 h0..h7 | q2 h0..h7]
    dv = 2 * head_dim              # per-head value width (8)

    xT = xT_ref[...].astype(bf16)                                   # (D, L)

    # Packed, pre-transposed, pre-permuted projection (host-prepared):
    #   rows [0:D)   Q rows, group-major, 1/sqrt(head_dim) folded in
    #   rows [D:2D)  K rows, same group-major order
    #   rows [2D:3D) V rows, head-major
    qkvT = jnp.dot(wqkvT_ref[...], xT, preferred_element_type=f32)  # (3D, L)

    qg = qkvT[0:D].reshape(G, head_dim, L)                          # (16, 4, L)
    kg = qkvT[D:2 * D].reshape(G, head_dim, L)                      # (16, 4, L)
    vg = qkvT[2 * D:3 * D].reshape(heads, dv, L).astype(bf16)       # (8, 8, L)

    # head-major (g, l, d) operands for the batched QK^T (flash-style pattern)
    q = jnp.swapaxes(qg, 1, 2).astype(bf16)                         # (16, L, 4)
    k = jnp.swapaxes(kg, 1, 2).astype(bf16)                         # (16, L, 4)

    s = jnp.einsum('gld,gmd->glm', q, k,
                   preferred_element_type=f32)                      # (16, L, L)

    # batched softmax over the key axis
    m = jnp.max(s, axis=-1, keepdims=True)
    e = jnp.exp(s - m)
    sm = e * pl.reciprocal(jnp.sum(e, axis=-1, keepdims=True), approx=True)

    # differential attention: softmax(Q1K1^T) - lambda * softmax(Q2K2^T)
    p = (sm[:heads] - lam * sm[heads:]).astype(bf16)                # (8, L, L)

    # P @ V produced channel-major: oT[h, d, l] = sum_m v[h, d, m] p[h, l, m]
    oT = jnp.einsum('gdm,glm->gdl', vg, p,
                    preferred_element_type=f32)                     # (8, 8, L)

    # grouped headwise RMSNorm over the 2*head_dim channels; the affine gamma
    # and the (1 - lambda_init) scale are diagonal and folded into Wo on host.
    ms = jnp.mean(oT * oT, axis=1, keepdims=True)                   # (8, 1, L)
    oT = oT * lax.rsqrt(ms + RMS_EPS)

    o_flat = oT.reshape(D, L).astype(bf16)                          # (64, L)
    outT_ref[...] = jnp.dot(woT_ref[...], o_flat,
                            preferred_element_type=f32)             # (D, L)


def differential_attention(params, x, *, lam=0.1, heads=HEADS):
    """x: (B, L, D) float32 -> (B, L, D) float32."""
    B, L, D = x.shape
    head_dim = D // heads // 2
    x_t = jnp.swapaxes(x, 1, 2)    # (B, D, L): lane-dense sequence axis

    kernel = functools.partial(_diff_attn_kernel, lam=float(lam),
                               heads=heads, head_dim=head_dim)

    flops = 2 * B * (L * D * 3 * D                       # packed QKV projection
                     + 2 * heads * L * L * head_dim      # Q1K1^T and Q2K2^T
                     + heads * L * L * 2 * head_dim      # P @ V
                     + L * D * D)                        # output projection
    cost = pl.CostEstimate(
        flops=flops,
        transcendentals=2 * heads * B * L * L,
        bytes_accessed=2 * 4 * B * L * D + 2 * (3 * D * D + D * D))

    outT = pl.pallas_call(
        kernel,
        out_shape=jax.ShapeDtypeStruct((B, D, L), jnp.float32),
        grid=(B,),
        in_specs=[
            # one batch item per grid step; leading dim squeezed -> 2-D refs
            pl.BlockSpec((None, D, L), lambda b: (b, 0, 0)),
            pl.BlockSpec((3 * D, D), lambda b: (0, 0)),   # packed Wqkv^T
            pl.BlockSpec((D, D), lambda b: (0, 0)),       # Wo^T (scales folded)
        ],
        out_specs=pl.BlockSpec((None, D, L), lambda b: (b, 0, 0)),
        compiler_params=pltpu.CompilerParams(
            dimension_semantics=("parallel",)),
        cost_estimate=cost,
    )(x_t, params['w_qkv_t'], params['w_o_t'])

    return jnp.swapaxes(outT, 1, 2)                       # back to (B, L, D)


def init_params(key, dim=EMBED_DIM, heads=HEADS, lam_init=0.05):
    """Deterministic synthetic init mirroring a freshly constructed module."""
    head_dim = dim // heads // 2
    kq, kk, kv, ko = jax.random.split(key, 4)
    s = 1.0 / math.sqrt(dim)
    wq = (s * jax.random.normal(kq, (dim, dim))).astype(jnp.float32)
    wk = (s * jax.random.normal(kk, (dim, dim))).astype(jnp.float32)
    wv = (s * jax.random.normal(kv, (dim, dim))).astype(jnp.float32)
    wo = (s * jax.random.normal(ko, (dim, dim))).astype(jnp.float32)

    # Output-channel permutation for Q/K: group-major [q1 h0..h7 | q2 h0..h7],
    # each head_dim wide, so the kernel split is a pure aligned reshape.
    perm = jnp.array([2 * head_dim * h + head_dim * c + r
                      for c in range(2)
                      for h in range(heads)
                      for r in range(head_dim)], dtype=jnp.int32)
    scale = 1.0 / math.sqrt(head_dim)

    wqT = (wq[:, perm] * scale).T            # 1/sqrt(d) folded into Q rows
    wkT = wk[:, perm].T
    wvT = wv.T                               # V is already head-contiguous
    w_qkv_t = jnp.concatenate([wqT, wkT, wvT], axis=0).astype(jnp.bfloat16)

    # RMSNorm affine gamma (ones at init) and the (1 - lambda_init) scale are
    # diagonal on Wo's input axis -> exact fold.  NOTE: must be re-done if
    # gamma or Wo ever change (valid for any diagonal gamma, not just ones).
    gamma_full = jnp.ones((dim,), jnp.float32)
    w_o_t = ((gamma_full * (1.0 - lam_init))[:, None] * wo).T.astype(jnp.bfloat16)

    return {'w_qkv_t': w_qkv_t, 'w_o_t': w_o_t}


def differrnt_transformer_forward(x, key, h=HEADS, lam=0.1, lam_init=0.05):
    # The PyTorch module constructs DifferentialTransformer(...) with fresh
    # default-initialised parameters inside forward(); mirrored here with a
    # deterministic key-derived init.
    params = init_params(key, dim=EMBED_DIM, heads=h, lam_init=lam_init)
    return differential_attention(params, x, lam=lam, heads=h)


if __name__ == "__main__":
    key = jax.random.PRNGKey(0)
    pkey, xkey = jax.random.split(key)

    B, L, D = 2, 128, EMBED_DIM
    x = jax.random.normal(xkey, (B, L, D), jnp.float32)

    out = differrnt_transformer_forward(x, pkey, h=HEADS, lam=0.1, lam_init=0.05)
    jax.block_until_ready(out)

    assert out.shape == (B, L, D) and out.dtype == jnp.float32
    assert bool(jnp.all(jnp.isfinite(out)))
    print("KERNEL_OK")
</pallas_src>

<mosaic_0001>
module attributes {stable_mosaic.version = 11 : i64} {
  func.func @_diff_attn_kernel(%arg0: i32, %arg1: memref<1x64x128xf32, #tpu.memory_space<vmem>>, %arg2: memref<192x64xbf16, #tpu.memory_space<vmem>>, %arg3: memref<64x64xbf16, #tpu.memory_space<vmem>>, %arg4: memref<1x64x128xf32, #tpu.memory_space<vmem>>) attributes {dimension_semantics = [#tpu.dimension_semantics<parallel>], iteration_bounds = array<i64: 2>, scalar_prefetch = 0 : i64, scratch_operands = 0 : i64, tpu.core_type = #tpu.core_type<tc>, window_params = [{transform_indices = @transform_0, window_bounds = array<i64: 1, 64, 128>}, {pipeline_mode = #tpu.pipeline_mode<synchronous>, transform_indices = @transform_1, window_bounds = array<i64: 192, 64>}, {pipeline_mode = #tpu.pipeline_mode<synchronous>, transform_indices = @transform_2, window_bounds = array<i64: 64, 64>}, {transform_indices = @transform_3, window_bounds = array<i64: 1, 64, 128>}]} {
    %c0 = arith.constant 0 : index
    %c0_0 = arith.constant 0 : index
    %c0_1 = arith.constant 0 : index
    %0 = vector.load %arg1[%c0, %c0_0, %c0_1] : memref<1x64x128xf32, #tpu.memory_space<vmem>>, vector<1x64x128xf32>
    %1 = vector.shape_cast %0 : vector<1x64x128xf32> to vector<64x128xf32>
    %2 = arith.truncf %1 : vector<64x128xf32> to vector<64x128xbf16>
    %c0_2 = arith.constant 0 : index
    %c0_3 = arith.constant 0 : index
    %3 = vector.load %arg2[%c0_2, %c0_3] : memref<192x64xbf16, #tpu.memory_space<vmem>>, vector<192x64xbf16>
    %cst = arith.constant dense<0.000000e+00> : vector<192x128xf32>
    %4 = tpu.matmul %3, %2, %cst {dimension_numbers = #tpu.dot_dimension_numbers<[1], [0], [0], [1], [0, 0, 1, 1], [], []>} : vector<192x64xbf16>, vector<64x128xbf16>, vector<192x128xf32> -> vector<192x128xf32>
    %5 = vector.extract_strided_slice %4 {offsets = [0, 0], sizes = [64, 128], strides = [1, 1]} : vector<192x128xf32> to vector<64x128xf32>
    %6 = vector.shape_cast %5 : vector<64x128xf32> to vector<16x4x128xf32>
    %7 = vector.extract_strided_slice %4 {offsets = [64, 0], sizes = [64, 128], strides = [1, 1]} : vector<192x128xf32> to vector<64x128xf32>
    %8 = vector.shape_cast %7 : vector<64x128xf32> to vector<16x4x128xf32>
    %9 = vector.extract_strided_slice %4 {offsets = [128, 0], sizes = [64, 128], strides = [1, 1]} : vector<192x128xf32> to vector<64x128xf32>
    %10 = vector.shape_cast %9 : vector<64x128xf32> to vector<8x8x128xf32>
    %11 = arith.truncf %10 : vector<8x8x128xf32> to vector<8x8x128xbf16>
    %12 = tpu.transpose %6, [0, 2, 1] : vector<16x4x128xf32> -> vector<16x128x4xf32>
    %13 = arith.truncf %12 : vector<16x128x4xf32> to vector<16x128x4xbf16>
    %14 = tpu.transpose %8, [0, 2, 1] : vector<16x4x128xf32> -> vector<16x128x4xf32>
    %15 = arith.truncf %14 : vector<16x128x4xf32> to vector<16x128x4xbf16>
    "tpu.trace_start"() <{level = 10 : i32, message = "gld,gmd->glm"}> : () -> ()
    %cst_4 = arith.constant dense<0.000000e+00> : vector<16x128x128xf32>
    %16 = tpu.matmul %13, %15, %cst_4 {dimension_numbers = #tpu.dot_dimension_numbers<[2], [2], [1], [1], [0, 0, 0, 1, 1, 1], [0], [0]>} : vector<16x128x4xbf16>, vector<16x128x4xbf16>, vector<16x128x128xf32> -> vector<16x128x128xf32>
    "tpu.trace_stop"() : () -> ()
    %cst_5 = arith.constant dense<0xFF800000> : vector<16x128xf32>
    %17 = vector.multi_reduction <maximumf>, %16, %cst_5 [2] : vector<16x128x128xf32> to vector<16x128xf32>
    %18 = vector.shape_cast %17 : vector<16x128xf32> to vector<16x128x1xf32>
    %19 = vector.broadcast %18 : vector<16x128x1xf32> to vector<16x128x128xf32>
    %20 = arith.subf %16, %19 : vector<16x128x128xf32>
    %21 = math.exp %20 : vector<16x128x128xf32>
    %cst_6 = arith.constant dense<0.000000e+00> : vector<16x128xf32>
    %22 = vector.multi_reduction <add>, %21, %cst_6 [2] : vector<16x128x128xf32> to vector<16x128xf32>
    %23 = vector.shape_cast %22 : vector<16x128xf32> to vector<16x128x1xf32>
    %24 = tpu.reciprocal %23 {approx = true} : vector<16x128x1xf32> -> vector<16x128x1xf32>
    %25 = vector.broadcast %24 : vector<16x128x1xf32> to vector<16x128x128xf32>
    %26 = arith.mulf %21, %25 : vector<16x128x128xf32>
    %27 = vector.extract_strided_slice %26 {offsets = [0, 0, 0], sizes = [8, 128, 128], strides = [1, 1, 1]} : vector<16x128x128xf32> to vector<8x128x128xf32>
    %28 = vector.extract_strided_slice %26 {offsets = [8, 0, 0], sizes = [8, 128, 128], strides = [1, 1, 1]} : vector<16x128x128xf32> to vector<8x128x128xf32>
    %cst_7 = arith.constant 1.000000e-01 : f32
    %29 = vector.broadcast %cst_7 : f32 to vector<8x128x128xf32>
    %30 = arith.mulf %29, %28 : vector<8x128x128xf32>
    %31 = arith.subf %27, %30 : vector<8x128x128xf32>
    %32 = arith.truncf %31 : vector<8x128x128xf32> to vector<8x128x128xbf16>
    "tpu.trace_start"() <{level = 10 : i32, message = "gdm,glm->gdl"}> : () -> ()
    %cst_8 = arith.constant dense<0.000000e+00> : vector<8x8x128xf32>
    %33 = tpu.matmul %11, %32, %cst_8 {dimension_numbers = #tpu.dot_dimension_numbers<[2], [2], [1], [1], [0, 0, 0, 1, 1, 1], [0], [0]>} : vector<8x8x128xbf16>, vector<8x128x128xbf16>, vector<8x8x128xf32> -> vector<8x8x128xf32>
    "tpu.trace_stop"() : () -> ()
    %34 = arith.mulf %33, %33 : vector<8x8x128xf32>
    %cst_9 = arith.constant dense<0.000000e+00> : vector<8x128xf32>
    %35 = vector.multi_reduction <add>, %34, %cst_9 [1] : vector<8x8x128xf32> to vector<8x128xf32>
    %36 = vector.shape_cast %35 : vector<8x128xf32> to vector<8x1x128xf32>
    %cst_10 = arith.constant 8.000000e+00 : f32
    %37 = vector.broadcast %cst_10 : f32 to vector<8x1x128xf32>
    %38 = arith.divf %36, %37 : vector<8x1x128xf32>
    %cst_11 = arith.constant 9.99999974E-6 : f32
    %39 = vector.broadcast %cst_11 : f32 to vector<8x1x128xf32>
    %40 = arith.addf %38, %39 : vector<8x1x128xf32>
    %41 = math.rsqrt %40 : vector<8x1x128xf32>
    %42 = vector.broadcast %41 : vector<8x1x128xf32> to vector<8x8x128xf32>
    %43 = arith.mulf %33, %42 : vector<8x8x128xf32>
    %44 = vector.shape_cast %43 : vector<8x8x128xf32> to vector<64x128xf32>
    %45 = arith.truncf %44 : vector<64x128xf32> to vector<64x128xbf16>
    %c0_12 = arith.constant 0 : index
    %c0_13 = arith.constant 0 : index
    %46 = vector.load %arg3[%c0_12, %c0_13] : memref<64x64xbf16, #tpu.memory_space<vmem>>, vector<64x64xbf16>
    %cst_14 = arith.constant dense<0.000000e+00> : vector<64x128xf32>
    %47 = tpu.matmul %46, %45, %cst_14 {dimension_numbers = #tpu.dot_dimension_numbers<[1], [0], [0], [1], [0, 0, 1, 1], [], []>} : vector<64x64xbf16>, vector<64x128xbf16>, vector<64x128xf32> -> vector<64x128xf32>
    %c0_15 = arith.constant 0 : index
    %c0_16 = arith.constant 0 : index
    %c0_17 = arith.constant 0 : index
    %48 = vector.load %arg4[%c0_15, %c0_16, %c0_17] : memref<1x64x128xf32, #tpu.memory_space<vmem>>, vector<1x64x128xf32>
    %49 = vector.shape_cast %48 : vector<1x64x128xf32> to vector<64x128xf32>
    %50 = vector.shape_cast %47 : vector<64x128xf32> to vector<1x64x128xf32>
    tpu.vector_store %arg4[%c0_15, %c0_16, %c0_17], %50 {strides = array<i32>} : memref<1x64x128xf32, #tpu.memory_space<vmem>>, vector<1x64x128xf32>,
    return
  }
  func.func @transform_0(%arg0: i32) -> (i32, i32, i32) {
    %c0_i32 = arith.constant 0 : i32
    %c0_i32_0 = arith.constant 0 : i32
    %c0_i32_1 = arith.constant 0 : i32
    return %arg0, %c0_i32, %c0_i32_0 : i32, i32, i32
  }
  func.func @transform_1(%arg0: i32) -> (i32, i32) {
    %c0_i32 = arith.constant 0 : i32
    %c0_i32_0 = arith.constant 0 : i32
    %c0_i32_1 = arith.constant 0 : i32
    return %c0_i32, %c0_i32_0 : i32, i32
  }
  func.func @transform_2(%arg0: i32) -> (i32, i32) {
    %c0_i32 = arith.constant 0 : i32
    %c0_i32_0 = arith.constant 0 : i32
    %c0_i32_1 = arith.constant 0 : i32
    return %c0_i32, %c0_i32_0 : i32, i32
  }
  func.func @transform_3(%arg0: i32) -> (i32, i32, i32) {
    %c0_i32 = arith.constant 0 : i32
    %c0_i32_0 = arith.constant 0 : i32
    %c0_i32_1 = arith.constant 0 : i32
    return %arg0, %c0_i32, %c0_i32_0 : i32, i32, i32
  }
}

</mosaic_0001>

<llo_original>
// kernel: tpu_custom_call.1
$region0: #{tpu_custom_call.1}
  #allocation0 [shape = 'u32[]', space=smem, size = 0x4, offset = 0x4, fixed_abs, tag = 'smem constant byte address 0x4 - core index']
  #allocation1 [shape = 'u32[144,128]{1,0:T(1,128)}', space=vmem, size = 0x12000, scoped, tag = 'internal scratch']
  %s0 = inlined_call_operand.vmem [shape: f32[2,64,128], index: 0, kind: input, shape index: {}]
  %s1 = inlined_call_operand.vmem [shape: bf16[192,64], index: 1, kind: input, shape index: {}]
  %s2 = inlined_call_operand.vmem [shape: bf16[64,64], index: 2, kind: input, shape index: {}]
  %s3 = inlined_call_operand.hbm [shape: f32[2,64,128], index: 3, kind: output, shape index: {}]
  %s4 = sld [smem:[#allocation0]]
  $region45: #{tpu_custom_call.1} parent=0
    _
  %s6 = ssub.s32 1, %s4
  %s7 = scalar_select 0, %s6, %s4
  $region1: #{tpu_custom_call.1} parent=0
    #allocation2 [shape = 'u8[65536]{0}', space=vmem, size = 0x10000, scoped, tag = 'output window, operand 0']
    #allocation3 [shape = 's32[2]{0}', space=sflag, size = 0x8, scoped, tag = 'scoped memory for tpu_custom_call.1']
    %8 = vsyncpa [#allocation3], 0
    %s9 = scalar_lea.sflag [#allocation3], 1
    %10 = vsyncpa %s9, 0
    loop: start=0, step=1, limit=4
    $region2: #{tpu_custom_call.1} parent=1 // loop_pre_header
      _
    $region3: #{tpu_custom_call.1} parent=1 // loop_header
      %s12 = sphi 0, %s16
      %p13 = scmp.ge.s32.totalorder %s12, 4
      %s22 = sphi 0, %s24
      %s25 = sphi 0, %s22
      %s26 = sphi 0, %s25
      %s42 = sphi 0, %s26
      %s46 = sphi 0, %s46
      %s48 = sphi 0, %s46
      %s49 = sphi 0, %s48
      %s63 = sphi 0, %s49
      %s67 = sphi 0, %s67
      %s69 = sphi 0, %s67
      %s70 = sphi 0, %s69
      %s84 = sphi 0, %s70
      %s90 = sphi 0, %s92
      %s93 = sphi 0, %s90
      %s94 = sphi 0, %s93
      %s110 = sphi 0, %s94
    $region4: #{tpu_custom_call.1} parent=1 // loop_header_branch
      %15 = sbr.rel (%p13) target = $region8
    $region5: #{tpu_custom_call.1} parent=1 // loop_body
      %s17 = ssub.s32 %s12, 1
      %s18 = ssub.s32 %s12, 2
      %s19 = sadd.s32 %s12, 1
      %s20 = ssub.s32 %s12, %s19
      %p21 = scmp.eq.s32.totalorder %s20, 0
      %s23 = sadd.s32 %s22, 1
      %s24 = scalar_select %p21, %s22, %s23
      %p27 = pneg %p21
      %p28 = scmp.eq.s32.totalorder %s12, 1
      %p29 = por %p27, %p28
      %p30 = scmp.ne.s32.totalorder %s22, %s25
      %p31 = scmp.eq.s32.totalorder %s12, 0
      %p32 = por %p30, %p31
      %p33 = scmp.ne.s32.totalorder %s22, %s25
      %p34 = scmp.eq.s32.totalorder %s17, 1
      %p35 = por %p33, %p34
      %p36 = scmp.ne.s32.totalorder %s25, %s26
      %p37 = scmp.eq.s32.totalorder %s17, 0
      %p38 = por %p36, %p37
      %p39 = scmp.ne.s32.totalorder %s25, %s26
      %p40 = scmp.eq.s32.totalorder %s18, 1
      %p41 = por %p39, %p40
      %p43 = scmp.ne.s32.totalorder %s26, %s42
      %p44 = scmp.eq.s32.totalorder %s18, 0
      %p45 = por %p43, %p44
      %s47 = sadd.s32 %s46, 1
      %p50 = scmp.eq.s32.totalorder %s12, 1
      %p51 = scmp.ne.s32.totalorder %s46, %s48
      %p52 = scmp.eq.s32.totalorder %s12, 0
      %p53 = por %p51, %p52
      %p54 = scmp.ne.s32.totalorder %s46, %s48
      %p55 = scmp.eq.s32.totalorder %s17, 1
      %p56 = por %p54, %p55
      %p57 = scmp.ne.s32.totalorder %s48, %s49
      %p58 = scmp.eq.s32.totalorder %s17, 0
      %p59 = por %p57, %p58
      %p60 = scmp.ne.s32.totalorder %s48, %s49
      %p61 = scmp.eq.s32.totalorder %s18, 1
      %p62 = por %p60, %p61
      %p64 = scmp.ne.s32.totalorder %s49, %s63
      %p65 = scmp.eq.s32.totalorder %s18, 0
      %p66 = por %p64, %p65
      %s68 = sadd.s32 %s67, 1
      %p71 = scmp.eq.s32.totalorder %s12, 1
      %p72 = scmp.ne.s32.totalorder %s67, %s69
      %p73 = scmp.eq.s32.totalorder %s12, 0
      %p74 = por %p72, %p73
      %p75 = scmp.ne.s32.totalorder %s67, %s69
      %p76 = scmp.eq.s32.totalorder %s17, 1
      %p77 = por %p75, %p76
      %p78 = scmp.ne.s32.totalorder %s69, %s70
      %p79 = scmp.eq.s32.totalorder %s17, 0
      %p80 = por %p78, %p79
      %p81 = scmp.ne.s32.totalorder %s69, %s70
      %p82 = scmp.eq.s32.totalorder %s18, 1
      %p83 = por %p81, %p82
      %p85 = scmp.ne.s32.totalorder %s70, %s84
      %p86 = scmp.eq.s32.totalorder %s18, 0
      %p87 = por %p85, %p86
      %s88 = ssub.s32 %s12, %s19
      %p89 = scmp.eq.s32.totalorder %s88, 0
      %s91 = sadd.s32 %s90, 1
      %s92 = scalar_select %p89, %s90, %s91
      %p95 = pneg %p89
      %p96 = scmp.eq.s32.totalorder %s12, 1
      %p97 = por %p95, %p96
      %p98 = scmp.ne.s32.totalorder %s90, %s93
      %p99 = scmp.eq.s32.totalorder %s12, 0
      %p100 = por %p98, %p99
      %p101 = scmp.ne.s32.totalorder %s90, %s93
      %p102 = scmp.eq.s32.totalorder %s17, 1
      %p103 = por %p101, %p102
      %p104 = scmp.ne.s32.totalorder %s93, %s94
      %p105 = scmp.eq.s32.totalorder %s17, 0
      %p106 = por %p104, %p105
      %p107 = scmp.ne.s32.totalorder %s93, %s94
      %p108 = scmp.eq.s32.totalorder %s18, 1
      %p109 = por %p107, %p108
      %p111 = scmp.ne.s32.totalorder %s94, %s110
      %p112 = scmp.eq.s32.totalorder %s18, 0
      %p113 = por %p111, %p112
      %p114 = scmp.le.s32.totalorder 1, %s12
      %p115 = scmp.lt.s32.totalorder %s12, 3
      %p116 = pnand %p114, %p115
      %p117 = pneg %p116
      // Predicated region
      $region9: #{tpu_custom_call.1} parent=5 // pred_check
        _
      $region10: #{tpu_custom_call.1} parent=5 // pred_check_branch
        %119 = sbr.rel (%p116) target = $region12
      $region11: #{tpu_custom_call.1} parent=5 // pred_region
        %s120 = ssub.s32 %s12, 1
        // Predicated region
        $region13: #{tpu_custom_call.1} parent=11 // pred_check
          %p121 = pneg %p59
        $region14: #{tpu_custom_call.1} parent=11 // pred_check_branch
          %123 = sbr.rel (%p121) target = $region16
        $region15: #{tpu_custom_call.1} parent=11 // pred_region
          _
        $region16: #{tpu_custom_call.1} parent=11 // pred_fallthru
          _
        // Predicated region
        $region17: #{tpu_custom_call.1} parent=11 // pred_check
          %p124 = pneg %p80
        $region18: #{tpu_custom_call.1} parent=11 // pred_check_branch
          %126 = sbr.rel (%p124) target = $region20
        $region19: #{tpu_custom_call.1} parent=11 // pred_region
          _
        $region20: #{tpu_custom_call.1} parent=11 // pred_fallthru
          _
      $region12: #{tpu_custom_call.1} parent=5 // pred_fallthru
        _
      %p127 = scmp.lt.s32.totalorder %s12, 2
      // Predicated region
      $region21: #{tpu_custom_call.1} parent=5 // pred_check
        %p128 = pneg %p127
      $region22: #{tpu_custom_call.1} parent=5 // pred_check_branch
        %130 = sbr.rel (%p128) target = $region24
      $region23: #{tpu_custom_call.1} parent=5 // pred_region
        // Predicated region
        $region25: #{tpu_custom_call.1} parent=23 // pred_check
          %p131 = pneg %p32
        $region26: #{tpu_custom_call.1} parent=23 // pred_check_branch
          %133 = sbr.rel (%p131) target = $region28
        $region27: #{tpu_custom_call.1} parent=23 // pred_region
          %p134 = scmp.lt.s32.totalorder %s12, 1
          %s135 = scalar_select %p134, %s12, 1
          %s136 = smul.addr %s135, 8
          %s137 = smul.addr %s136, 8
          %s138 = scalar_lea.vmem %s0, %s137
        $region28: #{tpu_custom_call.1} parent=23 // pred_fallthru
          _
      $region24: #{tpu_custom_call.1} parent=5 // pred_fallthru
        _
      %p139 = scmp.le.s32.totalorder 1, %s12
      %p140 = scmp.lt.s32.totalorder %s12, 3
      %p141 = pnand %p139, %p140
      %p142 = pneg %p141
      // Predicated region
      $region29: #{tpu_custom_call.1} parent=5 // pred_check
        _
      $region30: #{tpu_custom_call.1} parent=5 // pred_check_branch
        %144 = sbr.rel (%p141) target = $region32
      $region31: #{tpu_custom_call.1} parent=5 // pred_region
        %s145 = ssub.s32 %s12, 1
        %p146 = scmp.lt.s32.totalorder %s17, 1
        %s147 = scalar_select %p146, %s17, 1
        %s148 = smul.addr %s147, 8
        %s149 = smul.addr %s148, 8
        %s150 = scalar_lea.vmem %s0, %s149
        %p151 = pneg %p38
        %p152 = pneg %p35
        %p153 = pneg %p59
        %p154 = pneg %p56
        %p155 = pneg %p80
        %p156 = pneg %p77
        %p157 = pneg %p106
        %p158 = pneg %p103
        %s159 = sand.u32 %s93, 1
        %s160 = scalar_lea.sflag [#allocation3], %s159
        %s161 = sand.u32 %s93, 1
        %s162 = smul.addr %s161, 64
        %s163 = scalar_lea.vmem [#allocation2], %s162
        %p164 = scmp.lt.s32.totalorder %s17, 1
        %s165 = scalar_select %p164, %s17, 1
        %s166 = smul.addr %s165, 8
        %s167 = smul.addr %s166, 8
        %s168 = scalar_lea.vmem %s0, %s167
        %v170 = vld [vmem:[%s168] sm:$0xff]
        %v171 = vld [vmem:[%s168 + $0x8] sm:$0xff]
        %v172 = vld [vmem:[%s168 + $0x10] sm:$0xff]
        %v173 = vld [vmem:[%s168 + $0x18] sm:$0xff]
        %v174 = vld [vmem:[%s168 + $0x20] sm:$0xff]
        %v175 = vld [vmem:[%s168 + $0x28] sm:$0xff]
        %v176 = vld [vmem:[%s168 + $0x30] sm:$0xff]
        %v177 = vld [vmem:[%s168 + $0x38] sm:$0xff]
        %v178 = vpack.c.bf16 %v171, %v170
        %v179 = vpack.c.bf16 %v173, %v172
        %v180 = vpack.c.bf16 %v175, %v174
        %v181 = vpack.c.bf16 %v177, %v176
        %v182 = vld [vmem:[%s1] sm:$0xf]
        %v183 = vld [vmem:[%s1 + $0x4] sm:$0xf]
        %v184 = vld [vmem:[%s1 + $0x8] sm:$0xf]
        %v185 = vld [vmem:[%s1 + $0xc] sm:$0xf]
        %v186 = vld [vmem:[%s1 + $0x10] sm:$0xf]
        %v187 = vld [vmem:[%s1 + $0x14] sm:$0xf]
        %v188 = vld [vmem:[%s1 + $0x18] sm:$0xf]
        %v189 = vld [vmem:[%s1 + $0x1c] sm:$0xf]
        %v190 = vld [vmem:[%s1 + $0x20] sm:$0xf]
        %v191 = vld [vmem:[%s1 + $0x24] sm:$0xf]
        %v192 = vld [vmem:[%s1 + $0x28] sm:$0xf]
        %v193 = vld [vmem:[%s1 + $0x2c] sm:$0xf]
        %v194 = vld [vmem:[%s1 + $0x30] sm:$0xf]
        %v195 = vld [vmem:[%s1 + $0x34] sm:$0xf]
        %v196 = vld [vmem:[%s1 + $0x38] sm:$0xf]
        %v197 = vld [vmem:[%s1 + $0x3c] sm:$0xf]
        %v198 = vld [vmem:[%s1 + $0x40] sm:$0xf]
        %v199 = vld [vmem:[%s1 + $0x44] sm:$0xf]
        %v200 = vld [vmem:[%s1 + $0x48] sm:$0xf]
        %v201 = vld [vmem:[%s1 + $0x4c] sm:$0xf]
        %v202 = vld [vmem:[%s1 + $0x50] sm:$0xf]
        %v203 = vld [vmem:[%s1 + $0x54] sm:$0xf]
        %v204 = vld [vmem:[%s1 + $0x58] sm:$0xf]
        %v205 = vld [vmem:[%s1 + $0x5c] sm:$0xf]
        %v230 = vunpack.c.l.b16 %v182
        %v231 = vunpack.c.l.b16 %v183
        %v232 = vunpack.c.l.b16 %v184
        %v233 = vunpack.c.l.b16 %v185
        %v234 = vunpack.c.l.b16 %v186
        %v235 = vunpack.c.l.b16 %v187
        %v236 = vunpack.c.l.b16 %v188
        %v237 = vunpack.c.l.b16 %v189
        %v238 = vunpack.c.l.b16 %v190
        %v239 = vunpack.c.l.b16 %v191
        %v240 = vunpack.c.l.b16 %v192
        %v241 = vunpack.c.l.b16 %v193
        %v242 = vunpack.c.l.b16 %v194
        %v243 = vunpack.c.l.b16 %v195
        %v244 = vunpack.c.l.b16 %v196
        %v245 = vunpack.c.l.b16 %v197
        %v246 = vunpack.c.l.b16 %v198
        %v247 = vunpack.c.l.b16 %v199
        %v248 = vunpack.c.l.b16 %v200
        %v249 = vunpack.c.l.b16 %v201
        %v250 = vunpack.c.l.b16 %v202
        %v251 = vunpack.c.l.b16 %v203
        %v252 = vunpack.c.l.b16 %v204
        %v253 = vunpack.c.l.b16 %v205
        %v254 = vpack.c.b16 %v231, %v230
        %v255 = vpack.c.b16 %v233, %v232
        %v256 = vpack.c.b16 %v235, %v234
        %v257 = vpack.c.b16 %v237, %v236
        %v258 = vpack.c.b16 %v239, %v238
        %v259 = vpack.c.b16 %v241, %v240
        %v260 = vpack.c.b16 %v243, %v242
        %v261 = vpack.c.b16 %v245, %v244
        %v262 = vpack.c.b16 %v247, %v246
        %v263 = vpack.c.b16 %v249, %v248
        %v264 = vpack.c.b16 %v251, %v250
        %v265 = vpack.c.b16 %v253, %v252
        %vm266 = vcmask 523264
        %v268 = vsel %vm266, %v254, 0
        %v271 = vsel %vm266, %v255, 0
        %v274 = vsel %vm266, %v256, 0
        %v277 = vsel %vm266, %v257, 0
        %v280 = vsel %vm266, %v258, 0
        %v283 = vsel %vm266, %v259, 0
        %v286 = vsel %vm266, %v260, 0
        %v289 = vsel %vm266, %v261, 0
        %v292 = vsel %vm266, %v262, 0
        %v295 = vsel %vm266, %v263, 0
        %v298 = vsel %vm266, %v264, 0
        %v301 = vsel %vm266, %v265, 0
        %303 = vmatprep.subr.bf16.mxu0 0
        %304 = vmatpush1.bf16.msra.mxu0 %v178
        %305 = vmatprep.subr.bf16.mxu0 0
        %306 = vmatpush1.bf16.msra.mxu0 %v179
        %307 = vmatprep.subr.bf16.mxu0 0
        %308 = vmatpush1.bf16.msra.mxu0 %v180
        %309 = vmatprep.subr.bf16.mxu0 0
        %310 = vmatpush1.bf16.msra.mxu0 %v181
        %311 = vmatprep.subr.bf16.mxu0 0
        %312 = vmatpush1.bf16.msra.mxu0 0
        %313 = vmatprep.subr.bf16.mxu0 0
        %314 = vmatpush1.bf16.msra.mxu0 0
        %315 = vmatprep.subr.bf16.mxu0 0
        %316 = vmatpush1.bf16.msra.mxu0 0
        %317 = vmatprep.subr.bf16.mxu0 0
        %318 = vmatpush1.bf16.msra.mxu0 0
        %319 = vmatprep.subr.bf16.mxu0 0
        %320 = vmatpush1.bf16.msra.mxu0 0
        %321 = vmatprep.subr.bf16.mxu0 0
        %322 = vmatpush1.bf16.msra.mxu0 0
        %323 = vmatprep.subr.bf16.mxu0 0
        %324 = vmatpush1.bf16.msra.mxu0 0
        %325 = vmatprep.subr.bf16.mxu0 0
        %326 = vmatpush1.bf16.msra.mxu0 0
        %327 = vmatprep.subr.bf16.mxu0 0
        %328 = vmatpush1.bf16.msra.mxu0 0
        %329 = vmatprep.subr.bf16.mxu0 0
        %330 = vmatpush1.bf16.msra.mxu0 0
        %331 = vmatprep.subr.bf16.mxu0 0
        %332 = vmatpush1.bf16.msra.mxu0 0
        %333 = vmatprep.subr.bf16.mxu0 0
        %334 = vmatpush1.bf16.msra.mxu0 0
        %335 = vmatprep.mubr.bf16.mxu0 0
        %336 = vmatmul.mubr.bf16.gmra.mrb[0].mxu0 %v268
        %v337 = vpop.f32.mrb[0].mxu0
        %v338 = vadd.f32 0.0, %v337
        %v339 = vpop.f32.mrb[0].mxu0
        %v340 = vpop.f32.mrb[0].mxu0
        %v341 = vadd.f32 0.0, %v340
        %v342 = vpop.f32.mrb[0].mxu0
        %343 = vmatprep.mubr.bf16.mxu0 0
        %344 = vmatmul.mubr.bf16.gmra.mrb[0].mxu0 %v271
        %v345 = vpop.f32.mrb[0].mxu0
        %v346 = vadd.f32 0.0, %v345
        %v347 = vpop.f32.mrb[0].mxu0
        %v348 = vpop.f32.mrb[0].mxu0
        %v349 = vadd.f32 0.0, %v348
        %v350 = vpop.f32.mrb[0].mxu0
        %351 = vmatprep.mubr.bf16.mxu0 0
        %352 = vmatmul.mubr.bf16.gmra.mrb[0].mxu0 %v274
        %v353 = vpop.f32.mrb[0].mxu0
        %v354 = vadd.f32 0.0, %v353
        %v355 = vpop.f32.mrb[0].mxu0
        %v356 = vpop.f32.mrb[0].mxu0
        %v357 = vadd.f32 0.0, %v356
        %v358 = vpop.f32.mrb[0].mxu0
        %359 = vmatprep.mubr.bf16.mxu0 0
        %360 = vmatmul.mubr.bf16.gmra.mrb[0].mxu0 %v277
        %v361 = vpop.f32.mrb[0].mxu0
        %v362 = vadd.f32 0.0, %v361
        %v363 = vpop.f32.mrb[0].mxu0
        %v364 = vpop.f32.mrb[0].mxu0
        %v365 = vadd.f32 0.0, %v364
        %v366 = vpop.f32.mrb[0].mxu0
        %367 = vmatprep.mubr.bf16.mxu0 0
        %368 = vmatmul.mubr.bf16.gmra.mrb[0].mxu0 %v280
        %v369 = vpop.f32.mrb[0].mxu0
        %v370 = vadd.f32 0.0, %v369
        %v371 = vpop.f32.mrb[0].mxu0
        %v372 = vpop.f32.mrb[0].mxu0
        %v373 = vadd.f32 0.0, %v372
        %v374 = vpop.f32.mrb[0].mxu0
        %375 = vmatprep.mubr.bf16.mxu0 0
        %376 = vmatmul.mubr.bf16.gmra.mrb[0].mxu0 %v283
        %v377 = vpop.f32.mrb[0].mxu0
        %v378 = vadd.f32 0.0, %v377
        %v379 = vpop.f32.mrb[0].mxu0
        %v380 = vpop.f32.mrb[0].mxu0
        %v381 = vadd.f32 0.0, %v380
        %v382 = vpop.f32.mrb[0].mxu0
        %383 = vmatprep.mubr.bf16.mxu0 0
        %384 = vmatmul.mubr.bf16.gmra.mrb[0].mxu0 %v286
        %v385 = vpop.f32.mrb[0].mxu0
        %v386 = vadd.f32 0.0, %v385
        %v387 = vpop.f32.mrb[0].mxu0
        %v388 = vpop.f32.mrb[0].mxu0
        %v389 = vadd.f32 0.0, %v388
        %v390 = vpop.f32.mrb[0].mxu0
        %391 = vmatprep.mubr.bf16.mxu0 0
        %392 = vmatmul.mubr.bf16.gmra.mrb[0].mxu0 %v289
        %v393 = vpop.f32.mrb[0].mxu0
        %v394 = vadd.f32 0.0, %v393
        %v395 = vpop.f32.mrb[0].mxu0
        %v396 = vpop.f32.mrb[0].mxu0
        %v397 = vadd.f32 0.0, %v396
        %v398 = vpop.f32.mrb[0].mxu0
        %399 = vmatprep.mubr.bf16.mxu0 0
        %400 = vmatmul.mubr.bf16.gmra.mrb[0].mxu0 %v292
        %v401 = vpop.f32.mrb[0].mxu0
        %v402 = vadd.f32 0.0, %v401
        %v403 = vpop.f32.mrb[0].mxu0
        %v404 = vpop.f32.mrb[0].mxu0
        %v405 = vadd.f32 0.0, %v404
        %v406 = vpop.f32.mrb[0].mxu0
        %407 = vmatprep.mubr.bf16.mxu0 0
        %408 = vmatmul.mubr.bf16.gmra.mrb[0].mxu0 %v295
        %v409 = vpop.f32.mrb[0].mxu0
        %v410 = vadd.f32 0.0, %v409
        %v411 = vpop.f32.mrb[0].mxu0
        %v412 = vpop.f32.mrb[0].mxu0
        %v413 = vadd.f32 0.0, %v412
        %v414 = vpop.f32.mrb[0].mxu0
        %415 = vmatprep.mubr.bf16.mxu0 0
        %416 = vmatmul.mubr.bf16.gmra.mrb[0].mxu0 %v298
        %v417 = vpop.f32.mrb[0].mxu0
        %v418 = vadd.f32 0.0, %v417
        %v419 = vpop.f32.mrb[0].mxu0
        %v420 = vpop.f32.mrb[0].mxu0
        %v421 = vadd.f32 0.0, %v420
        %v422 = vpop.f32.mrb[0].mxu0
        %423 = vmatprep.mubr.bf16.mxu0 0
        %424 = vmatmul.mubr.bf16.gmra.mrb[0].mxu0 %v301
        %v425 = vpop.f32.mrb[0].mxu0
        %v426 = vadd.f32 0.0, %v425
        %v427 = vpop.f32.mrb[0].mxu0
        %v428 = vpop.f32.mrb[0].mxu0
        %v429 = vadd.f32 0.0, %v428
        %v430 = vpop.f32.mrb[0].mxu0
        %431 = vdwg.mxu0
        %v440 = vcombine.high %v338, %v338
        %v441 = vcombine.high %v341, %v341
        %v442 = vcombine.high %v346, %v346
        %v443 = vcombine.high %v349, %v349
        %v444 = vcombine.high %v354, %v354
        %v445 = vcombine.high %v357, %v357
        %v446 = vcombine.high %v362, %v362
        %v447 = vcombine.high %v365, %v365
        %v464 = vcombine.high %v370, %v370
        %v465 = vcombine.high %v373, %v373
        %v466 = vcombine.high %v378, %v378
        %v467 = vcombine.high %v381, %v381
        %v468 = vcombine.high %v386, %v386
        %v469 = vcombine.high %v389, %v389
        %v470 = vcombine.high %v394, %v394
        %v471 = vcombine.high %v397, %v397
        %v480 = vpack.c.bf16 %v402, %v402
        %v481 = vpack.c.bf16 %v405, %v405
        %v482 = vpack.c.bf16 %v410, %v410
        %v483 = vpack.c.bf16 %v413, %v413
        %v484 = vpack.c.bf16 %v418, %v418
        %v485 = vpack.c.bf16 %v421, %v421
        %v486 = vpack.c.bf16 %v426, %v426
        %v487 = vpack.c.bf16 %v429, %v429
        %488 = vxpose.xlu0.b32.start [1/16] %v338, 128
        %489 = vxpose.xlu0.b32.cont [2/16] 0.0, 128
        %490 = vxpose.xlu0.b32.cont [3/16] 0.0, 128
        %491 = vxpose.xlu0.b32.cont [4/16] 0.0, 128
        %492 = vxpose.xlu0.b32.cont [5/16] 0.0, 128
        %493 = vxpose.xlu0.b32.cont [6/16] 0.0, 128
        %494 = vxpose.xlu0.b32.cont [7/16] 0.0, 128
        %495 = vxpose.xlu0.b32.cont [8/16] 0.0, 128
        %496 = vxpose.xlu0.b32.cont [9/16] 0.0, 128
        %497 = vxpose.xlu0.b32.cont [10/16] 0.0, 128
        %498 = vxpose.xlu0.b32.cont [11/16] 0.0, 128
        %499 = vxpose.xlu0.b32.cont [12/16] 0.0, 128
        %500 = vxpose.xlu0.b32.cont [13/16] 0.0, 128
        %501 = vxpose.xlu0.b32.cont [14/16] 0.0, 128
        %502 = vxpose.xlu0.b32.cont [15/16] 0.0, 128
        %503 = vxpose.xlu0.b32.end [16/16] 0.0, 128
        %v504 = vpop.trf.xlu0
        %v505 = vpop.trf.xlu0
        %v506 = vpop.trf.xlu0
        %v507 = vpop.trf.xlu0
        %v508 = vpop.trf.xlu0
        %v509 = vpop.trf.xlu0
        %v510 = vpop.trf.xlu0
        %v511 = vpop.trf.xlu0
        %v512 = vpop.trf.xlu0
        %v513 = vpop.trf.xlu0
        %v514 = vpop.trf.xlu0
        %v515 = vpop.trf.xlu0
        %v516 = vpop.trf.xlu0
        %v517 = vpop.trf.xlu0
        %v518 = vpop.trf.xlu0
        %v519 = vpop.trf.xlu0
        %520 = vxpose.xlu0.b32.start [1/16] %v440, 128
        %521 = vxpose.xlu0.b32.cont [2/16] 0.0, 128
        %522 = vxpose.xlu0.b32.cont [3/16] 0.0, 128
        %523 = vxpose.xlu0.b32.cont [4/16] 0.0, 128
        %524 = vxpose.xlu0.b32.cont [5/16] 0.0, 128
        %525 = vxpose.xlu0.b32.cont [6/16] 0.0, 128
        %526 = vxpose.xlu0.b32.cont [7/16] 0.0, 128
        %527 = vxpose.xlu0.b32.cont [8/16] 0.0, 128
        %528 = vxpose.xlu0.b32.cont [9/16] 0.0, 128
        %529 = vxpose.xlu0.b32.cont [10/16] 0.0, 128
        %530 = vxpose.xlu0.b32.cont [11/16] 0.0, 128
        %531 = vxpose.xlu0.b32.cont [12/16] 0.0, 128
        %532 = vxpose.xlu0.b32.cont [13/16] 0.0, 128
        %533 = vxpose.xlu0.b32.cont [14/16] 0.0, 128
        %534 = vxpose.xlu0.b32.cont [15/16] 0.0, 128
        %535 = vxpose.xlu0.b32.end [16/16] 0.0, 128
        %v536 = vpop.trf.xlu0
        %v537 = vpop.trf.xlu0
        %v538 = vpop.trf.xlu0
        %v539 = vpop.trf.xlu0
        %v540 = vpop.trf.xlu0
        %v541 = vpop.trf.xlu0
        %v542 = vpop.trf.xlu0
        %v543 = vpop.trf.xlu0
        %v544 = vpop.trf.xlu0
        %v545 = vpop.trf.xlu0
        %v546 = vpop.trf.xlu0
        %v547 = vpop.trf.xlu0
        %v548 = vpop.trf.xlu0
        %v549 = vpop.trf.xlu0
        %v550 = vpop.trf.xlu0
        %v551 = vpop.trf.xlu0
        %552 = vxpose.xlu0.b32.start [1/16] %v341, 128
        %553 = vxpose.xlu0.b32.cont [2/16] 0.0, 128
        %554 = vxpose.xlu0.b32.cont [3/16] 0.0, 128
        %555 = vxpose.xlu0.b32.cont [4/16] 0.0, 128
        %556 = vxpose.xlu0.b32.cont [5/16] 0.0, 128
        %557 = vxpose.xlu0.b32.cont [6/16] 0.0, 128
        %558 = vxpose.xlu0.b32.cont [7/16] 0.0, 128
        %559 = vxpose.xlu0.b32.cont [8/16] 0.0, 128
        %560 = vxpose.xlu0.b32.cont [9/16] 0.0, 128
        %561 = vxpose.xlu0.b32.cont [10/16] 0.0, 128
        %562 = vxpose.xlu0.b32.cont [11/16] 0.0, 128
        %563 = vxpose.xlu0.b32.cont [12/16] 0.0, 128
        %564 = vxpose.xlu0.b32.cont [13/16] 0.0, 128
        %565 = vxpose.xlu0.b32.cont [14/16] 0.0, 128
        %566 = vxpose.xlu0.b32.cont [15/16] 0.0, 128
        %567 = vxpose.xlu0.b32.end [16/16] 0.0, 128
        %v568 = vpop.trf.xlu0
        %v569 = vpop.trf.xlu0
        %v570 = vpop.trf.xlu0
        %v571 = vpop.trf.xlu0
        %v572 = vpop.trf.xlu0
        %v573 = vpop.trf.xlu0
        %v574 = vpop.trf.xlu0
        %v575 = vpop.trf.xlu0
        %v576 = vpop.trf.xlu0
        %v577 = vpop.trf.xlu0
        %v578 = vpop.trf.xlu0
        %v579 = vpop.trf.xlu0
        %v580 = vpop.trf.xlu0
        %v581 = vpop.trf.xlu0
        %v582 = vpop.trf.xlu0
        %v583 = vpop.trf.xlu0
        %584 = vxpose.xlu0.b32.start [1/16] %v441, 128
        %585 = vxpose.xlu0.b32.cont [2/16] 0.0, 128
        %586 = vxpose.xlu0.b32.cont [3/16] 0.0, 128
        %587 = vxpose.xlu0.b32.cont [4/16] 0.0, 128
        %588 = vxpose.xlu0.b32.cont [5/16] 0.0, 128
        %589 = vxpose.xlu0.b32.cont [6/16] 0.0, 128
        %590 = vxpose.xlu0.b32.cont [7/16] 0.0, 128
        %591 = vxpose.xlu0.b32.cont [8/16] 0.0, 128
        %592 = vxpose.xlu0.b32.cont [9/16] 0.0, 128
        %593 = vxpose.xlu0.b32.cont [10/16] 0.0, 128
        %594 = vxpose.xlu0.b32.cont [11/16] 0.0, 128
        %595 = vxpose.xlu0.b32.cont [12/16] 0.0, 128
        %596 = vxpose.xlu0.b32.cont [13/16] 0.0, 128
        %597 = vxpose.xlu0.b32.cont [14/16] 0.0, 128
        %598 = vxpose.xlu0.b32.cont [15/16] 0.0, 128
        %599 = vxpose.xlu0.b32.end [16/16] 0.0, 128
        %v600 = vpop.trf.xlu0
        %v601 = vpop.trf.xlu0
        %v602 = vpop.trf.xlu0
        %v603 = vpop.trf.xlu0
        %v604 = vpop.trf.xlu0
        %v605 = vpop.trf.xlu0
        %v606 = vpop.trf.xlu0
        %v607 = vpop.trf.xlu0
        %v608 = vpop.trf.xlu0
        %v609 = vpop.trf.xlu0
        %v610 = vpop.trf.xlu0
        %v611 = vpop.trf.xlu0
        %v612 = vpop.trf.xlu0
        %v613 = vpop.trf.xlu0
        %v614 = vpop.trf.xlu0
        %v615 = vpop.trf.xlu0
        %616 = vxpose.xlu0.b32.start [1/16] %v346, 128
        %617 = vxpose.xlu0.b32.cont [2/16] 0.0, 128
        %618 = vxpose.xlu0.b32.cont [3/16] 0.0, 128
        %619 = vxpose.xlu0.b32.cont [4/16] 0.0, 128
        %620 = vxpose.xlu0.b32.cont [5/16] 0.0, 128
        %621 = vxpose.xlu0.b32.cont [6/16] 0.0, 128
        %622 = vxpose.xlu0.b32.cont [7/16] 0.0, 128
        %623 = vxpose.xlu0.b32.cont [8/16] 0.0, 128
        %624 = vxpose.xlu0.b32.cont [9/16] 0.0, 128
        %625 = vxpose.xlu0.b32.cont [10/16] 0.0, 128
        %626 = vxpose.xlu0.b32.cont [11/16] 0.0, 128
        %627 = vxpose.xlu0.b32.cont [12/16] 0.0, 128
        %628 = vxpose.xlu0.b32.cont [13/16] 0.0, 128
        %629 = vxpose.xlu0.b32.cont [14/16] 0.0, 128
        %630 = vxpose.xlu0.b32.cont [15/16] 0.0, 128
        %631 = vxpose.xlu0.b32.end [16/16] 0.0, 128
        %v632 = vpop.trf.xlu0
        %v633 = vpop.trf.xlu0
        %v634 = vpop.trf.xlu0
        %v635 = vpop.trf.xlu0
        %v636 = vpop.trf.xlu0
        %v637 = vpop.trf.xlu0
        %v638 = vpop.trf.xlu0
        %v639 = vpop.trf.xlu0
        %v640 = vpop.trf.xlu0
        %v641 = vpop.trf.xlu0
        %v642 = vpop.trf.xlu0
        %v643 = vpop.trf.xlu0
        %v644 = vpop.trf.xlu0
        %v645 = vpop.trf.xlu0
        %v646 = vpop.trf.xlu0
        %v647 = vpop.trf.xlu0
        %648 = vxpose.xlu0.b32.start [1/16] %v442, 128
        %649 = vxpose.xlu0.b32.cont [2/16] 0.0, 128
        %650 = vxpose.xlu0.b32.cont [3/16] 0.0, 128
        %651 = vxpose.xlu0.b32.cont [4/16] 0.0, 128
        %652 = vxpose.xlu0.b32.cont [5/16] 0.0, 128
        %653 = vxpose.xlu0.b32.cont [6/16] 0.0, 128
        %654 = vxpose.xlu0.b32.cont [7/16] 0.0, 128
        %655 = vxpose.xlu0.b32.cont [8/16] 0.0, 128
        %656 = vxpose.xlu0.b32.cont [9/16] 0.0, 128
        %657 = vxpose.xlu0.b32.cont [10/16] 0.0, 128
        %658 = vxpose.xlu0.b32.cont [11/16] 0.0, 128
        %659 = vxpose.xlu0.b32.cont [12/16] 0.0, 128
        %660 = vxpose.xlu0.b32.cont [13/16] 0.0, 128
        %661 = vxpose.xlu0.b32.cont [14/16] 0.0, 128
        %662 = vxpose.xlu0.b32.cont [15/16] 0.0, 128
        %663 = vxpose.xlu0.b32.end [16/16] 0.0, 128
        %v664 = vpop.trf.xlu0
        %v665 = vpop.trf.xlu0
        %v666 = vpop.trf.xlu0
        %v667 = vpop.trf.xlu0
        %v668 = vpop.trf.xlu0
        %v669 = vpop.trf.xlu0
        %v670 = vpop.trf.xlu0
        %v671 = vpop.trf.xlu0
        %v672 = vpop.trf.xlu0
        %v673 = vpop.trf.xlu0
        %v674 = vpop.trf.xlu0
        %v675 = vpop.trf.xlu0
        %v676 = vpop.trf.xlu0
        %v677 = vpop.trf.xlu0
        %v678 = vpop.trf.xlu0
        %v679 = vpop.trf.xlu0
        %680 = vxpose.xlu0.b32.start [1/16] %v349, 128
        %681 = vxpose.xlu0.b32.cont [2/16] 0.0, 128
        %682 = vxpose.xlu0.b32.cont [3/16] 0.0, 128
        %683 = vxpose.xlu0.b32.cont [4/16] 0.0, 128
        %684 = vxpose.xlu0.b32.cont [5/16] 0.0, 128
        %685 = vxpose.xlu0.b32.cont [6/16] 0.0, 128
        %686 = vxpose.xlu0.b32.cont [7/16] 0.0, 128
        %687 = vxpose.xlu0.b32.cont [8/16] 0.0, 128
        %688 = vxpose.xlu0.b32.cont [9/16] 0.0, 128
        %689 = vxpose.xlu0.b32.cont [10/16] 0.0, 128
        %690 = vxpose.xlu0.b32.cont [11/16] 0.0, 128
        %691 = vxpose.xlu0.b32.cont [12/16] 0.0, 128
        %692 = vxpose.xlu0.b32.cont [13/16] 0.0, 128
        %693 = vxpose.xlu0.b32.cont [14/16] 0.0, 128
        %694 = vxpose.xlu0.b32.cont [15/16] 0.0, 128
        %695 = vxpose.xlu0.b32.end [16/16] 0.0, 128
        %v696 = vpop.trf.xlu0
        %v697 = vpop.trf.xlu0
        %v698 = vpop.trf.xlu0
        %v699 = vpop.trf.xlu0
        %v700 = vpop.trf.xlu0
        %v701 = vpop.trf.xlu0
        %v702 = vpop.trf.xlu0
        %v703 = vpop.trf.xlu0
        %v704 = vpop.trf.xlu0
        %v705 = vpop.trf.xlu0
        %v706 = vpop.trf.xlu0
        %v707 = vpop.trf.xlu0
        %v708 = vpop.trf.xlu0
        %v709 = vpop.trf.xlu0
        %v710 = vpop.trf.xlu0
        %v711 = vpop.trf.xlu0
        %712 = vxpose.xlu0.b32.start [1/16] %v443, 128
        %713 = vxpose.xlu0.b32.cont [2/16] 0.0, 128
        %714 = vxpose.xlu0.b32.cont [3/16] 0.0, 128
        %715 = vxpose.xlu0.b32.cont [4/16] 0.0, 128
        %716 = vxpose.xlu0.b32.cont [5/16] 0.0, 128
        %717 = vxpose.xlu0.b32.cont [6/16] 0.0, 128
        %718 = vxpose.xlu0.b32.cont [7/16] 0.0, 128
        %719 = vxpose.xlu0.b32.cont [8/16] 0.0, 128
        %720 = vxpose.xlu0.b32.cont [9/16] 0.0, 128
        %721 = vxpose.xlu0.b32.cont [10/16] 0.0, 128
        %722 = vxpose.xlu0.b32.cont [11/16] 0.0, 128
        %723 = vxpose.xlu0.b32.cont [12/16] 0.0, 128
        %724 = vxpose.xlu0.b32.cont [13/16] 0.0, 128
        %725 = vxpose.xlu0.b32.cont [14/16] 0.0, 128
        %726 = vxpose.xlu0.b32.cont [15/16] 0.0, 128
        %727 = vxpose.xlu0.b32.end [16/16] 0.0, 128
        %v728 = vpop.trf.xlu0
        %v729 = vpop.trf.xlu0
        %v730 = vpop.trf.xlu0
        %v731 = vpop.trf.xlu0
        %v732 = vpop.trf.xlu0
        %v733 = vpop.trf.xlu0
        %v734 = vpop.trf.xlu0
        %v735 = vpop.trf.xlu0
        %v736 = vpop.trf.xlu0
        %v737 = vpop.trf.xlu0
        %v738 = vpop.trf.xlu0
        %v739 = vpop.trf.xlu0
        %v740 = vpop.trf.xlu0
        %v741 = vpop.trf.xlu0
        %v742 = vpop.trf.xlu0
        %v743 = vpop.trf.xlu0
        %744 = vxpose.xlu0.b32.start [1/16] %v354, 128
        %745 = vxpose.xlu0.b32.cont [2/16] 0.0, 128
        %746 = vxpose.xlu0.b32.cont [3/16] 0.0, 128
        %747 = vxpose.xlu0.b32.cont [4/16] 0.0, 128
        %748 = vxpose.xlu0.b32.cont [5/16] 0.0, 128
        %749 = vxpose.xlu0.b32.cont [6/16] 0.0, 128
        %750 = vxpose.xlu0.b32.cont [7/16] 0.0, 128
        %751 = vxpose.xlu0.b32.cont [8/16] 0.0, 128
        %752 = vxpose.xlu0.b32.cont [9/16] 0.0, 128
        %753 = vxpose.xlu0.b32.cont [10/16] 0.0, 128
        %754 = vxpose.xlu0.b32.cont [11/16] 0.0, 128
        %755 = vxpose.xlu0.b32.cont [12/16] 0.0, 128
        %756 = vxpose.xlu0.b32.cont [13/16] 0.0, 128
        %757 = vxpose.xlu0.b32.cont [14/16] 0.0, 128
        %758 = vxpose.xlu0.b32.cont [15/16] 0.0, 128
        %759 = vxpose.xlu0.b32.end [16/16] 0.0, 128
        %v760 = vpop.trf.xlu0
        %v761 = vpop.trf.xlu0
        %v762 = vpop.trf.xlu0
        %v763 = vpop.trf.xlu0
        %v764 = vpop.trf.xlu0
        %v765 = vpop.trf.xlu0
        %v766 = vpop.trf.xlu0
        %v767 = vpop.trf.xlu0
        %v768 = vpop.trf.xlu0
        %v769 = vpop.trf.xlu0
        %v770 = vpop.trf.xlu0
        %v771 = vpop.trf.xlu0
        %v772 = vpop.trf.xlu0
        %v773 = vpop.trf.xlu0
        %v774 = vpop.trf.xlu0
        %v775 = vpop.trf.xlu0
        %776 = vxpose.xlu0.b32.start [1/16] %v444, 128
        %777 = vxpose.xlu0.b32.cont [2/16] 0.0, 128
        %778 = vxpose.xlu0.b32.cont [3/16] 0.0, 128
        %779 = vxpose.xlu0.b32.cont [4/16] 0.0, 128
        %780 = vxpose.xlu0.b32.cont [5/16] 0.0, 128
        %781 = vxpose.xlu0.b32.cont [6/16] 0.0, 128
        %782 = vxpose.xlu0.b32.cont [7/16] 0.0, 128
        %783 = vxpose.xlu0.b32.cont [8/16] 0.0, 128
        %784 = vxpose.xlu0.b32.cont [9/16] 0.0, 128
        %785 = vxpose.xlu0.b32.cont [10/16] 0.0, 128
        %786 = vxpose.xlu0.b32.cont [11/16] 0.0, 128
        %787 = vxpose.xlu0.b32.cont [12/16] 0.0, 128
        %788 = vxpose.xlu0.b32.cont [13/16] 0.0, 128
        %789 = vxpose.xlu0.b32.cont [14/16] 0.0, 128
        %790 = vxpose.xlu0.b32.cont [15/16] 0.0, 128
        %791 = vxpose.xlu0.b32.end [16/16] 0.0, 128
        %v792 = vpop.trf.xlu0
        %v793 = vpop.trf.xlu0
        %v794 = vpop.trf.xlu0
        %v795 = vpop.trf.xlu0
        %v796 = vpop.trf.xlu0
        %v797 = vpop.trf.xlu0
        %v798 = vpop.trf.xlu0
        %v799 = vpop.trf.xlu0
        %v800 = vpop.trf.xlu0
        %v801 = vpop.trf.xlu0
        %v802 = vpop.trf.xlu0
        %v803 = vpop.trf.xlu0
        %v804 = vpop.trf.xlu0
        %v805 = vpop.trf.xlu0
        %v806 = vpop.trf.xlu0
        %v807 = vpop.trf.xlu0
        %808 = vxpose.xlu0.b32.start [1/16] %v357, 128
        %809 = vxpose.xlu0.b32.cont [2/16] 0.0, 128
        %810 = vxpose.xlu0.b32.cont [3/16] 0.0, 128
        %811 = vxpose.xlu0.b32.cont [4/16] 0.0, 128
        %812 = vxpose.xlu0.b32.cont [5/16] 0.0, 128
        %813 = vxpose.xlu0.b32.cont [6/16] 0.0, 128
        %814 = vxpose.xlu0.b32.cont [7/16] 0.0, 128
        %815 = vxpose.xlu0.b32.cont [8/16] 0.0, 128
        %816 = vxpose.xlu0.b32.cont [9/16] 0.0, 128
        %817 = vxpose.xlu0.b32.cont [10/16] 0.0, 128
        %818 = vxpose.xlu0.b32.cont [11/16] 0.0, 128
        %819 = vxpose.xlu0.b32.cont [12/16] 0.0, 128
        %820 = vxpose.xlu0.b32.cont [13/16] 0.0, 128
        %821 = vxpose.xlu0.b32.cont [14/16] 0.0, 128
        %822 = vxpose.xlu0.b32.cont [15/16] 0.0, 128
        %823 = vxpose.xlu0.b32.end [16/16] 0.0, 128
        %v824 = vpop.trf.xlu0
        %v825 = vpop.trf.xlu0
        %v826 = vpop.trf.xlu0
        %v827 = vpop.trf.xlu0
        %v828 = vpop.trf.xlu0
        %v829 = vpop.trf.xlu0
        %v830 = vpop.trf.xlu0
        %v831 = vpop.trf.xlu0
        %v832 = vpop.trf.xlu0
        %v833 = vpop.trf.xlu0
        %v834 = vpop.trf.xlu0
        %v835 = vpop.trf.xlu0
        %v836 = vpop.trf.xlu0
        %v837 = vpop.trf.xlu0
        %v838 = vpop.trf.xlu0
        %v839 = vpop.trf.xlu0
        %840 = vxpose.xlu0.b32.start [1/16] %v445, 128
        %841 = vxpose.xlu0.b32.cont [2/16] 0.0, 128
        %842 = vxpose.xlu0.b32.cont [3/16] 0.0, 128
        %843 = vxpose.xlu0.b32.cont [4/16] 0.0, 128
        %844 = vxpose.xlu0.b32.cont [5/16] 0.0, 128
        %845 = vxpose.xlu0.b32.cont [6/16] 0.0, 128
        %846 = vxpose.xlu0.b32.cont [7/16] 0.0, 128
        %847 = vxpose.xlu0.b32.cont [8/16] 0.0, 128
        %848 = vxpose.xlu0.b32.cont [9/16] 0.0, 128
        %849 = vxpose.xlu0.b32.cont [10/16] 0.0, 128
        %850 = vxpose.xlu0.b32.cont [11/16] 0.0, 128
        %851 = vxpose.xlu0.b32.cont [12/16] 0.0, 128
        %852 = vxpose.xlu0.b32.cont [13/16] 0.0, 128
        %853 = vxpose.xlu0.b32.cont [14/16] 0.0, 128
        %854 = vxpose.xlu0.b32.cont [15/16] 0.0, 128
        %855 = vxpose.xlu0.b32.end [16/16] 0.0, 128
        %v856 = vpop.trf.xlu0
        %v857 = vpop.trf.xlu0
        %v858 = vpop.trf.xlu0
        %v859 = vpop.trf.xlu0
        %v860 = vpop.trf.xlu0
        %v861 = vpop.trf.xlu0
        %v862 = vpop.trf.xlu0
        %v863 = vpop.trf.xlu0
        %v864 = vpop.trf.xlu0
        %v865 = vpop.trf.xlu0
        %v866 = vpop.trf.xlu0
        %v867 = vpop.trf.xlu0
        %v868 = vpop.trf.xlu0
        %v869 = vpop.trf.xlu0
        %v870 = vpop.trf.xlu0
        %v871 = vpop.trf.xlu0
        %872 = vxpose.xlu0.b32.start [1/16] %v362, 128
        %873 = vxpose.xlu0.b32.cont [2/16] 0.0, 128
        %874 = vxpose.xlu0.b32.cont [3/16] 0.0, 128
        %875 = vxpose.xlu0.b32.cont [4/16] 0.0, 128
        %876 = vxpose.xlu0.b32.cont [5/16] 0.0, 128
        %877 = vxpose.xlu0.b32.cont [6/16] 0.0, 128
        %878 = vxpose.xlu0.b32.cont [7/16] 0.0, 128
        %879 = vxpose.xlu0.b32.cont [8/16] 0.0, 128
        %880 = vxpose.xlu0.b32.cont [9/16] 0.0, 128
        %881 = vxpose.xlu0.b32.cont [10/16] 0.0, 128
        %882 = vxpose.xlu0.b32.cont [11/16] 0.0, 128
        %883 = vxpose.xlu0.b32.cont [12/16] 0.0, 128
        %884 = vxpose.xlu0.b32.cont [13/16] 0.0, 128
        %885 = vxpose.xlu0.b32.cont [14/16] 0.0, 128
        %886 = vxpose.xlu0.b32.cont [15/16] 0.0, 128
        %887 = vxpose.xlu0.b32.end [16/16] 0.0, 128
        %v888 = vpop.trf.xlu0
        %v889 = vpop.trf.xlu0
        %v890 = vpop.trf.xlu0
        %v891 = vpop.trf.xlu0
        %v892 = vpop.trf.xlu0
        %v893 = vpop.trf.xlu0
        %v894 = vpop.trf.xlu0
        %v895 = vpop.trf.xlu0
        %v896 = vpop.trf.xlu0
        %v897 = vpop.trf.xlu0
        %v898 = vpop.trf.xlu0
        %v899 = vpop.trf.xlu0
        %v900 = vpop.trf.xlu0
        %v901 = vpop.trf.xlu0
        %v902 = vpop.trf.xlu0
        %v903 = vpop.trf.xlu0
        %904 = vxpose.xlu0.b32.start [1/16] %v446, 128
        %905 = vxpose.xlu0.b32.cont [2/16] 0.0, 128
        %906 = vxpose.xlu0.b32.cont [3/16] 0.0, 128
        %907 = vxpose.xlu0.b32.cont [4/16] 0.0, 128
        %908 = vxpose.xlu0.b32.cont [5/16] 0.0, 128
        %909 = vxpose.xlu0.b32.cont [6/16] 0.0, 128
        %910 = vxpose.xlu0.b32.cont [7/16] 0.0, 128
        %911 = vxpose.xlu0.b32.cont [8/16] 0.0, 128
        %912 = vxpose.xlu0.b32.cont [9/16] 0.0, 128
        %913 = vxpose.xlu0.b32.cont [10/16] 0.0, 128
        %914 = vxpose.xlu0.b32.cont [11/16] 0.0, 128
        %915 = vxpose.xlu0.b32.cont [12/16] 0.0, 128
        %916 = vxpose.xlu0.b32.cont [13/16] 0.0, 128
        %917 = vxpose.xlu0.b32.cont [14/16] 0.0, 128
        %918 = vxpose.xlu0.b32.cont [15/16] 0.0, 128
        %919 = vxpose.xlu0.b32.end [16/16] 0.0, 128
        %v920 = vpop.trf.xlu0
        %v921 = vpop.trf.xlu0
        %v922 = vpop.trf.xlu0
        %v923 = vpop.trf.xlu0
        %v924 = vpop.trf.xlu0
        %v925 = vpop.trf.xlu0
        %v926 = vpop.trf.xlu0
        %v927 = vpop.trf.xlu0
        %v928 = vpop.trf.xlu0
        %v929 = vpop.trf.xlu0
        %v930 = vpop.trf.xlu0
        %v931 = vpop.trf.xlu0
        %v932 = vpop.trf.xlu0
        %v933 = vpop.trf.xlu0
        %v934 = vpop.trf.xlu0
        %v935 = vpop.trf.xlu0
        %936 = vxpose.xlu0.b32.start [1/16] %v365, 128
        %937 = vxpose.xlu0.b32.cont [2/16] 0.0, 128
        %938 = vxpose.xlu0.b32.cont [3/16] 0.0, 128
        %939 = vxpose.xlu0.b32.cont [4/16] 0.0, 128
        %940 = vxpose.xlu0.b32.cont [5/16] 0.0, 128
        %941 = vxpose.xlu0.b32.cont [6/16] 0.0, 128
        %942 = vxpose.xlu0.b32.cont [7/16] 0.0, 128
        %943 = vxpose.xlu0.b32.cont [8/16] 0.0, 128
        %944 = vxpose.xlu0.b32.cont [9/16] 0.0, 128
        %945 = vxpose.xlu0.b32.cont [10/16] 0.0, 128
        %946 = vxpose.xlu0.b32.cont [11/16] 0.0, 128
        %947 = vxpose.xlu0.b32.cont [12/16] 0.0, 128
        %948 = vxpose.xlu0.b32.cont [13/16] 0.0, 128
        %949 = vxpose.xlu0.b32.cont [14/16] 0.0, 128
        %950 = vxpose.xlu0.b32.cont [15/16] 0.0, 128
        %951 = vxpose.xlu0.b32.end [16/16] 0.0, 128
        %v952 = vpop.trf.xlu0
        %v953 = vpop.trf.xlu0
        %v954 = vpop.trf.xlu0
        %v955 = vpop.trf.xlu0
        %v956 = vpop.trf.xlu0
        %v957 = vpop.trf.xlu0
        %v958 = vpop.trf.xlu0
        %v959 = vpop.trf.xlu0
        %v960 = vpop.trf.xlu0
        %v961 = vpop.trf.xlu0
        %v962 = vpop.trf.xlu0
        %v963 = vpop.trf.xlu0
        %v964 = vpop.trf.xlu0
        %v965 = vpop.trf.xlu0
        %v966 = vpop.trf.xlu0
        %v967 = vpop.trf.xlu0
        %968 = vxpose.xlu0.b32.start [1/16] %v447, 128
        %969 = vxpose.xlu0.b32.cont [2/16] 0.0, 128
        %970 = vxpose.xlu0.b32.cont [3/16] 0.0, 128
        %971 = vxpose.xlu0.b32.cont [4/16] 0.0, 128
        %972 = vxpose.xlu0.b32.cont [5/16] 0.0, 128
        %973 = vxpose.xlu0.b32.cont [6/16] 0.0, 128
        %974 = vxpose.xlu0.b32.cont [7/16] 0.0, 128
        %975 = vxpose.xlu0.b32.cont [8/16] 0.0, 128
        %976 = vxpose.xlu0.b32.cont [9/16] 0.0, 128
        %977 = vxpose.xlu0.b32.cont [10/16] 0.0, 128
        %978 = vxpose.xlu0.b32.cont [11/16] 0.0, 128
        %979 = vxpose.xlu0.b32.cont [12/16] 0.0, 128
        %980 = vxpose.xlu0.b32.cont [13/16] 0.0, 128
        %981 = vxpose.xlu0.b32.cont [14/16] 0.0, 128
        %982 = vxpose.xlu0.b32.cont [15/16] 0.0, 128
        %983 = vxpose.xlu0.b32.end [16/16] 0.0, 128
        %v984 = vpop.trf.xlu0
        %v985 = vpop.trf.xlu0
        %v986 = vpop.trf.xlu0
        %v987 = vpop.trf.xlu0
        %v988 = vpop.trf.xlu0
        %v989 = vpop.trf.xlu0
        %v990 = vpop.trf.xlu0
        %v991 = vpop.trf.xlu0
        %v992 = vpop.trf.xlu0
        %v993 = vpop.trf.xlu0
        %v994 = vpop.trf.xlu0
        %v995 = vpop.trf.xlu0
        %v996 = vpop.trf.xlu0
        %v997 = vpop.trf.xlu0
        %v998 = vpop.trf.xlu0
        %v999 = vpop.trf.xlu0
        %v1000 = vpack.c.bf16 %v505, %v504
        %v1001 = vpack.c.bf16 %v507, %v506
        %v1002 = vpack.c.bf16 %v509, %v508
        %v1003 = vpack.c.bf16 %v511, %v510
        %v1004 = vpack.c.bf16 %v513, %v512
        %v1005 = vpack.c.bf16 %v515, %v514
        %v1006 = vpack.c.bf16 %v517, %v516
        %v1007 = vpack.c.bf16 %v519, %v518
        %v1008 = vpack.c.bf16 %v537, %v536
        %v1009 = vpack.c.bf16 %v539, %v538
        %v1010 = vpack.c.bf16 %v541, %v540
        %v1011 = vpack.c.bf16 %v543, %v542
        %v1012 = vpack.c.bf16 %v545, %v544
        %v1013 = vpack.c.bf16 %v547, %v546
        %v1014 = vpack.c.bf16 %v549, %v548
        %v1015 = vpack.c.bf16 %v551, %v550
        %v1016 = vpack.c.bf16 %v569, %v568
        %v1017 = vpack.c.bf16 %v571, %v570
        %v1018 = vpack.c.bf16 %v573, %v572
        %v1019 = vpack.c.bf16 %v575, %v574
        %v1020 = vpack.c.bf16 %v577, %v576
        %v1021 = vpack.c.bf16 %v579, %v578
        %v1022 = vpack.c.bf16 %v581, %v580
        %v1023 = vpack.c.bf16 %v583, %v582
        %v1024 = vpack.c.bf16 %v601, %v600
        %v1025 = vpack.c.bf16 %v603, %v602
        %v1026 = vpack.c.bf16 %v605, %v604
        %v1027 = vpack.c.bf16 %v607, %v606
        %v1028 = vpack.c.bf16 %v609, %v608
        %v1029 = vpack.c.bf16 %v611, %v610
        %v1030 = vpack.c.bf16 %v613, %v612
        %v1031 = vpack.c.bf16 %v615, %v614
        %v1032 = vpack.c.bf16 %v633, %v632
        %v1033 = vpack.c.bf16 %v635, %v634
        %v1034 = vpack.c.bf16 %v637, %v636
        %v1035 = vpack.c.bf16 %v639, %v638
        %v1036 = vpack.c.bf16 %v641, %v640
        %v1037 = vpack.c.bf16 %v643, %v642
        %v1038 = vpack.c.bf16 %v645, %v644
        %v1039 = vpack.c.bf16 %v647, %v646
        %v1040 = vpack.c.bf16 %v665, %v664
        %v1041 = vpack.c.bf16 %v667, %v666
        %v1042 = vpack.c.bf16 %v669, %v668
        %v1043 = vpack.c.bf16 %v671, %v670
        %v1044 = vpack.c.bf16 %v673, %v672
        %v1045 = vpack.c.bf16 %v675, %v674
        %v1046 = vpack.c.bf16 %v677, %v676
        %v1047 = vpack.c.bf16 %v679, %v678
        %v1048 = vpack.c.bf16 %v697, %v696
        %v1049 = vpack.c.bf16 %v699, %v698
        %v1050 = vpack.c.bf16 %v701, %v700
        %v1051 = vpack.c.bf16 %v703, %v702
        %v1052 = vpack.c.bf16 %v705, %v704
        %v1053 = vpack.c.bf16 %v707, %v706
        %v1054 = vpack.c.bf16 %v709, %v708
        %v1055 = vpack.c.bf16 %v711, %v710
        %v1056 = vpack.c.bf16 %v729, %v728
        %v1057 = vpack.c.bf16 %v731, %v730
        %v1058 = vpack.c.bf16 %v733, %v732
        %v1059 = vpack.c.bf16 %v735, %v734
        %v1060 = vpack.c.bf16 %v737, %v736
        %v1061 = vpack.c.bf16 %v739, %v738
        %v1062 = vpack.c.bf16 %v741, %v740
        %v1063 = vpack.c.bf16 %v743, %v742
        %v1064 = vpack.c.bf16 %v761, %v760
        %v1065 = vpack.c.bf16 %v763, %v762
        %v1066 = vpack.c.bf16 %v765, %v764
        %v1067 = vpack.c.bf16 %v767, %v766
        %v1068 = vpack.c.bf16 %v769, %v768
        %v1069 = vpack.c.bf16 %v771, %v770
        %v1070 = vpack.c.bf16 %v773, %v772
        %v1071 = vpack.c.bf16 %v775, %v774
        %v1072 = vpack.c.bf16 %v793, %v792
        %v1073 = vpack.c.bf16 %v795, %v794
        %v1074 = vpack.c.bf16 %v797, %v796
        %v1075 = vpack.c.bf16 %v799, %v798
        %v1076 = vpack.c.bf16 %v801, %v800
        %v1077 = vpack.c.bf16 %v803, %v802
        %v1078 = vpack.c.bf16 %v805, %v804
        %v1079 = vpack.c.bf16 %v807, %v806
        %v1080 = vpack.c.bf16 %v825, %v824
        %v1081 = vpack.c.bf16 %v827, %v826
        %v1082 = vpack.c.bf16 %v829, %v828
        %v1083 = vpack.c.bf16 %v831, %v830
        %v1084 = vpack.c.bf16 %v833, %v832
        %v1085 = vpack.c.bf16 %v835, %v834
        %v1086 = vpack.c.bf16 %v837, %v836
        %v1087 = vpack.c.bf16 %v839, %v838
        %v1088 = vpack.c.bf16 %v857, %v856
        %v1089 = vpack.c.bf16 %v859, %v858
        %v1090 = vpack.c.bf16 %v861, %v860
        %v1091 = vpack.c.bf16 %v863, %v862
        %v1092 = vpack.c.bf16 %v865, %v864
        %v1093 = vpack.c.bf16 %v867, %v866
        %v1094 = vpack.c.bf16 %v869, %v868
        %v1095 = vpack.c.bf16 %v871, %v870
        %v1096 = vpack.c.bf16 %v889, %v888
        %v1097 = vpack.c.bf16 %v891, %v890
        %v1098 = vpack.c.bf16 %v893, %v892
        %v1099 = vpack.c.bf16 %v895, %v894
        %v1100 = vpack.c.bf16 %v897, %v896
        %v1101 = vpack.c.bf16 %v899, %v898
        %v1102 = vpack.c.bf16 %v901, %v900
        %v1103 = vpack.c.bf16 %v903, %v902
        %v1104 = vpack.c.bf16 %v921, %v920
        %v1105 = vpack.c.bf16 %v923, %v922
        %v1106 = vpack.c.bf16 %v925, %v924
        %v1107 = vpack.c.bf16 %v927, %v926
        %v1108 = vpack.c.bf16 %v929, %v928
        %v1109 = vpack.c.bf16 %v931, %v930
        %v1110 = vpack.c.bf16 %v933, %v932
        %v1111 = vpack.c.bf16 %v935, %v934
        %v1112 = vpack.c.bf16 %v953, %v952
        %v1113 = vpack.c.bf16 %v955, %v954
        %v1114 = vpack.c.bf16 %v957, %v956
        %v1115 = vpack.c.bf16 %v959, %v958
        %v1116 = vpack.c.bf16 %v961, %v960
        %v1117 = vpack.c.bf16 %v963, %v962
        %v1118 = vpack.c.bf16 %v965, %v964
        %v1119 = vpack.c.bf16 %v967, %v966
        %v1120 = vpack.c.bf16 %v985, %v984
        %v1121 = vpack.c.bf16 %v987, %v986
        %v1122 = vpack.c.bf16 %v989, %v988
        %v1123 = vpack.c.bf16 %v991, %v990
        %v1124 = vpack.c.bf16 %v993, %v992
        %v1125 = vpack.c.bf16 %v995, %v994
        %v1126 = vpack.c.bf16 %v997, %v996
        %v1127 = vpack.c.bf16 %v999, %v998
        %1128 = vxpose.xlu0.b32.start [1/16] %v370, 128
        %1129 = vxpose.xlu0.b32.cont [2/16] 0.0, 128
        %1130 = vxpose.xlu0.b32.cont [3/16] 0.0, 128
        %1131 = vxpose.xlu0.b32.cont [4/16] 0.0, 128
        %1132 = vxpose.xlu0.b32.cont [5/16] 0.0, 128
        %1133 = vxpose.xlu0.b32.cont [6/16] 0.0, 128
        %1134 = vxpose.xlu0.b32.cont [7/16] 0.0, 128
        %1135 = vxpose.xlu0.b32.cont [8/16] 0.0, 128
        %1136 = vxpose.xlu0.b32.cont [9/16] 0.0, 128
        %1137 = vxpose.xlu0.b32.cont [10/16] 0.0, 128
        %1138 = vxpose.xlu0.b32.cont [11/16] 0.0, 128
        %1139 = vxpose.xlu0.b32.cont [12/16] 0.0, 128
        %1140 = vxpose.xlu0.b32.cont [13/16] 0.0, 128
        %1141 = vxpose.xlu0.b32.cont [14/16] 0.0, 128
        %1142 = vxpose.xlu0.b32.cont [15/16] 0.0, 128
        %1143 = vxpose.xlu0.b32.end [16/16] 0.0, 128
        %v1144 = vpop.trf.xlu0
        %v1145 = vpop.trf.xlu0
        %v1146 = vpop.trf.xlu0
        %v1147 = vpop.trf.xlu0
        %v1148 = vpop.trf.xlu0
        %v1149 = vpop.trf.xlu0
        %v1150 = vpop.trf.xlu0
        %v1151 = vpop.trf.xlu0
        %v1152 = vpop.trf.xlu0
        %v1153 = vpop.trf.xlu0
        %v1154 = vpop.trf.xlu0
        %v1155 = vpop.trf.xlu0
        %v1156 = vpop.trf.xlu0
        %v1157 = vpop.trf.xlu0
        %v1158 = vpop.trf.xlu0
        %v1159 = vpop.trf.xlu0
        %1160 = vxpose.xlu0.b32.start [1/16] %v464, 128
        %1161 = vxpose.xlu0.b32.cont [2/16] 0.0, 128
        %1162 = vxpose.xlu0.b32.cont [3/16] 0.0, 128
        %1163 = vxpose.xlu0.b32.cont [4/16] 0.0, 128
        %1164 = vxpose.xlu0.b32.cont [5/16] 0.0, 128
        %1165 = vxpose.xlu0.b32.cont [6/16] 0.0, 128
        %1166 = vxpose.xlu0.b32.cont [7/16] 0.0, 128
        %1167 = vxpose.xlu0.b32.cont [8/16] 0.0, 128
        %1168 = vxpose.xlu0.b32.cont [9/16] 0.0, 128
        %1169 = vxpose.xlu0.b32.cont [10/16] 0.0, 128
        %1170 = vxpose.xlu0.b32.cont [11/16] 0.0, 128
        %1171 = vxpose.xlu0.b32.cont [12/16] 0.0, 128
        %1172 = vxpose.xlu0.b32.cont [13/16] 0.0, 128
        %1173 = vxpose.xlu0.b32.cont [14/16] 0.0, 128
        %1174 = vxpose.xlu0.b32.cont [15/16] 0.0, 128
        %1175 = vxpose.xlu0.b32.end [16/16] 0.0, 128
        %v1176 = vpop.trf.xlu0
        %v1177 = vpop.trf.xlu0
        %v1178 = vpop.trf.xlu0
        %v1179 = vpop.trf.xlu0
        %v1180 = vpop.trf.xlu0
        %v1181 = vpop.trf.xlu0
        %v1182 = vpop.trf.xlu0
        %v1183 = vpop.trf.xlu0
        %v1184 = vpop.trf.xlu0
        %v1185 = vpop.trf.xlu0
        %v1186 = vpop.trf.xlu0
        %v1187 = vpop.trf.xlu0
        %v1188 = vpop.trf.xlu0
        %v1189 = vpop.trf.xlu0
        %v1190 = vpop.trf.xlu0
        %v1191 = vpop.trf.xlu0
        %1192 = vxpose.xlu0.b32.start [1/16] %v373, 128
        %1193 = vxpose.xlu0.b32.cont [2/16] 0.0, 128
        %1194 = vxpose.xlu0.b32.cont [3/16] 0.0, 128
        %1195 = vxpose.xlu0.b32.cont [4/16] 0.0, 128
        %1196 = vxpose.xlu0.b32.cont [5/16] 0.0, 128
        %1197 = vxpose.xlu0.b32.cont [6/16] 0.0, 128
        %1198 = vxpose.xlu0.b32.cont [7/16] 0.0, 128
        %1199 = vxpose.xlu0.b32.cont [8/16] 0.0, 128
        %1200 = vxpose.xlu0.b32.cont [9/16] 0.0, 128
        %1201 = vxpose.xlu0.b32.cont [10/16] 0.0, 128
        %1202 = vxpose.xlu0.b32.cont [11/16] 0.0, 128
        %1203 = vxpose.xlu0.b32.cont [12/16] 0.0, 128
        %1204 = vxpose.xlu0.b32.cont [13/16] 0.0, 128
        %1205 = vxpose.xlu0.b32.cont [14/16] 0.0, 128
        %1206 = vxpose.xlu0.b32.cont [15/16] 0.0, 128
        %1207 = vxpose.xlu0.b32.end [16/16] 0.0, 128
        %v1208 = vpop.trf.xlu0
        %v1209 = vpop.trf.xlu0
        %v1210 = vpop.trf.xlu0
        %v1211 = vpop.trf.xlu0
        %v1212 = vpop.trf.xlu0
        %v1213 = vpop.trf.xlu0
        %v1214 = vpop.trf.xlu0
        %v1215 = vpop.trf.xlu0
        %v1216 = vpop.trf.xlu0
        %v1217 = vpop.trf.xlu0
        %v1218 = vpop.trf.xlu0
        %v1219 = vpop.trf.xlu0
        %v1220 = vpop.trf.xlu0
        %v1221 = vpop.trf.xlu0
        %v1222 = vpop.trf.xlu0
        %v1223 = vpop.trf.xlu0
        %1224 = vxpose.xlu0.b32.start [1/16] %v465, 128
        %1225 = vxpose.xlu0.b32.cont [2/16] 0.0, 128
        %1226 = vxpose.xlu0.b32.cont [3/16] 0.0, 128
        %1227 = vxpose.xlu0.b32.cont [4/16] 0.0, 128
        %1228 = vxpose.xlu0.b32.cont [5/16] 0.0, 128
        %1229 = vxpose.xlu0.b32.cont [6/16] 0.0, 128
        %1230 = vxpose.xlu0.b32.cont [7/16] 0.0, 128
        %1231 = vxpose.xlu0.b32.cont [8/16] 0.0, 128
        %1232 = vxpose.xlu0.b32.cont [9/16] 0.0, 128
        %1233 = vxpose.xlu0.b32.cont [10/16] 0.0, 128
        %1234 = vxpose.xlu0.b32.cont [11/16] 0.0, 128
        %1235 = vxpose.xlu0.b32.cont [12/16] 0.0, 128
        %1236 = vxpose.xlu0.b32.cont [13/16] 0.0, 128
        %1237 = vxpose.xlu0.b32.cont [14/16] 0.0, 128
        %1238 = vxpose.xlu0.b32.cont [15/16] 0.0, 128
        %1239 = vxpose.xlu0.b32.end [16/16] 0.0, 128
        %v1240 = vpop.trf.xlu0
        %v1241 = vpop.trf.xlu0
        %v1242 = vpop.trf.xlu0
        %v1243 = vpop.trf.xlu0
        %v1244 = vpop.trf.xlu0
        %v1245 = vpop.trf.xlu0
        %v1246 = vpop.trf.xlu0
        %v1247 = vpop.trf.xlu0
        %v1248 = vpop.trf.xlu0
        %v1249 = vpop.trf.xlu0
        %v1250 = vpop.trf.xlu0
        %v1251 = vpop.trf.xlu0
        %v1252 = vpop.trf.xlu0
        %v1253 = vpop.trf.xlu0
        %v1254 = vpop.trf.xlu0
        %v1255 = vpop.trf.xlu0
        %1256 = vxpose.xlu0.b32.start [1/16] %v378, 128
        %1257 = vxpose.xlu0.b32.cont [2/16] 0.0, 128
        %1258 = vxpose.xlu0.b32.cont [3/16] 0.0, 128
        %1259 = vxpose.xlu0.b32.cont [4/16] 0.0, 128
        %1260 = vxpose.xlu0.b32.cont [5/16] 0.0, 128
        %1261 = vxpose.xlu0.b32.cont [6/16] 0.0, 128
        %1262 = vxpose.xlu0.b32.cont [7/16] 0.0, 128
        %1263 = vxpose.xlu0.b32.cont [8/16] 0.0, 128
        %1264 = vxpose.xlu0.b32.cont [9/16] 0.0, 128
        %1265 = vxpose.xlu0.b32.cont [10/16] 0.0, 128
        %1266 = vxpose.xlu0.b32.cont [11/16] 0.0, 128
        %1267 = vxpose.xlu0.b32.cont [12/16] 0.0, 128
        %1268 = vxpose.xlu0.b32.cont [13/16] 0.0, 128
        %1269 = vxpose.xlu0.b32.cont [14/16] 0.0, 128
        %1270 = vxpose.xlu0.b32.cont [15/16] 0.0, 128
        %1271 = vxpose.xlu0.b32.end [16/16] 0.0, 128
        %v1272 = vpop.trf.xlu0
        %v1273 = vpop.trf.xlu0
        %v1274 = vpop.trf.xlu0
        %v1275 = vpop.trf.xlu0
        %v1276 = vpop.trf.xlu0
        %v1277 = vpop.trf.xlu0
        %v1278 = vpop.trf.xlu0
        %v1279 = vpop.trf.xlu0
        %v1280 = vpop.trf.xlu0
        %v1281 = vpop.trf.xlu0
        %v1282 = vpop.trf.xlu0
        %v1283 = vpop.trf.xlu0
        %v1284 = vpop.trf.xlu0
        %v1285 = vpop.trf.xlu0
        %v1286 = vpop.trf.xlu0
        %v1287 = vpop.trf.xlu0
        %1288 = vxpose.xlu0.b32.start [1/16] %v466, 128
        %1289 = vxpose.xlu0.b32.cont [2/16] 0.0, 128
        %1290 = vxpose.xlu0.b32.cont [3/16] 0.0, 128
        %1291 = vxpose.xlu0.b32.cont [4/16] 0.0, 128
        %1292 = vxpose.xlu0.b32.cont [5/16] 0.0, 128
        %1293 = vxpose.xlu0.b32.cont [6/16] 0.0, 128
        %1294 = vxpose.xlu0.b32.cont [7/16] 0.0, 128
        %1295 = vxpose.xlu0.b32.cont [8/16] 0.0, 128
        %1296 = vxpose.xlu0.b32.cont [9/16] 0.0, 128
        %1297 = vxpose.xlu0.b32.cont [10/16] 0.0, 128
        %1298 = vxpose.xlu0.b32.cont [11/16] 0.0, 128
        %1299 = vxpose.xlu0.b32.cont [12/16] 0.0, 128
        %1300 = vxpose.xlu0.b32.cont [13/16] 0.0, 128
        %1301 = vxpose.xlu0.b32.cont [14/16] 0.0, 128
        %1302 = vxpose.xlu0.b32.cont [15/16] 0.0, 128
        %1303 = vxpose.xlu0.b32.end [16/16] 0.0, 128
        %v1304 = vpop.trf.xlu0
        %v1305 = vpop.trf.xlu0
        %v1306 = vpop.trf.xlu0
        %v1307 = vpop.trf.xlu0
        %v1308 = vpop.trf.xlu0
        %v1309 = vpop.trf.xlu0
        %v1310 = vpop.trf.xlu0
        %v1311 = vpop.trf.xlu0
        %v1312 = vpop.trf.xlu0
        %v1313 = vpop.trf.xlu0
        %v1314 = vpop.trf.xlu0
        %v1315 = vpop.trf.xlu0
        %v1316 = vpop.trf.xlu0
        %v1317 = vpop.trf.xlu0
        %v1318 = vpop.trf.xlu0
        %v1319 = vpop.trf.xlu0
        %1320 = vxpose.xlu0.b32.start [1/16] %v381, 128
        %1321 = vxpose.xlu0.b32.cont [2/16] 0.0, 128
        %1322 = vxpose.xlu0.b32.cont [3/16] 0.0, 128
        %1323 = vxpose.xlu0.b32.cont [4/16] 0.0, 128
        %1324 = vxpose.xlu0.b32.cont [5/16] 0.0, 128
        %1325 = vxpose.xlu0.b32.cont [6/16] 0.0, 128
        %1326 = vxpose.xlu0.b32.cont [7/16] 0.0, 128
        %1327 = vxpose.xlu0.b32.cont [8/16] 0.0, 128
        %1328 = vxpose.xlu0.b32.cont [9/16] 0.0, 128
        %1329 = vxpose.xlu0.b32.cont [10/16] 0.0, 128
        %1330 = vxpose.xlu0.b32.cont [11/16] 0.0, 128
        %1331 = vxpose.xlu0.b32.cont [12/16] 0.0, 128
        %1332 = vxpose.xlu0.b32.cont [13/16] 0.0, 128
        %1333 = vxpose.xlu0.b32.cont [14/16] 0.0, 128
        %1334 = vxpose.xlu0.b32.cont [15/16] 0.0, 128
        %1335 = vxpose.xlu0.b32.end [16/16] 0.0, 128
        %v1336 = vpop.trf.xlu0
        %v1337 = vpop.trf.xlu0
        %v1338 = vpop.trf.xlu0
        %v1339 = vpop.trf.xlu0
        %v1340 = vpop.trf.xlu0
        %v1341 = vpop.trf.xlu0
        %v1342 = vpop.trf.xlu0
        %v1343 = vpop.trf.xlu0
        %v1344 = vpop.trf.xlu0
        %v1345 = vpop.trf.xlu0
        %v1346 = vpop.trf.xlu0
        %v1347 = vpop.trf.xlu0
        %v1348 = vpop.trf.xlu0
        %v1349 = vpop.trf.xlu0
        %v1350 = vpop.trf.xlu0
        %v1351 = vpop.trf.xlu0
        %1352 = vxpose.xlu0.b32.start [1/16] %v467, 128
        %1353 = vxpose.xlu0.b32.cont [2/16] 0.0, 128
        %1354 = vxpose.xlu0.b32.cont [3/16] 0.0, 128
        %1355 = vxpose.xlu0.b32.cont [4/16] 0.0, 128
        %1356 = vxpose.xlu0.b32.cont [5/16] 0.0, 128
        %1357 = vxpose.xlu0.b32.cont [6/16] 0.0, 128
        %1358 = vxpose.xlu0.b32.cont [7/16] 0.0, 128
        %1359 = vxpose.xlu0.b32.cont [8/16] 0.0, 128
        %1360 = vxpose.xlu0.b32.cont [9/16] 0.0, 128
        %1361 = vxpose.xlu0.b32.cont [10/16] 0.0, 128
        %1362 = vxpose.xlu0.b32.cont [11/16] 0.0, 128
        %1363 = vxpose.xlu0.b32.cont [12/16] 0.0, 128
        %1364 = vxpose.xlu0.b32.cont [13/16] 0.0, 128
        %1365 = vxpose.xlu0.b32.cont [14/16] 0.0, 128
        %1366 = vxpose.xlu0.b32.cont [15/16] 0.0, 128
        %1367 = vxpose.xlu0.b32.end [16/16] 0.0, 128
        %v1368 = vpop.trf.xlu0
        %v1369 = vpop.trf.xlu0
        %v1370 = vpop.trf.xlu0
        %v1371 = vpop.trf.xlu0
        %v1372 = vpop.trf.xlu0
        %v1373 = vpop.trf.xlu0
        %v1374 = vpop.trf.xlu0
        %v1375 = vpop.trf.xlu0
        %v1376 = vpop.trf.xlu0
        %v1377 = vpop.trf.xlu0
        %v1378 = vpop.trf.xlu0
        %v1379 = vpop.trf.xlu0
        %v1380 = vpop.trf.xlu0
        %v1381 = vpop.trf.xlu0
        %v1382 = vpop.trf.xlu0
        %v1383 = vpop.trf.xlu0
        %1384 = vxpose.xlu0.b32.start [1/16] %v386, 128
        %1385 = vxpose.xlu0.b32.cont [2/16] 0.0, 128
        %1386 = vxpose.xlu0.b32.cont [3/16] 0.0, 128
        %1387 = vxpose.xlu0.b32.cont [4/16] 0.0, 128
        %1388 = vxpose.xlu0.b32.cont [5/16] 0.0, 128
        %1389 = vxpose.xlu0.b32.cont [6/16] 0.0, 128
        %1390 = vxpose.xlu0.b32.cont [7/16] 0.0, 128
        %1391 = vxpose.xlu0.b32.cont [8/16] 0.0, 128
        %1392 = vxpose.xlu0.b32.cont [9/16] 0.0, 128
        %1393 = vxpose.xlu0.b32.cont [10/16] 0.0, 128
        %1394 = vxpose.xlu0.b32.cont [11/16] 0.0, 128
        %1395 = vxpose.xlu0.b32.cont [12/16] 0.0, 128
        %1396 = vxpose.xlu0.b32.cont [13/16] 0.0, 128
        %1397 = vxpose.xlu0.b32.cont [14/16] 0.0, 128
        %1398 = vxpose.xlu0.b32.cont [15/16] 0.0, 128
        %1399 = vxpose.xlu0.b32.end [16/16] 0.0, 128
        %v1400 = vpop.trf.xlu0
        %v1401 = vpop.trf.xlu0
        %v1402 = vpop.trf.xlu0
        %v1403 = vpop.trf.xlu0
        %v1404 = vpop.trf.xlu0
        %v1405 = vpop.trf.xlu0
        %v1406 = vpop.trf.xlu0
        %v1407 = vpop.trf.xlu0
        %v1408 = vpop.trf.xlu0
        %v1409 = vpop.trf.xlu0
        %v1410 = vpop.trf.xlu0
        %v1411 = vpop.trf.xlu0
        %v1412 = vpop.trf.xlu0
        %v1413 = vpop.trf.xlu0
        %v1414 = vpop.trf.xlu0
        %v1415 = vpop.trf.xlu0
        %1416 = vxpose.xlu0.b32.start [1/16] %v468, 128
        %1417 = vxpose.xlu0.b32.cont [2/16] 0.0, 128
        %1418 = vxpose.xlu0.b32.cont [3/16] 0.0, 128
        %1419 = vxpose.xlu0.b32.cont [4/16] 0.0, 128
        %1420 = vxpose.xlu0.b32.cont [5/16] 0.0, 128
        %1421 = vxpose.xlu0.b32.cont [6/16] 0.0, 128
        %1422 = vxpose.xlu0.b32.cont [7/16] 0.0, 128
        %1423 = vxpose.xlu0.b32.cont [8/16] 0.0, 128
        %1424 = vxpose.xlu0.b32.cont [9/16] 0.0, 128
        %1425 = vxpose.xlu0.b32.cont [10/16] 0.0, 128
        %1426 = vxpose.xlu0.b32.cont [11/16] 0.0, 128
        %1427 = vxpose.xlu0.b32.cont [12/16] 0.0, 128
        %1428 = vxpose.xlu0.b32.cont [13/16] 0.0, 128
        %1429 = vxpose.xlu0.b32.cont [14/16] 0.0, 128
        %1430 = vxpose.xlu0.b32.cont [15/16] 0.0, 128
        %1431 = vxpose.xlu0.b32.end [16/16] 0.0, 128
        %v1432 = vpop.trf.xlu0
        %v1433 = vpop.trf.xlu0
        %v1434 = vpop.trf.xlu0
        %v1435 = vpop.trf.xlu0
        %v1436 = vpop.trf.xlu0
        %v1437 = vpop.trf.xlu0
        %v1438 = vpop.trf.xlu0
        %v1439 = vpop.trf.xlu0
        %v1440 = vpop.trf.xlu0
        %v1441 = vpop.trf.xlu0
        %v1442 = vpop.trf.xlu0
        %v1443 = vpop.trf.xlu0
        %v1444 = vpop.trf.xlu0
        %v1445 = vpop.trf.xlu0
        %v1446 = vpop.trf.xlu0
        %v1447 = vpop.trf.xlu0
        %1448 = vxpose.xlu0.b32.start [1/16] %v389, 128
        %1449 = vxpose.xlu0.b32.cont [2/16] 0.0, 128
        %1450 = vxpose.xlu0.b32.cont [3/16] 0.0, 128
        %1451 = vxpose.xlu0.b32.cont [4/16] 0.0, 128
        %1452 = vxpose.xlu0.b32.cont [5/16] 0.0, 128
        %1453 = vxpose.xlu0.b32.cont [6/16] 0.0, 128
        %1454 = vxpose.xlu0.b32.cont [7/16] 0.0, 128
        %1455 = vxpose.xlu0.b32.cont [8/16] 0.0, 128
        %1456 = vxpose.xlu0.b32.cont [9/16] 0.0, 128
        %1457 = vxpose.xlu0.b32.cont [10/16] 0.0, 128
        %1458 = vxpose.xlu0.b32.cont [11/16] 0.0, 128
        %1459 = vxpose.xlu0.b32.cont [12/16] 0.0, 128
        %1460 = vxpose.xlu0.b32.cont [13/16] 0.0, 128
        %1461 = vxpose.xlu0.b32.cont [14/16] 0.0, 128
        %1462 = vxpose.xlu0.b32.cont [15/16] 0.0, 128
        %1463 = vxpose.xlu0.b32.end [16/16] 0.0, 128
        %v1464 = vpop.trf.xlu0
        %v1465 = vpop.trf.xlu0
        %v1466 = vpop.trf.xlu0
        %v1467 = vpop.trf.xlu0
        %v1468 = vpop.trf.xlu0
        %v1469 = vpop.trf.xlu0
        %v1470 = vpop.trf.xlu0
        %v1471 = vpop.trf.xlu0
        %v1472 = vpop.trf.xlu0
        %v1473 = vpop.trf.xlu0
        %v1474 = vpop.trf.xlu0
        %v1475 = vpop.trf.xlu0
        %v1476 = vpop.trf.xlu0
        %v1477 = vpop.trf.xlu0
        %v1478 = vpop.trf.xlu0
        %v1479 = vpop.trf.xlu0
        %1480 = vxpose.xlu0.b32.start [1/16] %v469, 128
        %1481 = vxpose.xlu0.b32.cont [2/16] 0.0, 128
        %1482 = vxpose.xlu0.b32.cont [3/16] 0.0, 128
        %1483 = vxpose.xlu0.b32.cont [4/16] 0.0, 128
        %1484 = vxpose.xlu0.b32.cont [5/16] 0.0, 128
        %1485 = vxpose.xlu0.b32.cont [6/16] 0.0, 128
        %1486 = vxpose.xlu0.b32.cont [7/16] 0.0, 128
        %1487 = vxpose.xlu0.b32.cont [8/16] 0.0, 128
        %1488 = vxpose.xlu0.b32.cont [9/16] 0.0, 128
        %1489 = vxpose.xlu0.b32.cont [10/16] 0.0, 128
        %1490 = vxpose.xlu0.b32.cont [11/16] 0.0, 128
        %1491 = vxpose.xlu0.b32.cont [12/16] 0.0, 128
        %1492 = vxpose.xlu0.b32.cont [13/16] 0.0, 128
        %1493 = vxpose.xlu0.b32.cont [14/16] 0.0, 128
        %1494 = vxpose.xlu0.b32.cont [15/16] 0.0, 128
        %1495 = vxpose.xlu0.b32.end [16/16] 0.0, 128
        %v1496 = vpop.trf.xlu0
        %v1497 = vpop.trf.xlu0
        %v1498 = vpop.trf.xlu0
        %v1499 = vpop.trf.xlu0
        %v1500 = vpop.trf.xlu0
        %v1501 = vpop.trf.xlu0
        %v1502 = vpop.trf.xlu0
        %v1503 = vpop.trf.xlu0
        %v1504 = vpop.trf.xlu0
        %v1505 = vpop.trf.xlu0
        %v1506 = vpop.trf.xlu0
        %v1507 = vpop.trf.xlu0
        %v1508 = vpop.trf.xlu0
        %v1509 = vpop.trf.xlu0
        %v1510 = vpop.trf.xlu0
        %v1511 = vpop.trf.xlu0
        %1512 = vxpose.xlu0.b32.start [1/16] %v394, 128
        %1513 = vxpose.xlu0.b32.cont [2/16] 0.0, 128
        %1514 = vxpose.xlu0.b32.cont [3/16] 0.0, 128
        %1515 = vxpose.xlu0.b32.cont [4/16] 0.0, 128
        %1516 = vxpose.xlu0.b32.cont [5/16] 0.0, 128
        %1517 = vxpose.xlu0.b32.cont [6/16] 0.0, 128
        %1518 = vxpose.xlu0.b32.cont [7/16] 0.0, 128
        %1519 = vxpose.xlu0.b32.cont [8/16] 0.0, 128
        %1520 = vxpose.xlu0.b32.cont [9/16] 0.0, 128
        %1521 = vxpose.xlu0.b32.cont [10/16] 0.0, 128
        %1522 = vxpose.xlu0.b32.cont [11/16] 0.0, 128
        %1523 = vxpose.xlu0.b32.cont [12/16] 0.0, 128
        %1524 = vxpose.xlu0.b32.cont [13/16] 0.0, 128
        %1525 = vxpose.xlu0.b32.cont [14/16] 0.0, 128
        %1526 = vxpose.xlu0.b32.cont [15/16] 0.0, 128
        %1527 = vxpose.xlu0.b32.end [16/16] 0.0, 128
        %v1528 = vpop.trf.xlu0
        %v1529 = vpop.trf.xlu0
        %v1530 = vpop.trf.xlu0
        %v1531 = vpop.trf.xlu0
        %v1532 = vpop.trf.xlu0
        %v1533 = vpop.trf.xlu0
        %v1534 = vpop.trf.xlu0
        %v1535 = vpop.trf.xlu0
        %v1536 = vpop.trf.xlu0
        %v1537 = vpop.trf.xlu0
        %v1538 = vpop.trf.xlu0
        %v1539 = vpop.trf.xlu0
        %v1540 = vpop.trf.xlu0
        %v1541 = vpop.trf.xlu0
        %v1542 = vpop.trf.xlu0
        %v1543 = vpop.trf.xlu0
        %1544 = vxpose.xlu0.b32.start [1/16] %v470, 128
        %1545 = vxpose.xlu0.b32.cont [2/16] 0.0, 128
        %1546 = vxpose.xlu0.b32.cont [3/16] 0.0, 128
        %1547 = vxpose.xlu0.b32.cont [4/16] 0.0, 128
        %1548 = vxpose.xlu0.b32.cont [5/16] 0.0, 128
        %1549 = vxpose.xlu0.b32.cont [6/16] 0.0, 128
        %1550 = vxpose.xlu0.b32.cont [7/16] 0.0, 128
        %1551 = vxpose.xlu0.b32.cont [8/16] 0.0, 128
        %1552 = vxpose.xlu0.b32.cont [9/16] 0.0, 128
        %1553 = vxpose.xlu0.b32.cont [10/16] 0.0, 128
        %1554 = vxpose.xlu0.b32.cont [11/16] 0.0, 128
        %1555 = vxpose.xlu0.b32.cont [12/16] 0.0, 128
        %1556 = vxpose.xlu0.b32.cont [13/16] 0.0, 128
        %1557 = vxpose.xlu0.b32.cont [14/16] 0.0, 128
        %1558 = vxpose.xlu0.b32.cont [15/16] 0.0, 128
        %1559 = vxpose.xlu0.b32.end [16/16] 0.0, 128
        %v1560 = vpop.trf.xlu0
        %v1561 = vpop.trf.xlu0
        %v1562 = vpop.trf.xlu0
        %v1563 = vpop.trf.xlu0
        %v1564 = vpop.trf.xlu0
        %v1565 = vpop.trf.xlu0
        %v1566 = vpop.trf.xlu0
        %v1567 = vpop.trf.xlu0
        %v1568 = vpop.trf.xlu0
        %v1569 = vpop.trf.xlu0
        %v1570 = vpop.trf.xlu0
        %v1571 = vpop.trf.xlu0
        %v1572 = vpop.trf.xlu0
        %v1573 = vpop.trf.xlu0
        %v1574 = vpop.trf.xlu0
        %v1575 = vpop.trf.xlu0
        %1576 = vxpose.xlu0.b32.start [1/16] %v397, 128
        %1577 = vxpose.xlu0.b32.cont [2/16] 0.0, 128
        %1578 = vxpose.xlu0.b32.cont [3/16] 0.0, 128
        %1579 = vxpose.xlu0.b32.cont [4/16] 0.0, 128
        %1580 = vxpose.xlu0.b32.cont [5/16] 0.0, 128
        %1581 = vxpose.xlu0.b32.cont [6/16] 0.0, 128
        %1582 = vxpose.xlu0.b32.cont [7/16] 0.0, 128
        %1583 = vxpose.xlu0.b32.cont [8/16] 0.0, 128
        %1584 = vxpose.xlu0.b32.cont [9/16] 0.0, 128
        %1585 = vxpose.xlu0.b32.cont [10/16] 0.0, 128
        %1586 = vxpose.xlu0.b32.cont [11/16] 0.0, 128
        %1587 = vxpose.xlu0.b32.cont [12/16] 0.0, 128
        %1588 = vxpose.xlu0.b32.cont [13/16] 0.0, 128
        %1589 = vxpose.xlu0.b32.cont [14/16] 0.0, 128
        %1590 = vxpose.xlu0.b32.cont [15/16] 0.0, 128
        %1591 = vxpose.xlu0.b32.end [16/16] 0.0, 128
        %v1592 = vpop.trf.xlu0
        %v1593 = vpop.trf.xlu0
        %v1594 = vpop.trf.xlu0
        %v1595 = vpop.trf.xlu0
        %v1596 = vpop.trf.xlu0
        %v1597 = vpop.trf.xlu0
        %v1598 = vpop.trf.xlu0
        %v1599 = vpop.trf.xlu0
        %v1600 = vpop.trf.xlu0
        %v1601 = vpop.trf.xlu0
        %v1602 = vpop.trf.xlu0
        %v1603 = vpop.trf.xlu0
        %v1604 = vpop.trf.xlu0
        %v1605 = vpop.trf.xlu0
        %v1606 = vpop.trf.xlu0
        %v1607 = vpop.trf.xlu0
        %1608 = vxpose.xlu0.b32.start [1/16] %v471, 128
        %1609 = vxpose.xlu0.b32.cont [2/16] 0.0, 128
        %1610 = vxpose.xlu0.b32.cont [3/16] 0.0, 128
        %1611 = vxpose.xlu0.b32.cont [4/16] 0.0, 128
        %1612 = vxpose.xlu0.b32.cont [5/16] 0.0, 128
        %1613 = vxpose.xlu0.b32.cont [6/16] 0.0, 128
        %1614 = vxpose.xlu0.b32.cont [7/16] 0.0, 128
        %1615 = vxpose.xlu0.b32.cont [8/16] 0.0, 128
        %1616 = vxpose.xlu0.b32.cont [9/16] 0.0, 128
        %1617 = vxpose.xlu0.b32.cont [10/16] 0.0, 128
        %1618 = vxpose.xlu0.b32.cont [11/16] 0.0, 128
        %1619 = vxpose.xlu0.b32.cont [12/16] 0.0, 128
        %1620 = vxpose.xlu0.b32.cont [13/16] 0.0, 128
        %1621 = vxpose.xlu0.b32.cont [14/16] 0.0, 128
        %1622 = vxpose.xlu0.b32.cont [15/16] 0.0, 128
        %1623 = vxpose.xlu0.b32.end [16/16] 0.0, 128
        %v1624 = vpop.trf.xlu0
        %v1625 = vpop.trf.xlu0
        %v1626 = vpop.trf.xlu0
        %v1627 = vpop.trf.xlu0
        %v1628 = vpop.trf.xlu0
        %v1629 = vpop.trf.xlu0
        %v1630 = vpop.trf.xlu0
        %v1631 = vpop.trf.xlu0
        %v1632 = vpop.trf.xlu0
        %v1633 = vpop.trf.xlu0
        %v1634 = vpop.trf.xlu0
        %v1635 = vpop.trf.xlu0
        %v1636 = vpop.trf.xlu0
        %v1637 = vpop.trf.xlu0
        %v1638 = vpop.trf.xlu0
        %v1639 = vpop.trf.xlu0
        %v1640 = vpack.c.bf16 %v1145, %v1144
        %v1641 = vpack.c.bf16 %v1147, %v1146
        %v1642 = vpack.c.bf16 %v1149, %v1148
        %v1643 = vpack.c.bf16 %v1151, %v1150
        %v1644 = vpack.c.bf16 %v1153, %v1152
        %v1645 = vpack.c.bf16 %v1155, %v1154
        %v1646 = vpack.c.bf16 %v1157, %v1156
        %v1647 = vpack.c.bf16 %v1159, %v1158
        %v1648 = vpack.c.bf16 %v1177, %v1176
        %v1649 = vpack.c.bf16 %v1179, %v1178
        %v1650 = vpack.c.bf16 %v1181, %v1180
        %v1651 = vpack.c.bf16 %v1183, %v1182
        %v1652 = vpack.c.bf16 %v1185, %v1184
        %v1653 = vpack.c.bf16 %v1187, %v1186
        %v1654 = vpack.c.bf16 %v1189, %v1188
        %v1655 = vpack.c.bf16 %v1191, %v1190
        %v1656 = vpack.c.bf16 %v1209, %v1208
        %v1657 = vpack.c.bf16 %v1211, %v1210
        %v1658 = vpack.c.bf16 %v1213, %v1212
        %v1659 = vpack.c.bf16 %v1215, %v1214
        %v1660 = vpack.c.bf16 %v1217, %v1216
        %v1661 = vpack.c.bf16 %v1219, %v1218
        %v1662 = vpack.c.bf16 %v1221, %v1220
        %v1663 = vpack.c.bf16 %v1223, %v1222
        %v1664 = vpack.c.bf16 %v1241, %v1240
        %v1665 = vpack.c.bf16 %v1243, %v1242
        %v1666 = vpack.c.bf16 %v1245, %v1244
        %v1667 = vpack.c.bf16 %v1247, %v1246
        %v1668 = vpack.c.bf16 %v1249, %v1248
        %v1669 = vpack.c.bf16 %v1251, %v1250
        %v1670 = vpack.c.bf16 %v1253, %v1252
        %v1671 = vpack.c.bf16 %v1255, %v1254
        %v1672 = vpack.c.bf16 %v1273, %v1272
        %v1673 = vpack.c.bf16 %v1275, %v1274
        %v1674 = vpack.c.bf16 %v1277, %v1276
        %v1675 = vpack.c.bf16 %v1279, %v1278
        %v1676 = vpack.c.bf16 %v1281, %v1280
        %v1677 = vpack.c.bf16 %v1283, %v1282
        %v1678 = vpack.c.bf16 %v1285, %v1284
        %v1679 = vpack.c.bf16 %v1287, %v1286
        %v1680 = vpack.c.bf16 %v1305, %v1304
        %v1681 = vpack.c.bf16 %v1307, %v1306
        %v1682 = vpack.c.bf16 %v1309, %v1308
        %v1683 = vpack.c.bf16 %v1311, %v1310
        %v1684 = vpack.c.bf16 %v1313, %v1312
        %v1685 = vpack.c.bf16 %v1315, %v1314
        %v1686 = vpack.c.bf16 %v1317, %v1316
        %v1687 = vpack.c.bf16 %v1319, %v1318
        %v1688 = vpack.c.bf16 %v1337, %v1336
        %v1689 = vpack.c.bf16 %v1339, %v1338
        %v1690 = vpack.c.bf16 %v1341, %v1340
        %v1691 = vpack.c.bf16 %v1343, %v1342
        %v1692 = vpack.c.bf16 %v1345, %v1344
        %v1693 = vpack.c.bf16 %v1347, %v1346
        %v1694 = vpack.c.bf16 %v1349, %v1348
        %v1695 = vpack.c.bf16 %v1351, %v1350
        %v1696 = vpack.c.bf16 %v1369, %v1368
        %v1697 = vpack.c.bf16 %v1371, %v1370
        %v1698 = vpack.c.bf16 %v1373, %v1372
        %v1699 = vpack.c.bf16 %v1375, %v1374
        %v1700 = vpack.c.bf16 %v1377, %v1376
        %v1701 = vpack.c.bf16 %v1379, %v1378
        %v1702 = vpack.c.bf16 %v1381, %v1380
        %v1703 = vpack.c.bf16 %v1383, %v1382
        %v1704 = vpack.c.bf16 %v1401, %v1400
        %v1705 = vpack.c.bf16 %v1403, %v1402
        %v1706 = vpack.c.bf16 %v1405, %v1404
        %v1707 = vpack.c.bf16 %v1407, %v1406
        %v1708 = vpack.c.bf16 %v1409, %v1408
        %v1709 = vpack.c.bf16 %v1411, %v1410
        %v1710 = vpack.c.bf16 %v1413, %v1412
        %v1711 = vpack.c.bf16 %v1415, %v1414
        %v1712 = vpack.c.bf16 %v1433, %v1432
        %v1713 = vpack.c.bf16 %v1435, %v1434
        %v1714 = vpack.c.bf16 %v1437, %v1436
        %v1715 = vpack.c.bf16 %v1439, %v1438
        %v1716 = vpack.c.bf16 %v1441, %v1440
        %v1717 = vpack.c.bf16 %v1443, %v1442
        %v1718 = vpack.c.bf16 %v1445, %v1444
        %v1719 = vpack.c.bf16 %v1447, %v1446
        %v1720 = vpack.c.bf16 %v1465, %v1464
        %v1721 = vpack.c.bf16 %v1467, %v1466
        %v1722 = vpack.c.bf16 %v1469, %v1468
        %v1723 = vpack.c.bf16 %v1471, %v1470
        %v1724 = vpack.c.bf16 %v1473, %v1472
        %v1725 = vpack.c.bf16 %v1475, %v1474
        %v1726 = vpack.c.bf16 %v1477, %v1476
        %v1727 = vpack.c.bf16 %v1479, %v1478
        %v1728 = vpack.c.bf16 %v1497, %v1496
        %v1729 = vpack.c.bf16 %v1499, %v1498
        %v1730 = vpack.c.bf16 %v1501, %v1500
        %v1731 = vpack.c.bf16 %v1503, %v1502
        %v1732 = vpack.c.bf16 %v1505, %v1504
        %v1733 = vpack.c.bf16 %v1507, %v1506
        %v1734 = vpack.c.bf16 %v1509, %v1508
        %v1735 = vpack.c.bf16 %v1511, %v1510
        %v1736 = vpack.c.bf16 %v1529, %v1528
        %v1737 = vpack.c.bf16 %v1531, %v1530
        %v1738 = vpack.c.bf16 %v1533, %v1532
        %v1739 = vpack.c.bf16 %v1535, %v1534
        %v1740 = vpack.c.bf16 %v1537, %v1536
        %v1741 = vpack.c.bf16 %v1539, %v1538
        %v1742 = vpack.c.bf16 %v1541, %v1540
        %v1743 = vpack.c.bf16 %v1543, %v1542
        %v1744 = vpack.c.bf16 %v1561, %v1560
        %v1745 = vpack.c.bf16 %v1563, %v1562
        %v1746 = vpack.c.bf16 %v1565, %v1564
        %v1747 = vpack.c.bf16 %v1567, %v1566
        %v1748 = vpack.c.bf16 %v1569, %v1568
        %v1749 = vpack.c.bf16 %v1571, %v1570
        %v1750 = vpack.c.bf16 %v1573, %v1572
        %v1751 = vpack.c.bf16 %v1575, %v1574
        %v1752 = vpack.c.bf16 %v1593, %v1592
        %v1753 = vpack.c.bf16 %v1595, %v1594
        %v1754 = vpack.c.bf16 %v1597, %v1596
        %v1755 = vpack.c.bf16 %v1599, %v1598
        %v1756 = vpack.c.bf16 %v1601, %v1600
        %v1757 = vpack.c.bf16 %v1603, %v1602
        %v1758 = vpack.c.bf16 %v1605, %v1604
        %v1759 = vpack.c.bf16 %v1607, %v1606
        %v1760 = vpack.c.bf16 %v1625, %v1624
        %v1761 = vpack.c.bf16 %v1627, %v1626
        %v1762 = vpack.c.bf16 %v1629, %v1628
        %v1763 = vpack.c.bf16 %v1631, %v1630
        %v1764 = vpack.c.bf16 %v1633, %v1632
        %v1765 = vpack.c.bf16 %v1635, %v1634
        %v1766 = vpack.c.bf16 %v1637, %v1636
        %v1767 = vpack.c.bf16 %v1639, %v1638
        %vm1768 = vcmask 31744
        %v1770 = vsel %vm1768, %v1000, 0
        %v1773 = vsel %vm1768, %v1001, 0
        %v1776 = vsel %vm1768, %v1002, 0
        %v1779 = vsel %vm1768, %v1003, 0
        %v1782 = vsel %vm1768, %v1004, 0
        %v1785 = vsel %vm1768, %v1005, 0
        %v1788 = vsel %vm1768, %v1006, 0
        %v1791 = vsel %vm1768, %v1007, 0
        %v1794 = vsel %vm1768, %v1640, 0
        %v1797 = vsel %vm1768, %v1641, 0
        %v1800 = vsel %vm1768, %v1642, 0
        %v1803 = vsel %vm1768, %v1643, 0
        %v1806 = vsel %vm1768, %v1644, 0
        %v1809 = vsel %vm1768, %v1645, 0
        %v1812 = vsel %vm1768, %v1646, 0
        %v1815 = vsel %vm1768, %v1647, 0
        %1817 = vmatprep.subr.bf16.mxu0 0
        %1818 = vmatpush1.bf16.xpose.msra.mxu0 %v1794
        %1819 = vmatprep.subr.bf16.mxu0 0
        %1820 = vmatpush1.bf16.xpose.msra.mxu0 %v1797
        %1821 = vmatprep.subr.bf16.mxu0 0
        %1822 = vmatpush1.bf16.xpose.msra.mxu0 %v1800
        %1823 = vmatprep.subr.bf16.mxu0 0
        %1824 = vmatpush1.bf16.xpose.msra.mxu0 %v1803
        %1825 = vmatprep.subr.bf16.mxu0 0
        %1826 = vmatpush1.bf16.xpose.msra.mxu0 %v1806
        %1827 = vmatprep.subr.bf16.mxu0 0
        %1828 = vmatpush1.bf16.xpose.msra.mxu0 %v1809
        %1829 = vmatprep.subr.bf16.mxu0 0
        %1830 = vmatpush1.bf16.xpose.msra.mxu0 %v1812
        %1831 = vmatprep.subr.bf16.mxu0 0
        %1832 = vmatpush1.bf16.xpose.msra.mxu0 %v1815
        %1833 = vmatprep.subr.bf16.mxu0 0
        %1834 = vmatpush1.bf16.xpose.msra.mxu0 0
        %1835 = vmatprep.subr.bf16.mxu0 0
        %1836 = vmatpush1.bf16.xpose.msra.mxu0 0
        %1837 = vmatprep.subr.bf16.mxu0 0
        %1838 = vmatpush1.bf16.xpose.msra.mxu0 0
        %1839 = vmatprep.subr.bf16.mxu0 0
        %1840 = vmatpush1.bf16.xpose.msra.mxu0 0
        %1841 = vmatprep.subr.bf16.mxu0 0
        %1842 = vmatpush1.bf16.xpose.msra.mxu0 0
        %1843 = vmatprep.subr.bf16.mxu0 0
        %1844 = vmatpush1.bf16.xpose.msra.mxu0 0
        %1845 = vmatprep.subr.bf16.mxu0 0
        %1846 = vmatpush1.bf16.xpose.msra.mxu0 0
        %1847 = vmatprep.subr.bf16.mxu0 0
        %1848 = vmatpush1.bf16.xpose.msra.mxu0 0
        %1849 = vmatprep.mubr.bf16.mxu0 0
        %1850 = vmatmul.mubr.bf16.gmra.mrb[0].mxu0 %v1770
        %v1851 = vpop.f32.mrb[0].mxu0
        %v1852 = vadd.f32 0.0, %v1851
        %v1853 = vpop.f32.mrb[0].mxu0
        %v1854 = vpop.f32.mrb[0].mxu0
        %v1855 = vadd.f32 0.0, %v1854
        %v1856 = vpop.f32.mrb[0].mxu0
        %1857 = vmatprep.mubr.bf16.mxu0 0
        %1858 = vmatmul.mubr.bf16.gmra.mrb[0].mxu0 %v1773
        %v1859 = vpop.f32.mrb[0].mxu0
        %v1860 = vadd.f32 0.0, %v1859
        %v1861 = vpop.f32.mrb[0].mxu0
        %v1862 = vpop.f32.mrb[0].mxu0
        %v1863 = vadd.f32 0.0, %v1862
        %v1864 = vpop.f32.mrb[0].mxu0
        %1865 = vmatprep.mubr.bf16.mxu0 0
        %1866 = vmatmul.mubr.bf16.gmra.mrb[0].mxu0 %v1776
        %v1867 = vpop.f32.mrb[0].mxu0
        %v1868 = vadd.f32 0.0, %v1867
        %v1869 = vpop.f32.mrb[0].mxu0
        %v1870 = vpop.f32.mrb[0].mxu0
        %v1871 = vadd.f32 0.0, %v1870
        %v1872 = vpop.f32.mrb[0].mxu0
        %1873 = vmatprep.mubr.bf16.mxu0 0
        %1874 = vmatmul.mubr.bf16.gmra.mrb[0].mxu0 %v1779
        %v1875 = vpop.f32.mrb[0].mxu0
        %v1876 = vadd.f32 0.0, %v1875
        %v1877 = vpop.f32.mrb[0].mxu0
        %v1878 = vpop.f32.mrb[0].mxu0
        %v1879 = vadd.f32 0.0, %v1878
        %v1880 = vpop.f32.mrb[0].mxu0
        %1881 = vmatprep.mubr.bf16.mxu0 0
        %1882 = vmatmul.mubr.bf16.gmra.mrb[0].mxu0 %v1782
        %v1883 = vpop.f32.mrb[0].mxu0
        %v1884 = vadd.f32 0.0, %v1883
        %v1885 = vpop.f32.mrb[0].mxu0
        %v1886 = vpop.f32.mrb[0].mxu0
        %v1887 = vadd.f32 0.0, %v1886
        %v1888 = vpop.f32.mrb[0].mxu0
        %1889 = vmatprep.mubr.bf16.mxu0 0
        %1890 = vmatmul.mubr.bf16.gmra.mrb[0].mxu0 %v1785
        %v1891 = vpop.f32.mrb[0].mxu0
        %v1892 = vadd.f32 0.0, %v1891
        %v1893 = vpop.f32.mrb[0].mxu0
        %v1894 = vpop.f32.mrb[0].mxu0
        %v1895 = vadd.f32 0.0, %v1894
        %v1896 = vpop.f32.mrb[0].mxu0
        %1897 = vmatprep.mubr.bf16.mxu0 0
        %1898 = vmatmul.mubr.bf16.gmra.mrb[0].mxu0 %v1788
        %v1899 = vpop.f32.mrb[0].mxu0
        %v1900 = vadd.f32 0.0, %v1899
        %v1901 = vpop.f32.mrb[0].mxu0
        %v1902 = vpop.f32.mrb[0].mxu0
        %v1903 = vadd.f32 0.0, %v1902
        %v1904 = vpop.f32.mrb[0].mxu0
        %1905 = vmatprep.mubr.bf16.mxu0 0
        %1906 = vmatmul.mubr.bf16.gmra.mrb[0].mxu0 %v1791
        %v1907 = vpop.f32.mrb[0].mxu0
        %v1908 = vadd.f32 0.0, %v1907
        %v1909 = vpop.f32.mrb[0].mxu0
        %v1910 = vpop.f32.mrb[0].mxu0
        %v1911 = vadd.f32 0.0, %v1910
        %v1912 = vpop.f32.mrb[0].mxu0
        %1913 = vdwg.mxu0
        %v1915 = vsel %vm1768, %v1008, 0
        %v1918 = vsel %vm1768, %v1009, 0
        %v1921 = vsel %vm1768, %v1010, 0
        %v1924 = vsel %vm1768, %v1011, 0
        %v1927 = vsel %vm1768, %v1012, 0
        %v1930 = vsel %vm1768, %v1013, 0
        %v1933 = vsel %vm1768, %v1014, 0
        %v1936 = vsel %vm1768, %v1015, 0
        %v1939 = vsel %vm1768, %v1648, 0
        %v1942 = vsel %vm1768, %v1649, 0
        %v1945 = vsel %vm1768, %v1650, 0
        %v1948 = vsel %vm1768, %v1651, 0
        %v1951 = vsel %vm1768, %v1652, 0
        %v1954 = vsel %vm1768, %v1653, 0
        %v1957 = vsel %vm1768, %v1654, 0
        %v1960 = vsel %vm1768, %v1655, 0
        %1962 = vmatprep.subr.bf16.mxu0 0
        %1963 = vmatpush1.bf16.xpose.msra.mxu0 %v1939
        %1964 = vmatprep.subr.bf16.mxu0 0
        %1965 = vmatpush1.bf16.xpose.msra.mxu0 %v1942
        %1966 = vmatprep.subr.bf16.mxu0 0
        %1967 = vmatpush1.bf16.xpose.msra.mxu0 %v1945
        %1968 = vmatprep.subr.bf16.mxu0 0
        %1969 = vmatpush1.bf16.xpose.msra.mxu0 %v1948
        %1970 = vmatprep.subr.bf16.mxu0 0
        %1971 = vmatpush1.bf16.xpose.msra.mxu0 %v1951
        %1972 = vmatprep.subr.bf16.mxu0 0
        %1973 = vmatpush1.bf16.xpose.msra.mxu0 %v1954
        %1974 = vmatprep.subr.bf16.mxu0 0
        %1975 = vmatpush1.bf16.xpose.msra.mxu0 %v1957
        %1976 = vmatprep.subr.bf16.mxu0 0
        %1977 = vmatpush1.bf16.xpose.msra.mxu0 %v1960
        %1978 = vmatprep.subr.bf16.mxu0 0
        %1979 = vmatpush1.bf16.xpose.msra.mxu0 0
        %1980 = vmatprep.subr.bf16.mxu0 0
        %1981 = vmatpush1.bf16.xpose.msra.mxu0 0
        %1982 = vmatprep.subr.bf16.mxu0 0
        %1983 = vmatpush1.bf16.xpose.msra.mxu0 0
        %1984 = vmatprep.subr.bf16.mxu0 0
        %1985 = vmatpush1.bf16.xpose.msra.mxu0 0
        %1986 = vmatprep.subr.bf16.mxu0 0
        %1987 = vmatpush1.bf16.xpose.msra.mxu0 0
        %1988 = vmatprep.subr.bf16.mxu0 0
        %1989 = vmatpush1.bf16.xpose.msra.mxu0 0
        %1990 = vmatprep.subr.bf16.mxu0 0
        %1991 = vmatpush1.bf16.xpose.msra.mxu0 0
        %1992 = vmatprep.subr.bf16.mxu0 0
        %1993 = vmatpush1.bf16.xpose.msra.mxu0 0
        %1994 = vmatprep.mubr.bf16.mxu0 0
        %1995 = vmatmul.mubr.bf16.gmra.mrb[0].mxu0 %v1915
        %v1996 = vpop.f32.mrb[0].mxu0
        %v1997 = vadd.f32 0.0, %v1996
        %v1998 = vpop.f32.mrb[0].mxu0
        %v1999 = vpop.f32.mrb[0].mxu0
        %v2000 = vadd.f32 0.0, %v1999
        %v2001 = vpop.f32.mrb[0].mxu0
        %2002 = vmatprep.mubr.bf16.mxu0 0
        %2003 = vmatmul.mubr.bf16.gmra.mrb[0].mxu0 %v1918
        %v2004 = vpop.f32.mrb[0].mxu0
        %v2005 = vadd.f32 0.0, %v2004
        %v2006 = vpop.f32.mrb[0].mxu0
        %v2007 = vpop.f32.mrb[0].mxu0
        %v2008 = vadd.f32 0.0, %v2007
        %v2009 = vpop.f32.mrb[0].mxu0
        %2010 = vmatprep.mubr.bf16.mxu0 0
        %2011 = vmatmul.mubr.bf16.gmra.mrb[0].mxu0 %v1921
        %v2012 = vpop.f32.mrb[0].mxu0
        %v2013 = vadd.f32 0.0, %v2012
        %v2014 = vpop.f32.mrb[0].mxu0
        %v2015 = vpop.f32.mrb[0].mxu0
        %v2016 = vadd.f32 0.0, %v2015
        %v2017 = vpop.f32.mrb[0].mxu0
        %2018 = vmatprep.mubr.bf16.mxu0 0
        %2019 = vmatmul.mubr.bf16.gmra.mrb[0].mxu0 %v1924
        %v2020 = vpop.f32.mrb[0].mxu0
        %v2021 = vadd.f32 0.0, %v2020
        %v2022 = vpop.f32.mrb[0].mxu0
        %v2023 = vpop.f32.mrb[0].mxu0
        %v2024 = vadd.f32 0.0, %v2023
        %v2025 = vpop.f32.mrb[0].mxu0
        %2026 = vmatprep.mubr.bf16.mxu0 0
        %2027 = vmatmul.mubr.bf16.gmra.mrb[0].mxu0 %v1927
        %v2028 = vpop.f32.mrb[0].mxu0
        %v2029 = vadd.f32 0.0, %v2028
        %v2030 = vpop.f32.mrb[0].mxu0
        %v2031 = vpop.f32.mrb[0].mxu0
        %v2032 = vadd.f32 0.0, %v2031
        %v2033 = vpop.f32.mrb[0].mxu0
        %2034 = vmatprep.mubr.bf16.mxu0 0
        %2035 = vmatmul.mubr.bf16.gmra.mrb[0].mxu0 %v1930
        %v2036 = vpop.f32.mrb[0].mxu0
        %v2037 = vadd.f32 0.0, %v2036
        %v2038 = vpop.f32.mrb[0].mxu0
        %v2039 = vpop.f32.mrb[0].mxu0
        %v2040 = vadd.f32 0.0, %v2039
        %v2041 = vpop.f32.mrb[0].mxu0
        %2042 = vmatprep.mubr.bf16.mxu0 0
        %2043 = vmatmul.mubr.bf16.gmra.mrb[0].mxu0 %v1933
        %v2044 = vpop.f32.mrb[0].mxu0
        %v2045 = vadd.f32 0.0, %v2044
        %v2046 = vpop.f32.mrb[0].mxu0
        %v2047 = vpop.f32.mrb[0].mxu0
        %v2048 = vadd.f32 0.0, %v2047
        %v2049 = vpop.f32.mrb[0].mxu0
        %2050 = vmatprep.mubr.bf16.mxu0 0
        %2051 = vmatmul.mubr.bf16.gmra.mrb[0].mxu0 %v1936
        %v2052 = vpop.f32.mrb[0].mxu0
        %v2053 = vadd.f32 0.0, %v2052
        %v2054 = vpop.f32.mrb[0].mxu0
        %v2055 = vpop.f32.mrb[0].mxu0
        %v2056 = vadd.f32 0.0, %v2055
        %v2057 = vpop.f32.mrb[0].mxu0
        %2058 = vdwg.mxu0
        %v2060 = vsel %vm1768, %v1016, 0
        %v2063 = vsel %vm1768, %v1017, 0
        %v2066 = vsel %vm1768, %v1018, 0
        %v2069 = vsel %vm1768, %v1019, 0
        %v2072 = vsel %vm1768, %v1020, 0
        %v2075 = vsel %vm1768, %v1021, 0
        %v2078 = vsel %vm1768, %v1022, 0
        %v2081 = vsel %vm1768, %v1023, 0
        %v2084 = vsel %vm1768, %v1656, 0
        %v2087 = vsel %vm1768, %v1657, 0
        %v2090 = vsel %vm1768, %v1658, 0
        %v2093 = vsel %vm1768, %v1659, 0
        %v2096 = vsel %vm1768, %v1660, 0
        %v2099 = vsel %vm1768, %v1661, 0
        %v2102 = vsel %vm1768, %v1662, 0
        %v2105 = vsel %vm1768, %v1663, 0
        %2107 = vmatprep.subr.bf16.mxu0 0
        %2108 = vmatpush1.bf16.xpose.msra.mxu0 %v2084
        %2109 = vmatprep.subr.bf16.mxu0 0
        %2110 = vmatpush1.bf16.xpose.msra.mxu0 %v2087
        %2111 = vmatprep.subr.bf16.mxu0 0
        %2112 = vmatpush1.bf16.xpose.msra.mxu0 %v2090
        %2113 = vmatprep.subr.bf16.mxu0 0
        %2114 = vmatpush1.bf16.xpose.msra.mxu0 %v2093
        %2115 = vmatprep.subr.bf16.mxu0 0
        %2116 = vmatpush1.bf16.xpose.msra.mxu0 %v2096
        %2117 = vmatprep.subr.bf16.mxu0 0
        %2118 = vmatpush1.bf16.xpose.msra.mxu0 %v2099
        %2119 = vmatprep.subr.bf16.mxu0 0
        %2120 = vmatpush1.bf16.xpose.msra.mxu0 %v2102
        %2121 = vmatprep.subr.bf16.mxu0 0
        %2122 = vmatpush1.bf16.xpose.msra.mxu0 %v2105
        %2123 = vmatprep.subr.bf16.mxu0 0
        %2124 = vmatpush1.bf16.xpose.msra.mxu0 0
        %2125 = vmatprep.subr.bf16.mxu0 0
        %2126 = vmatpush1.bf16.xpose.msra.mxu0 0
        %2127 = vmatprep.subr.bf16.mxu0 0
        %2128 = vmatpush1.bf16.xpose.msra.mxu0 0
        %2129 = vmatprep.subr.bf16.mxu0 0
        %2130 = vmatpush1.bf16.xpose.msra.mxu0 0
        %2131 = vmatprep.subr.bf16.mxu0 0
        %2132 = vmatpush1.bf16.xpose.msra.mxu0 0
        %2133 = vmatprep.subr.bf16.mxu0 0
        %2134 = vmatpush1.bf16.xpose.msra.mxu0 0
        %2135 = vmatprep.subr.bf16.mxu0 0
        %2136 = vmatpush1.bf16.xpose.msra.mxu0 0
        %2137 = vmatprep.subr.bf16.mxu0 0
        %2138 = vmatpush1.bf16.xpose.msra.mxu0 0
        %2139 = vmatprep.mubr.bf16.mxu0 0
        %2140 = vmatmul.mubr.bf16.gmra.mrb[0].mxu0 %v2060
        %v2141 = vpop.f32.mrb[0].mxu0
        %v2142 = vadd.f32 0.0, %v2141
        %v2143 = vpop.f32.mrb[0].mxu0
        %v2144 = vpop.f32.mrb[0].mxu0
        %v2145 = vadd.f32 0.0, %v2144
        %v2146 = vpop.f32.mrb[0].mxu0
        %2147 = vmatprep.mubr.bf16.mxu0 0
        %2148 = vmatmul.mubr.bf16.gmra.mrb[0].mxu0 %v2063
        %v2149 = vpop.f32.mrb[0].mxu0
        %v2150 = vadd.f32 0.0, %v2149
        %v2151 = vpop.f32.mrb[0].mxu0
        %v2152 = vpop.f32.mrb[0].mxu0
        %v2153 = vadd.f32 0.0, %v2152
        %v2154 = vpop.f32.mrb[0].mxu0
        %2155 = vmatprep.mubr.bf16.mxu0 0
        %2156 = vmatmul.mubr.bf16.gmra.mrb[0].mxu0 %v2066
        %v2157 = vpop.f32.mrb[0].mxu0
        %v2158 = vadd.f32 0.0, %v2157
        %v2159 = vpop.f32.mrb[0].mxu0
        %v2160 = vpop.f32.mrb[0].mxu0
        %v2161 = vadd.f32 0.0, %v2160
        %v2162 = vpop.f32.mrb[0].mxu0
        %2163 = vmatprep.mubr.bf16.mxu0 0
        %2164 = vmatmul.mubr.bf16.gmra.mrb[0].mxu0 %v2069
        %v2165 = vpop.f32.mrb[0].mxu0
        %v2166 = vadd.f32 0.0, %v2165
        %v2167 = vpop.f32.mrb[0].mxu0
        %v2168 = vpop.f32.mrb[0].mxu0
        %v2169 = vadd.f32 0.0, %v2168
        %v2170 = vpop.f32.mrb[0].mxu0
        %2171 = vmatprep.mubr.bf16.mxu0 0
        %2172 = vmatmul.mubr.bf16.gmra.mrb[0].mxu0 %v2072
        %v2173 = vpop.f32.mrb[0].mxu0
        %v2174 = vadd.f32 0.0, %v2173
        %v2175 = vpop.f32.mrb[0].mxu0
        %v2176 = vpop.f32.mrb[0].mxu0
        %v2177 = vadd.f32 0.0, %v2176
        %v2178 = vpop.f32.mrb[0].mxu0
        %2179 = vmatprep.mubr.bf16.mxu0 0
        %2180 = vmatmul.mubr.bf16.gmra.mrb[0].mxu0 %v2075
        %v2181 = vpop.f32.mrb[0].mxu0
        %v2182 = vadd.f32 0.0, %v2181
        %v2183 = vpop.f32.mrb[0].mxu0
        %v2184 = vpop.f32.mrb[0].mxu0
        %v2185 = vadd.f32 0.0, %v2184
        %v2186 = vpop.f32.mrb[0].mxu0
        %2187 = vmatprep.mubr.bf16.mxu0 0
        %2188 = vmatmul.mubr.bf16.gmra.mrb[0].mxu0 %v2078
        %v2189 = vpop.f32.mrb[0].mxu0
        %v2190 = vadd.f32 0.0, %v2189
        %v2191 = vpop.f32.mrb[0].mxu0
        %v2192 = vpop.f32.mrb[0].mxu0
        %v2193 = vadd.f32 0.0, %v2192
        %v2194 = vpop.f32.mrb[0].mxu0
        %2195 = vmatprep.mubr.bf16.mxu0 0
        %2196 = vmatmul.mubr.bf16.gmra.mrb[0].mxu0 %v2081
        %v2197 = vpop.f32.mrb[0].mxu0
        %v2198 = vadd.f32 0.0, %v2197
        %v2199 = vpop.f32.mrb[0].mxu0
        %v2200 = vpop.f32.mrb[0].mxu0
        %v2201 = vadd.f32 0.0, %v2200
        %v2202 = vpop.f32.mrb[0].mxu0
        %2203 = vdwg.mxu0
        %v2205 = vsel %vm1768, %v1024, 0
        %v2208 = vsel %vm1768, %v1025, 0
        %v2211 = vsel %vm1768, %v1026, 0
        %v2214 = vsel %vm1768, %v1027, 0
        %v2217 = vsel %vm1768, %v1028, 0
        %v2220 = vsel %vm1768, %v1029, 0
        %v2223 = vsel %vm1768, %v1030, 0
        %v2226 = vsel %vm1768, %v1031, 0
        %v2229 = vsel %vm1768, %v1664, 0
        %v2232 = vsel %vm1768, %v1665, 0
        %v2235 = vsel %vm1768, %v1666, 0
        %v2238 = vsel %vm1768, %v1667, 0
        %v2241 = vsel %vm1768, %v1668, 0
        %v2244 = vsel %vm1768, %v1669, 0
        %v2247 = vsel %vm1768, %v1670, 0
        %v2250 = vsel %vm1768, %v1671, 0
        %2252 = vmatprep.subr.bf16.mxu0 0
        %2253 = vmatpush1.bf16.xpose.msra.mxu0 %v2229
        %2254 = vmatprep.subr.bf16.mxu0 0
        %2255 = vmatpush1.bf16.xpose.msra.mxu0 %v2232
        %2256 = vmatprep.subr.bf16.mxu0 0
        %2257 = vmatpush1.bf16.xpose.msra.mxu0 %v2235
        %2258 = vmatprep.subr.bf16.mxu0 0
        %2259 = vmatpush1.bf16.xpose.msra.mxu0 %v2238
        %2260 = vmatprep.subr.bf16.mxu0 0
        %2261 = vmatpush1.bf16.xpose.msra.mxu0 %v2241
        %2262 = vmatprep.subr.bf16.mxu0 0
        %2263 = vmatpush1.bf16.xpose.msra.mxu0 %v2244
        %2264 = vmatprep.subr.bf16.mxu0 0
        %2265 = vmatpush1.bf16.xpose.msra.mxu0 %v2247
        %2266 = vmatprep.subr.bf16.mxu0 0
        %2267 = vmatpush1.bf16.xpose.msra.mxu0 %v2250
        %2268 = vmatprep.subr.bf16.mxu0 0
        %2269 = vmatpush1.bf16.xpose.msra.mxu0 0
        %2270 = vmatprep.subr.bf16.mxu0 0
        %2271 = vmatpush1.bf16.xpose.msra.mxu0 0
        %2272 = vmatprep.subr.bf16.mxu0 0
        %2273 = vmatpush1.bf16.xpose.msra.mxu0 0
        %2274 = vmatprep.subr.bf16.mxu0 0
        %2275 = vmatpush1.bf16.xpose.msra.mxu0 0
        %2276 = vmatprep.subr.bf16.mxu0 0
        %2277 = vmatpush1.bf16.xpose.msra.mxu0 0
        %2278 = vmatprep.subr.bf16.mxu0 0
        %2279 = vmatpush1.bf16.xpose.msra.mxu0 0
        %2280 = vmatprep.subr.bf16.mxu0 0
        %2281 = vmatpush1.bf16.xpose.msra.mxu0 0
        %2282 = vmatprep.subr.bf16.mxu0 0
        %2283 = vmatpush1.bf16.xpose.msra.mxu0 0
        %2284 = vmatprep.mubr.bf16.mxu0 0
        %2285 = vmatmul.mubr.bf16.gmra.mrb[0].mxu0 %v2205
        %v2286 = vpop.f32.mrb[0].mxu0
        %v2287 = vadd.f32 0.0, %v2286
        %v2288 = vpop.f32.mrb[0].mxu0
        %v2289 = vpop.f32.mrb[0].mxu0
        %v2290 = vadd.f32 0.0, %v2289
        %v2291 = vpop.f32.mrb[0].mxu0
        %2292 = vmatprep.mubr.bf16.mxu0 0
        %2293 = vmatmul.mubr.bf16.gmra.mrb[0].mxu0 %v2208
        %v2294 = vpop.f32.mrb[0].mxu0
        %v2295 = vadd.f32 0.0, %v2294
        %v2296 = vpop.f32.mrb[0].mxu0
        %v2297 = vpop.f32.mrb[0].mxu0
        %v2298 = vadd.f32 0.0, %v2297
        %v2299 = vpop.f32.mrb[0].mxu0
        %2300 = vmatprep.mubr.bf16.mxu0 0
        %2301 = vmatmul.mubr.bf16.gmra.mrb[0].mxu0 %v2211
        %v2302 = vpop.f32.mrb[0].mxu0
        %v2303 = vadd.f32 0.0, %v2302
        %v2304 = vpop.f32.mrb[0].mxu0
        %v2305 = vpop.f32.mrb[0].mxu0
        %v2306 = vadd.f32 0.0, %v2305
        %v2307 = vpop.f32.mrb[0].mxu0
        %2308 = vmatprep.mubr.bf16.mxu0 0
        %2309 = vmatmul.mubr.bf16.gmra.mrb[0].mxu0 %v2214
        %v2310 = vpop.f32.mrb[0].mxu0
        %v2311 = vadd.f32 0.0, %v2310
        %v2312 = vpop.f32.mrb[0].mxu0
        %v2313 = vpop.f32.mrb[0].mxu0
        %v2314 = vadd.f32 0.0, %v2313
        %v2315 = vpop.f32.mrb[0].mxu0
        %2316 = vmatprep.mubr.bf16.mxu0 0
        %2317 = vmatmul.mubr.bf16.gmra.mrb[0].mxu0 %v2217
        %v2318 = vpop.f32.mrb[0].mxu0
        %v2319 = vadd.f32 0.0, %v2318
        %v2320 = vpop.f32.mrb[0].mxu0
        %v2321 = vpop.f32.mrb[0].mxu0
        %v2322 = vadd.f32 0.0, %v2321
        %v2323 = vpop.f32.mrb[0].mxu0
        %2324 = vmatprep.mubr.bf16.mxu0 0
        %2325 = vmatmul.mubr.bf16.gmra.mrb[0].mxu0 %v2220
        %v2326 = vpop.f32.mrb[0].mxu0
        %v2327 = vadd.f32 0.0, %v2326
        %v2328 = vpop.f32.mrb[0].mxu0
        %v2329 = vpop.f32.mrb[0].mxu0
        %v2330 = vadd.f32 0.0, %v2329
        %v2331 = vpop.f32.mrb[0].mxu0
        %2332 = vmatprep.mubr.bf16.mxu0 0
        %2333 = vmatmul.mubr.bf16.gmra.mrb[0].mxu0 %v2223
        %v2334 = vpop.f32.mrb[0].mxu0
        %v2335 = vadd.f32 0.0, %v2334
        %v2336 = vpop.f32.mrb[0].mxu0
        %v2337 = vpop.f32.mrb[0].mxu0
        %v2338 = vadd.f32 0.0, %v2337
        %v2339 = vpop.f32.mrb[0].mxu0
        %2340 = vmatprep.mubr.bf16.mxu0 0
        %2341 = vmatmul.mubr.bf16.gmra.mrb[0].mxu0 %v2226
        %v2342 = vpop.f32.mrb[0].mxu0
        %v2343 = vadd.f32 0.0, %v2342
        %v2344 = vpop.f32.mrb[0].mxu0
        %v2345 = vpop.f32.mrb[0].mxu0
        %v2346 = vadd.f32 0.0, %v2345
        %v2347 = vpop.f32.mrb[0].mxu0
        %2348 = vdwg.mxu0
        %v2350 = vsel %vm1768, %v1032, 0
        %v2353 = vsel %vm1768, %v1033, 0
        %v2356 = vsel %vm1768, %v1034, 0
        %v2359 = vsel %vm1768, %v1035, 0
        %v2362 = vsel %vm1768, %v1036, 0
        %v2365 = vsel %vm1768, %v1037, 0
        %v2368 = vsel %vm1768, %v1038, 0
        %v2371 = vsel %vm1768, %v1039, 0
        %v2374 = vsel %vm1768, %v1672, 0
        %v2377 = vsel %vm1768, %v1673, 0
        %v2380 = vsel %vm1768, %v1674, 0
        %v2383 = vsel %vm1768, %v1675, 0
        %v2386 = vsel %vm1768, %v1676, 0
        %v2389 = vsel %vm1768, %v1677, 0
        %v2392 = vsel %vm1768, %v1678, 0
        %v2395 = vsel %vm1768, %v1679, 0
        %2397 = vmatprep.subr.bf16.mxu0 0
        %2398 = vmatpush1.bf16.xpose.msra.mxu0 %v2374
        %2399 = vmatprep.subr.bf16.mxu0 0
        %2400 = vmatpush1.bf16.xpose.msra.mxu0 %v2377
        %2401 = vmatprep.subr.bf16.mxu0 0
        %2402 = vmatpush1.bf16.xpose.msra.mxu0 %v2380
        %2403 = vmatprep.subr.bf16.mxu0 0
        %2404 = vmatpush1.bf16.xpose.msra.mxu0 %v2383
        %2405 = vmatprep.subr.bf16.mxu0 0
        %2406 = vmatpush1.bf16.xpose.msra.mxu0 %v2386
        %2407 = vmatprep.subr.bf16.mxu0 0
        %2408 = vmatpush1.bf16.xpose.msra.mxu0 %v2389
        %2409 = vmatprep.subr.bf16.mxu0 0
        %2410 = vmatpush1.bf16.xpose.msra.mxu0 %v2392
        %2411 = vmatprep.subr.bf16.mxu0 0
        %2412 = vmatpush1.bf16.xpose.msra.mxu0 %v2395
        %2413 = vmatprep.subr.bf16.mxu0 0
        %2414 = vmatpush1.bf16.xpose.msra.mxu0 0
        %2415 = vmatprep.subr.bf16.mxu0 0
        %2416 = vmatpush1.bf16.xpose.msra.mxu0 0
        %2417 = vmatprep.subr.bf16.mxu0 0
        %2418 = vmatpush1.bf16.xpose.msra.mxu0 0
        %2419 = vmatprep.subr.bf16.mxu0 0
        %2420 = vmatpush1.bf16.xpose.msra.mxu0 0
        %2421 = vmatprep.subr.bf16.mxu0 0
        %2422 = vmatpush1.bf16.xpose.msra.mxu0 0
        %2423 = vmatprep.subr.bf16.mxu0 0
        %2424 = vmatpush1.bf16.xpose.msra.mxu0 0
        %2425 = vmatprep.subr.bf16.mxu0 0
        %2426 = vmatpush1.bf16.xpose.msra.mxu0 0
        %2427 = vmatprep.subr.bf16.mxu0 0
        %2428 = vmatpush1.bf16.xpose.msra.mxu0 0
        %2429 = vmatprep.mubr.bf16.mxu0 0
        %2430 = vmatmul.mubr.bf16.gmra.mrb[0].mxu0 %v2350
        %v2431 = vpop.f32.mrb[0].mxu0
        %v2432 = vadd.f32 0.0, %v2431
        %v2433 = vpop.f32.mrb[0].mxu0
        %v2434 = vpop.f32.mrb[0].mxu0
        %v2435 = vadd.f32 0.0, %v2434
        %v2436 = vpop.f32.mrb[0].mxu0
        %2437 = vmatprep.mubr.bf16.mxu0 0
        %2438 = vmatmul.mubr.bf16.gmra.mrb[0].mxu0 %v2353
        %v2439 = vpop.f32.mrb[0].mxu0
        %v2440 = vadd.f32 0.0, %v2439
        %v2441 = vpop.f32.mrb[0].mxu0
        %v2442 = vpop.f32.mrb[0].mxu0
        %v2443 = vadd.f32 0.0, %v2442
        %v2444 = vpop.f32.mrb[0].mxu0
        %2445 = vmatprep.mubr.bf16.mxu0 0
        %2446 = vmatmul.mubr.bf16.gmra.mrb[0].mxu0 %v2356
        %v2447 = vpop.f32.mrb[0].mxu0
        %v2448 = vadd.f32 0.0, %v2447
        %v2449 = vpop.f32.mrb[0].mxu0
        %v2450 = vpop.f32.mrb[0].mxu0
        %v2451 = vadd.f32 0.0, %v2450
        %v2452 = vpop.f32.mrb[0].mxu0
        %2453 = vmatprep.mubr.bf16.mxu0 0
        %2454 = vmatmul.mubr.bf16.gmra.mrb[0].mxu0 %v2359
        %v2455 = vpop.f32.mrb[0].mxu0
        %v2456 = vadd.f32 0.0, %v2455
        %v2457 = vpop.f32.mrb[0].mxu0
        %v2458 = vpop.f32.mrb[0].mxu0
        %v2459 = vadd.f32 0.0, %v2458
        %v2460 = vpop.f32.mrb[0].mxu0
        %2461 = vmatprep.mubr.bf16.mxu0 0
        %2462 = vmatmul.mubr.bf16.gmra.mrb[0].mxu0 %v2362
        %v2463 = vpop.f32.mrb[0].mxu0
        %v2464 = vadd.f32 0.0, %v2463
        %v2465 = vpop.f32.mrb[0].mxu0
        %v2466 = vpop.f32.mrb[0].mxu0
        %v2467 = vadd.f32 0.0, %v2466
        %v2468 = vpop.f32.mrb[0].mxu0
        %2469 = vmatprep.mubr.bf16.mxu0 0
        %2470 = vmatmul.mubr.bf16.gmra.mrb[0].mxu0 %v2365
        %v2471 = vpop.f32.mrb[0].mxu0
        %v2472 = vadd.f32 0.0, %v2471
        %v2473 = vpop.f32.mrb[0].mxu0
        %v2474 = vpop.f32.mrb[0].mxu0
        %v2475 = vadd.f32 0.0, %v2474
        %v2476 = vpop.f32.mrb[0].mxu0
        %2477 = vmatprep.mubr.bf16.mxu0 0
        %2478 = vmatmul.mubr.bf16.gmra.mrb[0].mxu0 %v2368
        %v2479 = vpop.f32.mrb[0].mxu0
        %v2480 = vadd.f32 0.0, %v2479
        %v2481 = vpop.f32.mrb[0].mxu0
        %v2482 = vpop.f32.mrb[0].mxu0
        %v2483 = vadd.f32 0.0, %v2482
        %v2484 = vpop.f32.mrb[0].mxu0
        %2485 = vmatprep.mubr.bf16.mxu0 0
        %2486 = vmatmul.mubr.bf16.gmra.mrb[0].mxu0 %v2371
        %v2487 = vpop.f32.mrb[0].mxu0
        %v2488 = vadd.f32 0.0, %v2487
        %v2489 = vpop.f32.mrb[0].mxu0
        %v2490 = vpop.f32.mrb[0].mxu0
        %v2491 = vadd.f32 0.0, %v2490
        %v2492 = vpop.f32.mrb[0].mxu0
        %2493 = vdwg.mxu0
        %v2495 = vsel %vm1768, %v1040, 0
        %v2498 = vsel %vm1768, %v1041, 0
        %v2501 = vsel %vm1768, %v1042, 0
        %v2504 = vsel %vm1768, %v1043, 0
        %v2507 = vsel %vm1768, %v1044, 0
        %v2510 = vsel %vm1768, %v1045, 0
        %v2513 = vsel %vm1768, %v1046, 0
        %v2516 = vsel %vm1768, %v1047, 0
        %v2519 = vsel %vm1768, %v1680, 0
        %v2522 = vsel %vm1768, %v1681, 0
        %v2525 = vsel %vm1768, %v1682, 0
        %v2528 = vsel %vm1768, %v1683, 0
        %v2531 = vsel %vm1768, %v1684, 0
        %v2534 = vsel %vm1768, %v1685, 0
        %v2537 = vsel %vm1768, %v1686, 0
        %v2540 = vsel %vm1768, %v1687, 0
        %2542 = vmatprep.subr.bf16.mxu0 0
        %2543 = vmatpush1.bf16.xpose.msra.mxu0 %v2519
        %2544 = vmatprep.subr.bf16.mxu0 0
        %2545 = vmatpush1.bf16.xpose.msra.mxu0 %v2522
        %2546 = vmatprep.subr.bf16.mxu0 0
        %2547 = vmatpush1.bf16.xpose.msra.mxu0 %v2525
        %2548 = vmatprep.subr.bf16.mxu0 0
        %2549 = vmatpush1.bf16.xpose.msra.mxu0 %v2528
        %2550 = vmatprep.subr.bf16.mxu0 0
        %2551 = vmatpush1.bf16.xpose.msra.mxu0 %v2531
        %2552 = vmatprep.subr.bf16.mxu0 0
        %2553 = vmatpush1.bf16.xpose.msra.mxu0 %v2534
        %2554 = vmatprep.subr.bf16.mxu0 0
        %2555 = vmatpush1.bf16.xpose.msra.mxu0 %v2537
        %2556 = vmatprep.subr.bf16.mxu0 0
        %2557 = vmatpush1.bf16.xpose.msra.mxu0 %v2540
        %2558 = vmatprep.subr.bf16.mxu0 0
        %2559 = vmatpush1.bf16.xpose.msra.mxu0 0
        %2560 = vmatprep.subr.bf16.mxu0 0
        %2561 = vmatpush1.bf16.xpose.msra.mxu0 0
        %2562 = vmatprep.subr.bf16.mxu0 0
        %2563 = vmatpush1.bf16.xpose.msra.mxu0 0
        %2564 = vmatprep.subr.bf16.mxu0 0
        %2565 = vmatpush1.bf16.xpose.msra.mxu0 0
        %2566 = vmatprep.subr.bf16.mxu0 0
        %2567 = vmatpush1.bf16.xpose.msra.mxu0 0
        %2568 = vmatprep.subr.bf16.mxu0 0
        %2569 = vmatpush1.bf16.xpose.msra.mxu0 0
        %2570 = vmatprep.subr.bf16.mxu0 0
        %2571 = vmatpush1.bf16.xpose.msra.mxu0 0
        %2572 = vmatprep.subr.bf16.mxu0 0
        %2573 = vmatpush1.bf16.xpose.msra.mxu0 0
        %2574 = vmatprep.mubr.bf16.mxu0 0
        %2575 = vmatmul.mubr.bf16.gmra.mrb[0].mxu0 %v2495
        %v2576 = vpop.f32.mrb[0].mxu0
        %v2577 = vadd.f32 0.0, %v2576
        %v2578 = vpop.f32.mrb[0].mxu0
        %v2579 = vpop.f32.mrb[0].mxu0
        %v2580 = vadd.f32 0.0, %v2579
        %v2581 = vpop.f32.mrb[0].mxu0
        %2582 = vmatprep.mubr.bf16.mxu0 0
        %2583 = vmatmul.mubr.bf16.gmra.mrb[0].mxu0 %v2498
        %v2584 = vpop.f32.mrb[0].mxu0
        %v2585 = vadd.f32 0.0, %v2584
        %v2586 = vpop.f32.mrb[0].mxu0
        %v2587 = vpop.f32.mrb[0].mxu0
        %v2588 = vadd.f32 0.0, %v2587
        %v2589 = vpop.f32.mrb[0].mxu0
        %2590 = vmatprep.mubr.bf16.mxu0 0
        %2591 = vmatmul.mubr.bf16.gmra.mrb[0].mxu0 %v2501
        %v2592 = vpop.f32.mrb[0].mxu0
        %v2593 = vadd.f32 0.0, %v2592
        %v2594 = vpop.f32.mrb[0].mxu0
        %v2595 = vpop.f32.mrb[0].mxu0
        %v2596 = vadd.f32 0.0, %v2595
        %v2597 = vpop.f32.mrb[0].mxu0
        %2598 = vmatprep.mubr.bf16.mxu0 0
        %2599 = vmatmul.mubr.bf16.gmra.mrb[0].mxu0 %v2504
        %v2600 = vpop.f32.mrb[0].mxu0
        %v2601 = vadd.f32 0.0, %v2600
        %v2602 = vpop.f32.mrb[0].mxu0
        %v2603 = vpop.f32.mrb[0].mxu0
        %v2604 = vadd.f32 0.0, %v2603
        %v2605 = vpop.f32.mrb[0].mxu0
        %2606 = vmatprep.mubr.bf16.mxu0 0
        %2607 = vmatmul.mubr.bf16.gmra.mrb[0].mxu0 %v2507
        %v2608 = vpop.f32.mrb[0].mxu0
        %v2609 = vadd.f32 0.0, %v2608
        %v2610 = vpop.f32.mrb[0].mxu0
        %v2611 = vpop.f32.mrb[0].mxu0
        %v2612 = vadd.f32 0.0, %v2611
        %v2613 = vpop.f32.mrb[0].mxu0
        %2614 = vmatprep.mubr.bf16.mxu0 0
        %2615 = vmatmul.mubr.bf16.gmra.mrb[0].mxu0 %v2510
        %v2616 = vpop.f32.mrb[0].mxu0
        %v2617 = vadd.f32 0.0, %v2616
        %v2618 = vpop.f32.mrb[0].mxu0
        %v2619 = vpop.f32.mrb[0].mxu0
        %v2620 = vadd.f32 0.0, %v2619
        %v2621 = vpop.f32.mrb[0].mxu0
        %2622 = vmatprep.mubr.bf16.mxu0 0
        %2623 = vmatmul.mubr.bf16.gmra.mrb[0].mxu0 %v2513
        %v2624 = vpop.f32.mrb[0].mxu0
        %v2625 = vadd.f32 0.0, %v2624
        %v2626 = vpop.f32.mrb[0].mxu0
        %v2627 = vpop.f32.mrb[0].mxu0
        %v2628 = vadd.f32 0.0, %v2627
        %v2629 = vpop.f32.mrb[0].mxu0
        %2630 = vmatprep.mubr.bf16.mxu0 0
        %2631 = vmatmul.mubr.bf16.gmra.mrb[0].mxu0 %v2516
        %v2632 = vpop.f32.mrb[0].mxu0
        %v2633 = vadd.f32 0.0, %v2632
        %v2634 = vpop.f32.mrb[0].mxu0
        %v2635 = vpop.f32.mrb[0].mxu0
        %v2636 = vadd.f32 0.0, %v2635
        %v2637 = vpop.f32.mrb[0].mxu0
        %2638 = vdwg.mxu0
        %v2640 = vsel %vm1768, %v1048, 0
        %v2643 = vsel %vm1768, %v1049, 0
        %v2646 = vsel %vm1768, %v1050, 0
        %v2649 = vsel %vm1768, %v1051, 0
        %v2652 = vsel %vm1768, %v1052, 0
        %v2655 = vsel %vm1768, %v1053, 0
        %v2658 = vsel %vm1768, %v1054, 0
        %v2661 = vsel %vm1768, %v1055, 0
        %v2664 = vsel %vm1768, %v1688, 0
        %v2667 = vsel %vm1768, %v1689, 0
        %v2670 = vsel %vm1768, %v1690, 0
        %v2673 = vsel %vm1768, %v1691, 0
        %v2676 = vsel %vm1768, %v1692, 0
        %v2679 = vsel %vm1768, %v1693, 0
        %v2682 = vsel %vm1768, %v1694, 0
        %v2685 = vsel %vm1768, %v1695, 0
        %2687 = vmatprep.subr.bf16.mxu0 0
        %2688 = vmatpush1.bf16.xpose.msra.mxu0 %v2664
        %2689 = vmatprep.subr.bf16.mxu0 0
        %2690 = vmatpush1.bf16.xpose.msra.mxu0 %v2667
        %2691 = vmatprep.subr.bf16.mxu0 0
        %2692 = vmatpush1.bf16.xpose.msra.mxu0 %v2670
        %2693 = vmatprep.subr.bf16.mxu0 0
        %2694 = vmatpush1.bf16.xpose.msra.mxu0 %v2673
        %2695 = vmatprep.subr.bf16.mxu0 0
        %2696 = vmatpush1.bf16.xpose.msra.mxu0 %v2676
        %2697 = vmatprep.subr.bf16.mxu0 0
        %2698 = vmatpush1.bf16.xpose.msra.mxu0 %v2679
        %2699 = vmatprep.subr.bf16.mxu0 0
        %2700 = vmatpush1.bf16.xpose.msra.mxu0 %v2682
        %2701 = vmatprep.subr.bf16.mxu0 0
        %2702 = vmatpush1.bf16.xpose.msra.mxu0 %v2685
        %2703 = vmatprep.subr.bf16.mxu0 0
        %2704 = vmatpush1.bf16.xpose.msra.mxu0 0
        %2705 = vmatprep.subr.bf16.mxu0 0
        %2706 = vmatpush1.bf16.xpose.msra.mxu0 0
        %2707 = vmatprep.subr.bf16.mxu0 0
        %2708 = vmatpush1.bf16.xpose.msra.mxu0 0
        %2709 = vmatprep.subr.bf16.mxu0 0
        %2710 = vmatpush1.bf16.xpose.msra.mxu0 0
        %2711 = vmatprep.subr.bf16.mxu0 0
        %2712 = vmatpush1.bf16.xpose.msra.mxu0 0
        %2713 = vmatprep.subr.bf16.mxu0 0
        %2714 = vmatpush1.bf16.xpose.msra.mxu0 0
        %2715 = vmatprep.subr.bf16.mxu0 0
        %2716 = vmatpush1.bf16.xpose.msra.mxu0 0
        %2717 = vmatprep.subr.bf16.mxu0 0
        %2718 = vmatpush1.bf16.xpose.msra.mxu0 0
        %2719 = vmatprep.mubr.bf16.mxu0 0
        %2720 = vmatmul.mubr.bf16.gmra.mrb[0].mxu0 %v2640
        %v2721 = vpop.f32.mrb[0].mxu0
        %v2722 = vadd.f32 0.0, %v2721
        %v2723 = vpop.f32.mrb[0].mxu0
        %v2724 = vpop.f32.mrb[0].mxu0
        %v2725 = vadd.f32 0.0, %v2724
        %v2726 = vpop.f32.mrb[0].mxu0
        %2727 = vmatprep.mubr.bf16.mxu0 0
        %2728 = vmatmul.mubr.bf16.gmra.mrb[0].mxu0 %v2643
        %v2729 = vpop.f32.mrb[0].mxu0
        %v2730 = vadd.f32 0.0, %v2729
        %v2731 = vpop.f32.mrb[0].mxu0
        %v2732 = vpop.f32.mrb[0].mxu0
        %v2733 = vadd.f32 0.0, %v2732
        %v2734 = vpop.f32.mrb[0].mxu0
        %2735 = vmatprep.mubr.bf16.mxu0 0
        %2736 = vmatmul.mubr.bf16.gmra.mrb[0].mxu0 %v2646
        %v2737 = vpop.f32.mrb[0].mxu0
        %v2738 = vadd.f32 0.0, %v2737
        %v2739 = vpop.f32.mrb[0].mxu0
        %v2740 = vpop.f32.mrb[0].mxu0
        %v2741 = vadd.f32 0.0, %v2740
        %v2742 = vpop.f32.mrb[0].mxu0
        %2743 = vmatprep.mubr.bf16.mxu0 0
        %2744 = vmatmul.mubr.bf16.gmra.mrb[0].mxu0 %v2649
        %v2745 = vpop.f32.mrb[0].mxu0
        %v2746 = vadd.f32 0.0, %v2745
        %v2747 = vpop.f32.mrb[0].mxu0
        %v2748 = vpop.f32.mrb[0].mxu0
        %v2749 = vadd.f32 0.0, %v2748
        %v2750 = vpop.f32.mrb[0].mxu0
        %2751 = vmatprep.mubr.bf16.mxu0 0
        %2752 = vmatmul.mubr.bf16.gmra.mrb[0].mxu0 %v2652
        %v2753 = vpop.f32.mrb[0].mxu0
        %v2754 = vadd.f32 0.0, %v2753
        %v2755 = vpop.f32.mrb[0].mxu0
        %v2756 = vpop.f32.mrb[0].mxu0
        %v2757 = vadd.f32 0.0, %v2756
        %v2758 = vpop.f32.mrb[0].mxu0
        %2759 = vmatprep.mubr.bf16.mxu0 0
        %2760 = vmatmul.mubr.bf16.gmra.mrb[0].mxu0 %v2655
        %v2761 = vpop.f32.mrb[0].mxu0
        %v2762 = vadd.f32 0.0, %v2761
        %v2763 = vpop.f32.mrb[0].mxu0
        %v2764 = vpop.f32.mrb[0].mxu0
        %v2765 = vadd.f32 0.0, %v2764
        %v2766 = vpop.f32.mrb[0].mxu0
        %2767 = vmatprep.mubr.bf16.mxu0 0
        %2768 = vmatmul.mubr.bf16.gmra.mrb[0].mxu0 %v2658
        %v2769 = vpop.f32.mrb[0].mxu0
        %v2770 = vadd.f32 0.0, %v2769
        %v2771 = vpop.f32.mrb[0].mxu0
        %v2772 = vpop.f32.mrb[0].mxu0
        %v2773 = vadd.f32 0.0, %v2772
        %v2774 = vpop.f32.mrb[0].mxu0
        %2775 = vmatprep.mubr.bf16.mxu0 0
        %2776 = vmatmul.mubr.bf16.gmra.mrb[0].mxu0 %v2661
        %v2777 = vpop.f32.mrb[0].mxu0
        %v2778 = vadd.f32 0.0, %v2777
        %v2779 = vpop.f32.mrb[0].mxu0
        %v2780 = vpop.f32.mrb[0].mxu0
        %v2781 = vadd.f32 0.0, %v2780
        %v2782 = vpop.f32.mrb[0].mxu0
        %2783 = vdwg.mxu0
        %v2785 = vsel %vm1768, %v1056, 0
        %v2788 = vsel %vm1768, %v1057, 0
        %v2791 = vsel %vm1768, %v1058, 0
        %v2794 = vsel %vm1768, %v1059, 0
        %v2797 = vsel %vm1768, %v1060, 0
        %v2800 = vsel %vm1768, %v1061, 0
        %v2803 = vsel %vm1768, %v1062, 0
        %v2806 = vsel %vm1768, %v1063, 0
        %v2809 = vsel %vm1768, %v1696, 0
        %v2812 = vsel %vm1768, %v1697, 0
        %v2815 = vsel %vm1768, %v1698, 0
        %v2818 = vsel %vm1768, %v1699, 0
        %v2821 = vsel %vm1768, %v1700, 0
        %v2824 = vsel %vm1768, %v1701, 0
        %v2827 = vsel %vm1768, %v1702, 0
        %v2830 = vsel %vm1768, %v1703, 0
        %2832 = vmatprep.subr.bf16.mxu0 0
        %2833 = vmatpush1.bf16.xpose.msra.mxu0 %v2809
        %2834 = vmatprep.subr.bf16.mxu0 0
        %2835 = vmatpush1.bf16.xpose.msra.mxu0 %v2812
        %2836 = vmatprep.subr.bf16.mxu0 0
        %2837 = vmatpush1.bf16.xpose.msra.mxu0 %v2815
        %2838 = vmatprep.subr.bf16.mxu0 0
        %2839 = vmatpush1.bf16.xpose.msra.mxu0 %v2818
        %2840 = vmatprep.subr.bf16.mxu0 0
        %2841 = vmatpush1.bf16.xpose.msra.mxu0 %v2821
        %2842 = vmatprep.subr.bf16.mxu0 0
        %2843 = vmatpush1.bf16.xpose.msra.mxu0 %v2824
        %2844 = vmatprep.subr.bf16.mxu0 0
        %2845 = vmatpush1.bf16.xpose.msra.mxu0 %v2827
        %2846 = vmatprep.subr.bf16.mxu0 0
        %2847 = vmatpush1.bf16.xpose.msra.mxu0 %v2830
        %2848 = vmatprep.subr.bf16.mxu0 0
        %2849 = vmatpush1.bf16.xpose.msra.mxu0 0
        %2850 = vmatprep.subr.bf16.mxu0 0
        %2851 = vmatpush1.bf16.xpose.msra.mxu0 0
        %2852 = vmatprep.subr.bf16.mxu0 0
        %2853 = vmatpush1.bf16.xpose.msra.mxu0 0
        %2854 = vmatprep.subr.bf16.mxu0 0
        %2855 = vmatpush1.bf16.xpose.msra.mxu0 0
        %2856 = vmatprep.subr.bf16.mxu0 0
        %2857 = vmatpush1.bf16.xpose.msra.mxu0 0
        %2858 = vmatprep.subr.bf16.mxu0 0
        %2859 = vmatpush1.bf16.xpose.msra.mxu0 0
        %2860 = vmatprep.subr.bf16.mxu0 0
        %2861 = vmatpush1.bf16.xpose.msra.mxu0 0
        %2862 = vmatprep.subr.bf16.mxu0 0
        %2863 = vmatpush1.bf16.xpose.msra.mxu0 0
        %2864 = vmatprep.mubr.bf16.mxu0 0
        %2865 = vmatmul.mubr.bf16.gmra.mrb[0].mxu0 %v2785
        %v2866 = vpop.f32.mrb[0].mxu0
        %v2867 = vadd.f32 0.0, %v2866
        %v2868 = vpop.f32.mrb[0].mxu0
        %v2869 = vpop.f32.mrb[0].mxu0
        %v2870 = vadd.f32 0.0, %v2869
        %v2871 = vpop.f32.mrb[0].mxu0
        %2872 = vmatprep.mubr.bf16.mxu0 0
        %2873 = vmatmul.mubr.bf16.gmra.mrb[0].mxu0 %v2788
        %v2874 = vpop.f32.mrb[0].mxu0
        %v2875 = vadd.f32 0.0, %v2874
        %v2876 = vpop.f32.mrb[0].mxu0
        %v2877 = vpop.f32.mrb[0].mxu0
        %v2878 = vadd.f32 0.0, %v2877
        %v2879 = vpop.f32.mrb[0].mxu0
        %2880 = vmatprep.mubr.bf16.mxu0 0
        %2881 = vmatmul.mubr.bf16.gmra.mrb[0].mxu0 %v2791
        %v2882 = vpop.f32.mrb[0].mxu0
        %v2883 = vadd.f32 0.0, %v2882
        %v2884 = vpop.f32.mrb[0].mxu0
        %v2885 = vpop.f32.mrb[0].mxu0
        %v2886 = vadd.f32 0.0, %v2885
        %v2887 = vpop.f32.mrb[0].mxu0
        %2888 = vmatprep.mubr.bf16.mxu0 0
        %2889 = vmatmul.mubr.bf16.gmra.mrb[0].mxu0 %v2794
        %v2890 = vpop.f32.mrb[0].mxu0
        %v2891 = vadd.f32 0.0, %v2890
        %v2892 = vpop.f32.mrb[0].mxu0
        %v2893 = vpop.f32.mrb[0].mxu0
        %v2894 = vadd.f32 0.0, %v2893
        %v2895 = vpop.f32.mrb[0].mxu0
        %2896 = vmatprep.mubr.bf16.mxu0 0
        %2897 = vmatmul.mubr.bf16.gmra.mrb[0].mxu0 %v2797
        %v2898 = vpop.f32.mrb[0].mxu0
        %v2899 = vadd.f32 0.0, %v2898
        %v2900 = vpop.f32.mrb[0].mxu0
        %v2901 = vpop.f32.mrb[0].mxu0
        %v2902 = vadd.f32 0.0, %v2901
        %v2903 = vpop.f32.mrb[0].mxu0
        %2904 = vmatprep.mubr.bf16.mxu0 0
        %2905 = vmatmul.mubr.bf16.gmra.mrb[0].mxu0 %v2800
        %v2906 = vpop.f32.mrb[0].mxu0
        %v2907 = vadd.f32 0.0, %v2906
        %v2908 = vpop.f32.mrb[0].mxu0
        %v2909 = vpop.f32.mrb[0].mxu0
        %v2910 = vadd.f32 0.0, %v2909
        %v2911 = vpop.f32.mrb[0].mxu0
        %2912 = vmatprep.mubr.bf16.mxu0 0
        %2913 = vmatmul.mubr.bf16.gmra.mrb[0].mxu0 %v2803
        %v2914 = vpop.f32.mrb[0].mxu0
        %v2915 = vadd.f32 0.0, %v2914
        %v2916 = vpop.f32.mrb[0].mxu0
        %v2917 = vpop.f32.mrb[0].mxu0
        %v2918 = vadd.f32 0.0, %v2917
        %v2919 = vpop.f32.mrb[0].mxu0
        %2920 = vmatprep.mubr.bf16.mxu0 0
        %2921 = vmatmul.mubr.bf16.gmra.mrb[0].mxu0 %v2806
        %v2922 = vpop.f32.mrb[0].mxu0
        %v2923 = vadd.f32 0.0, %v2922
        %v2924 = vpop.f32.mrb[0].mxu0
        %v2925 = vpop.f32.mrb[0].mxu0
        %v2926 = vadd.f32 0.0, %v2925
        %v2927 = vpop.f32.mrb[0].mxu0
        %2928 = vdwg.mxu0
        %v2930 = vsel %vm1768, %v1064, 0
        %v2933 = vsel %vm1768, %v1065, 0
        %v2936 = vsel %vm1768, %v1066, 0
        %v2939 = vsel %vm1768, %v1067, 0
        %v2942 = vsel %vm1768, %v1068, 0
        %v2945 = vsel %vm1768, %v1069, 0
        %v2948 = vsel %vm1768, %v1070, 0
        %v2951 = vsel %vm1768, %v1071, 0
        %v2954 = vsel %vm1768, %v1704, 0
        %v2957 = vsel %vm1768, %v1705, 0
        %v2960 = vsel %vm1768, %v1706, 0
        %v2963 = vsel %vm1768, %v1707, 0
        %v2966 = vsel %vm1768, %v1708, 0
        %v2969 = vsel %vm1768, %v1709, 0
        %v2972 = vsel %vm1768, %v1710, 0
        %v2975 = vsel %vm1768, %v1711, 0
        %2977 = vmatprep.subr.bf16.mxu0 0
        %2978 = vmatpush1.bf16.xpose.msra.mxu0 %v2954
        %2979 = vmatprep.subr.bf16.mxu0 0
        %2980 = vmatpush1.bf16.xpose.msra.mxu0 %v2957
        %2981 = vmatprep.subr.bf16.mxu0 0
        %2982 = vmatpush1.bf16.xpose.msra.mxu0 %v2960
        %2983 = vmatprep.subr.bf16.mxu0 0
        %2984 = vmatpush1.bf16.xpose.msra.mxu0 %v2963
        %2985 = vmatprep.subr.bf16.mxu0 0
        %2986 = vmatpush1.bf16.xpose.msra.mxu0 %v2966
        %2987 = vmatprep.subr.bf16.mxu0 0
        %2988 = vmatpush1.bf16.xpose.msra.mxu0 %v2969
        %2989 = vmatprep.subr.bf16.mxu0 0
        %2990 = vmatpush1.bf16.xpose.msra.mxu0 %v2972
        %2991 = vmatprep.subr.bf16.mxu0 0
        %2992 = vmatpush1.bf16.xpose.msra.mxu0 %v2975
        %2993 = vmatprep.subr.bf16.mxu0 0
        %2994 = vmatpush1.bf16.xpose.msra.mxu0 0
        %2995 = vmatprep.subr.bf16.mxu0 0
        %2996 = vmatpush1.bf16.xpose.msra.mxu0 0
        %2997 = vmatprep.subr.bf16.mxu0 0
        %2998 = vmatpush1.bf16.xpose.msra.mxu0 0
        %2999 = vmatprep.subr.bf16.mxu0 0
        %3000 = vmatpush1.bf16.xpose.msra.mxu0 0
        %3001 = vmatprep.subr.bf16.mxu0 0
        %3002 = vmatpush1.bf16.xpose.msra.mxu0 0
        %3003 = vmatprep.subr.bf16.mxu0 0
        %3004 = vmatpush1.bf16.xpose.msra.mxu0 0
        %3005 = vmatprep.subr.bf16.mxu0 0
        %3006 = vmatpush1.bf16.xpose.msra.mxu0 0
        %3007 = vmatprep.subr.bf16.mxu0 0
        %3008 = vmatpush1.bf16.xpose.msra.mxu0 0
        %3009 = vmatprep.mubr.bf16.mxu0 0
        %3010 = vmatmul.mubr.bf16.gmra.mrb[0].mxu0 %v2930
        %v3011 = vpop.f32.mrb[0].mxu0
        %v3012 = vadd.f32 0.0, %v3011
        %v3013 = vpop.f32.mrb[0].mxu0
        %v3014 = vpop.f32.mrb[0].mxu0
        %v3015 = vadd.f32 0.0, %v3014
        %v3016 = vpop.f32.mrb[0].mxu0
        %3017 = vmatprep.mubr.bf16.mxu0 0
        %3018 = vmatmul.mubr.bf16.gmra.mrb[0].mxu0 %v2933
        %v3019 = vpop.f32.mrb[0].mxu0
        %v3020 = vadd.f32 0.0, %v3019
        %v3021 = vpop.f32.mrb[0].mxu0
        %v3022 = vpop.f32.mrb[0].mxu0
        %v3023 = vadd.f32 0.0, %v3022
        %v3024 = vpop.f32.mrb[0].mxu0
        %3025 = vmatprep.mubr.bf16.mxu0 0
        %3026 = vmatmul.mubr.bf16.gmra.mrb[0].mxu0 %v2936
        %v3027 = vpop.f32.mrb[0].mxu0
        %v3028 = vadd.f32 0.0, %v3027
        %v3029 = vpop.f32.mrb[0].mxu0
        %v3030 = vpop.f32.mrb[0].mxu0
        %v3031 = vadd.f32 0.0, %v3030
        %v3032 = vpop.f32.mrb[0].mxu0
        %3033 = vmatprep.mubr.bf16.mxu0 0
        %3034 = vmatmul.mubr.bf16.gmra.mrb[0].mxu0 %v2939
        %v3035 = vpop.f32.mrb[0].mxu0
        %v3036 = vadd.f32 0.0, %v3035
        %v3037 = vpop.f32.mrb[0].mxu0
        %v3038 = vpop.f32.mrb[0].mxu0
        %v3039 = vadd.f32 0.0, %v3038
        %v3040 = vpop.f32.mrb[0].mxu0
        %3041 = vmatprep.mubr.bf16.mxu0 0
        %3042 = vmatmul.mubr.bf16.gmra.mrb[0].mxu0 %v2942
        %v3043 = vpop.f32.mrb[0].mxu0
        %v3044 = vadd.f32 0.0, %v3043
        %v3045 = vpop.f32.mrb[0].mxu0
        %v3046 = vpop.f32.mrb[0].mxu0
        %v3047 = vadd.f32 0.0, %v3046
        %v3048 = vpop.f32.mrb[0].mxu0
        %3049 = vmatprep.mubr.bf16.mxu0 0
        %3050 = vmatmul.mubr.bf16.gmra.mrb[0].mxu0 %v2945
        %v3051 = vpop.f32.mrb[0].mxu0
        %v3052 = vadd.f32 0.0, %v3051
        %v3053 = vpop.f32.mrb[0].mxu0
        %v3054 = vpop.f32.mrb[0].mxu0
        %v3055 = vadd.f32 0.0, %v3054
        %v3056 = vpop.f32.mrb[0].mxu0
        %3057 = vmatprep.mubr.bf16.mxu0 0
        %3058 = vmatmul.mubr.bf16.gmra.mrb[0].mxu0 %v2948
        %v3059 = vpop.f32.mrb[0].mxu0
        %v3060 = vadd.f32 0.0, %v3059
        %v3061 = vpop.f32.mrb[0].mxu0
        %v3062 = vpop.f32.mrb[0].mxu0
        %v3063 = vadd.f32 0.0, %v3062
        %v3064 = vpop.f32.mrb[0].mxu0
        %3065 = vmatprep.mubr.bf16.mxu0 0
        %3066 = vmatmul.mubr.bf16.gmra.mrb[0].mxu0 %v2951
        %v3067 = vpop.f32.mrb[0].mxu0
        %v3068 = vadd.f32 0.0, %v3067
        %v3069 = vpop.f32.mrb[0].mxu0
        %v3070 = vpop.f32.mrb[0].mxu0
        %v3071 = vadd.f32 0.0, %v3070
        %v3072 = vpop.f32.mrb[0].mxu0
        %3073 = vdwg.mxu0
        %v3075 = vsel %vm1768, %v1072, 0
        %v3078 = vsel %vm1768, %v1073, 0
        %v3081 = vsel %vm1768, %v1074, 0
        %v3084 = vsel %vm1768, %v1075, 0
        %v3087 = vsel %vm1768, %v1076, 0
        %v3090 = vsel %vm1768, %v1077, 0
        %v3093 = vsel %vm1768, %v1078, 0
        %v3096 = vsel %vm1768, %v1079, 0
        %v3099 = vsel %vm1768, %v1712, 0
        %v3102 = vsel %vm1768, %v1713, 0
        %v3105 = vsel %vm1768, %v1714, 0
        %v3108 = vsel %vm1768, %v1715, 0
        %v3111 = vsel %vm1768, %v1716, 0
        %v3114 = vsel %vm1768, %v1717, 0
        %v3117 = vsel %vm1768, %v1718, 0
        %v3120 = vsel %vm1768, %v1719, 0
        %3122 = vmatprep.subr.bf16.mxu0 0
        %3123 = vmatpush1.bf16.xpose.msra.mxu0 %v3099
        %3124 = vmatprep.subr.bf16.mxu0 0
        %3125 = vmatpush1.bf16.xpose.msra.mxu0 %v3102
        %3126 = vmatprep.subr.bf16.mxu0 0
        %3127 = vmatpush1.bf16.xpose.msra.mxu0 %v3105
        %3128 = vmatprep.subr.bf16.mxu0 0
        %3129 = vmatpush1.bf16.xpose.msra.mxu0 %v3108
        %3130 = vmatprep.subr.bf16.mxu0 0
        %3131 = vmatpush1.bf16.xpose.msra.mxu0 %v3111
        %3132 = vmatprep.subr.bf16.mxu0 0
        %3133 = vmatpush1.bf16.xpose.msra.mxu0 %v3114
        %3134 = vmatprep.subr.bf16.mxu0 0
        %3135 = vmatpush1.bf16.xpose.msra.mxu0 %v3117
        %3136 = vmatprep.subr.bf16.mxu0 0
        %3137 = vmatpush1.bf16.xpose.msra.mxu0 %v3120
        %3138 = vmatprep.subr.bf16.mxu0 0
        %3139 = vmatpush1.bf16.xpose.msra.mxu0 0
        %3140 = vmatprep.subr.bf16.mxu0 0
        %3141 = vmatpush1.bf16.xpose.msra.mxu0 0
        %3142 = vmatprep.subr.bf16.mxu0 0
        %3143 = vmatpush1.bf16.xpose.msra.mxu0 0
        %3144 = vmatprep.subr.bf16.mxu0 0
        %3145 = vmatpush1.bf16.xpose.msra.mxu0 0
        %3146 = vmatprep.subr.bf16.mxu0 0
        %3147 = vmatpush1.bf16.xpose.msra.mxu0 0
        %3148 = vmatprep.subr.bf16.mxu0 0
        %3149 = vmatpush1.bf16.xpose.msra.mxu0 0
        %3150 = vmatprep.subr.bf16.mxu0 0
        %3151 = vmatpush1.bf16.xpose.msra.mxu0 0
        %3152 = vmatprep.subr.bf16.mxu0 0
        %3153 = vmatpush1.bf16.xpose.msra.mxu0 0
        %3154 = vmatprep.mubr.bf16.mxu0 0
        %3155 = vmatmul.mubr.bf16.gmra.mrb[0].mxu0 %v3075
        %v3156 = vpop.f32.mrb[0].mxu0
        %v3157 = vadd.f32 0.0, %v3156
        %v3158 = vpop.f32.mrb[0].mxu0
        %v3159 = vpop.f32.mrb[0].mxu0
        %v3160 = vadd.f32 0.0, %v3159
        %v3161 = vpop.f32.mrb[0].mxu0
        %3162 = vmatprep.mubr.bf16.mxu0 0
        %3163 = vmatmul.mubr.bf16.gmra.mrb[0].mxu0 %v3078
        %v3164 = vpop.f32.mrb[0].mxu0
        %v3165 = vadd.f32 0.0, %v3164
        %v3166 = vpop.f32.mrb[0].mxu0
        %v3167 = vpop.f32.mrb[0].mxu0
        %v3168 = vadd.f32 0.0, %v3167
        %v3169 = vpop.f32.mrb[0].mxu0
        %3170 = vmatprep.mubr.bf16.mxu0 0
        %3171 = vmatmul.mubr.bf16.gmra.mrb[0].mxu0 %v3081
        %v3172 = vpop.f32.mrb[0].mxu0
        %v3173 = vadd.f32 0.0, %v3172
        %v3174 = vpop.f32.mrb[0].mxu0
        %v3175 = vpop.f32.mrb[0].mxu0
        %v3176 = vadd.f32 0.0, %v3175
        %v3177 = vpop.f32.mrb[0].mxu0
        %3178 = vmatprep.mubr.bf16.mxu0 0
        %3179 = vmatmul.mubr.bf16.gmra.mrb[0].mxu0 %v3084
        %v3180 = vpop.f32.mrb[0].mxu0
        %v3181 = vadd.f32 0.0, %v3180
        %v3182 = vpop.f32.mrb[0].mxu0
        %v3183 = vpop.f32.mrb[0].mxu0
        %v3184 = vadd.f32 0.0, %v3183
        %v3185 = vpop.f32.mrb[0].mxu0
        %3186 = vmatprep.mubr.bf16.mxu0 0
        %3187 = vmatmul.mubr.bf16.gmra.mrb[0].mxu0 %v3087
        %v3188 = vpop.f32.mrb[0].mxu0
        %v3189 = vadd.f32 0.0, %v3188
        %v3190 = vpop.f32.mrb[0].mxu0
        %v3191 = vpop.f32.mrb[0].mxu0
        %v3192 = vadd.f32 0.0, %v3191
        %v3193 = vpop.f32.mrb[0].mxu0
        %3194 = vmatprep.mubr.bf16.mxu0 0
        %3195 = vmatmul.mubr.bf16.gmra.mrb[0].mxu0 %v3090
        %v3196 = vpop.f32.mrb[0].mxu0
        %v3197 = vadd.f32 0.0, %v3196
        %v3198 = vpop.f32.mrb[0].mxu0
        %v3199 = vpop.f32.mrb[0].mxu0
        %v3200 = vadd.f32 0.0, %v3199
        %v3201 = vpop.f32.mrb[0].mxu0
        %3202 = vmatprep.mubr.bf16.mxu0 0
        %3203 = vmatmul.mubr.bf16.gmra.mrb[0].mxu0 %v3093
        %v3204 = vpop.f32.mrb[0].mxu0
        %v3205 = vadd.f32 0.0, %v3204
        %v3206 = vpop.f32.mrb[0].mxu0
        %v3207 = vpop.f32.mrb[0].mxu0
        %v3208 = vadd.f32 0.0, %v3207
        %v3209 = vpop.f32.mrb[0].mxu0
        %3210 = vmatprep.mubr.bf16.mxu0 0
        %3211 = vmatmul.mubr.bf16.gmra.mrb[0].mxu0 %v3096
        %v3212 = vpop.f32.mrb[0].mxu0
        %v3213 = vadd.f32 0.0, %v3212
        %v3214 = vpop.f32.mrb[0].mxu0
        %v3215 = vpop.f32.mrb[0].mxu0
        %v3216 = vadd.f32 0.0, %v3215
        %v3217 = vpop.f32.mrb[0].mxu0
        %3218 = vdwg.mxu0
        %v3220 = vsel %vm1768, %v1080, 0
        %v3223 = vsel %vm1768, %v1081, 0
        %v3226 = vsel %vm1768, %v1082, 0
        %v3229 = vsel %vm1768, %v1083, 0
        %v3232 = vsel %vm1768, %v1084, 0
        %v3235 = vsel %vm1768, %v1085, 0
        %v3238 = vsel %vm1768, %v1086, 0
        %v3241 = vsel %vm1768, %v1087, 0
        %v3244 = vsel %vm1768, %v1720, 0
        %v3247 = vsel %vm1768, %v1721, 0
        %v3250 = vsel %vm1768, %v1722, 0
        %v3253 = vsel %vm1768, %v1723, 0
        %v3256 = vsel %vm1768, %v1724, 0
        %v3259 = vsel %vm1768, %v1725, 0
        %v3262 = vsel %vm1768, %v1726, 0
        %v3265 = vsel %vm1768, %v1727, 0
        %3267 = vmatprep.subr.bf16.mxu0 0
        %3268 = vmatpush1.bf16.xpose.msra.mxu0 %v3244
        %3269 = vmatprep.subr.bf16.mxu0 0
        %3270 = vmatpush1.bf16.xpose.msra.mxu0 %v3247
        %3271 = vmatprep.subr.bf16.mxu0 0
        %3272 = vmatpush1.bf16.xpose.msra.mxu0 %v3250
        %3273 = vmatprep.subr.bf16.mxu0 0
        %3274 = vmatpush1.bf16.xpose.msra.mxu0 %v3253
        %3275 = vmatprep.subr.bf16.mxu0 0
        %3276 = vmatpush1.bf16.xpose.msra.mxu0 %v3256
        %3277 = vmatprep.subr.bf16.mxu0 0
        %3278 = vmatpush1.bf16.xpose.msra.mxu0 %v3259
        %3279 = vmatprep.subr.bf16.mxu0 0
        %3280 = vmatpush1.bf16.xpose.msra.mxu0 %v3262
        %3281 = vmatprep.subr.bf16.mxu0 0
        %3282 = vmatpush1.bf16.xpose.msra.mxu0 %v3265
        %3283 = vmatprep.subr.bf16.mxu0 0
        %3284 = vmatpush1.bf16.xpose.msra.mxu0 0
        %3285 = vmatprep.subr.bf16.mxu0 0
        %3286 = vmatpush1.bf16.xpose.msra.mxu0 0
        %3287 = vmatprep.subr.bf16.mxu0 0
        %3288 = vmatpush1.bf16.xpose.msra.mxu0 0
        %3289 = vmatprep.subr.bf16.mxu0 0
        %3290 = vmatpush1.bf16.xpose.msra.mxu0 0
        %3291 = vmatprep.subr.bf16.mxu0 0
        %3292 = vmatpush1.bf16.xpose.msra.mxu0 0
        %3293 = vmatprep.subr.bf16.mxu0 0
        %3294 = vmatpush1.bf16.xpose.msra.mxu0 0
        %3295 = vmatprep.subr.bf16.mxu0 0
        %3296 = vmatpush1.bf16.xpose.msra.mxu0 0
        %3297 = vmatprep.subr.bf16.mxu0 0
        %3298 = vmatpush1.bf16.xpose.msra.mxu0 0
        %3299 = vmatprep.mubr.bf16.mxu0 0
        %3300 = vmatmul.mubr.bf16.gmra.mrb[0].mxu0 %v3220
        %v3301 = vpop.f32.mrb[0].mxu0
        %v3302 = vadd.f32 0.0, %v3301
        %v3303 = vpop.f32.mrb[0].mxu0
        %v3304 = vpop.f32.mrb[0].mxu0
        %v3305 = vadd.f32 0.0, %v3304
        %v3306 = vpop.f32.mrb[0].mxu0
        %3307 = vmatprep.mubr.bf16.mxu0 0
        %3308 = vmatmul.mubr.bf16.gmra.mrb[0].mxu0 %v3223
        %v3309 = vpop.f32.mrb[0].mxu0
        %v3310 = vadd.f32 0.0, %v3309
        %v3311 = vpop.f32.mrb[0].mxu0
        %v3312 = vpop.f32.mrb[0].mxu0
        %v3313 = vadd.f32 0.0, %v3312
        %v3314 = vpop.f32.mrb[0].mxu0
        %3315 = vmatprep.mubr.bf16.mxu0 0
        %3316 = vmatmul.mubr.bf16.gmra.mrb[0].mxu0 %v3226
        %v3317 = vpop.f32.mrb[0].mxu0
        %v3318 = vadd.f32 0.0, %v3317
        %v3319 = vpop.f32.mrb[0].mxu0
        %v3320 = vpop.f32.mrb[0].mxu0
        %v3321 = vadd.f32 0.0, %v3320
        %v3322 = vpop.f32.mrb[0].mxu0
        %3323 = vmatprep.mubr.bf16.mxu0 0
        %3324 = vmatmul.mubr.bf16.gmra.mrb[0].mxu0 %v3229
        %v3325 = vpop.f32.mrb[0].mxu0
        %v3326 = vadd.f32 0.0, %v3325
        %v3327 = vpop.f32.mrb[0].mxu0
        %v3328 = vpop.f32.mrb[0].mxu0
        %v3329 = vadd.f32 0.0, %v3328
        %v3330 = vpop.f32.mrb[0].mxu0
        %3331 = vmatprep.mubr.bf16.mxu0 0
        %3332 = vmatmul.mubr.bf16.gmra.mrb[0].mxu0 %v3232
        %v3333 = vpop.f32.mrb[0].mxu0
        %v3334 = vadd.f32 0.0, %v3333
        %v3335 = vpop.f32.mrb[0].mxu0
        %v3336 = vpop.f32.mrb[0].mxu0
        %v3337 = vadd.f32 0.0, %v3336
        %v3338 = vpop.f32.mrb[0].mxu0
        %3339 = vmatprep.mubr.bf16.mxu0 0
        %3340 = vmatmul.mubr.bf16.gmra.mrb[0].mxu0 %v3235
        %v3341 = vpop.f32.mrb[0].mxu0
        %v3342 = vadd.f32 0.0, %v3341
        %v3343 = vpop.f32.mrb[0].mxu0
        %v3344 = vpop.f32.mrb[0].mxu0
        %v3345 = vadd.f32 0.0, %v3344
        %v3346 = vpop.f32.mrb[0].mxu0
        %3347 = vmatprep.mubr.bf16.mxu0 0
        %3348 = vmatmul.mubr.bf16.gmra.mrb[0].mxu0 %v3238
        %v3349 = vpop.f32.mrb[0].mxu0
        %v3350 = vadd.f32 0.0, %v3349
        %v3351 = vpop.f32.mrb[0].mxu0
        %v3352 = vpop.f32.mrb[0].mxu0
        %v3353 = vadd.f32 0.0, %v3352
        %v3354 = vpop.f32.mrb[0].mxu0
        %3355 = vmatprep.mubr.bf16.mxu0 0
        %3356 = vmatmul.mubr.bf16.gmra.mrb[0].mxu0 %v3241
        %v3357 = vpop.f32.mrb[0].mxu0
        %v3358 = vadd.f32 0.0, %v3357
        %v3359 = vpop.f32.mrb[0].mxu0
        %v3360 = vpop.f32.mrb[0].mxu0
        %v3361 = vadd.f32 0.0, %v3360
        %v3362 = vpop.f32.mrb[0].mxu0
        %3363 = vdwg.mxu0
        %v3365 = vsel %vm1768, %v1088, 0
        %v3368 = vsel %vm1768, %v1089, 0
        %v3371 = vsel %vm1768, %v1090, 0
        %v3374 = vsel %vm1768, %v1091, 0
        %v3377 = vsel %vm1768, %v1092, 0
        %v3380 = vsel %vm1768, %v1093, 0
        %v3383 = vsel %vm1768, %v1094, 0
        %v3386 = vsel %vm1768, %v1095, 0
        %v3389 = vsel %vm1768, %v1728, 0
        %v3392 = vsel %vm1768, %v1729, 0
        %v3395 = vsel %vm1768, %v1730, 0
        %v3398 = vsel %vm1768, %v1731, 0
        %v3401 = vsel %vm1768, %v1732, 0
        %v3404 = vsel %vm1768, %v1733, 0
        %v3407 = vsel %vm1768, %v1734, 0
        %v3410 = vsel %vm1768, %v1735, 0
        %3412 = vmatprep.subr.bf16.mxu0 0
        %3413 = vmatpush1.bf16.xpose.msra.mxu0 %v3389
        %3414 = vmatprep.subr.bf16.mxu0 0
        %3415 = vmatpush1.bf16.xpose.msra.mxu0 %v3392
        %3416 = vmatprep.subr.bf16.mxu0 0
        %3417 = vmatpush1.bf16.xpose.msra.mxu0 %v3395
        %3418 = vmatprep.subr.bf16.mxu0 0
        %3419 = vmatpush1.bf16.xpose.msra.mxu0 %v3398
        %3420 = vmatprep.subr.bf16.mxu0 0
        %3421 = vmatpush1.bf16.xpose.msra.mxu0 %v3401
        %3422 = vmatprep.subr.bf16.mxu0 0
        %3423 = vmatpush1.bf16.xpose.msra.mxu0 %v3404
        %3424 = vmatprep.subr.bf16.mxu0 0
        %3425 = vmatpush1.bf16.xpose.msra.mxu0 %v3407
        %3426 = vmatprep.subr.bf16.mxu0 0
        %3427 = vmatpush1.bf16.xpose.msra.mxu0 %v3410
        %3428 = vmatprep.subr.bf16.mxu0 0
        %3429 = vmatpush1.bf16.xpose.msra.mxu0 0
        %3430 = vmatprep.subr.bf16.mxu0 0
        %3431 = vmatpush1.bf16.xpose.msra.mxu0 0
        %3432 = vmatprep.subr.bf16.mxu0 0
        %3433 = vmatpush1.bf16.xpose.msra.mxu0 0
        %3434 = vmatprep.subr.bf16.mxu0 0
        %3435 = vmatpush1.bf16.xpose.msra.mxu0 0
        %3436 = vmatprep.subr.bf16.mxu0 0
        %3437 = vmatpush1.bf16.xpose.msra.mxu0 0
        %3438 = vmatprep.subr.bf16.mxu0 0
        %3439 = vmatpush1.bf16.xpose.msra.mxu0 0
        %3440 = vmatprep.subr.bf16.mxu0 0
        %3441 = vmatpush1.bf16.xpose.msra.mxu0 0
        %3442 = vmatprep.subr.bf16.mxu0 0
        %3443 = vmatpush1.bf16.xpose.msra.mxu0 0
        %3444 = vmatprep.mubr.bf16.mxu0 0
        %3445 = vmatmul.mubr.bf16.gmra.mrb[0].mxu0 %v3365
        %v3446 = vpop.f32.mrb[0].mxu0
        %v3447 = vadd.f32 0.0, %v3446
        %v3448 = vpop.f32.mrb[0].mxu0
        %v3449 = vpop.f32.mrb[0].mxu0
        %v3450 = vadd.f32 0.0, %v3449
        %v3451 = vpop.f32.mrb[0].mxu0
        %3452 = vmatprep.mubr.bf16.mxu0 0
        %3453 = vmatmul.mubr.bf16.gmra.mrb[0].mxu0 %v3368
        %v3454 = vpop.f32.mrb[0].mxu0
        %v3455 = vadd.f32 0.0, %v3454
        %v3456 = vpop.f32.mrb[0].mxu0
        %v3457 = vpop.f32.mrb[0].mxu0
        %v3458 = vadd.f32 0.0, %v3457
        %v3459 = vpop.f32.mrb[0].mxu0
        %3460 = vmatprep.mubr.bf16.mxu0 0
        %3461 = vmatmul.mubr.bf16.gmra.mrb[0].mxu0 %v3371
        %v3462 = vpop.f32.mrb[0].mxu0
        %v3463 = vadd.f32 0.0, %v3462
        %v3464 = vpop.f32.mrb[0].mxu0
        %v3465 = vpop.f32.mrb[0].mxu0
        %v3466 = vadd.f32 0.0, %v3465
        %v3467 = vpop.f32.mrb[0].mxu0
        %3468 = vmatprep.mubr.bf16.mxu0 0
        %3469 = vmatmul.mubr.bf16.gmra.mrb[0].mxu0 %v3374
        %v3470 = vpop.f32.mrb[0].mxu0
        %v3471 = vadd.f32 0.0, %v3470
        %v3472 = vpop.f32.mrb[0].mxu0
        %v3473 = vpop.f32.mrb[0].mxu0
        %v3474 = vadd.f32 0.0, %v3473
        %v3475 = vpop.f32.mrb[0].mxu0
        %3476 = vmatprep.mubr.bf16.mxu0 0
        %3477 = vmatmul.mubr.bf16.gmra.mrb[0].mxu0 %v3377
        %v3478 = vpop.f32.mrb[0].mxu0
        %v3479 = vadd.f32 0.0, %v3478
        %v3480 = vpop.f32.mrb[0].mxu0
        %v3481 = vpop.f32.mrb[0].mxu0
        %v3482 = vadd.f32 0.0, %v3481
        %v3483 = vpop.f32.mrb[0].mxu0
        %3484 = vmatprep.mubr.bf16.mxu0 0
        %3485 = vmatmul.mubr.bf16.gmra.mrb[0].mxu0 %v3380
        %v3486 = vpop.f32.mrb[0].mxu0
        %v3487 = vadd.f32 0.0, %v3486
        %v3488 = vpop.f32.mrb[0].mxu0
        %v3489 = vpop.f32.mrb[0].mxu0
        %v3490 = vadd.f32 0.0, %v3489
        %v3491 = vpop.f32.mrb[0].mxu0
        %3492 = vmatprep.mubr.bf16.mxu0 0
        %3493 = vmatmul.mubr.bf16.gmra.mrb[0].mxu0 %v3383
        %v3494 = vpop.f32.mrb[0].mxu0
        %v3495 = vadd.f32 0.0, %v3494
        %v3496 = vpop.f32.mrb[0].mxu0
        %v3497 = vpop.f32.mrb[0].mxu0
        %v3498 = vadd.f32 0.0, %v3497
        %v3499 = vpop.f32.mrb[0].mxu0
        %3500 = vmatprep.mubr.bf16.mxu0 0
        %3501 = vmatmul.mubr.bf16.gmra.mrb[0].mxu0 %v3386
        %v3502 = vpop.f32.mrb[0].mxu0
        %v3503 = vadd.f32 0.0, %v3502
        %v3504 = vpop.f32.mrb[0].mxu0
        %v3505 = vpop.f32.mrb[0].mxu0
        %v3506 = vadd.f32 0.0, %v3505
        %v3507 = vpop.f32.mrb[0].mxu0
        %3508 = vdwg.mxu0
        %v3510 = vsel %vm1768, %v1096, 0
        %v3513 = vsel %vm1768, %v1097, 0
        %v3516 = vsel %vm1768, %v1098, 0
        %v3519 = vsel %vm1768, %v1099, 0
        %v3522 = vsel %vm1768, %v1100, 0
        %v3525 = vsel %vm1768, %v1101, 0
        %v3528 = vsel %vm1768, %v1102, 0
        %v3531 = vsel %vm1768, %v1103, 0
        %v3534 = vsel %vm1768, %v1736, 0
        %v3537 = vsel %vm1768, %v1737, 0
        %v3540 = vsel %vm1768, %v1738, 0
        %v3543 = vsel %vm1768, %v1739, 0
        %v3546 = vsel %vm1768, %v1740, 0
        %v3549 = vsel %vm1768, %v1741, 0
        %v3552 = vsel %vm1768, %v1742, 0
        %v3555 = vsel %vm1768, %v1743, 0
        %3557 = vmatprep.subr.bf16.mxu0 0
        %3558 = vmatpush1.bf16.xpose.msra.mxu0 %v3534
        %3559 = vmatprep.subr.bf16.mxu0 0
        %3560 = vmatpush1.bf16.xpose.msra.mxu0 %v3537
        %3561 = vmatprep.subr.bf16.mxu0 0
        %3562 = vmatpush1.bf16.xpose.msra.mxu0 %v3540
        %3563 = vmatprep.subr.bf16.mxu0 0
        %3564 = vmatpush1.bf16.xpose.msra.mxu0 %v3543
        %3565 = vmatprep.subr.bf16.mxu0 0
        %3566 = vmatpush1.bf16.xpose.msra.mxu0 %v3546
        %3567 = vmatprep.subr.bf16.mxu0 0
        %3568 = vmatpush1.bf16.xpose.msra.mxu0 %v3549
        %3569 = vmatprep.subr.bf16.mxu0 0
        %3570 = vmatpush1.bf16.xpose.msra.mxu0 %v3552
        %3571 = vmatprep.subr.bf16.mxu0 0
        %3572 = vmatpush1.bf16.xpose.msra.mxu0 %v3555
        %3573 = vmatprep.subr.bf16.mxu0 0
        %3574 = vmatpush1.bf16.xpose.msra.mxu0 0
        %3575 = vmatprep.subr.bf16.mxu0 0
        %3576 = vmatpush1.bf16.xpose.msra.mxu0 0
        %3577 = vmatprep.subr.bf16.mxu0 0
        %3578 = vmatpush1.bf16.xpose.msra.mxu0 0
        %3579 = vmatprep.subr.bf16.mxu0 0
        %3580 = vmatpush1.bf16.xpose.msra.mxu0 0
        %3581 = vmatprep.subr.bf16.mxu0 0
        %3582 = vmatpush1.bf16.xpose.msra.mxu0 0
        %3583 = vmatprep.subr.bf16.mxu0 0
        %3584 = vmatpush1.bf16.xpose.msra.mxu0 0
        %3585 = vmatprep.subr.bf16.mxu0 0
        %3586 = vmatpush1.bf16.xpose.msra.mxu0 0
        %3587 = vmatprep.subr.bf16.mxu0 0
        %3588 = vmatpush1.bf16.xpose.msra.mxu0 0
        %3589 = vmatprep.mubr.bf16.mxu0 0
        %3590 = vmatmul.mubr.bf16.gmra.mrb[0].mxu0 %v3510
        %v3591 = vpop.f32.mrb[0].mxu0
        %v3592 = vadd.f32 0.0, %v3591
        %v3593 = vpop.f32.mrb[0].mxu0
        %v3594 = vpop.f32.mrb[0].mxu0
        %v3595 = vadd.f32 0.0, %v3594
        %v3596 = vpop.f32.mrb[0].mxu0
        %3597 = vmatprep.mubr.bf16.mxu0 0
        %3598 = vmatmul.mubr.bf16.gmra.mrb[0].mxu0 %v3513
        %v3599 = vpop.f32.mrb[0].mxu0
        %v3600 = vadd.f32 0.0, %v3599
        %v3601 = vpop.f32.mrb[0].mxu0
        %v3602 = vpop.f32.mrb[0].mxu0
        %v3603 = vadd.f32 0.0, %v3602
        %v3604 = vpop.f32.mrb[0].mxu0
        %3605 = vmatprep.mubr.bf16.mxu0 0
        %3606 = vmatmul.mubr.bf16.gmra.mrb[0].mxu0 %v3516
        %v3607 = vpop.f32.mrb[0].mxu0
        %v3608 = vadd.f32 0.0, %v3607
        %v3609 = vpop.f32.mrb[0].mxu0
        %v3610 = vpop.f32.mrb[0].mxu0
        %v3611 = vadd.f32 0.0, %v3610
        %v3612 = vpop.f32.mrb[0].mxu0
        %3613 = vmatprep.mubr.bf16.mxu0 0
        %3614 = vmatmul.mubr.bf16.gmra.mrb[0].mxu0 %v3519
        %v3615 = vpop.f32.mrb[0].mxu0
        %v3616 = vadd.f32 0.0, %v3615
        %v3617 = vpop.f32.mrb[0].mxu0
        %v3618 = vpop.f32.mrb[0].mxu0
        %v3619 = vadd.f32 0.0, %v3618
        %v3620 = vpop.f32.mrb[0].mxu0
        %3621 = vmatprep.mubr.bf16.mxu0 0
        %3622 = vmatmul.mubr.bf16.gmra.mrb[0].mxu0 %v3522
        %v3623 = vpop.f32.mrb[0].mxu0
        %v3624 = vadd.f32 0.0, %v3623
        %v3625 = vpop.f32.mrb[0].mxu0
        %v3626 = vpop.f32.mrb[0].mxu0
        %v3627 = vadd.f32 0.0, %v3626
        %v3628 = vpop.f32.mrb[0].mxu0
        %3629 = vmatprep.mubr.bf16.mxu0 0
        %3630 = vmatmul.mubr.bf16.gmra.mrb[0].mxu0 %v3525
        %v3631 = vpop.f32.mrb[0].mxu0
        %v3632 = vadd.f32 0.0, %v3631
        %v3633 = vpop.f32.mrb[0].mxu0
        %v3634 = vpop.f32.mrb[0].mxu0
        %v3635 = vadd.f32 0.0, %v3634
        %v3636 = vpop.f32.mrb[0].mxu0
        %3637 = vmatprep.mubr.bf16.mxu0 0
        %3638 = vmatmul.mubr.bf16.gmra.mrb[0].mxu0 %v3528
        %v3639 = vpop.f32.mrb[0].mxu0
        %v3640 = vadd.f32 0.0, %v3639
        %v3641 = vpop.f32.mrb[0].mxu0
        %v3642 = vpop.f32.mrb[0].mxu0
        %v3643 = vadd.f32 0.0, %v3642
        %v3644 = vpop.f32.mrb[0].mxu0
        %3645 = vmatprep.mubr.bf16.mxu0 0
        %3646 = vmatmul.mubr.bf16.gmra.mrb[0].mxu0 %v3531
        %v3647 = vpop.f32.mrb[0].mxu0
        %v3648 = vadd.f32 0.0, %v3647
        %v3649 = vpop.f32.mrb[0].mxu0
        %v3650 = vpop.f32.mrb[0].mxu0
        %v3651 = vadd.f32 0.0, %v3650
        %v3652 = vpop.f32.mrb[0].mxu0
        %3653 = vdwg.mxu0
        %v3655 = vsel %vm1768, %v1104, 0
        %v3658 = vsel %vm1768, %v1105, 0
        %v3661 = vsel %vm1768, %v1106, 0
        %v3664 = vsel %vm1768, %v1107, 0
        %v3667 = vsel %vm1768, %v1108, 0
        %v3670 = vsel %vm1768, %v1109, 0
        %v3673 = vsel %vm1768, %v1110, 0
        %v3676 = vsel %vm1768, %v1111, 0
        %v3679 = vsel %vm1768, %v1744, 0
        %v3682 = vsel %vm1768, %v1745, 0
        %v3685 = vsel %vm1768, %v1746, 0
        %v3688 = vsel %vm1768, %v1747, 0
        %v3691 = vsel %vm1768, %v1748, 0
        %v3694 = vsel %vm1768, %v1749, 0
        %v3697 = vsel %vm1768, %v1750, 0
        %v3700 = vsel %vm1768, %v1751, 0
        %3702 = vmatprep.subr.bf16.mxu0 0
        %3703 = vmatpush1.bf16.xpose.msra.mxu0 %v3679
        %3704 = vmatprep.subr.bf16.mxu0 0
        %3705 = vmatpush1.bf16.xpose.msra.mxu0 %v3682
        %3706 = vmatprep.subr.bf16.mxu0 0
        %3707 = vmatpush1.bf16.xpose.msra.mxu0 %v3685
        %3708 = vmatprep.subr.bf16.mxu0 0
        %3709 = vmatpush1.bf16.xpose.msra.mxu0 %v3688
        %3710 = vmatprep.subr.bf16.mxu0 0
        %3711 = vmatpush1.bf16.xpose.msra.mxu0 %v3691
        %3712 = vmatprep.subr.bf16.mxu0 0
        %3713 = vmatpush1.bf16.xpose.msra.mxu0 %v3694
        %3714 = vmatprep.subr.bf16.mxu0 0
        %3715 = vmatpush1.bf16.xpose.msra.mxu0 %v3697
        %3716 = vmatprep.subr.bf16.mxu0 0
        %3717 = vmatpush1.bf16.xpose.msra.mxu0 %v3700
        %3718 = vmatprep.subr.bf16.mxu0 0
        %3719 = vmatpush1.bf16.xpose.msra.mxu0 0
        %3720 = vmatprep.subr.bf16.mxu0 0
        %3721 = vmatpush1.bf16.xpose.msra.mxu0 0
        %3722 = vmatprep.subr.bf16.mxu0 0
        %3723 = vmatpush1.bf16.xpose.msra.mxu0 0
        %3724 = vmatprep.subr.bf16.mxu0 0
        %3725 = vmatpush1.bf16.xpose.msra.mxu0 0
        %3726 = vmatprep.subr.bf16.mxu0 0
        %3727 = vmatpush1.bf16.xpose.msra.mxu0 0
        %3728 = vmatprep.subr.bf16.mxu0 0
        %3729 = vmatpush1.bf16.xpose.msra.mxu0 0
        %3730 = vmatprep.subr.bf16.mxu0 0
        %3731 = vmatpush1.bf16.xpose.msra.mxu0 0
        %3732 = vmatprep.subr.bf16.mxu0 0
        %3733 = vmatpush1.bf16.xpose.msra.mxu0 0
        %3734 = vmatprep.mubr.bf16.mxu0 0
        %3735 = vmatmul.mubr.bf16.gmra.mrb[0].mxu0 %v3655
        %v3736 = vpop.f32.mrb[0].mxu0
        %v3737 = vadd.f32 0.0, %v3736
        %v3738 = vpop.f32.mrb[0].mxu0
        %v3739 = vpop.f32.mrb[0].mxu0
        %v3740 = vadd.f32 0.0, %v3739
        %v3741 = vpop.f32.mrb[0].mxu0
        %3742 = vmatprep.mubr.bf16.mxu0 0
        %3743 = vmatmul.mubr.bf16.gmra.mrb[0].mxu0 %v3658
        %v3744 = vpop.f32.mrb[0].mxu0
        %v3745 = vadd.f32 0.0, %v3744
        %v3746 = vpop.f32.mrb[0].mxu0
        %v3747 = vpop.f32.mrb[0].mxu0
        %v3748 = vadd.f32 0.0, %v3747
        %v3749 = vpop.f32.mrb[0].mxu0
        %3750 = vmatprep.mubr.bf16.mxu0 0
        %3751 = vmatmul.mubr.bf16.gmra.mrb[0].mxu0 %v3661
        %v3752 = vpop.f32.mrb[0].mxu0
        %v3753 = vadd.f32 0.0, %v3752
        %v3754 = vpop.f32.mrb[0].mxu0
        %v3755 = vpop.f32.mrb[0].mxu0
        %v3756 = vadd.f32 0.0, %v3755
        %v3757 = vpop.f32.mrb[0].mxu0
        %3758 = vmatprep.mubr.bf16.mxu0 0
        %3759 = vmatmul.mubr.bf16.gmra.mrb[0].mxu0 %v3664
        %v3760 = vpop.f32.mrb[0].mxu0
        %v3761 = vadd.f32 0.0, %v3760
        %v3762 = vpop.f32.mrb[0].mxu0
        %v3763 = vpop.f32.mrb[0].mxu0
        %v3764 = vadd.f32 0.0, %v3763
        %v3765 = vpop.f32.mrb[0].mxu0
        %3766 = vmatprep.mubr.bf16.mxu0 0
        %3767 = vmatmul.mubr.bf16.gmra.mrb[0].mxu0 %v3667
        %v3768 = vpop.f32.mrb[0].mxu0
        %v3769 = vadd.f32 0.0, %v3768
        %v3770 = vpop.f32.mrb[0].mxu0
        %v3771 = vpop.f32.mrb[0].mxu0
        %v3772 = vadd.f32 0.0, %v3771
        %v3773 = vpop.f32.mrb[0].mxu0
        %3774 = vmatprep.mubr.bf16.mxu0 0
        %3775 = vmatmul.mubr.bf16.gmra.mrb[0].mxu0 %v3670
        %v3776 = vpop.f32.mrb[0].mxu0
        %v3777 = vadd.f32 0.0, %v3776
        %v3778 = vpop.f32.mrb[0].mxu0
        %v3779 = vpop.f32.mrb[0].mxu0
        %v3780 = vadd.f32 0.0, %v3779
        %v3781 = vpop.f32.mrb[0].mxu0
        %3782 = vmatprep.mubr.bf16.mxu0 0
        %3783 = vmatmul.mubr.bf16.gmra.mrb[0].mxu0 %v3673
        %v3784 = vpop.f32.mrb[0].mxu0
        %v3785 = vadd.f32 0.0, %v3784
        %v3786 = vpop.f32.mrb[0].mxu0
        %v3787 = vpop.f32.mrb[0].mxu0
        %v3788 = vadd.f32 0.0, %v3787
        %v3789 = vpop.f32.mrb[0].mxu0
        %3790 = vmatprep.mubr.bf16.mxu0 0
        %3791 = vmatmul.mubr.bf16.gmra.mrb[0].mxu0 %v3676
        %v3792 = vpop.f32.mrb[0].mxu0
        %v3793 = vadd.f32 0.0, %v3792
        %v3794 = vpop.f32.mrb[0].mxu0
        %v3795 = vpop.f32.mrb[0].mxu0
        %v3796 = vadd.f32 0.0, %v3795
        %v3797 = vpop.f32.mrb[0].mxu0
        %3798 = vdwg.mxu0
        %v3800 = vsel %vm1768, %v1112, 0
        %v3803 = vsel %vm1768, %v1113, 0
        %v3806 = vsel %vm1768, %v1114, 0
        %v3809 = vsel %vm1768, %v1115, 0
        %v3812 = vsel %vm1768, %v1116, 0
        %v3815 = vsel %vm1768, %v1117, 0
        %v3818 = vsel %vm1768, %v1118, 0
        %v3821 = vsel %vm1768, %v1119, 0
        %v3824 = vsel %vm1768, %v1752, 0
        %v3827 = vsel %vm1768, %v1753, 0
        %v3830 = vsel %vm1768, %v1754, 0
        %v3833 = vsel %vm1768, %v1755, 0
        %v3836 = vsel %vm1768, %v1756, 0
        %v3839 = vsel %vm1768, %v1757, 0
        %v3842 = vsel %vm1768, %v1758, 0
        %v3845 = vsel %vm1768, %v1759, 0
        %3847 = vmatprep.subr.bf16.mxu0 0
        %3848 = vmatpush1.bf16.xpose.msra.mxu0 %v3824
        %3849 = vmatprep.subr.bf16.mxu0 0
        %3850 = vmatpush1.bf16.xpose.msra.mxu0 %v3827
        %3851 = vmatprep.subr.bf16.mxu0 0
        %3852 = vmatpush1.bf16.xpose.msra.mxu0 %v3830
        %3853 = vmatprep.subr.bf16.mxu0 0
        %3854 = vmatpush1.bf16.xpose.msra.mxu0 %v3833
        %3855 = vmatprep.subr.bf16.mxu0 0
        %3856 = vmatpush1.bf16.xpose.msra.mxu0 %v3836
        %3857 = vmatprep.subr.bf16.mxu0 0
        %3858 = vmatpush1.bf16.xpose.msra.mxu0 %v3839
        %3859 = vmatprep.subr.bf16.mxu0 0
        %3860 = vmatpush1.bf16.xpose.msra.mxu0 %v3842
        %3861 = vmatprep.subr.bf16.mxu0 0
        %3862 = vmatpush1.bf16.xpose.msra.mxu0 %v3845
        %3863 = vmatprep.subr.bf16.mxu0 0
        %3864 = vmatpush1.bf16.xpose.msra.mxu0 0
        %3865 = vmatprep.subr.bf16.mxu0 0
        %3866 = vmatpush1.bf16.xpose.msra.mxu0 0
        %3867 = vmatprep.subr.bf16.mxu0 0
        %3868 = vmatpush1.bf16.xpose.msra.mxu0 0
        %3869 = vmatprep.subr.bf16.mxu0 0
        %3870 = vmatpush1.bf16.xpose.msra.mxu0 0
        %3871 = vmatprep.subr.bf16.mxu0 0
        %3872 = vmatpush1.bf16.xpose.msra.mxu0 0
        %3873 = vmatprep.subr.bf16.mxu0 0
        %3874 = vmatpush1.bf16.xpose.msra.mxu0 0
        %3875 = vmatprep.subr.bf16.mxu0 0
        %3876 = vmatpush1.bf16.xpose.msra.mxu0 0
        %3877 = vmatprep.subr.bf16.mxu0 0
        %3878 = vmatpush1.bf16.xpose.msra.mxu0 0
        %3879 = vmatprep.mubr.bf16.mxu0 0
        %3880 = vmatmul.mubr.bf16.gmra.mrb[0].mxu0 %v3800
        %v3881 = vpop.f32.mrb[0].mxu0
        %v3882 = vadd.f32 0.0, %v3881
        %v3883 = vpop.f32.mrb[0].mxu0
        %v3884 = vpop.f32.mrb[0].mxu0
        %v3885 = vadd.f32 0.0, %v3884
        %v3886 = vpop.f32.mrb[0].mxu0
        %3887 = vmatprep.mubr.bf16.mxu0 0
        %3888 = vmatmul.mubr.bf16.gmra.mrb[0].mxu0 %v3803
        %v3889 = vpop.f32.mrb[0].mxu0
        %v3890 = vadd.f32 0.0, %v3889
        %v3891 = vpop.f32.mrb[0].mxu0
        %v3892 = vpop.f32.mrb[0].mxu0
        %v3893 = vadd.f32 0.0, %v3892
        %v3894 = vpop.f32.mrb[0].mxu0
        %3895 = vmatprep.mubr.bf16.mxu0 0
        %3896 = vmatmul.mubr.bf16.gmra.mrb[0].mxu0 %v3806
        %v3897 = vpop.f32.mrb[0].mxu0
        %v3898 = vadd.f32 0.0, %v3897
        %v3899 = vpop.f32.mrb[0].mxu0
        %v3900 = vpop.f32.mrb[0].mxu0
        %v3901 = vadd.f32 0.0, %v3900
        %v3902 = vpop.f32.mrb[0].mxu0
        %3903 = vmatprep.mubr.bf16.mxu0 0
        %3904 = vmatmul.mubr.bf16.gmra.mrb[0].mxu0 %v3809
        %v3905 = vpop.f32.mrb[0].mxu0
        %v3906 = vadd.f32 0.0, %v3905
        %v3907 = vpop.f32.mrb[0].mxu0
        %v3908 = vpop.f32.mrb[0].mxu0
        %v3909 = vadd.f32 0.0, %v3908
        %v3910 = vpop.f32.mrb[0].mxu0
        %3911 = vmatprep.mubr.bf16.mxu0 0
        %3912 = vmatmul.mubr.bf16.gmra.mrb[0].mxu0 %v3812
        %v3913 = vpop.f32.mrb[0].mxu0
        %v3914 = vadd.f32 0.0, %v3913
        %v3915 = vpop.f32.mrb[0].mxu0
        %v3916 = vpop.f32.mrb[0].mxu0
        %v3917 = vadd.f32 0.0, %v3916
        %v3918 = vpop.f32.mrb[0].mxu0
        %3919 = vmatprep.mubr.bf16.mxu0 0
        %3920 = vmatmul.mubr.bf16.gmra.mrb[0].mxu0 %v3815
        %v3921 = vpop.f32.mrb[0].mxu0
        %v3922 = vadd.f32 0.0, %v3921
        %v3923 = vpop.f32.mrb[0].mxu0
        %v3924 = vpop.f32.mrb[0].mxu0
        %v3925 = vadd.f32 0.0, %v3924
        %v3926 = vpop.f32.mrb[0].mxu0
        %3927 = vmatprep.mubr.bf16.mxu0 0
        %3928 = vmatmul.mubr.bf16.gmra.mrb[0].mxu0 %v3818
        %v3929 = vpop.f32.mrb[0].mxu0
        %v3930 = vadd.f32 0.0, %v3929
        %v3931 = vpop.f32.mrb[0].mxu0
        %v3932 = vpop.f32.mrb[0].mxu0
        %v3933 = vadd.f32 0.0, %v3932
        %v3934 = vpop.f32.mrb[0].mxu0
        %3935 = vmatprep.mubr.bf16.mxu0 0
        %3936 = vmatmul.mubr.bf16.gmra.mrb[0].mxu0 %v3821
        %v3937 = vpop.f32.mrb[0].mxu0
        %v3938 = vadd.f32 0.0, %v3937
        %v3939 = vpop.f32.mrb[0].mxu0
        %v3940 = vpop.f32.mrb[0].mxu0
        %v3941 = vadd.f32 0.0, %v3940
        %v3942 = vpop.f32.mrb[0].mxu0
        %3943 = vdwg.mxu0
        %v3945 = vsel %vm1768, %v1120, 0
        %v3948 = vsel %vm1768, %v1121, 0
        %v3951 = vsel %vm1768, %v1122, 0
        %v3954 = vsel %vm1768, %v1123, 0
        %v3957 = vsel %vm1768, %v1124, 0
        %v3960 = vsel %vm1768, %v1125, 0
        %v3963 = vsel %vm1768, %v1126, 0
        %v3966 = vsel %vm1768, %v1127, 0
        %v3969 = vsel %vm1768, %v1760, 0
        %v3972 = vsel %vm1768, %v1761, 0
        %v3975 = vsel %vm1768, %v1762, 0
        %v3978 = vsel %vm1768, %v1763, 0
        %v3981 = vsel %vm1768, %v1764, 0
        %v3984 = vsel %vm1768, %v1765, 0
        %v3987 = vsel %vm1768, %v1766, 0
        %v3990 = vsel %vm1768, %v1767, 0
        %3992 = vmatprep.subr.bf16.mxu0 0
        %3993 = vmatpush1.bf16.xpose.msra.mxu0 %v3969
        %3994 = vmatprep.subr.bf16.mxu0 0
        %3995 = vmatpush1.bf16.xpose.msra.mxu0 %v3972
        %3996 = vmatprep.subr.bf16.mxu0 0
        %3997 = vmatpush1.bf16.xpose.msra.mxu0 %v3975
        %3998 = vmatprep.subr.bf16.mxu0 0
        %3999 = vmatpush1.bf16.xpose.msra.mxu0 %v3978
        %4000 = vmatprep.subr.bf16.mxu0 0
        %4001 = vmatpush1.bf16.xpose.msra.mxu0 %v3981
        %4002 = vmatprep.subr.bf16.mxu0 0
        %4003 = vmatpush1.bf16.xpose.msra.mxu0 %v3984
        %4004 = vmatprep.subr.bf16.mxu0 0
        %4005 = vmatpush1.bf16.xpose.msra.mxu0 %v3987
        %4006 = vmatprep.subr.bf16.mxu0 0
        %4007 = vmatpush1.bf16.xpose.msra.mxu0 %v3990
        %4008 = vmatprep.subr.bf16.mxu0 0
        %4009 = vmatpush1.bf16.xpose.msra.mxu0 0
        %4010 = vmatprep.subr.bf16.mxu0 0
        %4011 = vmatpush1.bf16.xpose.msra.mxu0 0
        %4012 = vmatprep.subr.bf16.mxu0 0
        %4013 = vmatpush1.bf16.xpose.msra.mxu0 0
        %4014 = vmatprep.subr.bf16.mxu0 0
        %4015 = vmatpush1.bf16.xpose.msra.mxu0 0
        %4016 = vmatprep.subr.bf16.mxu0 0
        %4017 = vmatpush1.bf16.xpose.msra.mxu0 0
        %4018 = vmatprep.subr.bf16.mxu0 0
        %4019 = vmatpush1.bf16.xpose.msra.mxu0 0
        %4020 = vmatprep.subr.bf16.mxu0 0
        %4021 = vmatpush1.bf16.xpose.msra.mxu0 0
        %4022 = vmatprep.subr.bf16.mxu0 0
        %4023 = vmatpush1.bf16.xpose.msra.mxu0 0
        %4024 = vmatprep.mubr.bf16.mxu0 0
        %4025 = vmatmul.mubr.bf16.gmra.mrb[0].mxu0 %v3945
        %v4026 = vpop.f32.mrb[0].mxu0
        %v4027 = vadd.f32 0.0, %v4026
        %v4028 = vpop.f32.mrb[0].mxu0
        %v4029 = vpop.f32.mrb[0].mxu0
        %v4030 = vadd.f32 0.0, %v4029
        %v4031 = vpop.f32.mrb[0].mxu0
        %4032 = vmatprep.mubr.bf16.mxu0 0
        %4033 = vmatmul.mubr.bf16.gmra.mrb[0].mxu0 %v3948
        %v4034 = vpop.f32.mrb[0].mxu0
        %v4035 = vadd.f32 0.0, %v4034
        %v4036 = vpop.f32.mrb[0].mxu0
        %v4037 = vpop.f32.mrb[0].mxu0
        %v4038 = vadd.f32 0.0, %v4037
        %v4039 = vpop.f32.mrb[0].mxu0
        %4040 = vmatprep.mubr.bf16.mxu0 0
        %4041 = vmatmul.mubr.bf16.gmra.mrb[0].mxu0 %v3951
        %v4042 = vpop.f32.mrb[0].mxu0
        %v4043 = vadd.f32 0.0, %v4042
        %v4044 = vpop.f32.mrb[0].mxu0
        %v4045 = vpop.f32.mrb[0].mxu0
        %v4046 = vadd.f32 0.0, %v4045
        %v4047 = vpop.f32.mrb[0].mxu0
        %4048 = vmatprep.mubr.bf16.mxu0 0
        %4049 = vmatmul.mubr.bf16.gmra.mrb[0].mxu0 %v3954
        %v4050 = vpop.f32.mrb[0].mxu0
        %v4051 = vadd.f32 0.0, %v4050
        %v4052 = vpop.f32.mrb[0].mxu0
        %v4053 = vpop.f32.mrb[0].mxu0
        %v4054 = vadd.f32 0.0, %v4053
        %v4055 = vpop.f32.mrb[0].mxu0
        %4056 = vmatprep.mubr.bf16.mxu0 0
        %4057 = vmatmul.mubr.bf16.gmra.mrb[0].mxu0 %v3957
        %v4058 = vpop.f32.mrb[0].mxu0
        %v4059 = vadd.f32 0.0, %v4058
        %v4060 = vpop.f32.mrb[0].mxu0
        %v4061 = vpop.f32.mrb[0].mxu0
        %v4062 = vadd.f32 0.0, %v4061
        %v4063 = vpop.f32.mrb[0].mxu0
        %4064 = vmatprep.mubr.bf16.mxu0 0
        %4065 = vmatmul.mubr.bf16.gmra.mrb[0].mxu0 %v3960
        %v4066 = vpop.f32.mrb[0].mxu0
        %v4067 = vadd.f32 0.0, %v4066
        %v4068 = vpop.f32.mrb[0].mxu0
        %v4069 = vpop.f32.mrb[0].mxu0
        %v4070 = vadd.f32 0.0, %v4069
        %v4071 = vpop.f32.mrb[0].mxu0
        %4072 = vmatprep.mubr.bf16.mxu0 0
        %4073 = vmatmul.mubr.bf16.gmra.mrb[0].mxu0 %v3963
        %v4074 = vpop.f32.mrb[0].mxu0
        %v4075 = vadd.f32 0.0, %v4074
        %v4076 = vpop.f32.mrb[0].mxu0
        %v4077 = vpop.f32.mrb[0].mxu0
        %v4078 = vadd.f32 0.0, %v4077
        %v4079 = vpop.f32.mrb[0].mxu0
        %4080 = vmatprep.mubr.bf16.mxu0 0
        %4081 = vmatmul.mubr.bf16.gmra.mrb[0].mxu0 %v3966
        %v4082 = vpop.f32.mrb[0].mxu0
        %v4083 = vadd.f32 0.0, %v4082
        %v4084 = vpop.f32.mrb[0].mxu0
        %v4085 = vpop.f32.mrb[0].mxu0
        %v4086 = vadd.f32 0.0, %v4085
        %v4087 = vpop.f32.mrb[0].mxu0
        %4088 = vdwg.mxu0
        %4089 = vmax.xlane.f32.xlu0 %v1852
        %v4090 = vpop.xlane.xlu0 %4089
        %4091 = vmax.xlane.f32.xlu0 %v1855
        %v4092 = vpop.xlane.xlu0 %4091
        %4093 = vmax.xlane.f32.xlu0 %v1860
        %v4094 = vpop.xlane.xlu0 %4093
        %4095 = vmax.xlane.f32.xlu0 %v1863
        %v4096 = vpop.xlane.xlu0 %4095
        %4097 = vmax.xlane.f32.xlu0 %v1868
        %v4098 = vpop.xlane.xlu0 %4097
        %4099 = vmax.xlane.f32.xlu0 %v1871
        %v4100 = vpop.xlane.xlu0 %4099
        %4101 = vmax.xlane.f32.xlu0 %v1876
        %v4102 = vpop.xlane.xlu0 %4101
        %4103 = vmax.xlane.f32.xlu0 %v1879
        %v4104 = vpop.xlane.xlu0 %4103
        %4105 = vmax.xlane.f32.xlu0 %v1884
        %v4106 = vpop.xlane.xlu0 %4105
        %4107 = vmax.xlane.f32.xlu0 %v1887
        %v4108 = vpop.xlane.xlu0 %4107
        %4109 = vmax.xlane.f32.xlu0 %v1892
        %v4110 = vpop.xlane.xlu0 %4109
        %4111 = vmax.xlane.f32.xlu0 %v1895
        %v4112 = vpop.xlane.xlu0 %4111
        %4113 = vmax.xlane.f32.xlu0 %v1900
        %v4114 = vpop.xlane.xlu0 %4113
        %4115 = vmax.xlane.f32.xlu0 %v1903
        %v4116 = vpop.xlane.xlu0 %4115
        %4117 = vmax.xlane.f32.xlu0 %v1908
        %v4118 = vpop.xlane.xlu0 %4117
        %4119 = vmax.xlane.f32.xlu0 %v1911
        %v4120 = vpop.xlane.xlu0 %4119
        %4121 = vmax.xlane.f32.xlu0 %v1997
        %v4122 = vpop.xlane.xlu0 %4121
        %4123 = vmax.xlane.f32.xlu0 %v2000
        %v4124 = vpop.xlane.xlu0 %4123
        %4125 = vmax.xlane.f32.xlu0 %v2005
        %v4126 = vpop.xlane.xlu0 %4125
        %4127 = vmax.xlane.f32.xlu0 %v2008
        %v4128 = vpop.xlane.xlu0 %4127
        %4129 = vmax.xlane.f32.xlu0 %v2013
        %v4130 = vpop.xlane.xlu0 %4129
        %4131 = vmax.xlane.f32.xlu0 %v2016
        %v4132 = vpop.xlane.xlu0 %4131
        %4133 = vmax.xlane.f32.xlu0 %v2021
        %v4134 = vpop.xlane.xlu0 %4133
        %4135 = vmax.xlane.f32.xlu0 %v2024
        %v4136 = vpop.xlane.xlu0 %4135
        %4137 = vmax.xlane.f32.xlu0 %v2029
        %v4138 = vpop.xlane.xlu0 %4137
        %4139 = vmax.xlane.f32.xlu0 %v2032
        %v4140 = vpop.xlane.xlu0 %4139
        %4141 = vmax.xlane.f32.xlu0 %v2037
        %v4142 = vpop.xlane.xlu0 %4141
        %4143 = vmax.xlane.f32.xlu0 %v2040
        %v4144 = vpop.xlane.xlu0 %4143
        %4145 = vmax.xlane.f32.xlu0 %v2045
        %v4146 = vpop.xlane.xlu0 %4145
        %4147 = vmax.xlane.f32.xlu0 %v2048
        %v4148 = vpop.xlane.xlu0 %4147
        %4149 = vmax.xlane.f32.xlu0 %v2053
        %v4150 = vpop.xlane.xlu0 %4149
        %4151 = vmax.xlane.f32.xlu0 %v2056
        %v4152 = vpop.xlane.xlu0 %4151
        %4153 = vmax.xlane.f32.xlu0 %v2142
        %v4154 = vpop.xlane.xlu0 %4153
        %4155 = vmax.xlane.f32.xlu0 %v2145
        %v4156 = vpop.xlane.xlu0 %4155
        %4157 = vmax.xlane.f32.xlu0 %v2150
        %v4158 = vpop.xlane.xlu0 %4157
        %4159 = vmax.xlane.f32.xlu0 %v2153
        %v4160 = vpop.xlane.xlu0 %4159
        %4161 = vmax.xlane.f32.xlu0 %v2158
        %v4162 = vpop.xlane.xlu0 %4161
        %4163 = vmax.xlane.f32.xlu0 %v2161
        %v4164 = vpop.xlane.xlu0 %4163
        %4165 = vmax.xlane.f32.xlu0 %v2166
        %v4166 = vpop.xlane.xlu0 %4165
        %4167 = vmax.xlane.f32.xlu0 %v2169
        %v4168 = vpop.xlane.xlu0 %4167
        %4169 = vmax.xlane.f32.xlu0 %v2174
        %v4170 = vpop.xlane.xlu0 %4169
        %4171 = vmax.xlane.f32.xlu0 %v2177
        %v4172 = vpop.xlane.xlu0 %4171
        %4173 = vmax.xlane.f32.xlu0 %v2182
        %v4174 = vpop.xlane.xlu0 %4173
        %4175 = vmax.xlane.f32.xlu0 %v2185
        %v4176 = vpop.xlane.xlu0 %4175
        %4177 = vmax.xlane.f32.xlu0 %v2190
        %v4178 = vpop.xlane.xlu0 %4177
        %4179 = vmax.xlane.f32.xlu0 %v2193
        %v4180 = vpop.xlane.xlu0 %4179
        %4181 = vmax.xlane.f32.xlu0 %v2198
        %v4182 = vpop.xlane.xlu0 %4181
        %4183 = vmax.xlane.f32.xlu0 %v2201
        %v4184 = vpop.xlane.xlu0 %4183
        %4185 = vmax.xlane.f32.xlu0 %v2287
        %v4186 = vpop.xlane.xlu0 %4185
        %4187 = vmax.xlane.f32.xlu0 %v2290
        %v4188 = vpop.xlane.xlu0 %4187
        %4189 = vmax.xlane.f32.xlu0 %v2295
        %v4190 = vpop.xlane.xlu0 %4189
        %4191 = vmax.xlane.f32.xlu0 %v2298
        %v4192 = vpop.xlane.xlu0 %4191
        %4193 = vmax.xlane.f32.xlu0 %v2303
        %v4194 = vpop.xlane.xlu0 %4193
        %4195 = vmax.xlane.f32.xlu0 %v2306
        %v4196 = vpop.xlane.xlu0 %4195
        %4197 = vmax.xlane.f32.xlu0 %v2311
        %v4198 = vpop.xlane.xlu0 %4197
        %4199 = vmax.xlane.f32.xlu0 %v2314
        %v4200 = vpop.xlane.xlu0 %4199
        %4201 = vmax.xlane.f32.xlu0 %v2319
        %v4202 = vpop.xlane.xlu0 %4201
        %4203 = vmax.xlane.f32.xlu0 %v2322
        %v4204 = vpop.xlane.xlu0 %4203
        %4205 = vmax.xlane.f32.xlu0 %v2327
        %v4206 = vpop.xlane.xlu0 %4205
        %4207 = vmax.xlane.f32.xlu0 %v2330
        %v4208 = vpop.xlane.xlu0 %4207
        %4209 = vmax.xlane.f32.xlu0 %v2335
        %v4210 = vpop.xlane.xlu0 %4209
        %4211 = vmax.xlane.f32.xlu0 %v2338
        %v4212 = vpop.xlane.xlu0 %4211
        %4213 = vmax.xlane.f32.xlu0 %v2343
        %v4214 = vpop.xlane.xlu0 %4213
        %4215 = vmax.xlane.f32.xlu0 %v2346
        %v4216 = vpop.xlane.xlu0 %4215
        %4217 = vmax.xlane.f32.xlu0 %v2432
        %v4218 = vpop.xlane.xlu0 %4217
        %4219 = vmax.xlane.f32.xlu0 %v2435
        %v4220 = vpop.xlane.xlu0 %4219
        %4221 = vmax.xlane.f32.xlu0 %v2440
        %v4222 = vpop.xlane.xlu0 %4221
        %4223 = vmax.xlane.f32.xlu0 %v2443
        %v4224 = vpop.xlane.xlu0 %4223
        %4225 = vmax.xlane.f32.xlu0 %v2448
        %v4226 = vpop.xlane.xlu0 %4225
        %4227 = vmax.xlane.f32.xlu0 %v2451
        %v4228 = vpop.xlane.xlu0 %4227
        %4229 = vmax.xlane.f32.xlu0 %v2456
        %v4230 = vpop.xlane.xlu0 %4229
        %4231 = vmax.xlane.f32.xlu0 %v2459
        %v4232 = vpop.xlane.xlu0 %4231
        %4233 = vmax.xlane.f32.xlu0 %v2464
        %v4234 = vpop.xlane.xlu0 %4233
        %4235 = vmax.xlane.f32.xlu0 %v2467
        %v4236 = vpop.xlane.xlu0 %4235
        %4237 = vmax.xlane.f32.xlu0 %v2472
        %v4238 = vpop.xlane.xlu0 %4237
        %4239 = vmax.xlane.f32.xlu0 %v2475
        %v4240 = vpop.xlane.xlu0 %4239
        %4241 = vmax.xlane.f32.xlu0 %v2480
        %v4242 = vpop.xlane.xlu0 %4241
        %4243 = vmax.xlane.f32.xlu0 %v2483
        %v4244 = vpop.xlane.xlu0 %4243
        %4245 = vmax.xlane.f32.xlu0 %v2488
        %v4246 = vpop.xlane.xlu0 %4245
        %4247 = vmax.xlane.f32.xlu0 %v2491
        %v4248 = vpop.xlane.xlu0 %4247
        %4249 = vmax.xlane.f32.xlu0 %v2577
        %v4250 = vpop.xlane.xlu0 %4249
        %4251 = vmax.xlane.f32.xlu0 %v2580
        %v4252 = vpop.xlane.xlu0 %4251
        %4253 = vmax.xlane.f32.xlu0 %v2585
        %v4254 = vpop.xlane.xlu0 %4253
        %4255 = vmax.xlane.f32.xlu0 %v2588
        %v4256 = vpop.xlane.xlu0 %4255
        %4257 = vmax.xlane.f32.xlu0 %v2593
        %v4258 = vpop.xlane.xlu0 %4257
        %4259 = vmax.xlane.f32.xlu0 %v2596
        %v4260 = vpop.xlane.xlu0 %4259
        %4261 = vmax.xlane.f32.xlu0 %v2601
        %v4262 = vpop.xlane.xlu0 %4261
        %4263 = vmax.xlane.f32.xlu0 %v2604
        %v4264 = vpop.xlane.xlu0 %4263
        %4265 = vmax.xlane.f32.xlu0 %v2609
        %v4266 = vpop.xlane.xlu0 %4265
        %4267 = vmax.xlane.f32.xlu0 %v2612
        %v4268 = vpop.xlane.xlu0 %4267
        %4269 = vmax.xlane.f32.xlu0 %v2617
        %v4270 = vpop.xlane.xlu0 %4269
        %4271 = vmax.xlane.f32.xlu0 %v2620
        %v4272 = vpop.xlane.xlu0 %4271
        %4273 = vmax.xlane.f32.xlu0 %v2625
        %v4274 = vpop.xlane.xlu0 %4273
        %4275 = vmax.xlane.f32.xlu0 %v2628
        %v4276 = vpop.xlane.xlu0 %4275
        %4277 = vmax.xlane.f32.xlu0 %v2633
        %v4278 = vpop.xlane.xlu0 %4277
        %4279 = vmax.xlane.f32.xlu0 %v2636
        %v4280 = vpop.xlane.xlu0 %4279
        %4281 = vmax.xlane.f32.xlu0 %v2722
        %v4282 = vpop.xlane.xlu0 %4281
        %4283 = vmax.xlane.f32.xlu0 %v2725
        %v4284 = vpop.xlane.xlu0 %4283
        %4285 = vmax.xlane.f32.xlu0 %v2730
        %v4286 = vpop.xlane.xlu0 %4285
        %4287 = vmax.xlane.f32.xlu0 %v2733
        %v4288 = vpop.xlane.xlu0 %4287
        %4289 = vmax.xlane.f32.xlu0 %v2738
        %v4290 = vpop.xlane.xlu0 %4289
        %4291 = vmax.xlane.f32.xlu0 %v2741
        %v4292 = vpop.xlane.xlu0 %4291
        %4293 = vmax.xlane.f32.xlu0 %v2746
        %v4294 = vpop.xlane.xlu0 %4293
        %4295 = vmax.xlane.f32.xlu0 %v2749
        %v4296 = vpop.xlane.xlu0 %4295
        %4297 = vmax.xlane.f32.xlu0 %v2754
        %v4298 = vpop.xlane.xlu0 %4297
        %4299 = vmax.xlane.f32.xlu0 %v2757
        %v4300 = vpop.xlane.xlu0 %4299
        %4301 = vmax.xlane.f32.xlu0 %v2762
        %v4302 = vpop.xlane.xlu0 %4301
        %4303 = vmax.xlane.f32.xlu0 %v2765
        %v4304 = vpop.xlane.xlu0 %4303
        %4305 = vmax.xlane.f32.xlu0 %v2770
        %v4306 = vpop.xlane.xlu0 %4305
        %4307 = vmax.xlane.f32.xlu0 %v2773
        %v4308 = vpop.xlane.xlu0 %4307
        %4309 = vmax.xlane.f32.xlu0 %v2778
        %v4310 = vpop.xlane.xlu0 %4309
        %4311 = vmax.xlane.f32.xlu0 %v2781
        %v4312 = vpop.xlane.xlu0 %4311
        %4313 = vmax.xlane.f32.xlu0 %v2867
        %v4314 = vpop.xlane.xlu0 %4313
        %4315 = vmax.xlane.f32.xlu0 %v2870
        %v4316 = vpop.xlane.xlu0 %4315
        %4317 = vmax.xlane.f32.xlu0 %v2875
        %v4318 = vpop.xlane.xlu0 %4317
        %4319 = vmax.xlane.f32.xlu0 %v2878
        %v4320 = vpop.xlane.xlu0 %4319
        %4321 = vmax.xlane.f32.xlu0 %v2883
        %v4322 = vpop.xlane.xlu0 %4321
        %4323 = vmax.xlane.f32.xlu0 %v2886
        %v4324 = vpop.xlane.xlu0 %4323
        %4325 = vmax.xlane.f32.xlu0 %v2891
        %v4326 = vpop.xlane.xlu0 %4325
        %4327 = vmax.xlane.f32.xlu0 %v2894
        %v4328 = vpop.xlane.xlu0 %4327
        %4329 = vmax.xlane.f32.xlu0 %v2899
        %v4330 = vpop.xlane.xlu0 %4329
        %4331 = vmax.xlane.f32.xlu0 %v2902
        %v4332 = vpop.xlane.xlu0 %4331
        %4333 = vmax.xlane.f32.xlu0 %v2907
        %v4334 = vpop.xlane.xlu0 %4333
        %4335 = vmax.xlane.f32.xlu0 %v2910
        %v4336 = vpop.xlane.xlu0 %4335
        %4337 = vmax.xlane.f32.xlu0 %v2915
        %v4338 = vpop.xlane.xlu0 %4337
        %4339 = vmax.xlane.f32.xlu0 %v2918
        %v4340 = vpop.xlane.xlu0 %4339
        %4341 = vmax.xlane.f32.xlu0 %v2923
        %v4342 = vpop.xlane.xlu0 %4341
        %4343 = vmax.xlane.f32.xlu0 %v2926
        %v4344 = vpop.xlane.xlu0 %4343
        %4345 = vmax.xlane.f32.xlu0 %v3012
        %v4346 = vpop.xlane.xlu0 %4345
        %4347 = vmax.xlane.f32.xlu0 %v3015
        %v4348 = vpop.xlane.xlu0 %4347
        %4349 = vmax.xlane.f32.xlu0 %v3020
        %v4350 = vpop.xlane.xlu0 %4349
        %4351 = vmax.xlane.f32.xlu0 %v3023
        %v4352 = vpop.xlane.xlu0 %4351
        %4353 = vmax.xlane.f32.xlu0 %v3028
        %v4354 = vpop.xlane.xlu0 %4353
        %4355 = vmax.xlane.f32.xlu0 %v3031
        %v4356 = vpop.xlane.xlu0 %4355
        %4357 = vmax.xlane.f32.xlu0 %v3036
        %v4358 = vpop.xlane.xlu0 %4357
        %4359 = vmax.xlane.f32.xlu0 %v3039
        %v4360 = vpop.xlane.xlu0 %4359
        %4361 = vmax.xlane.f32.xlu0 %v3044
        %v4362 = vpop.xlane.xlu0 %4361
        %4363 = vmax.xlane.f32.xlu0 %v3047
        %v4364 = vpop.xlane.xlu0 %4363
        %4365 = vmax.xlane.f32.xlu0 %v3052
        %v4366 = vpop.xlane.xlu0 %4365
        %4367 = vmax.xlane.f32.xlu0 %v3055
        %v4368 = vpop.xlane.xlu0 %4367
        %4369 = vmax.xlane.f32.xlu0 %v3060
        %v4370 = vpop.xlane.xlu0 %4369
        %4371 = vmax.xlane.f32.xlu0 %v3063
        %v4372 = vpop.xlane.xlu0 %4371
        %4373 = vmax.xlane.f32.xlu0 %v3068
        %v4374 = vpop.xlane.xlu0 %4373
        %4375 = vmax.xlane.f32.xlu0 %v3071
        %v4376 = vpop.xlane.xlu0 %4375
        %4377 = vmax.xlane.f32.xlu0 %v3157
        %v4378 = vpop.xlane.xlu0 %4377
        %4379 = vmax.xlane.f32.xlu0 %v3160
        %v4380 = vpop.xlane.xlu0 %4379
        %4381 = vmax.xlane.f32.xlu0 %v3165
        %v4382 = vpop.xlane.xlu0 %4381
        %4383 = vmax.xlane.f32.xlu0 %v3168
        %v4384 = vpop.xlane.xlu0 %4383
        %4385 = vmax.xlane.f32.xlu0 %v3173
        %v4386 = vpop.xlane.xlu0 %4385
        %4387 = vmax.xlane.f32.xlu0 %v3176
        %v4388 = vpop.xlane.xlu0 %4387
        %4389 = vmax.xlane.f32.xlu0 %v3181
        %v4390 = vpop.xlane.xlu0 %4389
        %4391 = vmax.xlane.f32.xlu0 %v3184
        %v4392 = vpop.xlane.xlu0 %4391
        %4393 = vmax.xlane.f32.xlu0 %v3189
        %v4394 = vpop.xlane.xlu0 %4393
        %4395 = vmax.xlane.f32.xlu0 %v3192
        %v4396 = vpop.xlane.xlu0 %4395
        %4397 = vmax.xlane.f32.xlu0 %v3197
        %v4398 = vpop.xlane.xlu0 %4397
        %4399 = vmax.xlane.f32.xlu0 %v3200
        %v4400 = vpop.xlane.xlu0 %4399
        %4401 = vmax.xlane.f32.xlu0 %v3205
        %v4402 = vpop.xlane.xlu0 %4401
        %4403 = vmax.xlane.f32.xlu0 %v3208
        %v4404 = vpop.xlane.xlu0 %4403
        %4405 = vmax.xlane.f32.xlu0 %v3213
        %v4406 = vpop.xlane.xlu0 %4405
        %4407 = vmax.xlane.f32.xlu0 %v3216
        %v4408 = vpop.xlane.xlu0 %4407
        %4409 = vmax.xlane.f32.xlu0 %v3302
        %v4410 = vpop.xlane.xlu0 %4409
        %4411 = vmax.xlane.f32.xlu0 %v3305
        %v4412 = vpop.xlane.xlu0 %4411
        %4413 = vmax.xlane.f32.xlu0 %v3310
        %v4414 = vpop.xlane.xlu0 %4413
        %4415 = vmax.xlane.f32.xlu0 %v3313
        %v4416 = vpop.xlane.xlu0 %4415
        %4417 = vmax.xlane.f32.xlu0 %v3318
        %v4418 = vpop.xlane.xlu0 %4417
        %4419 = vmax.xlane.f32.xlu0 %v3321
        %v4420 = vpop.xlane.xlu0 %4419
        %4421 = vmax.xlane.f32.xlu0 %v3326
        %v4422 = vpop.xlane.xlu0 %4421
        %4423 = vmax.xlane.f32.xlu0 %v3329
        %v4424 = vpop.xlane.xlu0 %4423
        %4425 = vmax.xlane.f32.xlu0 %v3334
        %v4426 = vpop.xlane.xlu0 %4425
        %4427 = vmax.xlane.f32.xlu0 %v3337
        %v4428 = vpop.xlane.xlu0 %4427
        %4429 = vmax.xlane.f32.xlu0 %v3342
        %v4430 = vpop.xlane.xlu0 %4429
        %4431 = vmax.xlane.f32.xlu0 %v3345
        %v4432 = vpop.xlane.xlu0 %4431
        %4433 = vmax.xlane.f32.xlu0 %v3350
        %v4434 = vpop.xlane.xlu0 %4433
        %4435 = vmax.xlane.f32.xlu0 %v3353
        %v4436 = vpop.xlane.xlu0 %4435
        %4437 = vmax.xlane.f32.xlu0 %v3358
        %v4438 = vpop.xlane.xlu0 %4437
        %4439 = vmax.xlane.f32.xlu0 %v3361
        %v4440 = vpop.xlane.xlu0 %4439
        %4441 = vmax.xlane.f32.xlu0 %v3447
        %v4442 = vpop.xlane.xlu0 %4441
        %4443 = vmax.xlane.f32.xlu0 %v3450
        %v4444 = vpop.xlane.xlu0 %4443
        %4445 = vmax.xlane.f32.xlu0 %v3455
        %v4446 = vpop.xlane.xlu0 %4445
        %4447 = vmax.xlane.f32.xlu0 %v3458
        %v4448 = vpop.xlane.xlu0 %4447
        %4449 = vmax.xlane.f32.xlu0 %v3463
        %v4450 = vpop.xlane.xlu0 %4449
        %4451 = vmax.xlane.f32.xlu0 %v3466
        %v4452 = vpop.xlane.xlu0 %4451
        %4453 = vmax.xlane.f32.xlu0 %v3471
        %v4454 = vpop.xlane.xlu0 %4453
        %4455 = vmax.xlane.f32.xlu0 %v3474
        %v4456 = vpop.xlane.xlu0 %4455
        %4457 = vmax.xlane.f32.xlu0 %v3479
        %v4458 = vpop.xlane.xlu0 %4457
        %4459 = vmax.xlane.f32.xlu0 %v3482
        %v4460 = vpop.xlane.xlu0 %4459
        %4461 = vmax.xlane.f32.xlu0 %v3487
        %v4462 = vpop.xlane.xlu0 %4461
        %4463 = vmax.xlane.f32.xlu0 %v3490
        %v4464 = vpop.xlane.xlu0 %4463
        %4465 = vmax.xlane.f32.xlu0 %v3495
        %v4466 = vpop.xlane.xlu0 %4465
        %4467 = vmax.xlane.f32.xlu0 %v3498
        %v4468 = vpop.xlane.xlu0 %4467
        %4469 = vmax.xlane.f32.xlu0 %v3503
        %v4470 = vpop.xlane.xlu0 %4469
        %4471 = vmax.xlane.f32.xlu0 %v3506
        %v4472 = vpop.xlane.xlu0 %4471
        %4473 = vmax.xlane.f32.xlu0 %v3592
        %v4474 = vpop.xlane.xlu0 %4473
        %4475 = vmax.xlane.f32.xlu0 %v3595
        %v4476 = vpop.xlane.xlu0 %4475
        %4477 = vmax.xlane.f32.xlu0 %v3600
        %v4478 = vpop.xlane.xlu0 %4477
        %4479 = vmax.xlane.f32.xlu0 %v3603
        %v4480 = vpop.xlane.xlu0 %4479
        %4481 = vmax.xlane.f32.xlu0 %v3608
        %v4482 = vpop.xlane.xlu0 %4481
        %4483 = vmax.xlane.f32.xlu0 %v3611
        %v4484 = vpop.xlane.xlu0 %4483
        %4485 = vmax.xlane.f32.xlu0 %v3616
        %v4486 = vpop.xlane.xlu0 %4485
        %4487 = vmax.xlane.f32.xlu0 %v3619
        %v4488 = vpop.xlane.xlu0 %4487
        %4489 = vmax.xlane.f32.xlu0 %v3624
        %v4490 = vpop.xlane.xlu0 %4489
        %4491 = vmax.xlane.f32.xlu0 %v3627
        %v4492 = vpop.xlane.xlu0 %4491
        %4493 = vmax.xlane.f32.xlu0 %v3632
        %v4494 = vpop.xlane.xlu0 %4493
        %4495 = vmax.xlane.f32.xlu0 %v3635
        %v4496 = vpop.xlane.xlu0 %4495
        %4497 = vmax.xlane.f32.xlu0 %v3640
        %v4498 = vpop.xlane.xlu0 %4497
        %4499 = vmax.xlane.f32.xlu0 %v3643
        %v4500 = vpop.xlane.xlu0 %4499
        %4501 = vmax.xlane.f32.xlu0 %v3648
        %v4502 = vpop.xlane.xlu0 %4501
        %4503 = vmax.xlane.f32.xlu0 %v3651
        %v4504 = vpop.xlane.xlu0 %4503
        %4505 = vmax.xlane.f32.xlu0 %v3737
        %v4506 = vpop.xlane.xlu0 %4505
        %4507 = vmax.xlane.f32.xlu0 %v3740
        %v4508 = vpop.xlane.xlu0 %4507
        %4509 = vmax.xlane.f32.xlu0 %v3745
        %v4510 = vpop.xlane.xlu0 %4509
        %4511 = vmax.xlane.f32.xlu0 %v3748
        %v4512 = vpop.xlane.xlu0 %4511
        %4513 = vmax.xlane.f32.xlu0 %v3753
        %v4514 = vpop.xlane.xlu0 %4513
        %4515 = vmax.xlane.f32.xlu0 %v3756
        %v4516 = vpop.xlane.xlu0 %4515
        %4517 = vmax.xlane.f32.xlu0 %v3761
        %v4518 = vpop.xlane.xlu0 %4517
        %4519 = vmax.xlane.f32.xlu0 %v3764
        %v4520 = vpop.xlane.xlu0 %4519
        %4521 = vmax.xlane.f32.xlu0 %v3769
        %v4522 = vpop.xlane.xlu0 %4521
        %4523 = vmax.xlane.f32.xlu0 %v3772
        %v4524 = vpop.xlane.xlu0 %4523
        %4525 = vmax.xlane.f32.xlu0 %v3777
        %v4526 = vpop.xlane.xlu0 %4525
        %4527 = vmax.xlane.f32.xlu0 %v3780
        %v4528 = vpop.xlane.xlu0 %4527
        %4529 = vmax.xlane.f32.xlu0 %v3785
        %v4530 = vpop.xlane.xlu0 %4529
        %4531 = vmax.xlane.f32.xlu0 %v3788
        %v4532 = vpop.xlane.xlu0 %4531
        %4533 = vmax.xlane.f32.xlu0 %v3793
        %v4534 = vpop.xlane.xlu0 %4533
        %4535 = vmax.xlane.f32.xlu0 %v3796
        %v4536 = vpop.xlane.xlu0 %4535
        %4537 = vmax.xlane.f32.xlu0 %v3882
        %v4538 = vpop.xlane.xlu0 %4537
        %4539 = vmax.xlane.f32.xlu0 %v3885
        %v4540 = vpop.xlane.xlu0 %4539
        %4541 = vmax.xlane.f32.xlu0 %v3890
        %v4542 = vpop.xlane.xlu0 %4541
        %4543 = vmax.xlane.f32.xlu0 %v3893
        %v4544 = vpop.xlane.xlu0 %4543
        %4545 = vmax.xlane.f32.xlu0 %v3898
        %v4546 = vpop.xlane.xlu0 %4545
        %4547 = vmax.xlane.f32.xlu0 %v3901
        %v4548 = vpop.xlane.xlu0 %4547
        %4549 = vmax.xlane.f32.xlu0 %v3906
        %v4550 = vpop.xlane.xlu0 %4549
        %4551 = vmax.xlane.f32.xlu0 %v3909
        %v4552 = vpop.xlane.xlu0 %4551
        %4553 = vmax.xlane.f32.xlu0 %v3914
        %v4554 = vpop.xlane.xlu0 %4553
        %4555 = vmax.xlane.f32.xlu0 %v3917
        %v4556 = vpop.xlane.xlu0 %4555
        %4557 = vmax.xlane.f32.xlu0 %v3922
        %v4558 = vpop.xlane.xlu0 %4557
        %4559 = vmax.xlane.f32.xlu0 %v3925
        %v4560 = vpop.xlane.xlu0 %4559
        %4561 = vmax.xlane.f32.xlu0 %v3930
        %v4562 = vpop.xlane.xlu0 %4561
        %4563 = vmax.xlane.f32.xlu0 %v3933
        %v4564 = vpop.xlane.xlu0 %4563
        %4565 = vmax.xlane.f32.xlu0 %v3938
        %v4566 = vpop.xlane.xlu0 %4565
        %4567 = vmax.xlane.f32.xlu0 %v3941
        %v4568 = vpop.xlane.xlu0 %4567
        %4569 = vmax.xlane.f32.xlu0 %v4027
        %v4570 = vpop.xlane.xlu0 %4569
        %4571 = vmax.xlane.f32.xlu0 %v4030
        %v4572 = vpop.xlane.xlu0 %4571
        %4573 = vmax.xlane.f32.xlu0 %v4035
        %v4574 = vpop.xlane.xlu0 %4573
        %4575 = vmax.xlane.f32.xlu0 %v4038
        %v4576 = vpop.xlane.xlu0 %4575
        %4577 = vmax.xlane.f32.xlu0 %v4043
        %v4578 = vpop.xlane.xlu0 %4577
        %4579 = vmax.xlane.f32.xlu0 %v4046
        %v4580 = vpop.xlane.xlu0 %4579
        %4581 = vmax.xlane.f32.xlu0 %v4051
        %v4582 = vpop.xlane.xlu0 %4581
        %4583 = vmax.xlane.f32.xlu0 %v4054
        %v4584 = vpop.xlane.xlu0 %4583
        %4585 = vmax.xlane.f32.xlu0 %v4059
        %v4586 = vpop.xlane.xlu0 %4585
        %4587 = vmax.xlane.f32.xlu0 %v4062
        %v4588 = vpop.xlane.xlu0 %4587
        %4589 = vmax.xlane.f32.xlu0 %v4067
        %v4590 = vpop.xlane.xlu0 %4589
        %4591 = vmax.xlane.f32.xlu0 %v4070
        %v4592 = vpop.xlane.xlu0 %4591
        %4593 = vmax.xlane.f32.xlu0 %v4075
        %v4594 = vpop.xlane.xlu0 %4593
        %4595 = vmax.xlane.f32.xlu0 %v4078
        %v4596 = vpop.xlane.xlu0 %4595
        %4597 = vmax.xlane.f32.xlu0 %v4083
        %v4598 = vpop.xlane.xlu0 %4597
        %4599 = vmax.xlane.f32.xlu0 %v4086
        %v4600 = vpop.xlane.xlu0 %4599
        %v4601 = vsub.f32 %v1852, %v4090
        %v4602 = vsub.f32 %v1855, %v4092
        %v4603 = vsub.f32 %v1860, %v4094
        %v4604 = vsub.f32 %v1863, %v4096
        %v4605 = vsub.f32 %v1868, %v4098
        %v4606 = vsub.f32 %v1871, %v4100
        %v4607 = vsub.f32 %v1876, %v4102
        %v4608 = vsub.f32 %v1879, %v4104
        %v4609 = vsub.f32 %v1884, %v4106
        %v4610 = vsub.f32 %v1887, %v4108
        %v4611 = vsub.f32 %v1892, %v4110
        %v4612 = vsub.f32 %v1895, %v4112
        %v4613 = vsub.f32 %v1900, %v4114
        %v4614 = vsub.f32 %v1903, %v4116
        %v4615 = vsub.f32 %v1908, %v4118
        %v4616 = vsub.f32 %v1911, %v4120
        %v4617 = vsub.f32 %v1997, %v4122
        %v4618 = vsub.f32 %v2000, %v4124
        %v4619 = vsub.f32 %v2005, %v4126
        %v4620 = vsub.f32 %v2008, %v4128
        %v4621 = vsub.f32 %v2013, %v4130
        %v4622 = vsub.f32 %v2016, %v4132
        %v4623 = vsub.f32 %v2021, %v4134
        %v4624 = vsub.f32 %v2024, %v4136
        %v4625 = vsub.f32 %v2029, %v4138
        %v4626 = vsub.f32 %v2032, %v4140
        %v4627 = vsub.f32 %v2037, %v4142
        %v4628 = vsub.f32 %v2040, %v4144
        %v4629 = vsub.f32 %v2045, %v4146
        %v4630 = vsub.f32 %v2048, %v4148
        %v4631 = vsub.f32 %v2053, %v4150
        %v4632 = vsub.f32 %v2056, %v4152
        %v4633 = vsub.f32 %v2142, %v4154
        %v4634 = vsub.f32 %v2145, %v4156
        %v4635 = vsub.f32 %v2150, %v4158
        %v4636 = vsub.f32 %v2153, %v4160
        %v4637 = vsub.f32 %v2158, %v4162
        %v4638 = vsub.f32 %v2161, %v4164
        %v4639 = vsub.f32 %v2166, %v4166
        %v4640 = vsub.f32 %v2169, %v4168
        %v4641 = vsub.f32 %v2174, %v4170
        %v4642 = vsub.f32 %v2177, %v4172
        %v4643 = vsub.f32 %v2182, %v4174
        %v4644 = vsub.f32 %v2185, %v4176
        %v4645 = vsub.f32 %v2190, %v4178
        %v4646 = vsub.f32 %v2193, %v4180
        %v4647 = vsub.f32 %v2198, %v4182
        %v4648 = vsub.f32 %v2201, %v4184
        %v4649 = vsub.f32 %v2287, %v4186
        %v4650 = vsub.f32 %v2290, %v4188
        %v4651 = vsub.f32 %v2295, %v4190
        %v4652 = vsub.f32 %v2298, %v4192
        %v4653 = vsub.f32 %v2303, %v4194
        %v4654 = vsub.f32 %v2306, %v4196
        %v4655 = vsub.f32 %v2311, %v4198
        %v4656 = vsub.f32 %v2314, %v4200
        %v4657 = vsub.f32 %v2319, %v4202
        %v4658 = vsub.f32 %v2322, %v4204
        %v4659 = vsub.f32 %v2327, %v4206
        %v4660 = vsub.f32 %v2330, %v4208
        %v4661 = vsub.f32 %v2335, %v4210
        %v4662 = vsub.f32 %v2338, %v4212
        %v4663 = vsub.f32 %v2343, %v4214
        %v4664 = vsub.f32 %v2346, %v4216
        %v4665 = vsub.f32 %v2432, %v4218
        %v4666 = vsub.f32 %v2435, %v4220
        %v4667 = vsub.f32 %v2440, %v4222
        %v4668 = vsub.f32 %v2443, %v4224
        %v4669 = vsub.f32 %v2448, %v4226
        %v4670 = vsub.f32 %v2451, %v4228
        %v4671 = vsub.f32 %v2456, %v4230
        %v4672 = vsub.f32 %v2459, %v4232
        %v4673 = vsub.f32 %v2464, %v4234
        %v4674 = vsub.f32 %v2467, %v4236
        %v4675 = vsub.f32 %v2472, %v4238
        %v4676 = vsub.f32 %v2475, %v4240
        %v4677 = vsub.f32 %v2480, %v4242
        %v4678 = vsub.f32 %v2483, %v4244
        %v4679 = vsub.f32 %v2488, %v4246
        %v4680 = vsub.f32 %v2491, %v4248
        %v4681 = vsub.f32 %v2577, %v4250
        %v4682 = vsub.f32 %v2580, %v4252
        %v4683 = vsub.f32 %v2585, %v4254
        %v4684 = vsub.f32 %v2588, %v4256
        %v4685 = vsub.f32 %v2593, %v4258
        %v4686 = vsub.f32 %v2596, %v4260
        %v4687 = vsub.f32 %v2601, %v4262
        %v4688 = vsub.f32 %v2604, %v4264
        %v4689 = vsub.f32 %v2609, %v4266
        %v4690 = vsub.f32 %v2612, %v4268
        %v4691 = vsub.f32 %v2617, %v4270
        %v4692 = vsub.f32 %v2620, %v4272
        %v4693 = vsub.f32 %v2625, %v4274
        %v4694 = vsub.f32 %v2628, %v4276
        %v4695 = vsub.f32 %v2633, %v4278
        %v4696 = vsub.f32 %v2636, %v4280
        %v4697 = vsub.f32 %v2722, %v4282
        %v4698 = vsub.f32 %v2725, %v4284
        %v4699 = vsub.f32 %v2730, %v4286
        %v4700 = vsub.f32 %v2733, %v4288
        %v4701 = vsub.f32 %v2738, %v4290
        %v4702 = vsub.f32 %v2741, %v4292
        %v4703 = vsub.f32 %v2746, %v4294
        %v4704 = vsub.f32 %v2749, %v4296
        %v4705 = vsub.f32 %v2754, %v4298
        %v4706 = vsub.f32 %v2757, %v4300
        %v4707 = vsub.f32 %v2762, %v4302
        %v4708 = vsub.f32 %v2765, %v4304
        %v4709 = vsub.f32 %v2770, %v4306
        %v4710 = vsub.f32 %v2773, %v4308
        %v4711 = vsub.f32 %v2778, %v4310
        %v4712 = vsub.f32 %v2781, %v4312
        %v4713 = vsub.f32 %v2867, %v4314
        %v4714 = vsub.f32 %v2870, %v4316
        %v4715 = vsub.f32 %v2875, %v4318
        %v4716 = vsub.f32 %v2878, %v4320
        %v4717 = vsub.f32 %v2883, %v4322
        %v4718 = vsub.f32 %v2886, %v4324
        %v4719 = vsub.f32 %v2891, %v4326
        %v4720 = vsub.f32 %v2894, %v4328
        %v4721 = vsub.f32 %v2899, %v4330
        %v4722 = vsub.f32 %v2902, %v4332
        %v4723 = vsub.f32 %v2907, %v4334
        %v4724 = vsub.f32 %v2910, %v4336
        %v4725 = vsub.f32 %v2915, %v4338
        %v4726 = vsub.f32 %v2918, %v4340
        %v4727 = vsub.f32 %v2923, %v4342
        %v4728 = vsub.f32 %v2926, %v4344
        %v4729 = vsub.f32 %v3012, %v4346
        %v4730 = vsub.f32 %v3015, %v4348
        %v4731 = vsub.f32 %v3020, %v4350
        %v4732 = vsub.f32 %v3023, %v4352
        %v4733 = vsub.f32 %v3028, %v4354
        %v4734 = vsub.f32 %v3031, %v4356
        %v4735 = vsub.f32 %v3036, %v4358
        %v4736 = vsub.f32 %v3039, %v4360
        %v4737 = vsub.f32 %v3044, %v4362
        %v4738 = vsub.f32 %v3047, %v4364
        %v4739 = vsub.f32 %v3052, %v4366
        %v4740 = vsub.f32 %v3055, %v4368
        %v4741 = vsub.f32 %v3060, %v4370
        %v4742 = vsub.f32 %v3063, %v4372
        %v4743 = vsub.f32 %v3068, %v4374
        %v4744 = vsub.f32 %v3071, %v4376
        %v4745 = vsub.f32 %v3157, %v4378
        %v4746 = vsub.f32 %v3160, %v4380
        %v4747 = vsub.f32 %v3165, %v4382
        %v4748 = vsub.f32 %v3168, %v4384
        %v4749 = vsub.f32 %v3173, %v4386
        %v4750 = vsub.f32 %v3176, %v4388
        %v4751 = vsub.f32 %v3181, %v4390
        %v4752 = vsub.f32 %v3184, %v4392
        %v4753 = vsub.f32 %v3189, %v4394
        %v4754 = vsub.f32 %v3192, %v4396
        %v4755 = vsub.f32 %v3197, %v4398
        %v4756 = vsub.f32 %v3200, %v4400
        %v4757 = vsub.f32 %v3205, %v4402
        %v4758 = vsub.f32 %v3208, %v4404
        %v4759 = vsub.f32 %v3213, %v4406
        %v4760 = vsub.f32 %v3216, %v4408
        %v4761 = vsub.f32 %v3302, %v4410
        %v4762 = vsub.f32 %v3305, %v4412
        %v4763 = vsub.f32 %v3310, %v4414
        %v4764 = vsub.f32 %v3313, %v4416
        %v4765 = vsub.f32 %v3318, %v4418
        %v4766 = vsub.f32 %v3321, %v4420
        %v4767 = vsub.f32 %v3326, %v4422
        %v4768 = vsub.f32 %v3329, %v4424
        %v4769 = vsub.f32 %v3334, %v4426
        %v4770 = vsub.f32 %v3337, %v4428
        %v4771 = vsub.f32 %v3342, %v4430
        %v4772 = vsub.f32 %v3345, %v4432
        %v4773 = vsub.f32 %v3350, %v4434
        %v4774 = vsub.f32 %v3353, %v4436
        %v4775 = vsub.f32 %v3358, %v4438
        %v4776 = vsub.f32 %v3361, %v4440
        %v4777 = vsub.f32 %v3447, %v4442
        %v4778 = vsub.f32 %v3450, %v4444
        %v4779 = vsub.f32 %v3455, %v4446
        %v4780 = vsub.f32 %v3458, %v4448
        %v4781 = vsub.f32 %v3463, %v4450
        %v4782 = vsub.f32 %v3466, %v4452
        %v4783 = vsub.f32 %v3471, %v4454
        %v4784 = vsub.f32 %v3474, %v4456
        %v4785 = vsub.f32 %v3479, %v4458
        %v4786 = vsub.f32 %v3482, %v4460
        %v4787 = vsub.f32 %v3487, %v4462
        %v4788 = vsub.f32 %v3490, %v4464
        %v4789 = vsub.f32 %v3495, %v4466
        %v4790 = vsub.f32 %v3498, %v4468
        %v4791 = vsub.f32 %v3503, %v4470
        %v4792 = vsub.f32 %v3506, %v4472
        %v4793 = vsub.f32 %v3592, %v4474
        %v4794 = vsub.f32 %v3595, %v4476
        %v4795 = vsub.f32 %v3600, %v4478
        %v4796 = vsub.f32 %v3603, %v4480
        %v4797 = vsub.f32 %v3608, %v4482
        %v4798 = vsub.f32 %v3611, %v4484
        %v4799 = vsub.f32 %v3616, %v4486
        %v4800 = vsub.f32 %v3619, %v4488
        %v4801 = vsub.f32 %v3624, %v4490
        %v4802 = vsub.f32 %v3627, %v4492
        %v4803 = vsub.f32 %v3632, %v4494
        %v4804 = vsub.f32 %v3635, %v4496
        %v4805 = vsub.f32 %v3640, %v4498
        %v4806 = vsub.f32 %v3643, %v4500
        %v4807 = vsub.f32 %v3648, %v4502
        %v4808 = vsub.f32 %v3651, %v4504
        %v4809 = vsub.f32 %v3737, %v4506
        %v4810 = vsub.f32 %v3740, %v4508
        %v4811 = vsub.f32 %v3745, %v4510
        %v4812 = vsub.f32 %v3748, %v4512
        %v4813 = vsub.f32 %v3753, %v4514
        %v4814 = vsub.f32 %v3756, %v4516
        %v4815 = vsub.f32 %v3761, %v4518
        %v4816 = vsub.f32 %v3764, %v4520
        %v4817 = vsub.f32 %v3769, %v4522
        %v4818 = vsub.f32 %v3772, %v4524
        %v4819 = vsub.f32 %v3777, %v4526
        %v4820 = vsub.f32 %v3780, %v4528
        %v4821 = vsub.f32 %v3785, %v4530
        %v4822 = vsub.f32 %v3788, %v4532
        %v4823 = vsub.f32 %v3793, %v4534
        %v4824 = vsub.f32 %v3796, %v4536
        %v4825 = vsub.f32 %v3882, %v4538
        %v4826 = vsub.f32 %v3885, %v4540
        %v4827 = vsub.f32 %v3890, %v4542
        %v4828 = vsub.f32 %v3893, %v4544
        %v4829 = vsub.f32 %v3898, %v4546
        %v4830 = vsub.f32 %v3901, %v4548
        %v4831 = vsub.f32 %v3906, %v4550
        %v4832 = vsub.f32 %v3909, %v4552
        %v4833 = vsub.f32 %v3914, %v4554
        %v4834 = vsub.f32 %v3917, %v4556
        %v4835 = vsub.f32 %v3922, %v4558
        %v4836 = vsub.f32 %v3925, %v4560
        %v4837 = vsub.f32 %v3930, %v4562
        %v4838 = vsub.f32 %v3933, %v4564
        %v4839 = vsub.f32 %v3938, %v4566
        %v4840 = vsub.f32 %v3941, %v4568
        %v4841 = vsub.f32 %v4027, %v4570
        %v4842 = vsub.f32 %v4030, %v4572
        %v4843 = vsub.f32 %v4035, %v4574
        %v4844 = vsub.f32 %v4038, %v4576
        %v4845 = vsub.f32 %v4043, %v4578
        %v4846 = vsub.f32 %v4046, %v4580
        %v4847 = vsub.f32 %v4051, %v4582
        %v4848 = vsub.f32 %v4054, %v4584
        %v4849 = vsub.f32 %v4059, %v4586
        %v4850 = vsub.f32 %v4062, %v4588
        %v4851 = vsub.f32 %v4067, %v4590
        %v4852 = vsub.f32 %v4070, %v4592
        %v4853 = vsub.f32 %v4075, %v4594
        %v4854 = vsub.f32 %v4078, %v4596
        %v4855 = vsub.f32 %v4083, %v4598
        %v4856 = vsub.f32 %v4086, %v4600
        %v4857 = vmul.f32 %v4601, 1.442695
        %v4858 = vpow.pop %v4857
        %v4859 = vmul.f32 %v4602, 1.442695
        %v4860 = vpow.pop %v4859
        %v4861 = vmul.f32 %v4603, 1.442695
        %v4862 = vpow.pop %v4861
        %v4863 = vmul.f32 %v4604, 1.442695
        %v4864 = vpow.pop %v4863
        %v4865 = vmul.f32 %v4605, 1.442695
        %v4866 = vpow.pop %v4865
        %v4867 = vmul.f32 %v4606, 1.442695
        %v4868 = vpow.pop %v4867
        %v4869 = vmul.f32 %v4607, 1.442695
        %v4870 = vpow.pop %v4869
        %v4871 = vmul.f32 %v4608, 1.442695
        %v4872 = vpow.pop %v4871
        %v4873 = vmul.f32 %v4609, 1.442695
        %v4874 = vpow.pop %v4873
        %v4875 = vmul.f32 %v4610, 1.442695
        %v4876 = vpow.pop %v4875
        %v4877 = vmul.f32 %v4611, 1.442695
        %v4878 = vpow.pop %v4877
        %v4879 = vmul.f32 %v4612, 1.442695
        %v4880 = vpow.pop %v4879
        %v4881 = vmul.f32 %v4613, 1.442695
        %v4882 = vpow.pop %v4881
        %v4883 = vmul.f32 %v4614, 1.442695
        %v4884 = vpow.pop %v4883
        %v4885 = vmul.f32 %v4615, 1.442695
        %v4886 = vpow.pop %v4885
        %v4887 = vmul.f32 %v4616, 1.442695
        %v4888 = vpow.pop %v4887
        %v4889 = vmul.f32 %v4617, 1.442695
        %v4890 = vpow.pop %v4889
        %v4891 = vmul.f32 %v4618, 1.442695
        %v4892 = vpow.pop %v4891
        %v4893 = vmul.f32 %v4619, 1.442695
        %v4894 = vpow.pop %v4893
        %v4895 = vmul.f32 %v4620, 1.442695
        %v4896 = vpow.pop %v4895
        %v4897 = vmul.f32 %v4621, 1.442695
        %v4898 = vpow.pop %v4897
        %v4899 = vmul.f32 %v4622, 1.442695
        %v4900 = vpow.pop %v4899
        %v4901 = vmul.f32 %v4623, 1.442695
        %v4902 = vpow.pop %v4901
        %v4903 = vmul.f32 %v4624, 1.442695
        %v4904 = vpow.pop %v4903
        %v4905 = vmul.f32 %v4625, 1.442695
        %v4906 = vpow.pop %v4905
        %v4907 = vmul.f32 %v4626, 1.442695
        %v4908 = vpow.pop %v4907
        %v4909 = vmul.f32 %v4627, 1.442695
        %v4910 = vpow.pop %v4909
        %v4911 = vmul.f32 %v4628, 1.442695
        %v4912 = vpow.pop %v4911
        %v4913 = vmul.f32 %v4629, 1.442695
        %v4914 = vpow.pop %v4913
        %v4915 = vmul.f32 %v4630, 1.442695
        %v4916 = vpow.pop %v4915
        %v4917 = vmul.f32 %v4631, 1.442695
        %v4918 = vpow.pop %v4917
        %v4919 = vmul.f32 %v4632, 1.442695
        %v4920 = vpow.pop %v4919
        %v4921 = vmul.f32 %v4633, 1.442695
        %v4922 = vpow.pop %v4921
        %v4923 = vmul.f32 %v4634, 1.442695
        %v4924 = vpow.pop %v4923
        %v4925 = vmul.f32 %v4635, 1.442695
        %v4926 = vpow.pop %v4925
        %v4927 = vmul.f32 %v4636, 1.442695
        %v4928 = vpow.pop %v4927
        %v4929 = vmul.f32 %v4637, 1.442695
        %v4930 = vpow.pop %v4929
        %v4931 = vmul.f32 %v4638, 1.442695
        %v4932 = vpow.pop %v4931
        %v4933 = vmul.f32 %v4639, 1.442695
        %v4934 = vpow.pop %v4933
        %v4935 = vmul.f32 %v4640, 1.442695
        %v4936 = vpow.pop %v4935
        %v4937 = vmul.f32 %v4641, 1.442695
        %v4938 = vpow.pop %v4937
        %v4939 = vmul.f32 %v4642, 1.442695
        %v4940 = vpow.pop %v4939
        %v4941 = vmul.f32 %v4643, 1.442695
        %v4942 = vpow.pop %v4941
        %v4943 = vmul.f32 %v4644, 1.442695
        %v4944 = vpow.pop %v4943
        %v4945 = vmul.f32 %v4645, 1.442695
        %v4946 = vpow.pop %v4945
        %v4947 = vmul.f32 %v4646, 1.442695
        %v4948 = vpow.pop %v4947
        %v4949 = vmul.f32 %v4647, 1.442695
        %v4950 = vpow.pop %v4949
        %v4951 = vmul.f32 %v4648, 1.442695
        %v4952 = vpow.pop %v4951
        %v4953 = vmul.f32 %v4649, 1.442695
        %v4954 = vpow.pop %v4953
        %v4955 = vmul.f32 %v4650, 1.442695
        %v4956 = vpow.pop %v4955
        %v4957 = vmul.f32 %v4651, 1.442695
        %v4958 = vpow.pop %v4957
        %v4959 = vmul.f32 %v4652, 1.442695
        %v4960 = vpow.pop %v4959
        %v4961 = vmul.f32 %v4653, 1.442695
        %v4962 = vpow.pop %v4961
        %v4963 = vmul.f32 %v4654, 1.442695
        %v4964 = vpow.pop %v4963
        %v4965 = vmul.f32 %v4655, 1.442695
        %v4966 = vpow.pop %v4965
        %v4967 = vmul.f32 %v4656, 1.442695
        %v4968 = vpow.pop %v4967
        %v4969 = vmul.f32 %v4657, 1.442695
        %v4970 = vpow.pop %v4969
        %v4971 = vmul.f32 %v4658, 1.442695
        %v4972 = vpow.pop %v4971
        %v4973 = vmul.f32 %v4659, 1.442695
        %v4974 = vpow.pop %v4973
        %v4975 = vmul.f32 %v4660, 1.442695
        %v4976 = vpow.pop %v4975
        %v4977 = vmul.f32 %v4661, 1.442695
        %v4978 = vpow.pop %v4977
        %v4979 = vmul.f32 %v4662, 1.442695
        %v4980 = vpow.pop %v4979
        %v4981 = vmul.f32 %v4663, 1.442695
        %v4982 = vpow.pop %v4981
        %v4983 = vmul.f32 %v4664, 1.442695
        %v4984 = vpow.pop %v4983
        %v4985 = vmul.f32 %v4665, 1.442695
        %v4986 = vpow.pop %v4985
        %v4987 = vmul.f32 %v4666, 1.442695
        %v4988 = vpow.pop %v4987
        %v4989 = vmul.f32 %v4667, 1.442695
        %v4990 = vpow.pop %v4989
        %v4991 = vmul.f32 %v4668, 1.442695
        %v4992 = vpow.pop %v4991
        %v4993 = vmul.f32 %v4669, 1.442695
        %v4994 = vpow.pop %v4993
        %v4995 = vmul.f32 %v4670, 1.442695
        %v4996 = vpow.pop %v4995
        %v4997 = vmul.f32 %v4671, 1.442695
        %v4998 = vpow.pop %v4997
        %v4999 = vmul.f32 %v4672, 1.442695
        %v5000 = vpow.pop %v4999
        %v5001 = vmul.f32 %v4673, 1.442695
        %v5002 = vpow.pop %v5001
        %v5003 = vmul.f32 %v4674, 1.442695
        %v5004 = vpow.pop %v5003
        %v5005 = vmul.f32 %v4675, 1.442695
        %v5006 = vpow.pop %v5005
        %v5007 = vmul.f32 %v4676, 1.442695
        %v5008 = vpow.pop %v5007
        %v5009 = vmul.f32 %v4677, 1.442695
        %v5010 = vpow.pop %v5009
        %v5011 = vmul.f32 %v4678, 1.442695
        %v5012 = vpow.pop %v5011
        %v5013 = vmul.f32 %v4679, 1.442695
        %v5014 = vpow.pop %v5013
        %v5015 = vmul.f32 %v4680, 1.442695
        %v5016 = vpow.pop %v5015
        %v5017 = vmul.f32 %v4681, 1.442695
        %v5018 = vpow.pop %v5017
        %v5019 = vmul.f32 %v4682, 1.442695
        %v5020 = vpow.pop %v5019
        %v5021 = vmul.f32 %v4683, 1.442695
        %v5022 = vpow.pop %v5021
        %v5023 = vmul.f32 %v4684, 1.442695
        %v5024 = vpow.pop %v5023
        %v5025 = vmul.f32 %v4685, 1.442695
        %v5026 = vpow.pop %v5025
        %v5027 = vmul.f32 %v4686, 1.442695
        %v5028 = vpow.pop %v5027
        %v5029 = vmul.f32 %v4687, 1.442695
        %v5030 = vpow.pop %v5029
        %v5031 = vmul.f32 %v4688, 1.442695
        %v5032 = vpow.pop %v5031
        %v5033 = vmul.f32 %v4689, 1.442695
        %v5034 = vpow.pop %v5033
        %v5035 = vmul.f32 %v4690, 1.442695
        %v5036 = vpow.pop %v5035
        %v5037 = vmul.f32 %v4691, 1.442695
        %v5038 = vpow.pop %v5037
        %v5039 = vmul.f32 %v4692, 1.442695
        %v5040 = vpow.pop %v5039
        %v5041 = vmul.f32 %v4693, 1.442695
        %v5042 = vpow.pop %v5041
        %v5043 = vmul.f32 %v4694, 1.442695
        %v5044 = vpow.pop %v5043
        %v5045 = vmul.f32 %v4695, 1.442695
        %v5046 = vpow.pop %v5045
        %v5047 = vmul.f32 %v4696, 1.442695
        %v5048 = vpow.pop %v5047
        %v5049 = vmul.f32 %v4697, 1.442695
        %v5050 = vpow.pop %v5049
        %v5051 = vmul.f32 %v4698, 1.442695
        %v5052 = vpow.pop %v5051
        %v5053 = vmul.f32 %v4699, 1.442695
        %v5054 = vpow.pop %v5053
        %v5055 = vmul.f32 %v4700, 1.442695
        %v5056 = vpow.pop %v5055
        %v5057 = vmul.f32 %v4701, 1.442695
        %v5058 = vpow.pop %v5057
        %v5059 = vmul.f32 %v4702, 1.442695
        %v5060 = vpow.pop %v5059
        %v5061 = vmul.f32 %v4703, 1.442695
        %v5062 = vpow.pop %v5061
        %v5063 = vmul.f32 %v4704, 1.442695
        %v5064 = vpow.pop %v5063
        %v5065 = vmul.f32 %v4705, 1.442695
        %v5066 = vpow.pop %v5065
        %v5067 = vmul.f32 %v4706, 1.442695
        %v5068 = vpow.pop %v5067
        %v5069 = vmul.f32 %v4707, 1.442695
        %v5070 = vpow.pop %v5069
        %v5071 = vmul.f32 %v4708, 1.442695
        %v5072 = vpow.pop %v5071
        %v5073 = vmul.f32 %v4709, 1.442695
        %v5074 = vpow.pop %v5073
        %v5075 = vmul.f32 %v4710, 1.442695
        %v5076 = vpow.pop %v5075
        %v5077 = vmul.f32 %v4711, 1.442695
        %v5078 = vpow.pop %v5077
        %v5079 = vmul.f32 %v4712, 1.442695
        %v5080 = vpow.pop %v5079
        %v5081 = vmul.f32 %v4713, 1.442695
        %v5082 = vpow.pop %v5081
        %v5083 = vmul.f32 %v4714, 1.442695
        %v5084 = vpow.pop %v5083
        %v5085 = vmul.f32 %v4715, 1.442695
        %v5086 = vpow.pop %v5085
        %v5087 = vmul.f32 %v4716, 1.442695
        %v5088 = vpow.pop %v5087
        %v5089 = vmul.f32 %v4717, 1.442695
        %v5090 = vpow.pop %v5089
        %v5091 = vmul.f32 %v4718, 1.442695
        %v5092 = vpow.pop %v5091
        %v5093 = vmul.f32 %v4719, 1.442695
        %v5094 = vpow.pop %v5093
        %v5095 = vmul.f32 %v4720, 1.442695
        %v5096 = vpow.pop %v5095
        %v5097 = vmul.f32 %v4721, 1.442695
        %v5098 = vpow.pop %v5097
        %v5099 = vmul.f32 %v4722, 1.442695
        %v5100 = vpow.pop %v5099
        %v5101 = vmul.f32 %v4723, 1.442695
        %v5102 = vpow.pop %v5101
        %v5103 = vmul.f32 %v4724, 1.442695
        %v5104 = vpow.pop %v5103
        %v5105 = vmul.f32 %v4725, 1.442695
        %v5106 = vpow.pop %v5105
        %v5107 = vmul.f32 %v4726, 1.442695
        %v5108 = vpow.pop %v5107
        %v5109 = vmul.f32 %v4727, 1.442695
        %v5110 = vpow.pop %v5109
        %v5111 = vmul.f32 %v4728, 1.442695
        %v5112 = vpow.pop %v5111
        %v5113 = vmul.f32 %v4729, 1.442695
        %v5114 = vpow.pop %v5113
        %v5115 = vmul.f32 %v4730, 1.442695
        %v5116 = vpow.pop %v5115
        %v5117 = vmul.f32 %v4731, 1.442695
        %v5118 = vpow.pop %v5117
        %v5119 = vmul.f32 %v4732, 1.442695
        %v5120 = vpow.pop %v5119
        %v5121 = vmul.f32 %v4733, 1.442695
        %v5122 = vpow.pop %v5121
        %v5123 = vmul.f32 %v4734, 1.442695
        %v5124 = vpow.pop %v5123
        %v5125 = vmul.f32 %v4735, 1.442695
        %v5126 = vpow.pop %v5125
        %v5127 = vmul.f32 %v4736, 1.442695
        %v5128 = vpow.pop %v5127
        %v5129 = vmul.f32 %v4737, 1.442695
        %v5130 = vpow.pop %v5129
        %v5131 = vmul.f32 %v4738, 1.442695
        %v5132 = vpow.pop %v5131
        %v5133 = vmul.f32 %v4739, 1.442695
        %v5134 = vpow.pop %v5133
        %v5135 = vmul.f32 %v4740, 1.442695
        %v5136 = vpow.pop %v5135
        %v5137 = vmul.f32 %v4741, 1.442695
        %v5138 = vpow.pop %v5137
        %v5139 = vmul.f32 %v4742, 1.442695
        %v5140 = vpow.pop %v5139
        %v5141 = vmul.f32 %v4743, 1.442695
        %v5142 = vpow.pop %v5141
        %v5143 = vmul.f32 %v4744, 1.442695
        %v5144 = vpow.pop %v5143
        %v5145 = vmul.f32 %v4745, 1.442695
        %v5146 = vpow.pop %v5145
        %v5147 = vmul.f32 %v4746, 1.442695
        %v5148 = vpow.pop %v5147
        %v5149 = vmul.f32 %v4747, 1.442695
        %v5150 = vpow.pop %v5149
        %v5151 = vmul.f32 %v4748, 1.442695
        %v5152 = vpow.pop %v5151
        %v5153 = vmul.f32 %v4749, 1.442695
        %v5154 = vpow.pop %v5153
        %v5155 = vmul.f32 %v4750, 1.442695
        %v5156 = vpow.pop %v5155
        %v5157 = vmul.f32 %v4751, 1.442695
        %v5158 = vpow.pop %v5157
        %v5159 = vmul.f32 %v4752, 1.442695
        %v5160 = vpow.pop %v5159
        %v5161 = vmul.f32 %v4753, 1.442695
        %v5162 = vpow.pop %v5161
        %v5163 = vmul.f32 %v4754, 1.442695
        %v5164 = vpow.pop %v5163
        %v5165 = vmul.f32 %v4755, 1.442695
        %v5166 = vpow.pop %v5165
        %v5167 = vmul.f32 %v4756, 1.442695
        %v5168 = vpow.pop %v5167
        %v5169 = vmul.f32 %v4757, 1.442695
        %v5170 = vpow.pop %v5169
        %v5171 = vmul.f32 %v4758, 1.442695
        %v5172 = vpow.pop %v5171
        %v5173 = vmul.f32 %v4759, 1.442695
        %v5174 = vpow.pop %v5173
        %v5175 = vmul.f32 %v4760, 1.442695
        %v5176 = vpow.pop %v5175
        %v5177 = vmul.f32 %v4761, 1.442695
        %v5178 = vpow.pop %v5177
        %v5179 = vmul.f32 %v4762, 1.442695
        %v5180 = vpow.pop %v5179
        %v5181 = vmul.f32 %v4763, 1.442695
        %v5182 = vpow.pop %v5181
        %v5183 = vmul.f32 %v4764, 1.442695
        %v5184 = vpow.pop %v5183
        %v5185 = vmul.f32 %v4765, 1.442695
        %v5186 = vpow.pop %v5185
        %v5187 = vmul.f32 %v4766, 1.442695
        %v5188 = vpow.pop %v5187
        %v5189 = vmul.f32 %v4767, 1.442695
        %v5190 = vpow.pop %v5189
        %v5191 = vmul.f32 %v4768, 1.442695
        %v5192 = vpow.pop %v5191
        %v5193 = vmul.f32 %v4769, 1.442695
        %v5194 = vpow.pop %v5193
        %v5195 = vmul.f32 %v4770, 1.442695
        %v5196 = vpow.pop %v5195
        %v5197 = vmul.f32 %v4771, 1.442695
        %v5198 = vpow.pop %v5197
        %v5199 = vmul.f32 %v4772, 1.442695
        %v5200 = vpow.pop %v5199
        %v5201 = vmul.f32 %v4773, 1.442695
        %v5202 = vpow.pop %v5201
        %v5203 = vmul.f32 %v4774, 1.442695
        %v5204 = vpow.pop %v5203
        %v5205 = vmul.f32 %v4775, 1.442695
        %v5206 = vpow.pop %v5205
        %v5207 = vmul.f32 %v4776, 1.442695
        %v5208 = vpow.pop %v5207
        %v5209 = vmul.f32 %v4777, 1.442695
        %v5210 = vpow.pop %v5209
        %v5211 = vmul.f32 %v4778, 1.442695
        %v5212 = vpow.pop %v5211
        %v5213 = vmul.f32 %v4779, 1.442695
        %v5214 = vpow.pop %v5213
        %v5215 = vmul.f32 %v4780, 1.442695
        %v5216 = vpow.pop %v5215
        %v5217 = vmul.f32 %v4781, 1.442695
        %v5218 = vpow.pop %v5217
        %v5219 = vmul.f32 %v4782, 1.442695
        %v5220 = vpow.pop %v5219
        %v5221 = vmul.f32 %v4783, 1.442695
        %v5222 = vpow.pop %v5221
        %v5223 = vmul.f32 %v4784, 1.442695
        %v5224 = vpow.pop %v5223
        %v5225 = vmul.f32 %v4785, 1.442695
        %v5226 = vpow.pop %v5225
        %v5227 = vmul.f32 %v4786, 1.442695
        %v5228 = vpow.pop %v5227
        %v5229 = vmul.f32 %v4787, 1.442695
        %v5230 = vpow.pop %v5229
        %v5231 = vmul.f32 %v4788, 1.442695
        %v5232 = vpow.pop %v5231
        %v5233 = vmul.f32 %v4789, 1.442695
        %v5234 = vpow.pop %v5233
        %v5235 = vmul.f32 %v4790, 1.442695
        %v5236 = vpow.pop %v5235
        %v5237 = vmul.f32 %v4791, 1.442695
        %v5238 = vpow.pop %v5237
        %v5239 = vmul.f32 %v4792, 1.442695
        %v5240 = vpow.pop %v5239
        %v5241 = vmul.f32 %v4793, 1.442695
        %v5242 = vpow.pop %v5241
        %v5243 = vmul.f32 %v4794, 1.442695
        %v5244 = vpow.pop %v5243
        %v5245 = vmul.f32 %v4795, 1.442695
        %v5246 = vpow.pop %v5245
        %v5247 = vmul.f32 %v4796, 1.442695
        %v5248 = vpow.pop %v5247
        %v5249 = vmul.f32 %v4797, 1.442695
        %v5250 = vpow.pop %v5249
        %v5251 = vmul.f32 %v4798, 1.442695
        %v5252 = vpow.pop %v5251
        %v5253 = vmul.f32 %v4799, 1.442695
        %v5254 = vpow.pop %v5253
        %v5255 = vmul.f32 %v4800, 1.442695
        %v5256 = vpow.pop %v5255
        %v5257 = vmul.f32 %v4801, 1.442695
        %v5258 = vpow.pop %v5257
        %v5259 = vmul.f32 %v4802, 1.442695
        %v5260 = vpow.pop %v5259
        %v5261 = vmul.f32 %v4803, 1.442695
        %v5262 = vpow.pop %v5261
        %v5263 = vmul.f32 %v4804, 1.442695
        %v5264 = vpow.pop %v5263
        %v5265 = vmul.f32 %v4805, 1.442695
        %v5266 = vpow.pop %v5265
        %v5267 = vmul.f32 %v4806, 1.442695
        %v5268 = vpow.pop %v5267
        %v5269 = vmul.f32 %v4807, 1.442695
        %v5270 = vpow.pop %v5269
        %v5271 = vmul.f32 %v4808, 1.442695
        %v5272 = vpow.pop %v5271
        %v5273 = vmul.f32 %v4809, 1.442695
        %v5274 = vpow.pop %v5273
        %v5275 = vmul.f32 %v4810, 1.442695
        %v5276 = vpow.pop %v5275
        %v5277 = vmul.f32 %v4811, 1.442695
        %v5278 = vpow.pop %v5277
        %v5279 = vmul.f32 %v4812, 1.442695
        %v5280 = vpow.pop %v5279
        %v5281 = vmul.f32 %v4813, 1.442695
        %v5282 = vpow.pop %v5281
        %v5283 = vmul.f32 %v4814, 1.442695
        %v5284 = vpow.pop %v5283
        %v5285 = vmul.f32 %v4815, 1.442695
        %v5286 = vpow.pop %v5285
        %v5287 = vmul.f32 %v4816, 1.442695
        %v5288 = vpow.pop %v5287
        %v5289 = vmul.f32 %v4817, 1.442695
        %v5290 = vpow.pop %v5289
        %v5291 = vmul.f32 %v4818, 1.442695
        %v5292 = vpow.pop %v5291
        %v5293 = vmul.f32 %v4819, 1.442695
        %v5294 = vpow.pop %v5293
        %v5295 = vmul.f32 %v4820, 1.442695
        %v5296 = vpow.pop %v5295
        %v5297 = vmul.f32 %v4821, 1.442695
        %v5298 = vpow.pop %v5297
        %v5299 = vmul.f32 %v4822, 1.442695
        %v5300 = vpow.pop %v5299
        %v5301 = vmul.f32 %v4823, 1.442695
        %v5302 = vpow.pop %v5301
        %v5303 = vmul.f32 %v4824, 1.442695
        %v5304 = vpow.pop %v5303
        %v5305 = vmul.f32 %v4825, 1.442695
        %v5306 = vpow.pop %v5305
        %v5307 = vmul.f32 %v4826, 1.442695
        %v5308 = vpow.pop %v5307
        %v5309 = vmul.f32 %v4827, 1.442695
        %v5310 = vpow.pop %v5309
        %v5311 = vmul.f32 %v4828, 1.442695
        %v5312 = vpow.pop %v5311
        %v5313 = vmul.f32 %v4829, 1.442695
        %v5314 = vpow.pop %v5313
        %v5315 = vmul.f32 %v4830, 1.442695
        %v5316 = vpow.pop %v5315
        %v5317 = vmul.f32 %v4831, 1.442695
        %v5318 = vpow.pop %v5317
        %v5319 = vmul.f32 %v4832, 1.442695
        %v5320 = vpow.pop %v5319
        %v5321 = vmul.f32 %v4833, 1.442695
        %v5322 = vpow.pop %v5321
        %v5323 = vmul.f32 %v4834, 1.442695
        %v5324 = vpow.pop %v5323
        %v5325 = vmul.f32 %v4835, 1.442695
        %v5326 = vpow.pop %v5325
        %v5327 = vmul.f32 %v4836, 1.442695
        %v5328 = vpow.pop %v5327
        %v5329 = vmul.f32 %v4837, 1.442695
        %v5330 = vpow.pop %v5329
        %v5331 = vmul.f32 %v4838, 1.442695
        %v5332 = vpow.pop %v5331
        %v5333 = vmul.f32 %v4839, 1.442695
        %v5334 = vpow.pop %v5333
        %v5335 = vmul.f32 %v4840, 1.442695
        %v5336 = vpow.pop %v5335
        %v5337 = vmul.f32 %v4841, 1.442695
        %v5338 = vpow.pop %v5337
        %v5339 = vmul.f32 %v4842, 1.442695
        %v5340 = vpow.pop %v5339
        %v5341 = vmul.f32 %v4843, 1.442695
        %v5342 = vpow.pop %v5341
        %v5343 = vmul.f32 %v4844, 1.442695
        %v5344 = vpow.pop %v5343
        %v5345 = vmul.f32 %v4845, 1.442695
        %v5346 = vpow.pop %v5345
        %v5347 = vmul.f32 %v4846, 1.442695
        %v5348 = vpow.pop %v5347
        %v5349 = vmul.f32 %v4847, 1.442695
        %v5350 = vpow.pop %v5349
        %v5351 = vmul.f32 %v4848, 1.442695
        %v5352 = vpow.pop %v5351
        %v5353 = vmul.f32 %v4849, 1.442695
        %v5354 = vpow.pop %v5353
        %v5355 = vmul.f32 %v4850, 1.442695
        %v5356 = vpow.pop %v5355
        %v5357 = vmul.f32 %v4851, 1.442695
        %v5358 = vpow.pop %v5357
        %v5359 = vmul.f32 %v4852, 1.442695
        %v5360 = vpow.pop %v5359
        %v5361 = vmul.f32 %v4853, 1.442695
        %v5362 = vpow.pop %v5361
        %v5363 = vmul.f32 %v4854, 1.442695
        %v5364 = vpow.pop %v5363
        %v5365 = vmul.f32 %v4855, 1.442695
        %v5366 = vpow.pop %v5365
        %v5367 = vmul.f32 %v4856, 1.442695
        %v5368 = vpow.pop %v5367
        %5369 = vadd.xlane.f32.xlu0 %v4858
        %v5370 = vpop.xlane.xlu0 %5369
        %5371 = vadd.xlane.f32.xlu0 %v4860
        %v5372 = vpop.xlane.xlu0 %5371
        %5373 = vadd.xlane.f32.xlu0 %v4862
        %v5374 = vpop.xlane.xlu0 %5373
        %5375 = vadd.xlane.f32.xlu0 %v4864
        %v5376 = vpop.xlane.xlu0 %5375
        %5377 = vadd.xlane.f32.xlu0 %v4866
        %v5378 = vpop.xlane.xlu0 %5377
        %5379 = vadd.xlane.f32.xlu0 %v4868
        %v5380 = vpop.xlane.xlu0 %5379
        %5381 = vadd.xlane.f32.xlu0 %v4870
        %v5382 = vpop.xlane.xlu0 %5381
        %5383 = vadd.xlane.f32.xlu0 %v4872
        %v5384 = vpop.xlane.xlu0 %5383
        %5385 = vadd.xlane.f32.xlu0 %v4874
        %v5386 = vpop.xlane.xlu0 %5385
        %5387 = vadd.xlane.f32.xlu0 %v4876
        %v5388 = vpop.xlane.xlu0 %5387
        %5389 = vadd.xlane.f32.xlu0 %v4878
        %v5390 = vpop.xlane.xlu0 %5389
        %5391 = vadd.xlane.f32.xlu0 %v4880
        %v5392 = vpop.xlane.xlu0 %5391
        %5393 = vadd.xlane.f32.xlu0 %v4882
        %v5394 = vpop.xlane.xlu0 %5393
        %5395 = vadd.xlane.f32.xlu0 %v4884
        %v5396 = vpop.xlane.xlu0 %5395
        %5397 = vadd.xlane.f32.xlu0 %v4886
        %v5398 = vpop.xlane.xlu0 %5397
        %5399 = vadd.xlane.f32.xlu0 %v4888
        %v5400 = vpop.xlane.xlu0 %5399
        %5401 = vadd.xlane.f32.xlu0 %v4890
        %v5402 = vpop.xlane.xlu0 %5401
        %5403 = vadd.xlane.f32.xlu0 %v4892
        %v5404 = vpop.xlane.xlu0 %5403
        %5405 = vadd.xlane.f32.xlu0 %v4894
        %v5406 = vpop.xlane.xlu0 %5405
        %5407 = vadd.xlane.f32.xlu0 %v4896
        %v5408 = vpop.xlane.xlu0 %5407
        %5409 = vadd.xlane.f32.xlu0 %v4898
        %v5410 = vpop.xlane.xlu0 %5409
        %5411 = vadd.xlane.f32.xlu0 %v4900
        %v5412 = vpop.xlane.xlu0 %5411
        %5413 = vadd.xlane.f32.xlu0 %v4902
        %v5414 = vpop.xlane.xlu0 %5413
        %5415 = vadd.xlane.f32.xlu0 %v4904
        %v5416 = vpop.xlane.xlu0 %5415
        %5417 = vadd.xlane.f32.xlu0 %v4906
        %v5418 = vpop.xlane.xlu0 %5417
        %5419 = vadd.xlane.f32.xlu0 %v4908
        %v5420 = vpop.xlane.xlu0 %5419
        %5421 = vadd.xlane.f32.xlu0 %v4910
        %v5422 = vpop.xlane.xlu0 %5421
        %5423 = vadd.xlane.f32.xlu0 %v4912
        %v5424 = vpop.xlane.xlu0 %5423
        %5425 = vadd.xlane.f32.xlu0 %v4914
        %v5426 = vpop.xlane.xlu0 %5425
        %5427 = vadd.xlane.f32.xlu0 %v4916
        %v5428 = vpop.xlane.xlu0 %5427
        %5429 = vadd.xlane.f32.xlu0 %v4918
        %v5430 = vpop.xlane.xlu0 %5429
        %5431 = vadd.xlane.f32.xlu0 %v4920
        %v5432 = vpop.xlane.xlu0 %5431
        %5433 = vadd.xlane.f32.xlu0 %v4922
        %v5434 = vpop.xlane.xlu0 %5433
        %5435 = vadd.xlane.f32.xlu0 %v4924
        %v5436 = vpop.xlane.xlu0 %5435
        %5437 = vadd.xlane.f32.xlu0 %v4926
        %v5438 = vpop.xlane.xlu0 %5437
        %5439 = vadd.xlane.f32.xlu0 %v4928
        %v5440 = vpop.xlane.xlu0 %5439
        %5441 = vadd.xlane.f32.xlu0 %v4930
        %v5442 = vpop.xlane.xlu0 %5441
        %5443 = vadd.xlane.f32.xlu0 %v4932
        %v5444 = vpop.xlane.xlu0 %5443
        %5445 = vadd.xlane.f32.xlu0 %v4934
        %v5446 = vpop.xlane.xlu0 %5445
        %5447 = vadd.xlane.f32.xlu0 %v4936
        %v5448 = vpop.xlane.xlu0 %5447
        %5449 = vadd.xlane.f32.xlu0 %v4938
        %v5450 = vpop.xlane.xlu0 %5449
        %5451 = vadd.xlane.f32.xlu0 %v4940
        %v5452 = vpop.xlane.xlu0 %5451
        %5453 = vadd.xlane.f32.xlu0 %v4942
        %v5454 = vpop.xlane.xlu0 %5453
        %5455 = vadd.xlane.f32.xlu0 %v4944
        %v5456 = vpop.xlane.xlu0 %5455
        %5457 = vadd.xlane.f32.xlu0 %v4946
        %v5458 = vpop.xlane.xlu0 %5457
        %5459 = vadd.xlane.f32.xlu0 %v4948
        %v5460 = vpop.xlane.xlu0 %5459
        %5461 = vadd.xlane.f32.xlu0 %v4950
        %v5462 = vpop.xlane.xlu0 %5461
        %5463 = vadd.xlane.f32.xlu0 %v4952
        %v5464 = vpop.xlane.xlu0 %5463
        %5465 = vadd.xlane.f32.xlu0 %v4954
        %v5466 = vpop.xlane.xlu0 %5465
        %5467 = vadd.xlane.f32.xlu0 %v4956
        %v5468 = vpop.xlane.xlu0 %5467
        %5469 = vadd.xlane.f32.xlu0 %v4958
        %v5470 = vpop.xlane.xlu0 %5469
        %5471 = vadd.xlane.f32.xlu0 %v4960
        %v5472 = vpop.xlane.xlu0 %5471
        %5473 = vadd.xlane.f32.xlu0 %v4962
        %v5474 = vpop.xlane.xlu0 %5473
        %5475 = vadd.xlane.f32.xlu0 %v4964
        %v5476 = vpop.xlane.xlu0 %5475
        %5477 = vadd.xlane.f32.xlu0 %v4966
        %v5478 = vpop.xlane.xlu0 %5477
        %5479 = vadd.xlane.f32.xlu0 %v4968
        %v5480 = vpop.xlane.xlu0 %5479
        %5481 = vadd.xlane.f32.xlu0 %v4970
        %v5482 = vpop.xlane.xlu0 %5481
        %5483 = vadd.xlane.f32.xlu0 %v4972
        %v5484 = vpop.xlane.xlu0 %5483
        %5485 = vadd.xlane.f32.xlu0 %v4974
        %v5486 = vpop.xlane.xlu0 %5485
        %5487 = vadd.xlane.f32.xlu0 %v4976
        %v5488 = vpop.xlane.xlu0 %5487
        %5489 = vadd.xlane.f32.xlu0 %v4978
        %v5490 = vpop.xlane.xlu0 %5489
        %5491 = vadd.xlane.f32.xlu0 %v4980
        %v5492 = vpop.xlane.xlu0 %5491
        %5493 = vadd.xlane.f32.xlu0 %v4982
        %v5494 = vpop.xlane.xlu0 %5493
        %5495 = vadd.xlane.f32.xlu0 %v4984
        %v5496 = vpop.xlane.xlu0 %5495
        %5497 = vadd.xlane.f32.xlu0 %v4986
        %v5498 = vpop.xlane.xlu0 %5497
        %5499 = vadd.xlane.f32.xlu0 %v4988
        %v5500 = vpop.xlane.xlu0 %5499
        %5501 = vadd.xlane.f32.xlu0 %v4990
        %v5502 = vpop.xlane.xlu0 %5501
        %5503 = vadd.xlane.f32.xlu0 %v4992
        %v5504 = vpop.xlane.xlu0 %5503
        %5505 = vadd.xlane.f32.xlu0 %v4994
        %v5506 = vpop.xlane.xlu0 %5505
        %5507 = vadd.xlane.f32.xlu0 %v4996
        %v5508 = vpop.xlane.xlu0 %5507
        %5509 = vadd.xlane.f32.xlu0 %v4998
        %v5510 = vpop.xlane.xlu0 %5509
        %5511 = vadd.xlane.f32.xlu0 %v5000
        %v5512 = vpop.xlane.xlu0 %5511
        %5513 = vadd.xlane.f32.xlu0 %v5002
        %v5514 = vpop.xlane.xlu0 %5513
        %5515 = vadd.xlane.f32.xlu0 %v5004
        %v5516 = vpop.xlane.xlu0 %5515
        %5517 = vadd.xlane.f32.xlu0 %v5006
        %v5518 = vpop.xlane.xlu0 %5517
        %5519 = vadd.xlane.f32.xlu0 %v5008
        %v5520 = vpop.xlane.xlu0 %5519
        %5521 = vadd.xlane.f32.xlu0 %v5010
        %v5522 = vpop.xlane.xlu0 %5521
        %5523 = vadd.xlane.f32.xlu0 %v5012
        %v5524 = vpop.xlane.xlu0 %5523
        %5525 = vadd.xlane.f32.xlu0 %v5014
        %v5526 = vpop.xlane.xlu0 %5525
        %5527 = vadd.xlane.f32.xlu0 %v5016
        %v5528 = vpop.xlane.xlu0 %5527
        %5529 = vadd.xlane.f32.xlu0 %v5018
        %v5530 = vpop.xlane.xlu0 %5529
        %5531 = vadd.xlane.f32.xlu0 %v5020
        %v5532 = vpop.xlane.xlu0 %5531
        %5533 = vadd.xlane.f32.xlu0 %v5022
        %v5534 = vpop.xlane.xlu0 %5533
        %5535 = vadd.xlane.f32.xlu0 %v5024
        %v5536 = vpop.xlane.xlu0 %5535
        %5537 = vadd.xlane.f32.xlu0 %v5026
        %v5538 = vpop.xlane.xlu0 %5537
        %5539 = vadd.xlane.f32.xlu0 %v5028
        %v5540 = vpop.xlane.xlu0 %5539
        %5541 = vadd.xlane.f32.xlu0 %v5030
        %v5542 = vpop.xlane.xlu0 %5541
        %5543 = vadd.xlane.f32.xlu0 %v5032
        %v5544 = vpop.xlane.xlu0 %5543
        %5545 = vadd.xlane.f32.xlu0 %v5034
        %v5546 = vpop.xlane.xlu0 %5545
        %5547 = vadd.xlane.f32.xlu0 %v5036
        %v5548 = vpop.xlane.xlu0 %5547
        %5549 = vadd.xlane.f32.xlu0 %v5038
        %v5550 = vpop.xlane.xlu0 %5549
        %5551 = vadd.xlane.f32.xlu0 %v5040
        %v5552 = vpop.xlane.xlu0 %5551
        %5553 = vadd.xlane.f32.xlu0 %v5042
        %v5554 = vpop.xlane.xlu0 %5553
        %5555 = vadd.xlane.f32.xlu0 %v5044
        %v5556 = vpop.xlane.xlu0 %5555
        %5557 = vadd.xlane.f32.xlu0 %v5046
        %v5558 = vpop.xlane.xlu0 %5557
        %5559 = vadd.xlane.f32.xlu0 %v5048
        %v5560 = vpop.xlane.xlu0 %5559
        %5561 = vadd.xlane.f32.xlu0 %v5050
        %v5562 = vpop.xlane.xlu0 %5561
        %5563 = vadd.xlane.f32.xlu0 %v5052
        %v5564 = vpop.xlane.xlu0 %5563
        %5565 = vadd.xlane.f32.xlu0 %v5054
        %v5566 = vpop.xlane.xlu0 %5565
        %5567 = vadd.xlane.f32.xlu0 %v5056
        %v5568 = vpop.xlane.xlu0 %5567
        %5569 = vadd.xlane.f32.xlu0 %v5058
        %v5570 = vpop.xlane.xlu0 %5569
        %5571 = vadd.xlane.f32.xlu0 %v5060
        %v5572 = vpop.xlane.xlu0 %5571
        %5573 = vadd.xlane.f32.xlu0 %v5062
        %v5574 = vpop.xlane.xlu0 %5573
        %5575 = vadd.xlane.f32.xlu0 %v5064
        %v5576 = vpop.xlane.xlu0 %5575
        %5577 = vadd.xlane.f32.xlu0 %v5066
        %v5578 = vpop.xlane.xlu0 %5577
        %5579 = vadd.xlane.f32.xlu0 %v5068
        %v5580 = vpop.xlane.xlu0 %5579
        %5581 = vadd.xlane.f32.xlu0 %v5070
        %v5582 = vpop.xlane.xlu0 %5581
        %5583 = vadd.xlane.f32.xlu0 %v5072
        %v5584 = vpop.xlane.xlu0 %5583
        %5585 = vadd.xlane.f32.xlu0 %v5074
        %v5586 = vpop.xlane.xlu0 %5585
        %5587 = vadd.xlane.f32.xlu0 %v5076
        %v5588 = vpop.xlane.xlu0 %5587
        %5589 = vadd.xlane.f32.xlu0 %v5078
        %v5590 = vpop.xlane.xlu0 %5589
        %5591 = vadd.xlane.f32.xlu0 %v5080
        %v5592 = vpop.xlane.xlu0 %5591
        %5593 = vadd.xlane.f32.xlu0 %v5082
        %v5594 = vpop.xlane.xlu0 %5593
        %5595 = vadd.xlane.f32.xlu0 %v5084
        %v5596 = vpop.xlane.xlu0 %5595
        %5597 = vadd.xlane.f32.xlu0 %v5086
        %v5598 = vpop.xlane.xlu0 %5597
        %5599 = vadd.xlane.f32.xlu0 %v5088
        %v5600 = vpop.xlane.xlu0 %5599
        %5601 = vadd.xlane.f32.xlu0 %v5090
        %v5602 = vpop.xlane.xlu0 %5601
        %5603 = vadd.xlane.f32.xlu0 %v5092
        %v5604 = vpop.xlane.xlu0 %5603
        %5605 = vadd.xlane.f32.xlu0 %v5094
        %v5606 = vpop.xlane.xlu0 %5605
        %5607 = vadd.xlane.f32.xlu0 %v5096
        %v5608 = vpop.xlane.xlu0 %5607
        %5609 = vadd.xlane.f32.xlu0 %v5098
        %v5610 = vpop.xlane.xlu0 %5609
        %5611 = vadd.xlane.f32.xlu0 %v5100
        %v5612 = vpop.xlane.xlu0 %5611
        %5613 = vadd.xlane.f32.xlu0 %v5102
        %v5614 = vpop.xlane.xlu0 %5613
        %5615 = vadd.xlane.f32.xlu0 %v5104
        %v5616 = vpop.xlane.xlu0 %5615
        %5617 = vadd.xlane.f32.xlu0 %v5106
        %v5618 = vpop.xlane.xlu0 %5617
        %5619 = vadd.xlane.f32.xlu0 %v5108
        %v5620 = vpop.xlane.xlu0 %5619
        %5621 = vadd.xlane.f32.xlu0 %v5110
        %v5622 = vpop.xlane.xlu0 %5621
        %5623 = vadd.xlane.f32.xlu0 %v5112
        %v5624 = vpop.xlane.xlu0 %5623
        %5625 = vadd.xlane.f32.xlu0 %v5114
        %v5626 = vpop.xlane.xlu0 %5625
        %5627 = vadd.xlane.f32.xlu0 %v5116
        %v5628 = vpop.xlane.xlu0 %5627
        %5629 = vadd.xlane.f32.xlu0 %v5118
        %v5630 = vpop.xlane.xlu0 %5629
        %5631 = vadd.xlane.f32.xlu0 %v5120
        %v5632 = vpop.xlane.xlu0 %5631
        %5633 = vadd.xlane.f32.xlu0 %v5122
        %v5634 = vpop.xlane.xlu0 %5633
        %5635 = vadd.xlane.f32.xlu0 %v5124
        %v5636 = vpop.xlane.xlu0 %5635
        %5637 = vadd.xlane.f32.xlu0 %v5126
        %v5638 = vpop.xlane.xlu0 %5637
        %5639 = vadd.xlane.f32.xlu0 %v5128
        %v5640 = vpop.xlane.xlu0 %5639
        %5641 = vadd.xlane.f32.xlu0 %v5130
        %v5642 = vpop.xlane.xlu0 %5641
        %5643 = vadd.xlane.f32.xlu0 %v5132
        %v5644 = vpop.xlane.xlu0 %5643
        %5645 = vadd.xlane.f32.xlu0 %v5134
        %v5646 = vpop.xlane.xlu0 %5645
        %5647 = vadd.xlane.f32.xlu0 %v5136
        %v5648 = vpop.xlane.xlu0 %5647
        %5649 = vadd.xlane.f32.xlu0 %v5138
        %v5650 = vpop.xlane.xlu0 %5649
        %5651 = vadd.xlane.f32.xlu0 %v5140
        %v5652 = vpop.xlane.xlu0 %5651
        %5653 = vadd.xlane.f32.xlu0 %v5142
        %v5654 = vpop.xlane.xlu0 %5653
        %5655 = vadd.xlane.f32.xlu0 %v5144
        %v5656 = vpop.xlane.xlu0 %5655
        %5657 = vadd.xlane.f32.xlu0 %v5146
        %v5658 = vpop.xlane.xlu0 %5657
        %5659 = vadd.xlane.f32.xlu0 %v5148
        %v5660 = vpop.xlane.xlu0 %5659
        %5661 = vadd.xlane.f32.xlu0 %v5150
        %v5662 = vpop.xlane.xlu0 %5661
        %5663 = vadd.xlane.f32.xlu0 %v5152
        %v5664 = vpop.xlane.xlu0 %5663
        %5665 = vadd.xlane.f32.xlu0 %v5154
        %v5666 = vpop.xlane.xlu0 %5665
        %5667 = vadd.xlane.f32.xlu0 %v5156
        %v5668 = vpop.xlane.xlu0 %5667
        %5669 = vadd.xlane.f32.xlu0 %v5158
        %v5670 = vpop.xlane.xlu0 %5669
        %5671 = vadd.xlane.f32.xlu0 %v5160
        %v5672 = vpop.xlane.xlu0 %5671
        %5673 = vadd.xlane.f32.xlu0 %v5162
        %v5674 = vpop.xlane.xlu0 %5673
        %5675 = vadd.xlane.f32.xlu0 %v5164
        %v5676 = vpop.xlane.xlu0 %5675
        %5677 = vadd.xlane.f32.xlu0 %v5166
        %v5678 = vpop.xlane.xlu0 %5677
        %5679 = vadd.xlane.f32.xlu0 %v5168
        %v5680 = vpop.xlane.xlu0 %5679
        %5681 = vadd.xlane.f32.xlu0 %v5170
        %v5682 = vpop.xlane.xlu0 %5681
        %5683 = vadd.xlane.f32.xlu0 %v5172
        %v5684 = vpop.xlane.xlu0 %5683
        %5685 = vadd.xlane.f32.xlu0 %v5174
        %v5686 = vpop.xlane.xlu0 %5685
        %5687 = vadd.xlane.f32.xlu0 %v5176
        %v5688 = vpop.xlane.xlu0 %5687
        %5689 = vadd.xlane.f32.xlu0 %v5178
        %v5690 = vpop.xlane.xlu0 %5689
        %5691 = vadd.xlane.f32.xlu0 %v5180
        %v5692 = vpop.xlane.xlu0 %5691
        %5693 = vadd.xlane.f32.xlu0 %v5182
        %v5694 = vpop.xlane.xlu0 %5693
        %5695 = vadd.xlane.f32.xlu0 %v5184
        %v5696 = vpop.xlane.xlu0 %5695
        %5697 = vadd.xlane.f32.xlu0 %v5186
        %v5698 = vpop.xlane.xlu0 %5697
        %5699 = vadd.xlane.f32.xlu0 %v5188
        %v5700 = vpop.xlane.xlu0 %5699
        %5701 = vadd.xlane.f32.xlu0 %v5190
        %v5702 = vpop.xlane.xlu0 %5701
        %5703 = vadd.xlane.f32.xlu0 %v5192
        %v5704 = vpop.xlane.xlu0 %5703
        %5705 = vadd.xlane.f32.xlu0 %v5194
        %v5706 = vpop.xlane.xlu0 %5705
        %5707 = vadd.xlane.f32.xlu0 %v5196
        %v5708 = vpop.xlane.xlu0 %5707
        %5709 = vadd.xlane.f32.xlu0 %v5198
        %v5710 = vpop.xlane.xlu0 %5709
        %5711 = vadd.xlane.f32.xlu0 %v5200
        %v5712 = vpop.xlane.xlu0 %5711
        %5713 = vadd.xlane.f32.xlu0 %v5202
        %v5714 = vpop.xlane.xlu0 %5713
        %5715 = vadd.xlane.f32.xlu0 %v5204
        %v5716 = vpop.xlane.xlu0 %5715
        %5717 = vadd.xlane.f32.xlu0 %v5206
        %v5718 = vpop.xlane.xlu0 %5717
        %5719 = vadd.xlane.f32.xlu0 %v5208
        %v5720 = vpop.xlane.xlu0 %5719
        %5721 = vadd.xlane.f32.xlu0 %v5210
        %v5722 = vpop.xlane.xlu0 %5721
        %5723 = vadd.xlane.f32.xlu0 %v5212
        %v5724 = vpop.xlane.xlu0 %5723
        %5725 = vadd.xlane.f32.xlu0 %v5214
        %v5726 = vpop.xlane.xlu0 %5725
        %5727 = vadd.xlane.f32.xlu0 %v5216
        %v5728 = vpop.xlane.xlu0 %5727
        %5729 = vadd.xlane.f32.xlu0 %v5218
        %v5730 = vpop.xlane.xlu0 %5729
        %5731 = vadd.xlane.f32.xlu0 %v5220
        %v5732 = vpop.xlane.xlu0 %5731
        %5733 = vadd.xlane.f32.xlu0 %v5222
        %v5734 = vpop.xlane.xlu0 %5733
        %5735 = vadd.xlane.f32.xlu0 %v5224
        %v5736 = vpop.xlane.xlu0 %5735
        %5737 = vadd.xlane.f32.xlu0 %v5226
        %v5738 = vpop.xlane.xlu0 %5737
        %5739 = vadd.xlane.f32.xlu0 %v5228
        %v5740 = vpop.xlane.xlu0 %5739
        %5741 = vadd.xlane.f32.xlu0 %v5230
        %v5742 = vpop.xlane.xlu0 %5741
        %5743 = vadd.xlane.f32.xlu0 %v5232
        %v5744 = vpop.xlane.xlu0 %5743
        %5745 = vadd.xlane.f32.xlu0 %v5234
        %v5746 = vpop.xlane.xlu0 %5745
        %5747 = vadd.xlane.f32.xlu0 %v5236
        %v5748 = vpop.xlane.xlu0 %5747
        %5749 = vadd.xlane.f32.xlu0 %v5238
        %v5750 = vpop.xlane.xlu0 %5749
        %5751 = vadd.xlane.f32.xlu0 %v5240
        %v5752 = vpop.xlane.xlu0 %5751
        %5753 = vadd.xlane.f32.xlu0 %v5242
        %v5754 = vpop.xlane.xlu0 %5753
        %5755 = vadd.xlane.f32.xlu0 %v5244
        %v5756 = vpop.xlane.xlu0 %5755
        %5757 = vadd.xlane.f32.xlu0 %v5246
        %v5758 = vpop.xlane.xlu0 %5757
        %5759 = vadd.xlane.f32.xlu0 %v5248
        %v5760 = vpop.xlane.xlu0 %5759
        %5761 = vadd.xlane.f32.xlu0 %v5250
        %v5762 = vpop.xlane.xlu0 %5761
        %5763 = vadd.xlane.f32.xlu0 %v5252
        %v5764 = vpop.xlane.xlu0 %5763
        %5765 = vadd.xlane.f32.xlu0 %v5254
        %v5766 = vpop.xlane.xlu0 %5765
        %5767 = vadd.xlane.f32.xlu0 %v5256
        %v5768 = vpop.xlane.xlu0 %5767
        %5769 = vadd.xlane.f32.xlu0 %v5258
        %v5770 = vpop.xlane.xlu0 %5769
        %5771 = vadd.xlane.f32.xlu0 %v5260
        %v5772 = vpop.xlane.xlu0 %5771
        %5773 = vadd.xlane.f32.xlu0 %v5262
        %v5774 = vpop.xlane.xlu0 %5773
        %5775 = vadd.xlane.f32.xlu0 %v5264
        %v5776 = vpop.xlane.xlu0 %5775
        %5777 = vadd.xlane.f32.xlu0 %v5266
        %v5778 = vpop.xlane.xlu0 %5777
        %5779 = vadd.xlane.f32.xlu0 %v5268
        %v5780 = vpop.xlane.xlu0 %5779
        %5781 = vadd.xlane.f32.xlu0 %v5270
        %v5782 = vpop.xlane.xlu0 %5781
        %5783 = vadd.xlane.f32.xlu0 %v5272
        %v5784 = vpop.xlane.xlu0 %5783
        %5785 = vadd.xlane.f32.xlu0 %v5274
        %v5786 = vpop.xlane.xlu0 %5785
        %5787 = vadd.xlane.f32.xlu0 %v5276
        %v5788 = vpop.xlane.xlu0 %5787
        %5789 = vadd.xlane.f32.xlu0 %v5278
        %v5790 = vpop.xlane.xlu0 %5789
        %5791 = vadd.xlane.f32.xlu0 %v5280
        %v5792 = vpop.xlane.xlu0 %5791
        %5793 = vadd.xlane.f32.xlu0 %v5282
        %v5794 = vpop.xlane.xlu0 %5793
        %5795 = vadd.xlane.f32.xlu0 %v5284
        %v5796 = vpop.xlane.xlu0 %5795
        %5797 = vadd.xlane.f32.xlu0 %v5286
        %v5798 = vpop.xlane.xlu0 %5797
        %5799 = vadd.xlane.f32.xlu0 %v5288
        %v5800 = vpop.xlane.xlu0 %5799
        %5801 = vadd.xlane.f32.xlu0 %v5290
        %v5802 = vpop.xlane.xlu0 %5801
        %5803 = vadd.xlane.f32.xlu0 %v5292
        %v5804 = vpop.xlane.xlu0 %5803
        %5805 = vadd.xlane.f32.xlu0 %v5294
        %v5806 = vpop.xlane.xlu0 %5805
        %5807 = vadd.xlane.f32.xlu0 %v5296
        %v5808 = vpop.xlane.xlu0 %5807
        %5809 = vadd.xlane.f32.xlu0 %v5298
        %v5810 = vpop.xlane.xlu0 %5809
        %5811 = vadd.xlane.f32.xlu0 %v5300
        %v5812 = vpop.xlane.xlu0 %5811
        %5813 = vadd.xlane.f32.xlu0 %v5302
        %v5814 = vpop.xlane.xlu0 %5813
        %5815 = vadd.xlane.f32.xlu0 %v5304
        %v5816 = vpop.xlane.xlu0 %5815
        %5817 = vadd.xlane.f32.xlu0 %v5306
        %v5818 = vpop.xlane.xlu0 %5817
        %5819 = vadd.xlane.f32.xlu0 %v5308
        %v5820 = vpop.xlane.xlu0 %5819
        %5821 = vadd.xlane.f32.xlu0 %v5310
        %v5822 = vpop.xlane.xlu0 %5821
        %5823 = vadd.xlane.f32.xlu0 %v5312
        %v5824 = vpop.xlane.xlu0 %5823
        %5825 = vadd.xlane.f32.xlu0 %v5314
        %v5826 = vpop.xlane.xlu0 %5825
        %5827 = vadd.xlane.f32.xlu0 %v5316
        %v5828 = vpop.xlane.xlu0 %5827
        %5829 = vadd.xlane.f32.xlu0 %v5318
        %v5830 = vpop.xlane.xlu0 %5829
        %5831 = vadd.xlane.f32.xlu0 %v5320
        %v5832 = vpop.xlane.xlu0 %5831
        %5833 = vadd.xlane.f32.xlu0 %v5322
        %v5834 = vpop.xlane.xlu0 %5833
        %5835 = vadd.xlane.f32.xlu0 %v5324
        %v5836 = vpop.xlane.xlu0 %5835
        %5837 = vadd.xlane.f32.xlu0 %v5326
        %v5838 = vpop.xlane.xlu0 %5837
        %5839 = vadd.xlane.f32.xlu0 %v5328
        %v5840 = vpop.xlane.xlu0 %5839
        %5841 = vadd.xlane.f32.xlu0 %v5330
        %v5842 = vpop.xlane.xlu0 %5841
        %5843 = vadd.xlane.f32.xlu0 %v5332
        %v5844 = vpop.xlane.xlu0 %5843
        %5845 = vadd.xlane.f32.xlu0 %v5334
        %v5846 = vpop.xlane.xlu0 %5845
        %5847 = vadd.xlane.f32.xlu0 %v5336
        %v5848 = vpop.xlane.xlu0 %5847
        %5849 = vadd.xlane.f32.xlu0 %v5338
        %v5850 = vpop.xlane.xlu0 %5849
        %5851 = vadd.xlane.f32.xlu0 %v5340
        %v5852 = vpop.xlane.xlu0 %5851
        %5853 = vadd.xlane.f32.xlu0 %v5342
        %v5854 = vpop.xlane.xlu0 %5853
        %5855 = vadd.xlane.f32.xlu0 %v5344
        %v5856 = vpop.xlane.xlu0 %5855
        %5857 = vadd.xlane.f32.xlu0 %v5346
        %v5858 = vpop.xlane.xlu0 %5857
        %5859 = vadd.xlane.f32.xlu0 %v5348
        %v5860 = vpop.xlane.xlu0 %5859
        %5861 = vadd.xlane.f32.xlu0 %v5350
        %v5862 = vpop.xlane.xlu0 %5861
        %5863 = vadd.xlane.f32.xlu0 %v5352
        %v5864 = vpop.xlane.xlu0 %5863
        %5865 = vadd.xlane.f32.xlu0 %v5354
        %v5866 = vpop.xlane.xlu0 %5865
        %5867 = vadd.xlane.f32.xlu0 %v5356
        %v5868 = vpop.xlane.xlu0 %5867
        %5869 = vadd.xlane.f32.xlu0 %v5358
        %v5870 = vpop.xlane.xlu0 %5869
        %5871 = vadd.xlane.f32.xlu0 %v5360
        %v5872 = vpop.xlane.xlu0 %5871
        %5873 = vadd.xlane.f32.xlu0 %v5362
        %v5874 = vpop.xlane.xlu0 %5873
        %5875 = vadd.xlane.f32.xlu0 %v5364
        %v5876 = vpop.xlane.xlu0 %5875
        %5877 = vadd.xlane.f32.xlu0 %v5366
        %v5878 = vpop.xlane.xlu0 %5877
        %5879 = vadd.xlane.f32.xlu0 %v5368
        %v5880 = vpop.xlane.xlu0 %5879
        %v5881 = vrcp.pop %v5370
        %v5882 = vrcp.pop %v5372
        %v5883 = vrcp.pop %v5374
        %v5884 = vrcp.pop %v5376
        %v5885 = vrcp.pop %v5378
        %v5886 = vrcp.pop %v5380
        %v5887 = vrcp.pop %v5382
        %v5888 = vrcp.pop %v5384
        %v5889 = vrcp.pop %v5386
        %v5890 = vrcp.pop %v5388
        %v5891 = vrcp.pop %v5390
        %v5892 = vrcp.pop %v5392
        %v5893 = vrcp.pop %v5394
        %v5894 = vrcp.pop %v5396
        %v5895 = vrcp.pop %v5398
        %v5896 = vrcp.pop %v5400
        %v5897 = vrcp.pop %v5402
        %v5898 = vrcp.pop %v5404
        %v5899 = vrcp.pop %v5406
        %v5900 = vrcp.pop %v5408
        %v5901 = vrcp.pop %v5410
        %v5902 = vrcp.pop %v5412
        %v5903 = vrcp.pop %v5414
        %v5904 = vrcp.pop %v5416
        %v5905 = vrcp.pop %v5418
        %v5906 = vrcp.pop %v5420
        %v5907 = vrcp.pop %v5422
        %v5908 = vrcp.pop %v5424
        %v5909 = vrcp.pop %v5426
        %v5910 = vrcp.pop %v5428
        %v5911 = vrcp.pop %v5430
        %v5912 = vrcp.pop %v5432
        %v5913 = vrcp.pop %v5434
        %v5914 = vrcp.pop %v5436
        %v5915 = vrcp.pop %v5438
        %v5916 = vrcp.pop %v5440
        %v5917 = vrcp.pop %v5442
        %v5918 = vrcp.pop %v5444
        %v5919 = vrcp.pop %v5446
        %v5920 = vrcp.pop %v5448
        %v5921 = vrcp.pop %v5450
        %v5922 = vrcp.pop %v5452
        %v5923 = vrcp.pop %v5454
        %v5924 = vrcp.pop %v5456
        %v5925 = vrcp.pop %v5458
        %v5926 = vrcp.pop %v5460
        %v5927 = vrcp.pop %v5462
        %v5928 = vrcp.pop %v5464
        %v5929 = vrcp.pop %v5466
        %v5930 = vrcp.pop %v5468
        %v5931 = vrcp.pop %v5470
        %v5932 = vrcp.pop %v5472
        %v5933 = vrcp.pop %v5474
        %v5934 = vrcp.pop %v5476
        %v5935 = vrcp.pop %v5478
        %v5936 = vrcp.pop %v5480
        %v5937 = vrcp.pop %v5482
        %v5938 = vrcp.pop %v5484
        %v5939 = vrcp.pop %v5486
        %v5940 = vrcp.pop %v5488
        %v5941 = vrcp.pop %v5490
        %v5942 = vrcp.pop %v5492
        %v5943 = vrcp.pop %v5494
        %v5944 = vrcp.pop %v5496
        %v5945 = vrcp.pop %v5498
        %v5946 = vrcp.pop %v5500
        %v5947 = vrcp.pop %v5502
        %v5948 = vrcp.pop %v5504
        %v5949 = vrcp.pop %v5506
        %v5950 = vrcp.pop %v5508
        %v5951 = vrcp.pop %v5510
        %v5952 = vrcp.pop %v5512
        %v5953 = vrcp.pop %v5514
        %v5954 = vrcp.pop %v5516
        %v5955 = vrcp.pop %v5518
        %v5956 = vrcp.pop %v5520
        %v5957 = vrcp.pop %v5522
        %v5958 = vrcp.pop %v5524
        %v5959 = vrcp.pop %v5526
        %v5960 = vrcp.pop %v5528
        %v5961 = vrcp.pop %v5530
        %v5962 = vrcp.pop %v5532
        %v5963 = vrcp.pop %v5534
        %v5964 = vrcp.pop %v5536
        %v5965 = vrcp.pop %v5538
        %v5966 = vrcp.pop %v5540
        %v5967 = vrcp.pop %v5542
        %v5968 = vrcp.pop %v5544
        %v5969 = vrcp.pop %v5546
        %v5970 = vrcp.pop %v5548
        %v5971 = vrcp.pop %v5550
        %v5972 = vrcp.pop %v5552
        %v5973 = vrcp.pop %v5554
        %v5974 = vrcp.pop %v5556
        %v5975 = vrcp.pop %v5558
        %v5976 = vrcp.pop %v5560
        %v5977 = vrcp.pop %v5562
        %v5978 = vrcp.pop %v5564
        %v5979 = vrcp.pop %v5566
        %v5980 = vrcp.pop %v5568
        %v5981 = vrcp.pop %v5570
        %v5982 = vrcp.pop %v5572
        %v5983 = vrcp.pop %v5574
        %v5984 = vrcp.pop %v5576
        %v5985 = vrcp.pop %v5578
        %v5986 = vrcp.pop %v5580
        %v5987 = vrcp.pop %v5582
        %v5988 = vrcp.pop %v5584
        %v5989 = vrcp.pop %v5586
        %v5990 = vrcp.pop %v5588
        %v5991 = vrcp.pop %v5590
        %v5992 = vrcp.pop %v5592
        %v5993 = vrcp.pop %v5594
        %v5994 = vrcp.pop %v5596
        %v5995 = vrcp.pop %v5598
        %v5996 = vrcp.pop %v5600
        %v5997 = vrcp.pop %v5602
        %v5998 = vrcp.pop %v5604
        %v5999 = vrcp.pop %v5606
        %v6000 = vrcp.pop %v5608
        %v6001 = vrcp.pop %v5610
        %v6002 = vrcp.pop %v5612
        %v6003 = vrcp.pop %v5614
        %v6004 = vrcp.pop %v5616
        %v6005 = vrcp.pop %v5618
        %v6006 = vrcp.pop %v5620
        %v6007 = vrcp.pop %v5622
        %v6008 = vrcp.pop %v5624
        %v6009 = vrcp.pop %v5626
        %v6010 = vrcp.pop %v5628
        %v6011 = vrcp.pop %v5630
        %v6012 = vrcp.pop %v5632
        %v6013 = vrcp.pop %v5634
        %v6014 = vrcp.pop %v5636
        %v6015 = vrcp.pop %v5638
        %v6016 = vrcp.pop %v5640
        %v6017 = vrcp.pop %v5642
        %v6018 = vrcp.pop %v5644
        %v6019 = vrcp.pop %v5646
        %v6020 = vrcp.pop %v5648
        %v6021 = vrcp.pop %v5650
        %v6022 = vrcp.pop %v5652
        %v6023 = vrcp.pop %v5654
        %v6024 = vrcp.pop %v5656
        %v6025 = vrcp.pop %v5658
        %v6026 = vrcp.pop %v5660
        %v6027 = vrcp.pop %v5662
        %v6028 = vrcp.pop %v5664
        %v6029 = vrcp.pop %v5666
        %v6030 = vrcp.pop %v5668
        %v6031 = vrcp.pop %v5670
        %v6032 = vrcp.pop %v5672
        %v6033 = vrcp.pop %v5674
        %v6034 = vrcp.pop %v5676
        %v6035 = vrcp.pop %v5678
        %v6036 = vrcp.pop %v5680
        %v6037 = vrcp.pop %v5682
        %v6038 = vrcp.pop %v5684
        %v6039 = vrcp.pop %v5686
        %v6040 = vrcp.pop %v5688
        %v6041 = vrcp.pop %v5690
        %v6042 = vrcp.pop %v5692
        %v6043 = vrcp.pop %v5694
        %v6044 = vrcp.pop %v5696
        %v6045 = vrcp.pop %v5698
        %v6046 = vrcp.pop %v5700
        %v6047 = vrcp.pop %v5702
        %v6048 = vrcp.pop %v5704
        %v6049 = vrcp.pop %v5706
        %v6050 = vrcp.pop %v5708
        %v6051 = vrcp.pop %v5710
        %v6052 = vrcp.pop %v5712
        %v6053 = vrcp.pop %v5714
        %v6054 = vrcp.pop %v5716
        %v6055 = vrcp.pop %v5718
        %v6056 = vrcp.pop %v5720
        %v6057 = vrcp.pop %v5722
        %v6058 = vrcp.pop %v5724
        %v6059 = vrcp.pop %v5726
        %v6060 = vrcp.pop %v5728
        %v6061 = vrcp.pop %v5730
        %v6062 = vrcp.pop %v5732
        %v6063 = vrcp.pop %v5734
        %v6064 = vrcp.pop %v5736
        %v6065 = vrcp.pop %v5738
        %v6066 = vrcp.pop %v5740
        %v6067 = vrcp.pop %v5742
        %v6068 = vrcp.pop %v5744
        %v6069 = vrcp.pop %v5746
        %v6070 = vrcp.pop %v5748
        %v6071 = vrcp.pop %v5750
        %v6072 = vrcp.pop %v5752
        %v6073 = vrcp.pop %v5754
        %v6074 = vrcp.pop %v5756
        %v6075 = vrcp.pop %v5758
        %v6076 = vrcp.pop %v5760
        %v6077 = vrcp.pop %v5762
        %v6078 = vrcp.pop %v5764
        %v6079 = vrcp.pop %v5766
        %v6080 = vrcp.pop %v5768
        %v6081 = vrcp.pop %v5770
        %v6082 = vrcp.pop %v5772
        %v6083 = vrcp.pop %v5774
        %v6084 = vrcp.pop %v5776
        %v6085 = vrcp.pop %v5778
        %v6086 = vrcp.pop %v5780
        %v6087 = vrcp.pop %v5782
        %v6088 = vrcp.pop %v5784
        %v6089 = vrcp.pop %v5786
        %v6090 = vrcp.pop %v5788
        %v6091 = vrcp.pop %v5790
        %v6092 = vrcp.pop %v5792
        %v6093 = vrcp.pop %v5794
        %v6094 = vrcp.pop %v5796
        %v6095 = vrcp.pop %v5798
        %v6096 = vrcp.pop %v5800
        %v6097 = vrcp.pop %v5802
        %v6098 = vrcp.pop %v5804
        %v6099 = vrcp.pop %v5806
        %v6100 = vrcp.pop %v5808
        %v6101 = vrcp.pop %v5810
        %v6102 = vrcp.pop %v5812
        %v6103 = vrcp.pop %v5814
        %v6104 = vrcp.pop %v5816
        %v6105 = vrcp.pop %v5818
        %v6106 = vrcp.pop %v5820
        %v6107 = vrcp.pop %v5822
        %v6108 = vrcp.pop %v5824
        %v6109 = vrcp.pop %v5826
        %v6110 = vrcp.pop %v5828
        %v6111 = vrcp.pop %v5830
        %v6112 = vrcp.pop %v5832
        %v6113 = vrcp.pop %v5834
        %v6114 = vrcp.pop %v5836
        %v6115 = vrcp.pop %v5838
        %v6116 = vrcp.pop %v5840
        %v6117 = vrcp.pop %v5842
        %v6118 = vrcp.pop %v5844
        %v6119 = vrcp.pop %v5846
        %v6120 = vrcp.pop %v5848
        %v6121 = vrcp.pop %v5850
        %v6122 = vrcp.pop %v5852
        %v6123 = vrcp.pop %v5854
        %v6124 = vrcp.pop %v5856
        %v6125 = vrcp.pop %v5858
        %v6126 = vrcp.pop %v5860
        %v6127 = vrcp.pop %v5862
        %v6128 = vrcp.pop %v5864
        %v6129 = vrcp.pop %v5866
        %v6130 = vrcp.pop %v5868
        %v6131 = vrcp.pop %v5870
        %v6132 = vrcp.pop %v5872
        %v6133 = vrcp.pop %v5874
        %v6134 = vrcp.pop %v5876
        %v6135 = vrcp.pop %v5878
        %v6136 = vrcp.pop %v5880
        %v6137 = vmul.f32 %v4858, %v5881
        %v6138 = vmul.f32 %v4860, %v5882
        %v6139 = vmul.f32 %v4862, %v5883
        %v6140 = vmul.f32 %v4864, %v5884
        %v6141 = vmul.f32 %v4866, %v5885
        %v6142 = vmul.f32 %v4868, %v5886
        %v6143 = vmul.f32 %v4870, %v5887
        %v6144 = vmul.f32 %v4872, %v5888
        %v6145 = vmul.f32 %v4874, %v5889
        %v6146 = vmul.f32 %v4876, %v5890
        %v6147 = vmul.f32 %v4878, %v5891
        %v6148 = vmul.f32 %v4880, %v5892
        %v6149 = vmul.f32 %v4882, %v5893
        %v6150 = vmul.f32 %v4884, %v5894
        %v6151 = vmul.f32 %v4886, %v5895
        %v6152 = vmul.f32 %v4888, %v5896
        %v6153 = vmul.f32 %v4890, %v5897
        %v6154 = vmul.f32 %v4892, %v5898
        %v6155 = vmul.f32 %v4894, %v5899
        %v6156 = vmul.f32 %v4896, %v5900
        %v6157 = vmul.f32 %v4898, %v5901
        %v6158 = vmul.f32 %v4900, %v5902
        %v6159 = vmul.f32 %v4902, %v5903
        %v6160 = vmul.f32 %v4904, %v5904
        %v6161 = vmul.f32 %v4906, %v5905
        %v6162 = vmul.f32 %v4908, %v5906
        %v6163 = vmul.f32 %v4910, %v5907
        %v6164 = vmul.f32 %v4912, %v5908
        %v6165 = vmul.f32 %v4914, %v5909
        %v6166 = vmul.f32 %v4916, %v5910
        %v6167 = vmul.f32 %v4918, %v5911
        %v6168 = vmul.f32 %v4920, %v5912
        %v6169 = vmul.f32 %v4922, %v5913
        %v6170 = vmul.f32 %v4924, %v5914
        %v6171 = vmul.f32 %v4926, %v5915
        %v6172 = vmul.f32 %v4928, %v5916
        %v6173 = vmul.f32 %v4930, %v5917
        %v6174 = vmul.f32 %v4932, %v5918
        %v6175 = vmul.f32 %v4934, %v5919
        %v6176 = vmul.f32 %v4936, %v5920
        %v6177 = vmul.f32 %v4938, %v5921
        %v6178 = vmul.f32 %v4940, %v5922
        %v6179 = vmul.f32 %v4942, %v5923
        %v6180 = vmul.f32 %v4944, %v5924
        %v6181 = vmul.f32 %v4946, %v5925
        %v6182 = vmul.f32 %v4948, %v5926
        %v6183 = vmul.f32 %v4950, %v5927
        %v6184 = vmul.f32 %v4952, %v5928
        %v6185 = vmul.f32 %v4954, %v5929
        %v6186 = vmul.f32 %v4956, %v5930
        %v6187 = vmul.f32 %v4958, %v5931
        %v6188 = vmul.f32 %v4960, %v5932
        %v6189 = vmul.f32 %v4962, %v5933
        %v6190 = vmul.f32 %v4964, %v5934
        %v6191 = vmul.f32 %v4966, %v5935
        %v6192 = vmul.f32 %v4968, %v5936
        %v6193 = vmul.f32 %v4970, %v5937
        %v6194 = vmul.f32 %v4972, %v5938
        %v6195 = vmul.f32 %v4974, %v5939
        %v6196 = vmul.f32 %v4976, %v5940
        %v6197 = vmul.f32 %v4978, %v5941
        %v6198 = vmul.f32 %v4980, %v5942
        %v6199 = vmul.f32 %v4982, %v5943
        %v6200 = vmul.f32 %v4984, %v5944
        %v6201 = vmul.f32 %v4986, %v5945
        %v6202 = vmul.f32 %v4988, %v5946
        %v6203 = vmul.f32 %v4990, %v5947
        %v6204 = vmul.f32 %v4992, %v5948
        %v6205 = vmul.f32 %v4994, %v5949
        %v6206 = vmul.f32 %v4996, %v5950
        %v6207 = vmul.f32 %v4998, %v5951
        %v6208 = vmul.f32 %v5000, %v5952
        %v6209 = vmul.f32 %v5002, %v5953
        %v6210 = vmul.f32 %v5004, %v5954
        %v6211 = vmul.f32 %v5006, %v5955
        %v6212 = vmul.f32 %v5008, %v5956
        %v6213 = vmul.f32 %v5010, %v5957
        %v6214 = vmul.f32 %v5012, %v5958
        %v6215 = vmul.f32 %v5014, %v5959
        %v6216 = vmul.f32 %v5016, %v5960
        %v6217 = vmul.f32 %v5018, %v5961
        %v6218 = vmul.f32 %v5020, %v5962
        %v6219 = vmul.f32 %v5022, %v5963
        %v6220 = vmul.f32 %v5024, %v5964
        %v6221 = vmul.f32 %v5026, %v5965
        %v6222 = vmul.f32 %v5028, %v5966
        %v6223 = vmul.f32 %v5030, %v5967
        %v6224 = vmul.f32 %v5032, %v5968
        %v6225 = vmul.f32 %v5034, %v5969
        %v6226 = vmul.f32 %v5036, %v5970
        %v6227 = vmul.f32 %v5038, %v5971
        %v6228 = vmul.f32 %v5040, %v5972
        %v6229 = vmul.f32 %v5042, %v5973
        %v6230 = vmul.f32 %v5044, %v5974
        %v6231 = vmul.f32 %v5046, %v5975
        %v6232 = vmul.f32 %v5048, %v5976
        %v6233 = vmul.f32 %v5050, %v5977
        %v6234 = vmul.f32 %v5052, %v5978
        %v6235 = vmul.f32 %v5054, %v5979
        %v6236 = vmul.f32 %v5056, %v5980
        %v6237 = vmul.f32 %v5058, %v5981
        %v6238 = vmul.f32 %v5060, %v5982
        %v6239 = vmul.f32 %v5062, %v5983
        %v6240 = vmul.f32 %v5064, %v5984
        %v6241 = vmul.f32 %v5066, %v5985
        %v6242 = vmul.f32 %v5068, %v5986
        %v6243 = vmul.f32 %v5070, %v5987
        %v6244 = vmul.f32 %v5072, %v5988
        %v6245 = vmul.f32 %v5074, %v5989
        %v6246 = vmul.f32 %v5076, %v5990
        %v6247 = vmul.f32 %v5078, %v5991
        %v6248 = vmul.f32 %v5080, %v5992
        %v6249 = vmul.f32 %v5082, %v5993
        %v6250 = vmul.f32 %v5084, %v5994
        %v6251 = vmul.f32 %v5086, %v5995
        %v6252 = vmul.f32 %v5088, %v5996
        %v6253 = vmul.f32 %v5090, %v5997
        %v6254 = vmul.f32 %v5092, %v5998
        %v6255 = vmul.f32 %v5094, %v5999
        %v6256 = vmul.f32 %v5096, %v6000
        %v6257 = vmul.f32 %v5098, %v6001
        %v6258 = vmul.f32 %v5100, %v6002
        %v6259 = vmul.f32 %v5102, %v6003
        %v6260 = vmul.f32 %v5104, %v6004
        %v6261 = vmul.f32 %v5106, %v6005
        %v6262 = vmul.f32 %v5108, %v6006
        %v6263 = vmul.f32 %v5110, %v6007
        %v6264 = vmul.f32 %v5112, %v6008
        %v6265 = vmul.f32 %v5114, %v6009
        %v6266 = vmul.f32 %v5116, %v6010
        %v6267 = vmul.f32 %v5118, %v6011
        %v6268 = vmul.f32 %v5120, %v6012
        %v6269 = vmul.f32 %v5122, %v6013
        %v6270 = vmul.f32 %v5124, %v6014
        %v6271 = vmul.f32 %v5126, %v6015
        %v6272 = vmul.f32 %v5128, %v6016
        %v6273 = vmul.f32 %v5130, %v6017
        %v6274 = vmul.f32 %v5132, %v6018
        %v6275 = vmul.f32 %v5134, %v6019
        %v6276 = vmul.f32 %v5136, %v6020
        %v6277 = vmul.f32 %v5138, %v6021
        %v6278 = vmul.f32 %v5140, %v6022
        %v6279 = vmul.f32 %v5142, %v6023
        %v6280 = vmul.f32 %v5144, %v6024
        %v6281 = vmul.f32 %v5146, %v6025
        %v6282 = vmul.f32 %v5148, %v6026
        %v6283 = vmul.f32 %v5150, %v6027
        %v6284 = vmul.f32 %v5152, %v6028
        %v6285 = vmul.f32 %v5154, %v6029
        %v6286 = vmul.f32 %v5156, %v6030
        %v6287 = vmul.f32 %v5158, %v6031
        %v6288 = vmul.f32 %v5160, %v6032
        %v6289 = vmul.f32 %v5162, %v6033
        %v6290 = vmul.f32 %v5164, %v6034
        %v6291 = vmul.f32 %v5166, %v6035
        %v6292 = vmul.f32 %v5168, %v6036
        %v6293 = vmul.f32 %v5170, %v6037
        %v6294 = vmul.f32 %v5172, %v6038
        %v6295 = vmul.f32 %v5174, %v6039
        %v6296 = vmul.f32 %v5176, %v6040
        %v6297 = vmul.f32 %v5178, %v6041
        %v6298 = vmul.f32 %v5180, %v6042
        %v6299 = vmul.f32 %v5182, %v6043
        %v6300 = vmul.f32 %v5184, %v6044
        %v6301 = vmul.f32 %v5186, %v6045
        %v6302 = vmul.f32 %v5188, %v6046
        %v6303 = vmul.f32 %v5190, %v6047
        %v6304 = vmul.f32 %v5192, %v6048
        %v6305 = vmul.f32 %v5194, %v6049
        %v6306 = vmul.f32 %v5196, %v6050
        %v6307 = vmul.f32 %v5198, %v6051
        %v6308 = vmul.f32 %v5200, %v6052
        %v6309 = vmul.f32 %v5202, %v6053
        %v6310 = vmul.f32 %v5204, %v6054
        %v6311 = vmul.f32 %v5206, %v6055
        %v6312 = vmul.f32 %v5208, %v6056
        %v6313 = vmul.f32 %v5210, %v6057
        %v6314 = vmul.f32 %v5212, %v6058
        %v6315 = vmul.f32 %v5214, %v6059
        %v6316 = vmul.f32 %v5216, %v6060
        %v6317 = vmul.f32 %v5218, %v6061
        %v6318 = vmul.f32 %v5220, %v6062
        %v6319 = vmul.f32 %v5222, %v6063
        %v6320 = vmul.f32 %v5224, %v6064
        %v6321 = vmul.f32 %v5226, %v6065
        %v6322 = vmul.f32 %v5228, %v6066
        %v6323 = vmul.f32 %v5230, %v6067
        %v6324 = vmul.f32 %v5232, %v6068
        %v6325 = vmul.f32 %v5234, %v6069
        %v6326 = vmul.f32 %v5236, %v6070
        %v6327 = vmul.f32 %v5238, %v6071
        %v6328 = vmul.f32 %v5240, %v6072
        %v6329 = vmul.f32 %v5242, %v6073
        %v6330 = vmul.f32 %v5244, %v6074
        %v6331 = vmul.f32 %v5246, %v6075
        %v6332 = vmul.f32 %v5248, %v6076
        %v6333 = vmul.f32 %v5250, %v6077
        %v6334 = vmul.f32 %v5252, %v6078
        %v6335 = vmul.f32 %v5254, %v6079
        %v6336 = vmul.f32 %v5256, %v6080
        %v6337 = vmul.f32 %v5258, %v6081
        %v6338 = vmul.f32 %v5260, %v6082
        %v6339 = vmul.f32 %v5262, %v6083
        %v6340 = vmul.f32 %v5264, %v6084
        %v6341 = vmul.f32 %v5266, %v6085
        %v6342 = vmul.f32 %v5268, %v6086
        %v6343 = vmul.f32 %v5270, %v6087
        %v6344 = vmul.f32 %v5272, %v6088
        %v6345 = vmul.f32 %v5274, %v6089
        %v6346 = vmul.f32 %v5276, %v6090
        %v6347 = vmul.f32 %v5278, %v6091
        %v6348 = vmul.f32 %v5280, %v6092
        %v6349 = vmul.f32 %v5282, %v6093
        %v6350 = vmul.f32 %v5284, %v6094
        %v6351 = vmul.f32 %v5286, %v6095
        %v6352 = vmul.f32 %v5288, %v6096
        %v6353 = vmul.f32 %v5290, %v6097
        %v6354 = vmul.f32 %v5292, %v6098
        %v6355 = vmul.f32 %v5294, %v6099
        %v6356 = vmul.f32 %v5296, %v6100
        %v6357 = vmul.f32 %v5298, %v6101
        %v6358 = vmul.f32 %v5300, %v6102
        %v6359 = vmul.f32 %v5302, %v6103
        %v6360 = vmul.f32 %v5304, %v6104
        %v6361 = vmul.f32 %v5306, %v6105
        %v6362 = vmul.f32 %v5308, %v6106
        %v6363 = vmul.f32 %v5310, %v6107
        %v6364 = vmul.f32 %v5312, %v6108
        %v6365 = vmul.f32 %v5314, %v6109
        %v6366 = vmul.f32 %v5316, %v6110
        %v6367 = vmul.f32 %v5318, %v6111
        %v6368 = vmul.f32 %v5320, %v6112
        %v6369 = vmul.f32 %v5322, %v6113
        %v6370 = vmul.f32 %v5324, %v6114
        %v6371 = vmul.f32 %v5326, %v6115
        %v6372 = vmul.f32 %v5328, %v6116
        %v6373 = vmul.f32 %v5330, %v6117
        %v6374 = vmul.f32 %v5332, %v6118
        %v6375 = vmul.f32 %v5334, %v6119
        %v6376 = vmul.f32 %v5336, %v6120
        %v6377 = vmul.f32 %v5338, %v6121
        %v6378 = vmul.f32 %v5340, %v6122
        %v6379 = vmul.f32 %v5342, %v6123
        %v6380 = vmul.f32 %v5344, %v6124
        %v6381 = vmul.f32 %v5346, %v6125
        %v6382 = vmul.f32 %v5348, %v6126
        %v6383 = vmul.f32 %v5350, %v6127
        %v6384 = vmul.f32 %v5352, %v6128
        %v6385 = vmul.f32 %v5354, %v6129
        %v6386 = vmul.f32 %v5356, %v6130
        %v6387 = vmul.f32 %v5358, %v6131
        %v6388 = vmul.f32 %v5360, %v6132
        %v6389 = vmul.f32 %v5362, %v6133
        %v6390 = vmul.f32 %v5364, %v6134
        %v6391 = vmul.f32 %v5366, %v6135
        %v6392 = vmul.f32 %v5368, %v6136
        %v6393 = vmul.f32 %v6265, 0.1
        %v6394 = vmul.f32 %v6266, 0.1
        %v6395 = vmul.f32 %v6267, 0.1
        %v6396 = vmul.f32 %v6268, 0.1
        %v6397 = vmul.f32 %v6269, 0.1
        %v6398 = vmul.f32 %v6270, 0.1
        %v6399 = vmul.f32 %v6271, 0.1
        %v6400 = vmul.f32 %v6272, 0.1
        %v6401 = vmul.f32 %v6273, 0.1
        %v6402 = vmul.f32 %v6274, 0.1
        %v6403 = vmul.f32 %v6275, 0.1
        %v6404 = vmul.f32 %v6276, 0.1
        %v6405 = vmul.f32 %v6277, 0.1
        %v6406 = vmul.f32 %v6278, 0.1
        %v6407 = vmul.f32 %v6279, 0.1
        %v6408 = vmul.f32 %v6280, 0.1
        %v6409 = vmul.f32 %v6281, 0.1
        %v6410 = vmul.f32 %v6282, 0.1
        %v6411 = vmul.f32 %v6283, 0.1
        %v6412 = vmul.f32 %v6284, 0.1
        %v6413 = vmul.f32 %v6285, 0.1
        %v6414 = vmul.f32 %v6286, 0.1
        %v6415 = vmul.f32 %v6287, 0.1
        %v6416 = vmul.f32 %v6288, 0.1
        %v6417 = vmul.f32 %v6289, 0.1
        %v6418 = vmul.f32 %v6290, 0.1
        %v6419 = vmul.f32 %v6291, 0.1
        %v6420 = vmul.f32 %v6292, 0.1
        %v6421 = vmul.f32 %v6293, 0.1
        %v6422 = vmul.f32 %v6294, 0.1
        %v6423 = vmul.f32 %v6295, 0.1
        %v6424 = vmul.f32 %v6296, 0.1
        %v6425 = vmul.f32 %v6297, 0.1
        %v6426 = vmul.f32 %v6298, 0.1
        %v6427 = vmul.f32 %v6299, 0.1
        %v6428 = vmul.f32 %v6300, 0.1
        %v6429 = vmul.f32 %v6301, 0.1
        %v6430 = vmul.f32 %v6302, 0.1
        %v6431 = vmul.f32 %v6303, 0.1
        %v6432 = vmul.f32 %v6304, 0.1
        %v6433 = vmul.f32 %v6305, 0.1
        %v6434 = vmul.f32 %v6306, 0.1
        %v6435 = vmul.f32 %v6307, 0.1
        %v6436 = vmul.f32 %v6308, 0.1
        %v6437 = vmul.f32 %v6309, 0.1
        %v6438 = vmul.f32 %v6310, 0.1
        %v6439 = vmul.f32 %v6311, 0.1
        %v6440 = vmul.f32 %v6312, 0.1
        %v6441 = vmul.f32 %v6313, 0.1
        %v6442 = vmul.f32 %v6314, 0.1
        %v6443 = vmul.f32 %v6315, 0.1
        %v6444 = vmul.f32 %v6316, 0.1
        %v6445 = vmul.f32 %v6317, 0.1
        %v6446 = vmul.f32 %v6318, 0.1
        %v6447 = vmul.f32 %v6319, 0.1
        %v6448 = vmul.f32 %v6320, 0.1
        %v6449 = vmul.f32 %v6321, 0.1
        %v6450 = vmul.f32 %v6322, 0.1
        %v6451 = vmul.f32 %v6323, 0.1
        %v6452 = vmul.f32 %v6324, 0.1
        %v6453 = vmul.f32 %v6325, 0.1
        %v6454 = vmul.f32 %v6326, 0.1
        %v6455 = vmul.f32 %v6327, 0.1
        %v6456 = vmul.f32 %v6328, 0.1
        %v6457 = vmul.f32 %v6329, 0.1
        %v6458 = vmul.f32 %v6330, 0.1
        %v6459 = vmul.f32 %v6331, 0.1
        %v6460 = vmul.f32 %v6332, 0.1
        %v6461 = vmul.f32 %v6333, 0.1
        %v6462 = vmul.f32 %v6334, 0.1
        %v6463 = vmul.f32 %v6335, 0.1
        %v6464 = vmul.f32 %v6336, 0.1
        %v6465 = vmul.f32 %v6337, 0.1
        %v6466 = vmul.f32 %v6338, 0.1
        %v6467 = vmul.f32 %v6339, 0.1
        %v6468 = vmul.f32 %v6340, 0.1
        %v6469 = vmul.f32 %v6341, 0.1
        %v6470 = vmul.f32 %v6342, 0.1
        %v6471 = vmul.f32 %v6343, 0.1
        %v6472 = vmul.f32 %v6344, 0.1
        %v6473 = vmul.f32 %v6345, 0.1
        %v6474 = vmul.f32 %v6346, 0.1
        %v6475 = vmul.f32 %v6347, 0.1
        %v6476 = vmul.f32 %v6348, 0.1
        %v6477 = vmul.f32 %v6349, 0.1
        %v6478 = vmul.f32 %v6350, 0.1
        %v6479 = vmul.f32 %v6351, 0.1
        %v6480 = vmul.f32 %v6352, 0.1
        %v6481 = vmul.f32 %v6353, 0.1
        %v6482 = vmul.f32 %v6354, 0.1
        %v6483 = vmul.f32 %v6355, 0.1
        %v6484 = vmul.f32 %v6356, 0.1
        %v6485 = vmul.f32 %v6357, 0.1
        %v6486 = vmul.f32 %v6358, 0.1
        %v6487 = vmul.f32 %v6359, 0.1
        %v6488 = vmul.f32 %v6360, 0.1
        %v6489 = vmul.f32 %v6361, 0.1
        %v6490 = vmul.f32 %v6362, 0.1
        %v6491 = vmul.f32 %v6363, 0.1
        %v6492 = vmul.f32 %v6364, 0.1
        %v6493 = vmul.f32 %v6365, 0.1
        %v6494 = vmul.f32 %v6366, 0.1
        %v6495 = vmul.f32 %v6367, 0.1
        %v6496 = vmul.f32 %v6368, 0.1
        %v6497 = vmul.f32 %v6369, 0.1
        %v6498 = vmul.f32 %v6370, 0.1
        %v6499 = vmul.f32 %v6371, 0.1
        %v6500 = vmul.f32 %v6372, 0.1
        %v6501 = vmul.f32 %v6373, 0.1
        %v6502 = vmul.f32 %v6374, 0.1
        %v6503 = vmul.f32 %v6375, 0.1
        %v6504 = vmul.f32 %v6376, 0.1
        %v6505 = vmul.f32 %v6377, 0.1
        %v6506 = vmul.f32 %v6378, 0.1
        %v6507 = vmul.f32 %v6379, 0.1
        %v6508 = vmul.f32 %v6380, 0.1
        %v6509 = vmul.f32 %v6381, 0.1
        %v6510 = vmul.f32 %v6382, 0.1
        %v6511 = vmul.f32 %v6383, 0.1
        %v6512 = vmul.f32 %v6384, 0.1
        %v6513 = vmul.f32 %v6385, 0.1
        %v6514 = vmul.f32 %v6386, 0.1
        %v6515 = vmul.f32 %v6387, 0.1
        %v6516 = vmul.f32 %v6388, 0.1
        %v6517 = vmul.f32 %v6389, 0.1
        %v6518 = vmul.f32 %v6390, 0.1
        %v6519 = vmul.f32 %v6391, 0.1
        %v6520 = vmul.f32 %v6392, 0.1
        %v6521 = vsub.f32 %v6137, %v6393
        %v6522 = vsub.f32 %v6138, %v6394
        %v6523 = vsub.f32 %v6139, %v6395
        %v6524 = vsub.f32 %v6140, %v6396
        %v6525 = vsub.f32 %v6141, %v6397
        %v6526 = vsub.f32 %v6142, %v6398
        %v6527 = vsub.f32 %v6143, %v6399
        %v6528 = vsub.f32 %v6144, %v6400
        %v6529 = vsub.f32 %v6145, %v6401
        %v6530 = vsub.f32 %v6146, %v6402
        %v6531 = vsub.f32 %v6147, %v6403
        %v6532 = vsub.f32 %v6148, %v6404
        %v6533 = vsub.f32 %v6149, %v6405
        %v6534 = vsub.f32 %v6150, %v6406
        %v6535 = vsub.f32 %v6151, %v6407
        %v6536 = vsub.f32 %v6152, %v6408
        %v6537 = vsub.f32 %v6153, %v6409
        %v6538 = vsub.f32 %v6154, %v6410
        %v6539 = vsub.f32 %v6155, %v6411
        %v6540 = vsub.f32 %v6156, %v6412
        %v6541 = vsub.f32 %v6157, %v6413
        %v6542 = vsub.f32 %v6158, %v6414
        %v6543 = vsub.f32 %v6159, %v6415
        %v6544 = vsub.f32 %v6160, %v6416
        %v6545 = vsub.f32 %v6161, %v6417
        %v6546 = vsub.f32 %v6162, %v6418
        %v6547 = vsub.f32 %v6163, %v6419
        %v6548 = vsub.f32 %v6164, %v6420
        %v6549 = vsub.f32 %v6165, %v6421
        %v6550 = vsub.f32 %v6166, %v6422
        %v6551 = vsub.f32 %v6167, %v6423
        %v6552 = vsub.f32 %v6168, %v6424
        %v6553 = vsub.f32 %v6169, %v6425
        %v6554 = vsub.f32 %v6170, %v6426
        %v6555 = vsub.f32 %v6171, %v6427
        %v6556 = vsub.f32 %v6172, %v6428
        %v6557 = vsub.f32 %v6173, %v6429
        %v6558 = vsub.f32 %v6174, %v6430
        %v6559 = vsub.f32 %v6175, %v6431
        %v6560 = vsub.f32 %v6176, %v6432
        %v6561 = vsub.f32 %v6177, %v6433
        %v6562 = vsub.f32 %v6178, %v6434
        %v6563 = vsub.f32 %v6179, %v6435
        %v6564 = vsub.f32 %v6180, %v6436
        %v6565 = vsub.f32 %v6181, %v6437
        %v6566 = vsub.f32 %v6182, %v6438
        %v6567 = vsub.f32 %v6183, %v6439
        %v6568 = vsub.f32 %v6184, %v6440
        %v6569 = vsub.f32 %v6185, %v6441
        %v6570 = vsub.f32 %v6186, %v6442
        %v6571 = vsub.f32 %v6187, %v6443
        %v6572 = vsub.f32 %v6188, %v6444
        %v6573 = vsub.f32 %v6189, %v6445
        %v6574 = vsub.f32 %v6190, %v6446
        %v6575 = vsub.f32 %v6191, %v6447
        %v6576 = vsub.f32 %v6192, %v6448
        %v6577 = vsub.f32 %v6193, %v6449
        %v6578 = vsub.f32 %v6194, %v6450
        %v6579 = vsub.f32 %v6195, %v6451
        %v6580 = vsub.f32 %v6196, %v6452
        %v6581 = vsub.f32 %v6197, %v6453
        %v6582 = vsub.f32 %v6198, %v6454
        %v6583 = vsub.f32 %v6199, %v6455
        %v6584 = vsub.f32 %v6200, %v6456
        %v6585 = vsub.f32 %v6201, %v6457
        %v6586 = vsub.f32 %v6202, %v6458
        %v6587 = vsub.f32 %v6203, %v6459
        %v6588 = vsub.f32 %v6204, %v6460
        %v6589 = vsub.f32 %v6205, %v6461
        %v6590 = vsub.f32 %v6206, %v6462
        %v6591 = vsub.f32 %v6207, %v6463
        %v6592 = vsub.f32 %v6208, %v6464
        %v6593 = vsub.f32 %v6209, %v6465
        %v6594 = vsub.f32 %v6210, %v6466
        %v6595 = vsub.f32 %v6211, %v6467
        %v6596 = vsub.f32 %v6212, %v6468
        %v6597 = vsub.f32 %v6213, %v6469
        %v6598 = vsub.f32 %v6214, %v6470
        %v6599 = vsub.f32 %v6215, %v6471
        %v6600 = vsub.f32 %v6216, %v6472
        %v6601 = vsub.f32 %v6217, %v6473
        %v6602 = vsub.f32 %v6218, %v6474
        %v6603 = vsub.f32 %v6219, %v6475
        %v6604 = vsub.f32 %v6220, %v6476
        %v6605 = vsub.f32 %v6221, %v6477
        %v6606 = vsub.f32 %v6222, %v6478
        %v6607 = vsub.f32 %v6223, %v6479
        %v6608 = vsub.f32 %v6224, %v6480
        %v6609 = vsub.f32 %v6225, %v6481
        %v6610 = vsub.f32 %v6226, %v6482
        %v6611 = vsub.f32 %v6227, %v6483
        %v6612 = vsub.f32 %v6228, %v6484
        %v6613 = vsub.f32 %v6229, %v6485
        %v6614 = vsub.f32 %v6230, %v6486
        %v6615 = vsub.f32 %v6231, %v6487
        %v6616 = vsub.f32 %v6232, %v6488
        %v6617 = vsub.f32 %v6233, %v6489
        %v6618 = vsub.f32 %v6234, %v6490
        %v6619 = vsub.f32 %v6235, %v6491
        %v6620 = vsub.f32 %v6236, %v6492
        %v6621 = vsub.f32 %v6237, %v6493
        %v6622 = vsub.f32 %v6238, %v6494
        %v6623 = vsub.f32 %v6239, %v6495
        %v6624 = vsub.f32 %v6240, %v6496
        %v6625 = vsub.f32 %v6241, %v6497
        %v6626 = vsub.f32 %v6242, %v6498
        %v6627 = vsub.f32 %v6243, %v6499
        %v6628 = vsub.f32 %v6244, %v6500
        %v6629 = vsub.f32 %v6245, %v6501
        %v6630 = vsub.f32 %v6246, %v6502
        %v6631 = vsub.f32 %v6247, %v6503
        %v6632 = vsub.f32 %v6248, %v6504
        %v6633 = vsub.f32 %v6249, %v6505
        %v6634 = vsub.f32 %v6250, %v6506
        %v6635 = vsub.f32 %v6251, %v6507
        %v6636 = vsub.f32 %v6252, %v6508
        %v6637 = vsub.f32 %v6253, %v6509
        %v6638 = vsub.f32 %v6254, %v6510
        %v6639 = vsub.f32 %v6255, %v6511
        %v6640 = vsub.f32 %v6256, %v6512
        %v6641 = vsub.f32 %v6257, %v6513
        %v6642 = vsub.f32 %v6258, %v6514
        %v6643 = vsub.f32 %v6259, %v6515
        %v6644 = vsub.f32 %v6260, %v6516
        %v6645 = vsub.f32 %v6261, %v6517
        %v6646 = vsub.f32 %v6262, %v6518
        %v6647 = vsub.f32 %v6263, %v6519
        %v6648 = vsub.f32 %v6264, %v6520
        %v6649 = vpack.c.bf16 %v6522, %v6521
        %v6650 = vpack.c.bf16 %v6524, %v6523
        %v6651 = vpack.c.bf16 %v6526, %v6525
        %v6652 = vpack.c.bf16 %v6528, %v6527
        %v6653 = vpack.c.bf16 %v6530, %v6529
        %v6654 = vpack.c.bf16 %v6532, %v6531
        %v6655 = vpack.c.bf16 %v6534, %v6533
        %v6656 = vpack.c.bf16 %v6536, %v6535
        %v6657 = vpack.c.bf16 %v6538, %v6537
        %v6658 = vpack.c.bf16 %v6540, %v6539
        %v6659 = vpack.c.bf16 %v6542, %v6541
        %v6660 = vpack.c.bf16 %v6544, %v6543
        %v6661 = vpack.c.bf16 %v6546, %v6545
        %v6662 = vpack.c.bf16 %v6548, %v6547
        %v6663 = vpack.c.bf16 %v6550, %v6549
        %v6664 = vpack.c.bf16 %v6552, %v6551
        %v6665 = vpack.c.bf16 %v6554, %v6553
        %v6666 = vpack.c.bf16 %v6556, %v6555
        %v6667 = vpack.c.bf16 %v6558, %v6557
        %v6668 = vpack.c.bf16 %v6560, %v6559
        %v6669 = vpack.c.bf16 %v6562, %v6561
        %v6670 = vpack.c.bf16 %v6564, %v6563
        %v6671 = vpack.c.bf16 %v6566, %v6565
        %v6672 = vpack.c.bf16 %v6568, %v6567
        %v6673 = vpack.c.bf16 %v6570, %v6569
        %v6674 = vpack.c.bf16 %v6572, %v6571
        %v6675 = vpack.c.bf16 %v6574, %v6573
        %v6676 = vpack.c.bf16 %v6576, %v6575
        %v6677 = vpack.c.bf16 %v6578, %v6577
        %v6678 = vpack.c.bf16 %v6580, %v6579
        %v6679 = vpack.c.bf16 %v6582, %v6581
        %v6680 = vpack.c.bf16 %v6584, %v6583
        %v6681 = vpack.c.bf16 %v6586, %v6585
        %v6682 = vpack.c.bf16 %v6588, %v6587
        %v6683 = vpack.c.bf16 %v6590, %v6589
        %v6684 = vpack.c.bf16 %v6592, %v6591
        %v6685 = vpack.c.bf16 %v6594, %v6593
        %v6686 = vpack.c.bf16 %v6596, %v6595
        %v6687 = vpack.c.bf16 %v6598, %v6597
        %v6688 = vpack.c.bf16 %v6600, %v6599
        %v6689 = vpack.c.bf16 %v6602, %v6601
        %v6690 = vpack.c.bf16 %v6604, %v6603
        %v6691 = vpack.c.bf16 %v6606, %v6605
        %v6692 = vpack.c.bf16 %v6608, %v6607
        %v6693 = vpack.c.bf16 %v6610, %v6609
        %v6694 = vpack.c.bf16 %v6612, %v6611
        %v6695 = vpack.c.bf16 %v6614, %v6613
        %v6696 = vpack.c.bf16 %v6616, %v6615
        %v6697 = vpack.c.bf16 %v6618, %v6617
        %v6698 = vpack.c.bf16 %v6620, %v6619
        %v6699 = vpack.c.bf16 %v6622, %v6621
        %v6700 = vpack.c.bf16 %v6624, %v6623
        %v6701 = vpack.c.bf16 %v6626, %v6625
        %v6702 = vpack.c.bf16 %v6628, %v6627
        %v6703 = vpack.c.bf16 %v6630, %v6629
        %v6704 = vpack.c.bf16 %v6632, %v6631
        %v6705 = vpack.c.bf16 %v6634, %v6633
        %v6706 = vpack.c.bf16 %v6636, %v6635
        %v6707 = vpack.c.bf16 %v6638, %v6637
        %v6708 = vpack.c.bf16 %v6640, %v6639
        %v6709 = vpack.c.bf16 %v6642, %v6641
        %v6710 = vpack.c.bf16 %v6644, %v6643
        %v6711 = vpack.c.bf16 %v6646, %v6645
        %v6712 = vpack.c.bf16 %v6648, %v6647
        %6713 = vmatprep.subr.bf16.mxu0 0
        %6714 = vmatpush1.bf16.xpose.msra.mxu0 %v6649
        %6715 = vmatprep.subr.bf16.mxu0 0
        %6716 = vmatpush1.bf16.xpose.msra.mxu0 %v6650
        %6717 = vmatprep.subr.bf16.mxu0 0
        %6718 = vmatpush1.bf16.xpose.msra.mxu0 %v6651
        %6719 = vmatprep.subr.bf16.mxu0 0
        %6720 = vmatpush1.bf16.xpose.msra.mxu0 %v6652
        %6721 = vmatprep.subr.bf16.mxu0 0
        %6722 = vmatpush1.bf16.xpose.msra.mxu0 %v6653
        %6723 = vmatprep.subr.bf16.mxu0 0
        %6724 = vmatpush1.bf16.xpose.msra.mxu0 %v6654
        %6725 = vmatprep.subr.bf16.mxu0 0
        %6726 = vmatpush1.bf16.xpose.msra.mxu0 %v6655
        %6727 = vmatprep.subr.bf16.mxu0 0
        %6728 = vmatpush1.bf16.xpose.msra.mxu0 %v6656
        %6729 = vmatprep.subr.bf16.mxu0 0
        %6730 = vmatpush1.bf16.xpose.msra.mxu0 0
        %6731 = vmatprep.subr.bf16.mxu0 0
        %6732 = vmatpush1.bf16.xpose.msra.mxu0 0
        %6733 = vmatprep.subr.bf16.mxu0 0
        %6734 = vmatpush1.bf16.xpose.msra.mxu0 0
        %6735 = vmatprep.subr.bf16.mxu0 0
        %6736 = vmatpush1.bf16.xpose.msra.mxu0 0
        %6737 = vmatprep.subr.bf16.mxu0 0
        %6738 = vmatpush1.bf16.xpose.msra.mxu0 0
        %6739 = vmatprep.subr.bf16.mxu0 0
        %6740 = vmatpush1.bf16.xpose.msra.mxu0 0
        %6741 = vmatprep.subr.bf16.mxu0 0
        %6742 = vmatpush1.bf16.xpose.msra.mxu0 0
        %6743 = vmatprep.subr.bf16.mxu0 0
        %6744 = vmatpush1.bf16.xpose.msra.mxu0 0
        %6745 = vmatprep.mubr.bf16.mxu0 0
        %6746 = vmatmul.mubr.bf16.gmra.mrb[0].mxu0 %v480
        %v6747 = vpop.f32.mrb[0].mxu0
        %v6748 = vadd.f32 0.0, %v6747
        %v6749 = vpop.f32.mrb[0].mxu0
        %v6750 = vpop.f32.mrb[0].mxu0
        %v6751 = vpop.f32.mrb[0].mxu0
        %6752 = vdwg.mxu0
        %6753 = vmatprep.subr.bf16.mxu0 0
        %6754 = vmatpush1.bf16.xpose.msra.mxu0 %v6657
        %6755 = vmatprep.subr.bf16.mxu0 0
        %6756 = vmatpush1.bf16.xpose.msra.mxu0 %v6658
        %6757 = vmatprep.subr.bf16.mxu0 0
        %6758 = vmatpush1.bf16.xpose.msra.mxu0 %v6659
        %6759 = vmatprep.subr.bf16.mxu0 0
        %6760 = vmatpush1.bf16.xpose.msra.mxu0 %v6660
        %6761 = vmatprep.subr.bf16.mxu0 0
        %6762 = vmatpush1.bf16.xpose.msra.mxu0 %v6661
        %6763 = vmatprep.subr.bf16.mxu0 0
        %6764 = vmatpush1.bf16.xpose.msra.mxu0 %v6662
        %6765 = vmatprep.subr.bf16.mxu0 0
        %6766 = vmatpush1.bf16.xpose.msra.mxu0 %v6663
        %6767 = vmatprep.subr.bf16.mxu0 0
        %6768 = vmatpush1.bf16.xpose.msra.mxu0 %v6664
        %6769 = vmatprep.subr.bf16.mxu0 0
        %6770 = vmatpush1.bf16.xpose.msra.mxu0 0
        %6771 = vmatprep.subr.bf16.mxu0 0
        %6772 = vmatpush1.bf16.xpose.msra.mxu0 0
        %6773 = vmatprep.subr.bf16.mxu0 0
        %6774 = vmatpush1.bf16.xpose.msra.mxu0 0
        %6775 = vmatprep.subr.bf16.mxu0 0
        %6776 = vmatpush1.bf16.xpose.msra.mxu0 0
        %6777 = vmatprep.subr.bf16.mxu0 0
        %6778 = vmatpush1.bf16.xpose.msra.mxu0 0
        %6779 = vmatprep.subr.bf16.mxu0 0
        %6780 = vmatpush1.bf16.xpose.msra.mxu0 0
        %6781 = vmatprep.subr.bf16.mxu0 0
        %6782 = vmatpush1.bf16.xpose.msra.mxu0 0
        %6783 = vmatprep.subr.bf16.mxu0 0
        %6784 = vmatpush1.bf16.xpose.msra.mxu0 0
        %6785 = vmatprep.mubr.bf16.mxu0 0
        %6786 = vmatmul.mubr.bf16.gmra.mrb[0].mxu0 %v481
        %v6787 = vpop.f32.mrb[0].mxu0
        %v6788 = vadd.f32 0.0, %v6787
        %v6789 = vpop.f32.mrb[0].mxu0
        %v6790 = vpop.f32.mrb[0].mxu0
        %v6791 = vpop.f32.mrb[0].mxu0
        %6792 = vdwg.mxu0
        %6793 = vmatprep.subr.bf16.mxu0 0
        %6794 = vmatpush1.bf16.xpose.msra.mxu0 %v6665
        %6795 = vmatprep.subr.bf16.mxu0 0
        %6796 = vmatpush1.bf16.xpose.msra.mxu0 %v6666
        %6797 = vmatprep.subr.bf16.mxu0 0
        %6798 = vmatpush1.bf16.xpose.msra.mxu0 %v6667
        %6799 = vmatprep.subr.bf16.mxu0 0
        %6800 = vmatpush1.bf16.xpose.msra.mxu0 %v6668
        %6801 = vmatprep.subr.bf16.mxu0 0
        %6802 = vmatpush1.bf16.xpose.msra.mxu0 %v6669
        %6803 = vmatprep.subr.bf16.mxu0 0
        %6804 = vmatpush1.bf16.xpose.msra.mxu0 %v6670
        %6805 = vmatprep.subr.bf16.mxu0 0
        %6806 = vmatpush1.bf16.xpose.msra.mxu0 %v6671
        %6807 = vmatprep.subr.bf16.mxu0 0
        %6808 = vmatpush1.bf16.xpose.msra.mxu0 %v6672
        %6809 = vmatprep.subr.bf16.mxu0 0
        %6810 = vmatpush1.bf16.xpose.msra.mxu0 0
        %6811 = vmatprep.subr.bf16.mxu0 0
        %6812 = vmatpush1.bf16.xpose.msra.mxu0 0
        %6813 = vmatprep.subr.bf16.mxu0 0
        %6814 = vmatpush1.bf16.xpose.msra.mxu0 0
        %6815 = vmatprep.subr.bf16.mxu0 0
        %6816 = vmatpush1.bf16.xpose.msra.mxu0 0
        %6817 = vmatprep.subr.bf16.mxu0 0
        %6818 = vmatpush1.bf16.xpose.msra.mxu0 0
        %6819 = vmatprep.subr.bf16.mxu0 0
        %6820 = vmatpush1.bf16.xpose.msra.mxu0 0
        %6821 = vmatprep.subr.bf16.mxu0 0
        %6822 = vmatpush1.bf16.xpose.msra.mxu0 0
        %6823 = vmatprep.subr.bf16.mxu0 0
        %6824 = vmatpush1.bf16.xpose.msra.mxu0 0
        %6825 = vmatprep.mubr.bf16.mxu0 0
        %6826 = vmatmul.mubr.bf16.gmra.mrb[0].mxu0 %v482
        %v6827 = vpop.f32.mrb[0].mxu0
        %v6828 = vadd.f32 0.0, %v6827
        %v6829 = vpop.f32.mrb[0].mxu0
        %v6830 = vpop.f32.mrb[0].mxu0
        %v6831 = vpop.f32.mrb[0].mxu0
        %6832 = vdwg.mxu0
        %6833 = vmatprep.subr.bf16.mxu0 0
        %6834 = vmatpush1.bf16.xpose.msra.mxu0 %v6673
        %6835 = vmatprep.subr.bf16.mxu0 0
        %6836 = vmatpush1.bf16.xpose.msra.mxu0 %v6674
        %6837 = vmatprep.subr.bf16.mxu0 0
        %6838 = vmatpush1.bf16.xpose.msra.mxu0 %v6675
        %6839 = vmatprep.subr.bf16.mxu0 0
        %6840 = vmatpush1.bf16.xpose.msra.mxu0 %v6676
        %6841 = vmatprep.subr.bf16.mxu0 0
        %6842 = vmatpush1.bf16.xpose.msra.mxu0 %v6677
        %6843 = vmatprep.subr.bf16.mxu0 0
        %6844 = vmatpush1.bf16.xpose.msra.mxu0 %v6678
        %6845 = vmatprep.subr.bf16.mxu0 0
        %6846 = vmatpush1.bf16.xpose.msra.mxu0 %v6679
        %6847 = vmatprep.subr.bf16.mxu0 0
        %6848 = vmatpush1.bf16.xpose.msra.mxu0 %v6680
        %6849 = vmatprep.subr.bf16.mxu0 0
        %6850 = vmatpush1.bf16.xpose.msra.mxu0 0
        %6851 = vmatprep.subr.bf16.mxu0 0
        %6852 = vmatpush1.bf16.xpose.msra.mxu0 0
        %6853 = vmatprep.subr.bf16.mxu0 0
        %6854 = vmatpush1.bf16.xpose.msra.mxu0 0
        %6855 = vmatprep.subr.bf16.mxu0 0
        %6856 = vmatpush1.bf16.xpose.msra.mxu0 0
        %6857 = vmatprep.subr.bf16.mxu0 0
        %6858 = vmatpush1.bf16.xpose.msra.mxu0 0
        %6859 = vmatprep.subr.bf16.mxu0 0
        %6860 = vmatpush1.bf16.xpose.msra.mxu0 0
        %6861 = vmatprep.subr.bf16.mxu0 0
        %6862 = vmatpush1.bf16.xpose.msra.mxu0 0
        %6863 = vmatprep.subr.bf16.mxu0 0
        %6864 = vmatpush1.bf16.xpose.msra.mxu0 0
        %6865 = vmatprep.mubr.bf16.mxu0 0
        %6866 = vmatmul.mubr.bf16.gmra.mrb[0].mxu0 %v483
        %v6867 = vpop.f32.mrb[0].mxu0
        %v6868 = vadd.f32 0.0, %v6867
        %v6869 = vpop.f32.mrb[0].mxu0
        %v6870 = vpop.f32.mrb[0].mxu0
        %v6871 = vpop.f32.mrb[0].mxu0
        %6872 = vdwg.mxu0
        %6873 = vmatprep.subr.bf16.mxu0 0
        %6874 = vmatpush1.bf16.xpose.msra.mxu0 %v6681
        %6875 = vmatprep.subr.bf16.mxu0 0
        %6876 = vmatpush1.bf16.xpose.msra.mxu0 %v6682
        %6877 = vmatprep.subr.bf16.mxu0 0
        %6878 = vmatpush1.bf16.xpose.msra.mxu0 %v6683
        %6879 = vmatprep.subr.bf16.mxu0 0
        %6880 = vmatpush1.bf16.xpose.msra.mxu0 %v6684
        %6881 = vmatprep.subr.bf16.mxu0 0
        %6882 = vmatpush1.bf16.xpose.msra.mxu0 %v6685
        %6883 = vmatprep.subr.bf16.mxu0 0
        %6884 = vmatpush1.bf16.xpose.msra.mxu0 %v6686
        %6885 = vmatprep.subr.bf16.mxu0 0
        %6886 = vmatpush1.bf16.xpose.msra.mxu0 %v6687
        %6887 = vmatprep.subr.bf16.mxu0 0
        %6888 = vmatpush1.bf16.xpose.msra.mxu0 %v6688
        %6889 = vmatprep.subr.bf16.mxu0 0
        %6890 = vmatpush1.bf16.xpose.msra.mxu0 0
        %6891 = vmatprep.subr.bf16.mxu0 0
        %6892 = vmatpush1.bf16.xpose.msra.mxu0 0
        %6893 = vmatprep.subr.bf16.mxu0 0
        %6894 = vmatpush1.bf16.xpose.msra.mxu0 0
        %6895 = vmatprep.subr.bf16.mxu0 0
        %6896 = vmatpush1.bf16.xpose.msra.mxu0 0
        %6897 = vmatprep.subr.bf16.mxu0 0
        %6898 = vmatpush1.bf16.xpose.msra.mxu0 0
        %6899 = vmatprep.subr.bf16.mxu0 0
        %6900 = vmatpush1.bf16.xpose.msra.mxu0 0
        %6901 = vmatprep.subr.bf16.mxu0 0
        %6902 = vmatpush1.bf16.xpose.msra.mxu0 0
        %6903 = vmatprep.subr.bf16.mxu0 0
        %6904 = vmatpush1.bf16.xpose.msra.mxu0 0
        %6905 = vmatprep.mubr.bf16.mxu0 0
        %6906 = vmatmul.mubr.bf16.gmra.mrb[0].mxu0 %v484
        %v6907 = vpop.f32.mrb[0].mxu0
        %v6908 = vadd.f32 0.0, %v6907
        %v6909 = vpop.f32.mrb[0].mxu0
        %v6910 = vpop.f32.mrb[0].mxu0
        %v6911 = vpop.f32.mrb[0].mxu0
        %6912 = vdwg.mxu0
        %6913 = vmatprep.subr.bf16.mxu0 0
        %6914 = vmatpush1.bf16.xpose.msra.mxu0 %v6689
        %6915 = vmatprep.subr.bf16.mxu0 0
        %6916 = vmatpush1.bf16.xpose.msra.mxu0 %v6690
        %6917 = vmatprep.subr.bf16.mxu0 0
        %6918 = vmatpush1.bf16.xpose.msra.mxu0 %v6691
        %6919 = vmatprep.subr.bf16.mxu0 0
        %6920 = vmatpush1.bf16.xpose.msra.mxu0 %v6692
        %6921 = vmatprep.subr.bf16.mxu0 0
        %6922 = vmatpush1.bf16.xpose.msra.mxu0 %v6693
        %6923 = vmatprep.subr.bf16.mxu0 0
        %6924 = vmatpush1.bf16.xpose.msra.mxu0 %v6694
        %6925 = vmatprep.subr.bf16.mxu0 0
        %6926 = vmatpush1.bf16.xpose.msra.mxu0 %v6695
        %6927 = vmatprep.subr.bf16.mxu0 0
        %6928 = vmatpush1.bf16.xpose.msra.mxu0 %v6696
        %6929 = vmatprep.subr.bf16.mxu0 0
        %6930 = vmatpush1.bf16.xpose.msra.mxu0 0
        %6931 = vmatprep.subr.bf16.mxu0 0
        %6932 = vmatpush1.bf16.xpose.msra.mxu0 0
        %6933 = vmatprep.subr.bf16.mxu0 0
        %6934 = vmatpush1.bf16.xpose.msra.mxu0 0
        %6935 = vmatprep.subr.bf16.mxu0 0
        %6936 = vmatpush1.bf16.xpose.msra.mxu0 0
        %6937 = vmatprep.subr.bf16.mxu0 0
        %6938 = vmatpush1.bf16.xpose.msra.mxu0 0
        %6939 = vmatprep.subr.bf16.mxu0 0
        %6940 = vmatpush1.bf16.xpose.msra.mxu0 0
        %6941 = vmatprep.subr.bf16.mxu0 0
        %6942 = vmatpush1.bf16.xpose.msra.mxu0 0
        %6943 = vmatprep.subr.bf16.mxu0 0
        %6944 = vmatpush1.bf16.xpose.msra.mxu0 0
        %6945 = vmatprep.mubr.bf16.mxu0 0
        %6946 = vmatmul.mubr.bf16.gmra.mrb[0].mxu0 %v485
        %v6947 = vpop.f32.mrb[0].mxu0
        %v6948 = vadd.f32 0.0, %v6947
        %v6949 = vpop.f32.mrb[0].mxu0
        %v6950 = vpop.f32.mrb[0].mxu0
        %v6951 = vpop.f32.mrb[0].mxu0
        %6952 = vdwg.mxu0
        %6953 = vmatprep.subr.bf16.mxu0 0
        %6954 = vmatpush1.bf16.xpose.msra.mxu0 %v6697
        %6955 = vmatprep.subr.bf16.mxu0 0
        %6956 = vmatpush1.bf16.xpose.msra.mxu0 %v6698
        %6957 = vmatprep.subr.bf16.mxu0 0
        %6958 = vmatpush1.bf16.xpose.msra.mxu0 %v6699
        %6959 = vmatprep.subr.bf16.mxu0 0
        %6960 = vmatpush1.bf16.xpose.msra.mxu0 %v6700
        %6961 = vmatprep.subr.bf16.mxu0 0
        %6962 = vmatpush1.bf16.xpose.msra.mxu0 %v6701
        %6963 = vmatprep.subr.bf16.mxu0 0
        %6964 = vmatpush1.bf16.xpose.msra.mxu0 %v6702
        %6965 = vmatprep.subr.bf16.mxu0 0
        %6966 = vmatpush1.bf16.xpose.msra.mxu0 %v6703
        %6967 = vmatprep.subr.bf16.mxu0 0
        %6968 = vmatpush1.bf16.xpose.msra.mxu0 %v6704
        %6969 = vmatprep.subr.bf16.mxu0 0
        %6970 = vmatpush1.bf16.xpose.msra.mxu0 0
        %6971 = vmatprep.subr.bf16.mxu0 0
        %6972 = vmatpush1.bf16.xpose.msra.mxu0 0
        %6973 = vmatprep.subr.bf16.mxu0 0
        %6974 = vmatpush1.bf16.xpose.msra.mxu0 0
        %6975 = vmatprep.subr.bf16.mxu0 0
        %6976 = vmatpush1.bf16.xpose.msra.mxu0 0
        %6977 = vmatprep.subr.bf16.mxu0 0
        %6978 = vmatpush1.bf16.xpose.msra.mxu0 0
        %6979 = vmatprep.subr.bf16.mxu0 0
        %6980 = vmatpush1.bf16.xpose.msra.mxu0 0
        %6981 = vmatprep.subr.bf16.mxu0 0
        %6982 = vmatpush1.bf16.xpose.msra.mxu0 0
        %6983 = vmatprep.subr.bf16.mxu0 0
        %6984 = vmatpush1.bf16.xpose.msra.mxu0 0
        %6985 = vmatprep.mubr.bf16.mxu0 0
        %6986 = vmatmul.mubr.bf16.gmra.mrb[0].mxu0 %v486
        %v6987 = vpop.f32.mrb[0].mxu0
        %v6988 = vadd.f32 0.0, %v6987
        %v6989 = vpop.f32.mrb[0].mxu0
        %v6990 = vpop.f32.mrb[0].mxu0
        %v6991 = vpop.f32.mrb[0].mxu0
        %6992 = vdwg.mxu0
        %6993 = vmatprep.subr.bf16.mxu0 0
        %6994 = vmatpush1.bf16.xpose.msra.mxu0 %v6705
        %6995 = vmatprep.subr.bf16.mxu0 0
        %6996 = vmatpush1.bf16.xpose.msra.mxu0 %v6706
        %6997 = vmatprep.subr.bf16.mxu0 0
        %6998 = vmatpush1.bf16.xpose.msra.mxu0 %v6707
        %6999 = vmatprep.subr.bf16.mxu0 0
        %7000 = vmatpush1.bf16.xpose.msra.mxu0 %v6708
        %7001 = vmatprep.subr.bf16.mxu0 0
        %7002 = vmatpush1.bf16.xpose.msra.mxu0 %v6709
        %7003 = vmatprep.subr.bf16.mxu0 0
        %7004 = vmatpush1.bf16.xpose.msra.mxu0 %v6710
        %7005 = vmatprep.subr.bf16.mxu0 0
        %7006 = vmatpush1.bf16.xpose.msra.mxu0 %v6711
        %7007 = vmatprep.subr.bf16.mxu0 0
        %7008 = vmatpush1.bf16.xpose.msra.mxu0 %v6712
        %7009 = vmatprep.subr.bf16.mxu0 0
        %7010 = vmatpush1.bf16.xpose.msra.mxu0 0
        %7011 = vmatprep.subr.bf16.mxu0 0
        %7012 = vmatpush1.bf16.xpose.msra.mxu0 0
        %7013 = vmatprep.subr.bf16.mxu0 0
        %7014 = vmatpush1.bf16.xpose.msra.mxu0 0
        %7015 = vmatprep.subr.bf16.mxu0 0
        %7016 = vmatpush1.bf16.xpose.msra.mxu0 0
        %7017 = vmatprep.subr.bf16.mxu0 0
        %7018 = vmatpush1.bf16.xpose.msra.mxu0 0
        %7019 = vmatprep.subr.bf16.mxu0 0
        %7020 = vmatpush1.bf16.xpose.msra.mxu0 0
        %7021 = vmatprep.subr.bf16.mxu0 0
        %7022 = vmatpush1.bf16.xpose.msra.mxu0 0
        %7023 = vmatprep.subr.bf16.mxu0 0
        %7024 = vmatpush1.bf16.xpose.msra.mxu0 0
        %7025 = vmatprep.mubr.bf16.mxu0 0
        %7026 = vmatmul.mubr.bf16.gmra.mrb[0].mxu0 %v487
        %v7027 = vpop.f32.mrb[0].mxu0
        %v7028 = vadd.f32 0.0, %v7027
        %v7029 = vpop.f32.mrb[0].mxu0
        %v7030 = vpop.f32.mrb[0].mxu0
        %v7031 = vpop.f32.mrb[0].mxu0
        %7032 = vdwg.mxu0
        %v7033 = vmul.f32 %v6748, %v6748
        %v7034 = vmul.f32 %v6788, %v6788
        %v7035 = vmul.f32 %v6828, %v6828
        %v7036 = vmul.f32 %v6868, %v6868
        %v7037 = vmul.f32 %v6908, %v6908
        %v7038 = vmul.f32 %v6948, %v6948
        %v7039 = vmul.f32 %v6988, %v6988
        %v7040 = vmul.f32 %v7028, %v7028
        %v7041 = vrot.slane %v7033, 4
        %v7042 = vadd.f32 %v7033, %v7041
        %v7043 = vrot.slane %v7042, 2
        %v7044 = vadd.f32 %v7042, %v7043
        %v7045 = vrot.slane %v7044, 1
        %v7046 = vadd.f32 %v7044, %v7045
        %v7047 = vrot.slane %v7034, 4
        %v7048 = vadd.f32 %v7034, %v7047
        %v7049 = vrot.slane %v7048, 2
        %v7050 = vadd.f32 %v7048, %v7049
        %v7051 = vrot.slane %v7050, 1
        %v7052 = vadd.f32 %v7050, %v7051
        %v7053 = vrot.slane %v7035, 4
        %v7054 = vadd.f32 %v7035, %v7053
        %v7055 = vrot.slane %v7054, 2
        %v7056 = vadd.f32 %v7054, %v7055
        %v7057 = vrot.slane %v7056, 1
        %v7058 = vadd.f32 %v7056, %v7057
        %v7059 = vrot.slane %v7036, 4
        %v7060 = vadd.f32 %v7036, %v7059
        %v7061 = vrot.slane %v7060, 2
        %v7062 = vadd.f32 %v7060, %v7061
        %v7063 = vrot.slane %v7062, 1
        %v7064 = vadd.f32 %v7062, %v7063
        %v7065 = vrot.slane %v7037, 4
        %v7066 = vadd.f32 %v7037, %v7065
        %v7067 = vrot.slane %v7066, 2
        %v7068 = vadd.f32 %v7066, %v7067
        %v7069 = vrot.slane %v7068, 1
        %v7070 = vadd.f32 %v7068, %v7069
        %v7071 = vrot.slane %v7038, 4
        %v7072 = vadd.f32 %v7038, %v7071
        %v7073 = vrot.slane %v7072, 2
        %v7074 = vadd.f32 %v7072, %v7073
        %v7075 = vrot.slane %v7074, 1
        %v7076 = vadd.f32 %v7074, %v7075
        %v7077 = vrot.slane %v7039, 4
        %v7078 = vadd.f32 %v7039, %v7077
        %v7079 = vrot.slane %v7078, 2
        %v7080 = vadd.f32 %v7078, %v7079
        %v7081 = vrot.slane %v7080, 1
        %v7082 = vadd.f32 %v7080, %v7081
        %v7083 = vrot.slane %v7040, 4
        %v7084 = vadd.f32 %v7040, %v7083
        %v7085 = vrot.slane %v7084, 2
        %v7086 = vadd.f32 %v7084, %v7085
        %v7087 = vrot.slane %v7086, 1
        %v7088 = vadd.f32 %v7086, %v7087
        %v7089 = vrcp.pop 8.0
        %v7090 = vmul.f32 %v7046, %v7089
        %v7091 = vmul.f32 %v7052, %v7089
        %v7092 = vmul.f32 %v7058, %v7089
        %v7093 = vmul.f32 %v7064, %v7089
        %v7094 = vmul.f32 %v7070, %v7089
        %v7095 = vmul.f32 %v7076, %v7089
        %v7096 = vmul.f32 %v7082, %v7089
        %v7097 = vmul.f32 %v7088, %v7089
        %v7098 = vadd.f32 %v7090, 1e-05
        %v7099 = vadd.f32 %v7091, 1e-05
        %v7100 = vadd.f32 %v7092, 1e-05
        %v7101 = vadd.f32 %v7093, 1e-05
        %v7102 = vadd.f32 %v7094, 1e-05
        %v7103 = vadd.f32 %v7095, 1e-05
        %v7104 = vadd.f32 %v7096, 1e-05
        %v7105 = vadd.f32 %v7097, 1e-05
        %v7106 = vrsqrt.pop %v7098
        %v7107 = vrsqrt.pop %v7099
        %v7108 = vrsqrt.pop %v7100
        %v7109 = vrsqrt.pop %v7101
        %v7110 = vrsqrt.pop %v7102
        %v7111 = vrsqrt.pop %v7103
        %v7112 = vrsqrt.pop %v7104
        %v7113 = vrsqrt.pop %v7105
        %v7114 = vmul.f32 %v6748, %v7106
        %v7115 = vmul.f32 %v6788, %v7107
        %v7116 = vmul.f32 %v6828, %v7108
        %v7117 = vmul.f32 %v6868, %v7109
        %v7118 = vmul.f32 %v6908, %v7110
        %v7119 = vmul.f32 %v6948, %v7111
        %v7120 = vmul.f32 %v6988, %v7112
        %v7121 = vmul.f32 %v7028, %v7113
        %v7122 = vpack.c.bf16 %v7115, %v7114
        %v7123 = vpack.c.bf16 %v7117, %v7116
        %v7124 = vpack.c.bf16 %v7119, %v7118
        %v7125 = vpack.c.bf16 %v7121, %v7120
        %v7126 = vld [vmem:[%s2] sm:$0xf]
        %v7127 = vld [vmem:[%s2 + $0x4] sm:$0xf]
        %v7128 = vld [vmem:[%s2 + $0x8] sm:$0xf]
        %v7129 = vld [vmem:[%s2 + $0xc] sm:$0xf]
        %v7130 = vld [vmem:[%s2 + $0x10] sm:$0xf]
        %v7131 = vld [vmem:[%s2 + $0x14] sm:$0xf]
        %v7132 = vld [vmem:[%s2 + $0x18] sm:$0xf]
        %v7133 = vld [vmem:[%s2 + $0x1c] sm:$0xf]
        %v7142 = vunpack.c.l.b16 %v7126
        %v7143 = vunpack.c.l.b16 %v7127
        %v7144 = vunpack.c.l.b16 %v7128
        %v7145 = vunpack.c.l.b16 %v7129
        %v7146 = vunpack.c.l.b16 %v7130
        %v7147 = vunpack.c.l.b16 %v7131
        %v7148 = vunpack.c.l.b16 %v7132
        %v7149 = vunpack.c.l.b16 %v7133
        %v7150 = vpack.c.b16 %v7143, %v7142
        %v7151 = vpack.c.b16 %v7145, %v7144
        %v7152 = vpack.c.b16 %v7147, %v7146
        %v7153 = vpack.c.b16 %v7149, %v7148
        %v7155 = vsel %vm266, %v7150, 0
        %v7158 = vsel %vm266, %v7151, 0
        %v7161 = vsel %vm266, %v7152, 0
        %v7164 = vsel %vm266, %v7153, 0
        %7166 = vmatprep.subr.bf16.mxu0 0
        %7167 = vmatpush1.bf16.msra.mxu0 %v7122
        %7168 = vmatprep.subr.bf16.mxu0 0
        %7169 = vmatpush1.bf16.msra.mxu0 %v7123
        %7170 = vmatprep.subr.bf16.mxu0 0
        %7171 = vmatpush1.bf16.msra.mxu0 %v7124
        %7172 = vmatprep.subr.bf16.mxu0 0
        %7173 = vmatpush1.bf16.msra.mxu0 %v7125
        %7174 = vmatprep.subr.bf16.mxu0 0
        %7175 = vmatpush1.bf16.msra.mxu0 0
        %7176 = vmatprep.subr.bf16.mxu0 0
        %7177 = vmatpush1.bf16.msra.mxu0 0
        %7178 = vmatprep.subr.bf16.mxu0 0
        %7179 = vmatpush1.bf16.msra.mxu0 0
        %7180 = vmatprep.subr.bf16.mxu0 0
        %7181 = vmatpush1.bf16.msra.mxu0 0
        %7182 = vmatprep.subr.bf16.mxu0 0
        %7183 = vmatpush1.bf16.msra.mxu0 0
        %7184 = vmatprep.subr.bf16.mxu0 0
        %7185 = vmatpush1.bf16.msra.mxu0 0
        %7186 = vmatprep.subr.bf16.mxu0 0
        %7187 = vmatpush1.bf16.msra.mxu0 0
        %7188 = vmatprep.subr.bf16.mxu0 0
        %7189 = vmatpush1.bf16.msra.mxu0 0
        %7190 = vmatprep.subr.bf16.mxu0 0
        %7191 = vmatpush1.bf16.msra.mxu0 0
        %7192 = vmatprep.subr.bf16.mxu0 0
        %7193 = vmatpush1.bf16.msra.mxu0 0
        %7194 = vmatprep.subr.bf16.mxu0 0
        %7195 = vmatpush1.bf16.msra.mxu0 0
        %7196 = vmatprep.subr.bf16.mxu0 0
        %7197 = vmatpush1.bf16.msra.mxu0 0
        %7198 = vmatprep.mubr.bf16.mxu0 0
        %7199 = vmatmul.mubr.bf16.gmra.mrb[0].mxu0 %v7155
        %v7200 = vpop.f32.mrb[0].mxu0
        %v7201 = vadd.f32 0.0, %v7200
        %v7202 = vpop.f32.mrb[0].mxu0
        %v7203 = vpop.f32.mrb[0].mxu0
        %v7204 = vadd.f32 0.0, %v7203
        %v7205 = vpop.f32.mrb[0].mxu0
        %7206 = vmatprep.mubr.bf16.mxu0 0
        %7207 = vmatmul.mubr.bf16.gmra.mrb[0].mxu0 %v7158
        %v7208 = vpop.f32.mrb[0].mxu0
        %v7209 = vadd.f32 0.0, %v7208
        %v7210 = vpop.f32.mrb[0].mxu0
        %v7211 = vpop.f32.mrb[0].mxu0
        %v7212 = vadd.f32 0.0, %v7211
        %v7213 = vpop.f32.mrb[0].mxu0
        %7214 = vmatprep.mubr.bf16.mxu0 0
        %7215 = vmatmul.mubr.bf16.gmra.mrb[0].mxu0 %v7161
        %v7216 = vpop.f32.mrb[0].mxu0
        %v7217 = vadd.f32 0.0, %v7216
        %v7218 = vpop.f32.mrb[0].mxu0
        %v7219 = vpop.f32.mrb[0].mxu0
        %v7220 = vadd.f32 0.0, %v7219
        %v7221 = vpop.f32.mrb[0].mxu0
        %7222 = vmatprep.mubr.bf16.mxu0 0
        %7223 = vmatmul.mubr.bf16.gmra.mrb[0].mxu0 %v7164
        %v7224 = vpop.f32.mrb[0].mxu0
        %v7225 = vadd.f32 0.0, %v7224
        %v7226 = vpop.f32.mrb[0].mxu0
        %v7227 = vpop.f32.mrb[0].mxu0
        %v7228 = vadd.f32 0.0, %v7227
        %v7229 = vpop.f32.mrb[0].mxu0
        %7230 = vdwg.mxu0
        %7231 = vst [vmem:[%s163] sm:$0xff] %v7201
        %7232 = vst [vmem:[%s163 + $0x8] sm:$0xff] %v7204
        %7233 = vst [vmem:[%s163 + $0x10] sm:$0xff] %v7209
        %7234 = vst [vmem:[%s163 + $0x18] sm:$0xff] %v7212
        %7235 = vst [vmem:[%s163 + $0x20] sm:$0xff] %v7217
        %7236 = vst [vmem:[%s163 + $0x28] sm:$0xff] %v7220
        %7237 = vst [vmem:[%s163 + $0x30] sm:$0xff] %v7225
        %7238 = vst [vmem:[%s163 + $0x38] sm:$0xff] %v7228
        %s7239 = sand.u32 %s93, 1
        %s7240 = scalar_lea.sflag [#allocation3], %s7239
        %s7241 = sand.u32 %s93, 1
        %s7242 = smul.addr %s7241, 64
        %s7243 = scalar_lea.vmem [#allocation2], %s7242
        // Predicated region
        $region33: #{tpu_custom_call.1} parent=31 // pred_check
          %p7244 = pneg %p103
        $region34: #{tpu_custom_call.1} parent=31 // pred_check_branch
          %7246 = sbr.rel (%p7244) target = $region36
        $region35: #{tpu_custom_call.1} parent=31 // pred_region
          %s7248 = ssub.s32 1024, 1024
          %7249 = vsyncadd %s7240, %s7248
          %s7250 = smul.addr %s17, 8
          %s7251 = smul.addr %s7250, 128
          %s7252 = scalar_lea.hbm %s3, %s7251
          %s7253 = sshll.u32 %s7243, 4
          %s7254 = int_to_ptr.vmem [resolvable:$true] %s7253
          %7259 = dma.vmem_to_hbm [thread:$0]  %s7254, 1024, %s7252, %s7240, 128, 128, 8
        $region36: #{tpu_custom_call.1} parent=31 // pred_fallthru
          _
      $region32: #{tpu_custom_call.1} parent=5 // pred_fallthru
        _
      %p7260 = scmp.le.s32.totalorder 2, %s12
      // Predicated region
      $region37: #{tpu_custom_call.1} parent=5 // pred_check
        %p7261 = pneg %p7260
      $region38: #{tpu_custom_call.1} parent=5 // pred_check_branch
        %7263 = sbr.rel (%p7261) target = $region40
      $region39: #{tpu_custom_call.1} parent=5 // pred_region
        %s7264 = ssub.s32 %s12, 2
        // Predicated region
        $region41: #{tpu_custom_call.1} parent=39 // pred_check
          %p7265 = pneg %p109
        $region42: #{tpu_custom_call.1} parent=39 // pred_check_branch
          %7267 = sbr.rel (%p7265) target = $region44
        $region43: #{tpu_custom_call.1} parent=39 // pred_region
          %s7268 = sand.u32 %s94, 1
          %s7269 = scalar_lea.sflag [#allocation3], %s7268
          %s7270 = sand.u32 %s94, 1
          %s7271 = smul.addr %s7270, 64
          %s7272 = scalar_lea.vmem [#allocation2], %s7271
          %7273 = dma.done %s7269, 1024
        $region44: #{tpu_custom_call.1} parent=39 // pred_fallthru
          _
      $region40: #{tpu_custom_call.1} parent=5 // pred_fallthru
        _
    $region6: #{tpu_custom_call.1} parent=1 // loop_footer
      %s16 = sadd.s32 1, %s12
    $region7: #{tpu_custom_call.1} parent=1 // loop_footer_branch
      %11 = sbr.rel target = $region3
    $region8: #{tpu_custom_call.1} parent=1 // loop_exit
      _
    %7274 = vsyncpa [#allocation3], 1
    %s7275 = scalar_lea.sflag [#allocation3], 1
    %7276 = vsyncpa %s7275, 1

</llo_original>
